<compile_context>
chip_gen: v7x
topology: tpu7x:2x2x1
jax: 0.10.0
libtpu: 0.0.40
codegen_flags: <defaults>
</compile_context>

<pallas_src>
import jax
import jax.numpy as jnp
from jax.experimental import pallas as pl
from jax.experimental.pallas import tpu as pltpu

BN_EPS = 0.8          # nn.BatchNorm1d(out_feat, 0.8): 0.8 is the *eps* arg
LRELU_SLOPE = 0.2
LANE = 128


def _round_up(n, m):
    return ((n + m - 1) // m) * m


def _leaky(x):
    return jnp.where(x > 0, x, LRELU_SLOPE * x)


def _bn_leaky(x, gamma, beta):
    # Training-mode BatchNorm1d (batch mean, biased batch variance) with the
    # affine folded into a single scale/shift per feature:
    #   scale = gamma * rsqrt(var + eps);  shift = beta - mean * scale
    #   y     = x * scale + shift          (2 full-tile VPU ops, not 4)
    # Single reduction pass: var = E[x^2] - E[x]^2 (eps=0.8 dwarfs any
    # cancellation error).
    mean = jnp.mean(x, axis=0, keepdims=True)
    mean_sq = jnp.mean(x * x, axis=0, keepdims=True)
    var = mean_sq - mean * mean
    scale = gamma * jax.lax.rsqrt(var + BN_EPS)
    shift = beta - mean * scale
    return _leaky(x * scale + shift)


def _dot_bf16(h, w_ref):
    # bf16 x bf16 MXU matmul with f32 accumulation.  Activations stay f32 for
    # all element-wise math; only the matmul operand is cast.
    return jnp.dot(h.astype(jnp.bfloat16), w_ref[...],
                   preferred_element_type=jnp.float32)


def _make_kernel(out_pad):
    # Static lane-aligned offsets into the coalesced (1, 4608+out_pad-896)
    # small-parameter row: b1 | g2 | be2 | g3 | be3 | g4 | be4 | b5.
    widths = [128, 256, 256, 512, 512, 1024, 1024, out_pad]
    offs = [0]
    for w in widths:
        offs.append(offs[-1] + w)

    def kernel(z_ref, p_ref, w1_ref, w2_ref,
               w3_hbm, w4_hbm, w5_hbm,
               out_ref,
               w3_v, w4_v, w5_v, sem):
        # Kick off the big late-layer weight DMAs up front (w3 256 KiB,
        # w4 1 MiB, w5 ~1.75 MiB bf16) so they stream from HBM while the
        # early layers compute.  w1/w2 are already VMEM-resident (auto-DMA).
        cp3 = pltpu.make_async_copy(w3_hbm, w3_v, sem.at[0]); cp3.start()
        cp4 = pltpu.make_async_copy(w4_hbm, w4_v, sem.at[1]); cp4.start()
        cp5 = pltpu.make_async_copy(w5_hbm, w5_v, sem.at[2]); cp5.start()

        b1 = p_ref[:, offs[0]:offs[1]]
        g2 = p_ref[:, offs[1]:offs[2]]
        be2 = p_ref[:, offs[2]:offs[3]]
        g3 = p_ref[:, offs[3]:offs[4]]
        be3 = p_ref[:, offs[4]:offs[5]]
        g4 = p_ref[:, offs[5]:offs[6]]
        be4 = p_ref[:, offs[6]:offs[7]]
        b5 = p_ref[:, offs[7]:offs[8]]

        # block(latent, 128, normalize=False): Linear + LeakyReLU
        # (z already bf16; weights resident -> compute starts immediately).
        h = _leaky(jnp.dot(z_ref[...], w1_ref[...],
                           preferred_element_type=jnp.float32) + b1)

        # block(128, 256): Linear + BatchNorm1d(eps=0.8) + LeakyReLU
        # Linear bias cancels exactly in training-mode BN -> omitted.
        h = _bn_leaky(_dot_bf16(h, w2_ref), g2, be2)

        # block(256, 512)
        cp3.wait()
        h = _bn_leaky(_dot_bf16(h, w3_v), g3, be3)

        # block(512, 1024)
        cp4.wait()
        h = _bn_leaky(_dot_bf16(h, w4_v), g4, be4)

        # final Linear(1024, out_pad) + Tanh.  out_pad is a multiple of 128 so
        # the store is an unmasked lane-dense vst.
        cp5.wait()
        out_ref[...] = jnp.tanh(_dot_bf16(h, w5_v) + b5)

    return kernel


def init_params(key, latent_dim, img_shape):
    """Deterministic synthetic parameters (shapes match the PyTorch module)."""
    c, h, w = img_shape
    out_dim = c * h * w
    dims = [(latent_dim, 128), (128, 256), (256, 512), (512, 1024), (1024, out_dim)]
    params = {}
    keys = jax.random.split(key, 2 * len(dims) + 3 * 2)
    ki = 0
    for li, (fin, fout) in enumerate(dims, start=1):
        scale = 1.0 / jnp.sqrt(jnp.float32(fin))
        params[f"w{li}"] = (jax.random.normal(keys[ki], (fin, fout), jnp.float32)
                            * scale); ki += 1
        params[f"b{li}"] = (jax.random.normal(keys[ki], (1, fout), jnp.float32)
                            * 0.01); ki += 1
    # BatchNorm affine params for layers 2..4 (deterministic, non-trivial).
    for li, fout in [(2, 256), (3, 512), (4, 1024)]:
        params[f"g{li}"] = 1.0 + 0.1 * jax.random.normal(keys[ki], (1, fout), jnp.float32); ki += 1
        params[f"be{li}"] = 0.1 * jax.random.normal(keys[ki], (1, fout), jnp.float32); ki += 1
    return params


def _pad_axis(x, axis, target):
    pad = target - x.shape[axis]
    if pad <= 0:
        return x
    widths = [(0, 0)] * x.ndim
    widths[axis] = (0, pad)
    return jnp.pad(x, widths)


def generator_forward(z, params, img_shape):
    """z: (B, latent_dim) float32 -> img: (B, C, H, W) float32."""
    b, latent_dim = z.shape
    c, h, w = img_shape
    out_dim = c * h * w
    out_pad = _round_up(out_dim, LANE)
    lat_pad = _round_up(latent_dim, LANE)

    # Zero-pad latent / final lane dims to multiples of 128 (exact), cast the
    # latent input and all weights to bf16 (halves their HBM traffic).
    z_p = _pad_axis(z, 1, lat_pad).astype(jnp.bfloat16)
    w1 = _pad_axis(params["w1"], 0, lat_pad).astype(jnp.bfloat16)
    w2 = params["w2"].astype(jnp.bfloat16)
    w3 = params["w3"].astype(jnp.bfloat16)
    w4 = params["w4"].astype(jnp.bfloat16)
    w5 = _pad_axis(params["w5"], 1, out_pad).astype(jnp.bfloat16)
    b5 = _pad_axis(params["b5"], 1, out_pad)

    # Coalesce all small per-feature parameters into a single lane-padded f32
    # row (one prologue DMA instead of ~12).  b2/b3/b4 are intentionally
    # omitted: a Linear bias immediately before training-mode BatchNorm
    # cancels exactly in (x - mean).
    small = jnp.concatenate(
        [params["b1"],
         params["g2"], params["be2"],
         params["g3"], params["be3"],
         params["g4"], params["be4"],
         b5], axis=1)

    vmem_spec = pl.BlockSpec(memory_space=pltpu.MemorySpace.VMEM)
    hbm_spec = pl.BlockSpec(memory_space=pl.ANY)   # big weights: manual DMA

    flat = pl.pallas_call(
        _make_kernel(out_pad),
        out_shape=jax.ShapeDtypeStruct((b, out_pad), jnp.float32),
        in_specs=[vmem_spec, vmem_spec, vmem_spec, vmem_spec,   # z, small, w1, w2
                  hbm_spec, hbm_spec, hbm_spec],                # w3, w4, w5
        out_specs=vmem_spec,
        scratch_shapes=[
            pltpu.VMEM((256, 512), jnp.bfloat16),
            pltpu.VMEM((512, 1024), jnp.bfloat16),
            pltpu.VMEM((1024, out_pad), jnp.bfloat16),
            pltpu.SemaphoreType.DMA((3,)),
        ],
        compiler_params=pltpu.CompilerParams(vmem_limit_bytes=24 << 20),
    )(z_p, small, w1, w2, w3, w4, w5)

    # TODO(synk): for batches whose activations don't fit VMEM (budget against
    # v7x's 64 MiB physical / 32 MiB default-scoped, not v6e's 128 MiB), a
    # batch-tiled grid with carried sum / sum-of-squares BN accumulators and
    # weights held VMEM-resident across steps is required; full-batch BN stats
    # forbid naive per-tile stats.
    # TODO(synk): v7x dual-TensorCore throughput (leading "parallel" batch
    # axis, or VMEM_SHARED BN-stat exchange) is not exploited by this
    # grid-less single-core call.

    # img.view(B, C, H, W) — slice off lane padding, then reshape (plain JAX).
    return flat[:, :out_dim].reshape(b, c, h, w)


def generator_reference(z, params, img_shape):
    """Pure-JAX reference (same bf16 weight rounding, PyTorch BN semantics)."""
    def bn(x, g, be):
        mean = jnp.mean(x, axis=0, keepdims=True)
        var = jnp.mean((x - mean) ** 2, axis=0, keepdims=True)
        return (x - mean) * jax.lax.rsqrt(var + BN_EPS) * g + be

    def dot(h_, w_):
        return jnp.dot(h_.astype(jnp.bfloat16), w_.astype(jnp.bfloat16),
                       preferred_element_type=jnp.float32)

    h = _leaky(dot(z, params["w1"]) + params["b1"])
    h = _leaky(bn(dot(h, params["w2"]) + params["b2"], params["g2"], params["be2"]))
    h = _leaky(bn(dot(h, params["w3"]) + params["b3"], params["g3"], params["be3"]))
    h = _leaky(bn(dot(h, params["w4"]) + params["b4"], params["g4"], params["be4"]))
    h = jnp.tanh(dot(h, params["w5"]) + params["b5"])
    c, hh, ww = img_shape
    return h.reshape(z.shape[0], c, hh, ww)


if __name__ == "__main__":
    latent_dim = 64
    img_shape = (1, 28, 28)   # fanogan MNIST: out_dim = 784 -> lane-padded to 896
    batch = 256               # >=256 rows keeps the MXU (2x256^2 on v6e/v7x) busy

    key = jax.random.PRNGKey(0)
    k_params, k_z = jax.random.split(key)
    params = init_params(k_params, latent_dim, img_shape)
    z = jax.random.normal(k_z, (batch, latent_dim), jnp.float32)

    img = jax.block_until_ready(generator_forward(z, params, img_shape))
    ref = generator_reference(z, params, img_shape)

    assert img.shape == (batch, *img_shape), img.shape
    max_err = float(jnp.max(jnp.abs(img - ref)))
    assert max_err < 5e-3, max_err
    print("KERNEL_OK")
</pallas_src>

<mosaic_0001>
module attributes {stable_mosaic.version = 11 : i64} {
  func.func @kernel(%arg0: memref<256x128xbf16, #tpu.memory_space<vmem>>, %arg1: memref<1x4608xf32, #tpu.memory_space<vmem>>, %arg2: memref<128x128xbf16, #tpu.memory_space<vmem>>, %arg3: memref<128x256xbf16, #tpu.memory_space<vmem>>, %arg4: memref<256x512xbf16, #tpu.memory_space<any>>, %arg5: memref<512x1024xbf16, #tpu.memory_space<any>>, %arg6: memref<1024x896xbf16, #tpu.memory_space<any>>, %arg7: memref<256x896xf32, #tpu.memory_space<vmem>>, %arg8: memref<256x512xbf16, #tpu.memory_space<vmem>>, %arg9: memref<512x1024xbf16, #tpu.memory_space<vmem>>, %arg10: memref<1024x896xbf16, #tpu.memory_space<vmem>>, %arg11: memref<3x!tpu.dma_semaphore, #tpu.memory_space<semaphore_mem>>) attributes {dimension_semantics = [], scalar_prefetch = 0 : i64, scratch_operands = 4 : i64, tpu.core_type = #tpu.core_type<tc>} {
    %c0_i32 = arith.constant 0 : i32
    %0 = tpu.memref_slice %arg11[%c0_i32] : memref<3x!tpu.dma_semaphore, #tpu.memory_space<semaphore_mem>> -> memref<1x!tpu.dma_semaphore, #tpu.memory_space<semaphore_mem>>
    %1 = tpu.memref_squeeze %0 : memref<1x!tpu.dma_semaphore, #tpu.memory_space<semaphore_mem>> -> memref<!tpu.dma_semaphore, #tpu.memory_space<semaphore_mem>>
    tpu.enqueue_dma source(%arg4 : memref<256x512xbf16, #tpu.memory_space<any>>) target(%arg8 : memref<256x512xbf16, #tpu.memory_space<vmem>>) target_semaphore(%1 : memref<!tpu.dma_semaphore, #tpu.memory_space<semaphore_mem>>)
    %c1_i32 = arith.constant 1 : i32
    %2 = tpu.memref_slice %arg11[%c1_i32] : memref<3x!tpu.dma_semaphore, #tpu.memory_space<semaphore_mem>> -> memref<1x!tpu.dma_semaphore, #tpu.memory_space<semaphore_mem>>
    %3 = tpu.memref_squeeze %2 : memref<1x!tpu.dma_semaphore, #tpu.memory_space<semaphore_mem>> -> memref<!tpu.dma_semaphore, #tpu.memory_space<semaphore_mem>>
    tpu.enqueue_dma source(%arg5 : memref<512x1024xbf16, #tpu.memory_space<any>>) target(%arg9 : memref<512x1024xbf16, #tpu.memory_space<vmem>>) target_semaphore(%3 : memref<!tpu.dma_semaphore, #tpu.memory_space<semaphore_mem>>)
    %c2_i32 = arith.constant 2 : i32
    %4 = tpu.memref_slice %arg11[%c2_i32] : memref<3x!tpu.dma_semaphore, #tpu.memory_space<semaphore_mem>> -> memref<1x!tpu.dma_semaphore, #tpu.memory_space<semaphore_mem>>
    %5 = tpu.memref_squeeze %4 : memref<1x!tpu.dma_semaphore, #tpu.memory_space<semaphore_mem>> -> memref<!tpu.dma_semaphore, #tpu.memory_space<semaphore_mem>>
    tpu.enqueue_dma source(%arg6 : memref<1024x896xbf16, #tpu.memory_space<any>>) target(%arg10 : memref<1024x896xbf16, #tpu.memory_space<vmem>>) target_semaphore(%5 : memref<!tpu.dma_semaphore, #tpu.memory_space<semaphore_mem>>)
    %c0 = arith.constant 0 : index
    %c0_0 = arith.constant 0 : index
    %6 = vector.load %arg1[%c0, %c0_0] : memref<1x4608xf32, #tpu.memory_space<vmem>>, vector<1x128xf32>
    %c0_1 = arith.constant 0 : index
    %c128 = arith.constant 128 : index
    %7 = vector.load %arg1[%c0_1, %c128] : memref<1x4608xf32, #tpu.memory_space<vmem>>, vector<1x256xf32>
    %c0_2 = arith.constant 0 : index
    %c384 = arith.constant 384 : index
    %8 = vector.load %arg1[%c0_2, %c384] : memref<1x4608xf32, #tpu.memory_space<vmem>>, vector<1x256xf32>
    %c0_3 = arith.constant 0 : index
    %c640 = arith.constant 640 : index
    %9 = vector.load %arg1[%c0_3, %c640] : memref<1x4608xf32, #tpu.memory_space<vmem>>, vector<1x512xf32>
    %c0_4 = arith.constant 0 : index
    %c1152 = arith.constant 1152 : index
    %10 = vector.load %arg1[%c0_4, %c1152] : memref<1x4608xf32, #tpu.memory_space<vmem>>, vector<1x512xf32>
    %c0_5 = arith.constant 0 : index
    %c1664 = arith.constant 1664 : index
    %11 = vector.load %arg1[%c0_5, %c1664] : memref<1x4608xf32, #tpu.memory_space<vmem>>, vector<1x1024xf32>
    %c0_6 = arith.constant 0 : index
    %c2688 = arith.constant 2688 : index
    %12 = vector.load %arg1[%c0_6, %c2688] : memref<1x4608xf32, #tpu.memory_space<vmem>>, vector<1x1024xf32>
    %c0_7 = arith.constant 0 : index
    %c3712 = arith.constant 3712 : index
    %13 = vector.load %arg1[%c0_7, %c3712] : memref<1x4608xf32, #tpu.memory_space<vmem>>, vector<1x896xf32>
    %c0_8 = arith.constant 0 : index
    %c0_9 = arith.constant 0 : index
    %14 = vector.load %arg0[%c0_8, %c0_9] : memref<256x128xbf16, #tpu.memory_space<vmem>>, vector<256x128xbf16>
    %c0_10 = arith.constant 0 : index
    %c0_11 = arith.constant 0 : index
    %15 = vector.load %arg2[%c0_10, %c0_11] : memref<128x128xbf16, #tpu.memory_space<vmem>>, vector<128x128xbf16>
    %cst = arith.constant dense<0.000000e+00> : vector<256x128xf32>
    %16 = tpu.matmul %14, %15, %cst {dimension_numbers = #tpu.dot_dimension_numbers<[1], [0], [0], [1], [0, 0, 1, 1], [], []>} : vector<256x128xbf16>, vector<128x128xbf16>, vector<256x128xf32> -> vector<256x128xf32>
    %17 = vector.broadcast %6 : vector<1x128xf32> to vector<256x128xf32>
    %18 = arith.addf %16, %17 : vector<256x128xf32>
    %cst_12 = arith.constant 0.000000e+00 : f32
    %19 = vector.broadcast %cst_12 : f32 to vector<256x128xf32>
    %20 = arith.cmpf ogt, %18, %19 : vector<256x128xf32>
    %cst_13 = arith.constant 2.000000e-01 : f32
    %21 = vector.broadcast %cst_13 : f32 to vector<256x128xf32>
    %22 = arith.mulf %21, %18 : vector<256x128xf32>
    %23 = arith.select %20, %18, %22 : vector<256x128xi1>, vector<256x128xf32>
    %24 = arith.truncf %23 : vector<256x128xf32> to vector<256x128xbf16>
    %c0_14 = arith.constant 0 : index
    %c0_15 = arith.constant 0 : index
    %25 = vector.load %arg3[%c0_14, %c0_15] : memref<128x256xbf16, #tpu.memory_space<vmem>>, vector<128x256xbf16>
    %cst_16 = arith.constant dense<0.000000e+00> : vector<256x256xf32>
    %26 = tpu.matmul %24, %25, %cst_16 {dimension_numbers = #tpu.dot_dimension_numbers<[1], [0], [0], [1], [0, 0, 1, 1], [], []>} : vector<256x128xbf16>, vector<128x256xbf16>, vector<256x256xf32> -> vector<256x256xf32>
    %cst_17 = arith.constant dense<0.000000e+00> : vector<256xf32>
    %27 = vector.multi_reduction <add>, %26, %cst_17 [0] : vector<256x256xf32> to vector<256xf32>
    %28 = vector.shape_cast %27 : vector<256xf32> to vector<1x256xf32>
    %cst_18 = arith.constant 2.560000e+02 : f32
    %29 = vector.broadcast %cst_18 : f32 to vector<1x256xf32>
    %30 = arith.divf %28, %29 : vector<1x256xf32>
    %31 = arith.mulf %26, %26 : vector<256x256xf32>
    %cst_19 = arith.constant dense<0.000000e+00> : vector<256xf32>
    %32 = vector.multi_reduction <add>, %31, %cst_19 [0] : vector<256x256xf32> to vector<256xf32>
    %33 = vector.shape_cast %32 : vector<256xf32> to vector<1x256xf32>
    %cst_20 = arith.constant 2.560000e+02 : f32
    %34 = vector.broadcast %cst_20 : f32 to vector<1x256xf32>
    %35 = arith.divf %33, %34 : vector<1x256xf32>
    %36 = arith.mulf %30, %30 : vector<1x256xf32>
    %37 = arith.subf %35, %36 : vector<1x256xf32>
    %cst_21 = arith.constant 8.000000e-01 : f32
    %38 = vector.broadcast %cst_21 : f32 to vector<1x256xf32>
    %39 = arith.addf %37, %38 : vector<1x256xf32>
    %40 = math.rsqrt %39 : vector<1x256xf32>
    %41 = arith.mulf %7, %40 : vector<1x256xf32>
    %42 = arith.mulf %30, %41 : vector<1x256xf32>
    %43 = arith.subf %8, %42 : vector<1x256xf32>
    %44 = vector.broadcast %41 : vector<1x256xf32> to vector<256x256xf32>
    %45 = arith.mulf %26, %44 : vector<256x256xf32>
    %46 = vector.broadcast %43 : vector<1x256xf32> to vector<256x256xf32>
    %47 = arith.addf %45, %46 : vector<256x256xf32>
    %cst_22 = arith.constant 0.000000e+00 : f32
    %48 = vector.broadcast %cst_22 : f32 to vector<256x256xf32>
    %49 = arith.cmpf ogt, %47, %48 : vector<256x256xf32>
    %cst_23 = arith.constant 2.000000e-01 : f32
    %50 = vector.broadcast %cst_23 : f32 to vector<256x256xf32>
    %51 = arith.mulf %50, %47 : vector<256x256xf32>
    %52 = arith.select %49, %47, %51 : vector<256x256xi1>, vector<256x256xf32>
    %c0_i32_24 = arith.constant 0 : i32
    %53 = tpu.memref_slice %arg11[%c0_i32_24] : memref<3x!tpu.dma_semaphore, #tpu.memory_space<semaphore_mem>> -> memref<1x!tpu.dma_semaphore, #tpu.memory_space<semaphore_mem>>
    %54 = tpu.memref_squeeze %53 : memref<1x!tpu.dma_semaphore, #tpu.memory_space<semaphore_mem>> -> memref<!tpu.dma_semaphore, #tpu.memory_space<semaphore_mem>>
    tpu.wait_dma2 semaphore(%54 : memref<!tpu.dma_semaphore, #tpu.memory_space<semaphore_mem>>) src(%arg4 : memref<256x512xbf16, #tpu.memory_space<any>>) dst(%arg8 : memref<256x512xbf16, #tpu.memory_space<vmem>>)
    %55 = arith.truncf %52 : vector<256x256xf32> to vector<256x256xbf16>
    %c0_25 = arith.constant 0 : index
    %c0_26 = arith.constant 0 : index
    %56 = vector.load %arg8[%c0_25, %c0_26] : memref<256x512xbf16, #tpu.memory_space<vmem>>, vector<256x512xbf16>
    %cst_27 = arith.constant dense<0.000000e+00> : vector<256x512xf32>
    %57 = tpu.matmul %55, %56, %cst_27 {dimension_numbers = #tpu.dot_dimension_numbers<[1], [0], [0], [1], [0, 0, 1, 1], [], []>} : vector<256x256xbf16>, vector<256x512xbf16>, vector<256x512xf32> -> vector<256x512xf32>
    %cst_28 = arith.constant dense<0.000000e+00> : vector<512xf32>
    %58 = vector.multi_reduction <add>, %57, %cst_28 [0] : vector<256x512xf32> to vector<512xf32>
    %59 = vector.shape_cast %58 : vector<512xf32> to vector<1x512xf32>
    %cst_29 = arith.constant 2.560000e+02 : f32
    %60 = vector.broadcast %cst_29 : f32 to vector<1x512xf32>
    %61 = arith.divf %59, %60 : vector<1x512xf32>
    %62 = arith.mulf %57, %57 : vector<256x512xf32>
    %cst_30 = arith.constant dense<0.000000e+00> : vector<512xf32>
    %63 = vector.multi_reduction <add>, %62, %cst_30 [0] : vector<256x512xf32> to vector<512xf32>
    %64 = vector.shape_cast %63 : vector<512xf32> to vector<1x512xf32>
    %cst_31 = arith.constant 2.560000e+02 : f32
    %65 = vector.broadcast %cst_31 : f32 to vector<1x512xf32>
    %66 = arith.divf %64, %65 : vector<1x512xf32>
    %67 = arith.mulf %61, %61 : vector<1x512xf32>
    %68 = arith.subf %66, %67 : vector<1x512xf32>
    %cst_32 = arith.constant 8.000000e-01 : f32
    %69 = vector.broadcast %cst_32 : f32 to vector<1x512xf32>
    %70 = arith.addf %68, %69 : vector<1x512xf32>
    %71 = math.rsqrt %70 : vector<1x512xf32>
    %72 = arith.mulf %9, %71 : vector<1x512xf32>
    %73 = arith.mulf %61, %72 : vector<1x512xf32>
    %74 = arith.subf %10, %73 : vector<1x512xf32>
    %75 = vector.broadcast %72 : vector<1x512xf32> to vector<256x512xf32>
    %76 = arith.mulf %57, %75 : vector<256x512xf32>
    %77 = vector.broadcast %74 : vector<1x512xf32> to vector<256x512xf32>
    %78 = arith.addf %76, %77 : vector<256x512xf32>
    %cst_33 = arith.constant 0.000000e+00 : f32
    %79 = vector.broadcast %cst_33 : f32 to vector<256x512xf32>
    %80 = arith.cmpf ogt, %78, %79 : vector<256x512xf32>
    %cst_34 = arith.constant 2.000000e-01 : f32
    %81 = vector.broadcast %cst_34 : f32 to vector<256x512xf32>
    %82 = arith.mulf %81, %78 : vector<256x512xf32>
    %83 = arith.select %80, %78, %82 : vector<256x512xi1>, vector<256x512xf32>
    %c1_i32_35 = arith.constant 1 : i32
    %84 = tpu.memref_slice %arg11[%c1_i32_35] : memref<3x!tpu.dma_semaphore, #tpu.memory_space<semaphore_mem>> -> memref<1x!tpu.dma_semaphore, #tpu.memory_space<semaphore_mem>>
    %85 = tpu.memref_squeeze %84 : memref<1x!tpu.dma_semaphore, #tpu.memory_space<semaphore_mem>> -> memref<!tpu.dma_semaphore, #tpu.memory_space<semaphore_mem>>
    tpu.wait_dma2 semaphore(%85 : memref<!tpu.dma_semaphore, #tpu.memory_space<semaphore_mem>>) src(%arg5 : memref<512x1024xbf16, #tpu.memory_space<any>>) dst(%arg9 : memref<512x1024xbf16, #tpu.memory_space<vmem>>)
    %86 = arith.truncf %83 : vector<256x512xf32> to vector<256x512xbf16>
    %c0_36 = arith.constant 0 : index
    %c0_37 = arith.constant 0 : index
    %87 = vector.load %arg9[%c0_36, %c0_37] : memref<512x1024xbf16, #tpu.memory_space<vmem>>, vector<512x1024xbf16>
    %cst_38 = arith.constant dense<0.000000e+00> : vector<256x1024xf32>
    %88 = tpu.matmul %86, %87, %cst_38 {dimension_numbers = #tpu.dot_dimension_numbers<[1], [0], [0], [1], [0, 0, 1, 1], [], []>} : vector<256x512xbf16>, vector<512x1024xbf16>, vector<256x1024xf32> -> vector<256x1024xf32>
    %cst_39 = arith.constant dense<0.000000e+00> : vector<1024xf32>
    %89 = vector.multi_reduction <add>, %88, %cst_39 [0] : vector<256x1024xf32> to vector<1024xf32>
    %90 = vector.shape_cast %89 : vector<1024xf32> to vector<1x1024xf32>
    %cst_40 = arith.constant 2.560000e+02 : f32
    %91 = vector.broadcast %cst_40 : f32 to vector<1x1024xf32>
    %92 = arith.divf %90, %91 : vector<1x1024xf32>
    %93 = arith.mulf %88, %88 : vector<256x1024xf32>
    %cst_41 = arith.constant dense<0.000000e+00> : vector<1024xf32>
    %94 = vector.multi_reduction <add>, %93, %cst_41 [0] : vector<256x1024xf32> to vector<1024xf32>
    %95 = vector.shape_cast %94 : vector<1024xf32> to vector<1x1024xf32>
    %cst_42 = arith.constant 2.560000e+02 : f32
    %96 = vector.broadcast %cst_42 : f32 to vector<1x1024xf32>
    %97 = arith.divf %95, %96 : vector<1x1024xf32>
    %98 = arith.mulf %92, %92 : vector<1x1024xf32>
    %99 = arith.subf %97, %98 : vector<1x1024xf32>
    %cst_43 = arith.constant 8.000000e-01 : f32
    %100 = vector.broadcast %cst_43 : f32 to vector<1x1024xf32>
    %101 = arith.addf %99, %100 : vector<1x1024xf32>
    %102 = math.rsqrt %101 : vector<1x1024xf32>
    %103 = arith.mulf %11, %102 : vector<1x1024xf32>
    %104 = arith.mulf %92, %103 : vector<1x1024xf32>
    %105 = arith.subf %12, %104 : vector<1x1024xf32>
    %106 = vector.broadcast %103 : vector<1x1024xf32> to vector<256x1024xf32>
    %107 = arith.mulf %88, %106 : vector<256x1024xf32>
    %108 = vector.broadcast %105 : vector<1x1024xf32> to vector<256x1024xf32>
    %109 = arith.addf %107, %108 : vector<256x1024xf32>
    %cst_44 = arith.constant 0.000000e+00 : f32
    %110 = vector.broadcast %cst_44 : f32 to vector<256x1024xf32>
    %111 = arith.cmpf ogt, %109, %110 : vector<256x1024xf32>
    %cst_45 = arith.constant 2.000000e-01 : f32
    %112 = vector.broadcast %cst_45 : f32 to vector<256x1024xf32>
    %113 = arith.mulf %112, %109 : vector<256x1024xf32>
    %114 = arith.select %111, %109, %113 : vector<256x1024xi1>, vector<256x1024xf32>
    %c2_i32_46 = arith.constant 2 : i32
    %115 = tpu.memref_slice %arg11[%c2_i32_46] : memref<3x!tpu.dma_semaphore, #tpu.memory_space<semaphore_mem>> -> memref<1x!tpu.dma_semaphore, #tpu.memory_space<semaphore_mem>>
    %116 = tpu.memref_squeeze %115 : memref<1x!tpu.dma_semaphore, #tpu.memory_space<semaphore_mem>> -> memref<!tpu.dma_semaphore, #tpu.memory_space<semaphore_mem>>
    tpu.wait_dma2 semaphore(%116 : memref<!tpu.dma_semaphore, #tpu.memory_space<semaphore_mem>>) src(%arg6 : memref<1024x896xbf16, #tpu.memory_space<any>>) dst(%arg10 : memref<1024x896xbf16, #tpu.memory_space<vmem>>)
    %117 = arith.truncf %114 : vector<256x1024xf32> to vector<256x1024xbf16>
    %c0_47 = arith.constant 0 : index
    %c0_48 = arith.constant 0 : index
    %118 = vector.load %arg10[%c0_47, %c0_48] : memref<1024x896xbf16, #tpu.memory_space<vmem>>, vector<1024x896xbf16>
    %cst_49 = arith.constant dense<0.000000e+00> : vector<256x896xf32>
    %119 = tpu.matmul %117, %118, %cst_49 {dimension_numbers = #tpu.dot_dimension_numbers<[1], [0], [0], [1], [0, 0, 1, 1], [], []>} : vector<256x1024xbf16>, vector<1024x896xbf16>, vector<256x896xf32> -> vector<256x896xf32>
    %120 = vector.broadcast %13 : vector<1x896xf32> to vector<256x896xf32>
    %121 = arith.addf %119, %120 : vector<256x896xf32>
    %122 = math.tanh %121 : vector<256x896xf32>
    %c0_50 = arith.constant 0 : index
    %c0_51 = arith.constant 0 : index
    %123 = vector.load %arg7[%c0_50, %c0_51] : memref<256x896xf32, #tpu.memory_space<vmem>>, vector<256x896xf32>
    tpu.vector_store %arg7[%c0_50, %c0_51], %122 {strides = array<i32>} : memref<256x896xf32, #tpu.memory_space<vmem>>, vector<256x896xf32>,
    return
  }
}

</mosaic_0001>

<llo_original>
// kernel: tpu_custom_call.1
$region0: #{tpu_custom_call.1}
  #allocation0 [shape = 'u32[]', space=smem, size = 0x4, offset = 0x4, fixed_abs, tag = 'smem constant byte address 0x4 - core index']
  #allocation1 [shape = 'u32[144,128]{1,0:T(1,128)}', space=vmem, size = 0x12000, scoped, tag = 'internal scratch']
  #allocation2 [shape = 'bf16[256,512]{1,0:T(16,128)(2,1)}', space=vmem, size = 0x40000, scoped, tag = 'scratch operand']
  #allocation3 [shape = 'bf16[512,1024]{1,0:T(16,128)(2,1)}', space=vmem, size = 0x100000, scoped, tag = 'scratch operand']
  #allocation4 [shape = 'bf16[1024,896]{1,0:T(16,128)(2,1)}', space=vmem, size = 0x1c0000, scoped, tag = 'scratch operand']
  #allocation5 [shape = 's32[3]{0}', space=sflag, size = 0xc, scoped, tag = 'scratch operand']
  #allocation15 [shape = 's32[]', space=sflag, size = 0x4, offset = 0, fixed_abs, tag = 'sflag constant byte address 0x0 - dummy sync flag']
  #allocation17 [shape = 's32[]', space=sflag, size = 0x4, offset = 0, fixed_abs, tag = 'sflag constant byte address 0x0 - dummy sync flag']
  #allocation19 [shape = 's32[]', space=sflag, size = 0x4, offset = 0, fixed_abs, tag = 'sflag constant byte address 0x0 - dummy sync flag']
  %s0 = inlined_call_operand.hbm [shape: bf16[256,128], index: 0, kind: input, shape index: {}]
  %s1 = inlined_call_operand.hbm [shape: f32[1,4608], index: 1, kind: input, shape index: {}]
  %s2 = inlined_call_operand.hbm [shape: bf16[128,128], index: 2, kind: input, shape index: {}]
  %s3 = inlined_call_operand.hbm [shape: bf16[128,256], index: 3, kind: input, shape index: {}]
  %s4 = inlined_call_operand.hbm [shape: bf16[256,512], index: 4, kind: input, shape index: {}]
  %s5 = inlined_call_operand.hbm [shape: bf16[512,1024], index: 5, kind: input, shape index: {}]
  %s6 = inlined_call_operand.hbm [shape: bf16[1024,896], index: 6, kind: input, shape index: {}]
  %s7 = inlined_call_operand.hbm [shape: f32[256,896], index: 7, kind: output, shape index: {}]
  %s8 = sld [smem:[#allocation0]]
  $region42: #{tpu_custom_call.1} parent=0
    _
  %s10 = ssub.s32 1, %s8
  %s11 = scalar_select 0, %s10, %s8
  $region1: #{tpu_custom_call.1} parent=0
    #allocation6 [shape = 'u8[65536]{0}', space=vmem, size = 0x10000, scoped, tag = 'input window, operand 0, single buffered']
    #allocation7 [shape = 's32[1]{0}', space=sflag, size = 0x4, scoped, tag = 'scoped memory for tpu_custom_call.1']
    #allocation8 [shape = 's32[1]{0}', space=sflag, size = 0x4, scoped, tag = 'scoped memory for tpu_custom_call.1']
    #allocation9 [shape = 'u8[18432]{0}', space=vmem, size = 0x4800, scoped, tag = 'input window, operand 1, single buffered']
    #allocation10 [shape = 's32[1]{0}', space=sflag, size = 0x4, scoped, tag = 'scoped memory for tpu_custom_call.1']
    #allocation11 [shape = 'u8[32768]{0}', space=vmem, size = 0x8000, scoped, tag = 'input window, operand 2, single buffered']
    #allocation12 [shape = 'u8[65536]{0}', space=vmem, size = 0x10000, scoped, tag = 'input window, operand 3, single buffered']
    #allocation13 [shape = 's32[1]{0}', space=sflag, size = 0x4, scoped, tag = 'scoped memory for tpu_custom_call.1']
    #allocation14 [shape = 'u8[917504]{0}', space=vmem, size = 0xe0000, scoped, tag = 'output window, operand 0, single buffered']
    #allocation16 [shape = 'u32[9]{0}', space=smem, size = 0x24, scoped, tag = 'DMA stride descriptor']
    #allocation18 [shape = 'u32[9]{0}', space=smem, size = 0x24, scoped, tag = 'DMA stride descriptor']
    #allocation20 [shape = 'u32[9]{0}', space=smem, size = 0x24, scoped, tag = 'DMA stride descriptor']
    %12 = vsyncpa [#allocation7], 0
    %13 = vsyncpa [#allocation10], 0
    %14 = vsyncpa [#allocation13], 0
    %15 = vsyncpa [#allocation8], 0
    // Predicated region
    $region2: #{tpu_custom_call.1} parent=1 // pred_check
      _
    $region3: #{tpu_custom_call.1} parent=1 // pred_check_branch
      %17 = sbr.rel (0) target = $region5
    $region4: #{tpu_custom_call.1} parent=1 // pred_region
      %s19 = ssub.s32 2048, 2048
      %20 = vsyncadd [#allocation7], %s19
      %s21 = sshll.u32 [#allocation6], 4
      %s22 = int_to_ptr.vmem [resolvable:$true] %s21
      %27 = dma.hbm_to_vmem [thread:$0]  %s0, 2048, %s22, [#allocation7], 64, 64, 4
    $region5: #{tpu_custom_call.1} parent=1 // pred_fallthru
      _
    // Predicated region
    $region6: #{tpu_custom_call.1} parent=1 // pred_check
      _
    $region7: #{tpu_custom_call.1} parent=1 // pred_check_branch
      %29 = sbr.rel (0) target = $region9
    $region8: #{tpu_custom_call.1} parent=1 // pred_region
      %s31 = ssub.s32 576, 576
      %32 = vsyncadd [#allocation10], %s31
      %s34 = sshll.u32 [#allocation9], 4
      %s35 = int_to_ptr.vmem [resolvable:$true] %s34
      %37 = dma.hbm_to_vmem [thread:$0]  %s1, 576, %s35, [#allocation10]
    $region9: #{tpu_custom_call.1} parent=1 // pred_fallthru
      _
    // Predicated region
    $region10: #{tpu_custom_call.1} parent=1 // pred_check
      _
    $region11: #{tpu_custom_call.1} parent=1 // pred_check_branch
      %39 = sbr.rel (0) target = $region13
    $region12: #{tpu_custom_call.1} parent=1 // pred_region
      %s41 = ssub.s32 1024, 1024
      %42 = vsyncadd [#allocation10], %s41
      %s43 = sshll.u32 [#allocation11], 4
      %s44 = int_to_ptr.vmem [resolvable:$true] %s43
      %49 = dma.hbm_to_vmem [thread:$0]  %s2, 1024, %s44, [#allocation10], 64, 64, 4
    $region13: #{tpu_custom_call.1} parent=1 // pred_fallthru
      _
    // Predicated region
    $region14: #{tpu_custom_call.1} parent=1 // pred_check
      _
    $region15: #{tpu_custom_call.1} parent=1 // pred_check_branch
      %51 = sbr.rel (0) target = $region17
    $region16: #{tpu_custom_call.1} parent=1 // pred_region
      %s53 = ssub.s32 2048, 2048
      %54 = vsyncadd [#allocation13], %s53
      %s55 = sshll.u32 [#allocation12], 4
      %s56 = int_to_ptr.vmem [resolvable:$true] %s55
      %61 = dma.hbm_to_vmem [thread:$0]  %s3, 2048, %s56, [#allocation13], 128, 128, 8
    $region17: #{tpu_custom_call.1} parent=1 // pred_fallthru
      _
    // Predicated region
    $region18: #{tpu_custom_call.1} parent=1 // pred_check
      _
    $region19: #{tpu_custom_call.1} parent=1 // pred_check_branch
      %63 = sbr.rel (0) target = $region21
    $region20: #{tpu_custom_call.1} parent=1 // pred_region
      %64 = dma.done [#allocation7], 2048
    $region21: #{tpu_custom_call.1} parent=1 // pred_fallthru
      _
    // Predicated region
    $region22: #{tpu_custom_call.1} parent=1 // pred_check
      _
    $region23: #{tpu_custom_call.1} parent=1 // pred_check_branch
      %66 = sbr.rel (0) target = $region25
    $region24: #{tpu_custom_call.1} parent=1 // pred_region
      %67 = dma.done [#allocation10], 576
    $region25: #{tpu_custom_call.1} parent=1 // pred_fallthru
      _
    // Predicated region
    $region26: #{tpu_custom_call.1} parent=1 // pred_check
      _
    $region27: #{tpu_custom_call.1} parent=1 // pred_check_branch
      %69 = sbr.rel (0) target = $region29
    $region28: #{tpu_custom_call.1} parent=1 // pred_region
      %70 = dma.done [#allocation10], 1024
    $region29: #{tpu_custom_call.1} parent=1 // pred_fallthru
      _
    // Predicated region
    $region30: #{tpu_custom_call.1} parent=1 // pred_check
      _
    $region31: #{tpu_custom_call.1} parent=1 // pred_check_branch
      %72 = sbr.rel (0) target = $region33
    $region32: #{tpu_custom_call.1} parent=1 // pred_region
      %73 = dma.done [#allocation13], 2048
    $region33: #{tpu_custom_call.1} parent=1 // pred_fallthru
      _
    %s76 = sshll.u32 1, 14
    %s77 = sxor.u32 4294967295, %s76
    %s79 = sld [smem:[#allocation0]]
    %s80 = sadd.s32 2, %s79
    %s82 = sshll.u32 7, 26
    %s83 = sxor.u32 4294967295, %s82
    %s84 = sand.u32 0, %s83
    %s85 = sshll.u32 %s80, 26
    %s86 = sor.u32 %s84, %s85
    %s87 = sshll.u32 [#allocation2], 4
    %s88 = int_to_ptr.vmem [resolvable:$true] %s87
    %91 = sst [smem:[#allocation16]] 512
    %s92 = scalar_lea.smem [#allocation16], 1
    %93 = sst [smem:[%s92]] 512
    %s94 = scalar_lea.smem [#allocation16], 2
    %95 = sst [smem:[%s94]] 4
    %s96 = scalar_lea.smem [#allocation16], 3
    %97 = sst [smem:[%s96]] 64
    %s98 = scalar_lea.smem [#allocation16], 4
    %99 = sst [smem:[%s98]] 128
    %s100 = scalar_lea.smem [#allocation16], 5
    %101 = sst [smem:[%s100]] 2
    %s102 = scalar_lea.smem [#allocation16], 6
    %103 = sst [smem:[%s102]] 256
    %s104 = scalar_lea.smem [#allocation16], 7
    %105 = sst [smem:[%s104]] 64
    %s106 = scalar_lea.smem [#allocation16], 8
    %107 = sst [smem:[%s106]] 4
    %109 = dma.general %s4, 8192, %s88, [#allocation5], [#allocation15], [#allocation16], %s86, 0
    %s110 = scalar_lea.sflag [#allocation5], 1
    %s112 = sshll.u32 1, 14
    %s113 = sxor.u32 4294967295, %s112
    %s115 = sadd.s32 2, %s79
    %s117 = sshll.u32 7, 26
    %s118 = sxor.u32 4294967295, %s117
    %s119 = sand.u32 0, %s118
    %s120 = sshll.u32 %s115, 26
    %s121 = sor.u32 %s119, %s120
    %s122 = sshll.u32 [#allocation3], 4
    %s123 = int_to_ptr.vmem [resolvable:$true] %s122
    %126 = sst [smem:[#allocation18]] 1024
    %s127 = scalar_lea.smem [#allocation18], 1
    %128 = sst [smem:[%s127]] 1024
    %s129 = scalar_lea.smem [#allocation18], 2
    %130 = sst [smem:[%s129]] 8
    %s131 = scalar_lea.smem [#allocation18], 3
    %132 = sst [smem:[%s131]] 64
    %s133 = scalar_lea.smem [#allocation18], 4
    %134 = sst [smem:[%s133]] 128
    %s135 = scalar_lea.smem [#allocation18], 5
    %136 = sst [smem:[%s135]] 2
    %s137 = scalar_lea.smem [#allocation18], 6
    %138 = sst [smem:[%s137]] 512
    %s139 = scalar_lea.smem [#allocation18], 7
    %140 = sst [smem:[%s139]] 64
    %s141 = scalar_lea.smem [#allocation18], 8
    %142 = sst [smem:[%s141]] 4
    %144 = dma.general %s5, 32768, %s123, %s110, [#allocation17], [#allocation18], %s121, 0
    %s145 = scalar_lea.sflag [#allocation5], 2
    %s147 = sshll.u32 1, 14
    %s148 = sxor.u32 4294967295, %s147
    %s150 = sadd.s32 2, %s79
    %s152 = sshll.u32 7, 26
    %s153 = sxor.u32 4294967295, %s152
    %s154 = sand.u32 0, %s153
    %s155 = sshll.u32 %s150, 26
    %s156 = sor.u32 %s154, %s155
    %s157 = sshll.u32 [#allocation4], 4
    %s158 = int_to_ptr.vmem [resolvable:$true] %s157
    %161 = sst [smem:[#allocation20]] 896
    %s162 = scalar_lea.smem [#allocation20], 1
    %163 = sst [smem:[%s162]] 896
    %s164 = scalar_lea.smem [#allocation20], 2
    %165 = sst [smem:[%s164]] 7
    %s166 = scalar_lea.smem [#allocation20], 3
    %167 = sst [smem:[%s166]] 64
    %s168 = scalar_lea.smem [#allocation20], 4
    %169 = sst [smem:[%s168]] 128
    %s170 = scalar_lea.smem [#allocation20], 5
    %171 = sst [smem:[%s170]] 2
    %s172 = scalar_lea.smem [#allocation20], 6
    %173 = sst [smem:[%s172]] 448
    %s174 = scalar_lea.smem [#allocation20], 7
    %175 = sst [smem:[%s174]] 64
    %s176 = scalar_lea.smem [#allocation20], 8
    %177 = sst [smem:[%s176]] 4
    %179 = dma.general %s6, 57344, %s158, %s145, [#allocation19], [#allocation20], %s156, 0
    %v180 = vld [vmem:[#allocation9] sm:$0x1]
    %v181 = vld [vmem:[#allocation9 + $0x1] sm:$0x3]
    %v182 = vld [vmem:[#allocation9 + $0x3] sm:$0x3]
    %v183 = vld [vmem:[#allocation9 + $0x5] sm:$0xf]
    %v184 = vld [vmem:[#allocation9 + $0x9] sm:$0xf]
    %v185 = vld [vmem:[#allocation9 + $0xd] sm:$0xff]
    %v186 = vld [vmem:[#allocation9 + $0x15] sm:$0xff]
    %v187 = vld [vmem:[#allocation9 + $0x1d] sm:$0xff]
    %v188 = vld [vmem:[#allocation6] sm:$0xf]
    %v189 = vld [vmem:[#allocation6 + $0x4] sm:$0xf]
    %v190 = vld [vmem:[#allocation6 + $0x8] sm:$0xf]
    %v191 = vld [vmem:[#allocation6 + $0xc] sm:$0xf]
    %v192 = vld [vmem:[#allocation6 + $0x10] sm:$0xf]
    %v193 = vld [vmem:[#allocation6 + $0x14] sm:$0xf]
    %v194 = vld [vmem:[#allocation6 + $0x18] sm:$0xf]
    %v195 = vld [vmem:[#allocation6 + $0x1c] sm:$0xf]
    %v196 = vld [vmem:[#allocation6 + $0x20] sm:$0xf]
    %v197 = vld [vmem:[#allocation6 + $0x24] sm:$0xf]
    %v198 = vld [vmem:[#allocation6 + $0x28] sm:$0xf]
    %v199 = vld [vmem:[#allocation6 + $0x2c] sm:$0xf]
    %v200 = vld [vmem:[#allocation6 + $0x30] sm:$0xf]
    %v201 = vld [vmem:[#allocation6 + $0x34] sm:$0xf]
    %v202 = vld [vmem:[#allocation6 + $0x38] sm:$0xf]
    %v203 = vld [vmem:[#allocation6 + $0x3c] sm:$0xf]
    %v204 = vld [vmem:[#allocation6 + $0x40] sm:$0xf]
    %v205 = vld [vmem:[#allocation6 + $0x44] sm:$0xf]
    %v206 = vld [vmem:[#allocation6 + $0x48] sm:$0xf]
    %v207 = vld [vmem:[#allocation6 + $0x4c] sm:$0xf]
    %v208 = vld [vmem:[#allocation6 + $0x50] sm:$0xf]
    %v209 = vld [vmem:[#allocation6 + $0x54] sm:$0xf]
    %v210 = vld [vmem:[#allocation6 + $0x58] sm:$0xf]
    %v211 = vld [vmem:[#allocation6 + $0x5c] sm:$0xf]
    %v212 = vld [vmem:[#allocation6 + $0x60] sm:$0xf]
    %v213 = vld [vmem:[#allocation6 + $0x64] sm:$0xf]
    %v214 = vld [vmem:[#allocation6 + $0x68] sm:$0xf]
    %v215 = vld [vmem:[#allocation6 + $0x6c] sm:$0xf]
    %v216 = vld [vmem:[#allocation6 + $0x70] sm:$0xf]
    %v217 = vld [vmem:[#allocation6 + $0x74] sm:$0xf]
    %v218 = vld [vmem:[#allocation6 + $0x78] sm:$0xf]
    %v219 = vld [vmem:[#allocation6 + $0x7c] sm:$0xf]
    %v220 = vld [vmem:[#allocation11] sm:$0xf]
    %v221 = vld [vmem:[#allocation11 + $0x4] sm:$0xf]
    %v222 = vld [vmem:[#allocation11 + $0x8] sm:$0xf]
    %v223 = vld [vmem:[#allocation11 + $0xc] sm:$0xf]
    %v224 = vld [vmem:[#allocation11 + $0x10] sm:$0xf]
    %v225 = vld [vmem:[#allocation11 + $0x14] sm:$0xf]
    %v226 = vld [vmem:[#allocation11 + $0x18] sm:$0xf]
    %v227 = vld [vmem:[#allocation11 + $0x1c] sm:$0xf]
    %v228 = vld [vmem:[#allocation11 + $0x20] sm:$0xf]
    %v229 = vld [vmem:[#allocation11 + $0x24] sm:$0xf]
    %v230 = vld [vmem:[#allocation11 + $0x28] sm:$0xf]
    %v231 = vld [vmem:[#allocation11 + $0x2c] sm:$0xf]
    %v232 = vld [vmem:[#allocation11 + $0x30] sm:$0xf]
    %v233 = vld [vmem:[#allocation11 + $0x34] sm:$0xf]
    %v234 = vld [vmem:[#allocation11 + $0x38] sm:$0xf]
    %v235 = vld [vmem:[#allocation11 + $0x3c] sm:$0xf]
    %v237 = vlaneseq
    %v238 = vshrl.u32 %v237, 7
    %v239 = vsub.s32 0, %v238
    %v240 = vrot.slane %v180, %v239
    %v274 = vunpack.c.l.b16 %v188
    %v275 = vunpack.c.l.b16 %v189
    %v276 = vunpack.c.l.b16 %v190
    %v277 = vunpack.c.l.b16 %v191
    %v278 = vunpack.c.l.b16 %v192
    %v279 = vunpack.c.l.b16 %v193
    %v280 = vunpack.c.l.b16 %v194
    %v281 = vunpack.c.l.b16 %v195
    %v282 = vunpack.c.l.b16 %v196
    %v283 = vunpack.c.l.b16 %v197
    %v284 = vunpack.c.l.b16 %v198
    %v285 = vunpack.c.l.b16 %v199
    %v286 = vunpack.c.l.b16 %v200
    %v287 = vunpack.c.l.b16 %v201
    %v288 = vunpack.c.l.b16 %v202
    %v289 = vunpack.c.l.b16 %v203
    %v290 = vunpack.c.l.b16 %v204
    %v291 = vunpack.c.l.b16 %v205
    %v292 = vunpack.c.l.b16 %v206
    %v293 = vunpack.c.l.b16 %v207
    %v294 = vunpack.c.l.b16 %v208
    %v295 = vunpack.c.l.b16 %v209
    %v296 = vunpack.c.l.b16 %v210
    %v297 = vunpack.c.l.b16 %v211
    %v298 = vunpack.c.l.b16 %v212
    %v299 = vunpack.c.l.b16 %v213
    %v300 = vunpack.c.l.b16 %v214
    %v301 = vunpack.c.l.b16 %v215
    %v302 = vunpack.c.l.b16 %v216
    %v303 = vunpack.c.l.b16 %v217
    %v304 = vunpack.c.l.b16 %v218
    %v305 = vunpack.c.l.b16 %v219
    %v306 = vpack.c.b16 %v275, %v274
    %v307 = vpack.c.b16 %v277, %v276
    %v308 = vpack.c.b16 %v279, %v278
    %v309 = vpack.c.b16 %v281, %v280
    %v310 = vpack.c.b16 %v283, %v282
    %v311 = vpack.c.b16 %v285, %v284
    %v312 = vpack.c.b16 %v287, %v286
    %v313 = vpack.c.b16 %v289, %v288
    %v314 = vpack.c.b16 %v291, %v290
    %v315 = vpack.c.b16 %v293, %v292
    %v316 = vpack.c.b16 %v295, %v294
    %v317 = vpack.c.b16 %v297, %v296
    %v318 = vpack.c.b16 %v299, %v298
    %v319 = vpack.c.b16 %v301, %v300
    %v320 = vpack.c.b16 %v303, %v302
    %v321 = vpack.c.b16 %v305, %v304
    %v354 = vunpack.c.l.b16 %v220
    %v355 = vunpack.c.l.b16 %v221
    %v356 = vunpack.c.l.b16 %v222
    %v357 = vunpack.c.l.b16 %v223
    %v358 = vunpack.c.l.b16 %v224
    %v359 = vunpack.c.l.b16 %v225
    %v360 = vunpack.c.l.b16 %v226
    %v361 = vunpack.c.l.b16 %v227
    %v362 = vunpack.c.l.b16 %v228
    %v363 = vunpack.c.l.b16 %v229
    %v364 = vunpack.c.l.b16 %v230
    %v365 = vunpack.c.l.b16 %v231
    %v366 = vunpack.c.l.b16 %v232
    %v367 = vunpack.c.l.b16 %v233
    %v368 = vunpack.c.l.b16 %v234
    %v369 = vunpack.c.l.b16 %v235
    %v370 = vpack.c.b16 %v355, %v354
    %v371 = vpack.c.b16 %v357, %v356
    %v372 = vpack.c.b16 %v359, %v358
    %v373 = vpack.c.b16 %v361, %v360
    %v374 = vpack.c.b16 %v363, %v362
    %v375 = vpack.c.b16 %v365, %v364
    %v376 = vpack.c.b16 %v367, %v366
    %v377 = vpack.c.b16 %v369, %v368
    %386 = vmatprep.subr.bf16.mxu0 0
    %387 = vmatpush1.bf16.msra.mxu0 %v370
    %388 = vmatprep.subr.bf16.mxu0 0
    %389 = vmatpush1.bf16.msra.mxu0 %v371
    %390 = vmatprep.subr.bf16.mxu0 0
    %391 = vmatpush1.bf16.msra.mxu0 %v372
    %392 = vmatprep.subr.bf16.mxu0 0
    %393 = vmatpush1.bf16.msra.mxu0 %v373
    %394 = vmatprep.subr.bf16.mxu0 0
    %395 = vmatpush1.bf16.msra.mxu0 %v374
    %396 = vmatprep.subr.bf16.mxu0 0
    %397 = vmatpush1.bf16.msra.mxu0 %v375
    %398 = vmatprep.subr.bf16.mxu0 0
    %399 = vmatpush1.bf16.msra.mxu0 %v376
    %400 = vmatprep.subr.bf16.mxu0 0
    %401 = vmatpush1.bf16.msra.mxu0 %v377
    %402 = vmatprep.subr.bf16.mxu0 0
    %403 = vmatpush1.bf16.msra.mxu0 0
    %404 = vmatprep.subr.bf16.mxu0 0
    %405 = vmatpush1.bf16.msra.mxu0 0
    %406 = vmatprep.subr.bf16.mxu0 0
    %407 = vmatpush1.bf16.msra.mxu0 0
    %408 = vmatprep.subr.bf16.mxu0 0
    %409 = vmatpush1.bf16.msra.mxu0 0
    %410 = vmatprep.subr.bf16.mxu0 0
    %411 = vmatpush1.bf16.msra.mxu0 0
    %412 = vmatprep.subr.bf16.mxu0 0
    %413 = vmatpush1.bf16.msra.mxu0 0
    %414 = vmatprep.subr.bf16.mxu0 0
    %415 = vmatpush1.bf16.msra.mxu0 0
    %416 = vmatprep.subr.bf16.mxu0 0
    %417 = vmatpush1.bf16.msra.mxu0 0
    %418 = vmatprep.mubr.bf16.mxu0 0
    %419 = vmatmul.mubr.bf16.gmra.mrb[0].mxu0 %v306
    %v420 = vpop.f32.mrb[0].mxu0
    %v421 = vadd.f32 %v240, %v420
    %v422 = vpop.f32.mrb[0].mxu0
    %v423 = vpop.f32.mrb[0].mxu0
    %v424 = vadd.f32 %v240, %v423
    %v425 = vpop.f32.mrb[0].mxu0
    %426 = vmatprep.mubr.bf16.mxu0 0
    %427 = vmatmul.mubr.bf16.gmra.mrb[0].mxu0 %v307
    %v428 = vpop.f32.mrb[0].mxu0
    %v429 = vadd.f32 %v240, %v428
    %v430 = vpop.f32.mrb[0].mxu0
    %v431 = vpop.f32.mrb[0].mxu0
    %v432 = vadd.f32 %v240, %v431
    %v433 = vpop.f32.mrb[0].mxu0
    %434 = vmatprep.mubr.bf16.mxu0 0
    %435 = vmatmul.mubr.bf16.gmra.mrb[0].mxu0 %v308
    %v436 = vpop.f32.mrb[0].mxu0
    %v437 = vadd.f32 %v240, %v436
    %v438 = vpop.f32.mrb[0].mxu0
    %v439 = vpop.f32.mrb[0].mxu0
    %v440 = vadd.f32 %v240, %v439
    %v441 = vpop.f32.mrb[0].mxu0
    %442 = vmatprep.mubr.bf16.mxu0 0
    %443 = vmatmul.mubr.bf16.gmra.mrb[0].mxu0 %v309
    %v444 = vpop.f32.mrb[0].mxu0
    %v445 = vadd.f32 %v240, %v444
    %v446 = vpop.f32.mrb[0].mxu0
    %v447 = vpop.f32.mrb[0].mxu0
    %v448 = vadd.f32 %v240, %v447
    %v449 = vpop.f32.mrb[0].mxu0
    %450 = vmatprep.mubr.bf16.mxu0 0
    %451 = vmatmul.mubr.bf16.gmra.mrb[0].mxu0 %v310
    %v452 = vpop.f32.mrb[0].mxu0
    %v453 = vadd.f32 %v240, %v452
    %v454 = vpop.f32.mrb[0].mxu0
    %v455 = vpop.f32.mrb[0].mxu0
    %v456 = vadd.f32 %v240, %v455
    %v457 = vpop.f32.mrb[0].mxu0
    %458 = vmatprep.mubr.bf16.mxu0 0
    %459 = vmatmul.mubr.bf16.gmra.mrb[0].mxu0 %v311
    %v460 = vpop.f32.mrb[0].mxu0
    %v461 = vadd.f32 %v240, %v460
    %v462 = vpop.f32.mrb[0].mxu0
    %v463 = vpop.f32.mrb[0].mxu0
    %v464 = vadd.f32 %v240, %v463
    %v465 = vpop.f32.mrb[0].mxu0
    %466 = vmatprep.mubr.bf16.mxu0 0
    %467 = vmatmul.mubr.bf16.gmra.mrb[0].mxu0 %v312
    %v468 = vpop.f32.mrb[0].mxu0
    %v469 = vadd.f32 %v240, %v468
    %v470 = vpop.f32.mrb[0].mxu0
    %v471 = vpop.f32.mrb[0].mxu0
    %v472 = vadd.f32 %v240, %v471
    %v473 = vpop.f32.mrb[0].mxu0
    %474 = vmatprep.mubr.bf16.mxu0 0
    %475 = vmatmul.mubr.bf16.gmra.mrb[0].mxu0 %v313
    %v476 = vpop.f32.mrb[0].mxu0
    %v477 = vadd.f32 %v240, %v476
    %v478 = vpop.f32.mrb[0].mxu0
    %v479 = vpop.f32.mrb[0].mxu0
    %v480 = vadd.f32 %v240, %v479
    %v481 = vpop.f32.mrb[0].mxu0
    %482 = vmatprep.mubr.bf16.mxu0 0
    %483 = vmatmul.mubr.bf16.gmra.mrb[0].mxu0 %v314
    %v484 = vpop.f32.mrb[0].mxu0
    %v485 = vadd.f32 %v240, %v484
    %v486 = vpop.f32.mrb[0].mxu0
    %v487 = vpop.f32.mrb[0].mxu0
    %v488 = vadd.f32 %v240, %v487
    %v489 = vpop.f32.mrb[0].mxu0
    %490 = vmatprep.mubr.bf16.mxu0 0
    %491 = vmatmul.mubr.bf16.gmra.mrb[0].mxu0 %v315
    %v492 = vpop.f32.mrb[0].mxu0
    %v493 = vadd.f32 %v240, %v492
    %v494 = vpop.f32.mrb[0].mxu0
    %v495 = vpop.f32.mrb[0].mxu0
    %v496 = vadd.f32 %v240, %v495
    %v497 = vpop.f32.mrb[0].mxu0
    %498 = vmatprep.mubr.bf16.mxu0 0
    %499 = vmatmul.mubr.bf16.gmra.mrb[0].mxu0 %v316
    %v500 = vpop.f32.mrb[0].mxu0
    %v501 = vadd.f32 %v240, %v500
    %v502 = vpop.f32.mrb[0].mxu0
    %v503 = vpop.f32.mrb[0].mxu0
    %v504 = vadd.f32 %v240, %v503
    %v505 = vpop.f32.mrb[0].mxu0
    %506 = vmatprep.mubr.bf16.mxu0 0
    %507 = vmatmul.mubr.bf16.gmra.mrb[0].mxu0 %v317
    %v508 = vpop.f32.mrb[0].mxu0
    %v509 = vadd.f32 %v240, %v508
    %v510 = vpop.f32.mrb[0].mxu0
    %v511 = vpop.f32.mrb[0].mxu0
    %v512 = vadd.f32 %v240, %v511
    %v513 = vpop.f32.mrb[0].mxu0
    %514 = vmatprep.mubr.bf16.mxu0 0
    %515 = vmatmul.mubr.bf16.gmra.mrb[0].mxu0 %v318
    %v516 = vpop.f32.mrb[0].mxu0
    %v517 = vadd.f32 %v240, %v516
    %v518 = vpop.f32.mrb[0].mxu0
    %v519 = vpop.f32.mrb[0].mxu0
    %v520 = vadd.f32 %v240, %v519
    %v521 = vpop.f32.mrb[0].mxu0
    %522 = vmatprep.mubr.bf16.mxu0 0
    %523 = vmatmul.mubr.bf16.gmra.mrb[0].mxu0 %v319
    %v524 = vpop.f32.mrb[0].mxu0
    %v525 = vadd.f32 %v240, %v524
    %v526 = vpop.f32.mrb[0].mxu0
    %v527 = vpop.f32.mrb[0].mxu0
    %v528 = vadd.f32 %v240, %v527
    %v529 = vpop.f32.mrb[0].mxu0
    %530 = vmatprep.mubr.bf16.mxu0 0
    %531 = vmatmul.mubr.bf16.gmra.mrb[0].mxu0 %v320
    %v532 = vpop.f32.mrb[0].mxu0
    %v533 = vadd.f32 %v240, %v532
    %v534 = vpop.f32.mrb[0].mxu0
    %v535 = vpop.f32.mrb[0].mxu0
    %v536 = vadd.f32 %v240, %v535
    %v537 = vpop.f32.mrb[0].mxu0
    %538 = vmatprep.mubr.bf16.mxu0 0
    %539 = vmatmul.mubr.bf16.gmra.mrb[0].mxu0 %v321
    %v540 = vpop.f32.mrb[0].mxu0
    %v541 = vadd.f32 %v240, %v540
    %v542 = vpop.f32.mrb[0].mxu0
    %v543 = vpop.f32.mrb[0].mxu0
    %v544 = vadd.f32 %v240, %v543
    %v545 = vpop.f32.mrb[0].mxu0
    %546 = vdwg.mxu0
    %vm547 = vcmp.gt.f32.partialorder %v421, 0.0
    %vm548 = vcmp.gt.f32.partialorder %v424, 0.0
    %vm549 = vcmp.gt.f32.partialorder %v429, 0.0
    %vm550 = vcmp.gt.f32.partialorder %v432, 0.0
    %vm551 = vcmp.gt.f32.partialorder %v437, 0.0
    %vm552 = vcmp.gt.f32.partialorder %v440, 0.0
    %vm553 = vcmp.gt.f32.partialorder %v445, 0.0
    %vm554 = vcmp.gt.f32.partialorder %v448, 0.0
    %vm555 = vcmp.gt.f32.partialorder %v453, 0.0
    %vm556 = vcmp.gt.f32.partialorder %v456, 0.0
    %vm557 = vcmp.gt.f32.partialorder %v461, 0.0
    %vm558 = vcmp.gt.f32.partialorder %v464, 0.0
    %vm559 = vcmp.gt.f32.partialorder %v469, 0.0
    %vm560 = vcmp.gt.f32.partialorder %v472, 0.0
    %vm561 = vcmp.gt.f32.partialorder %v477, 0.0
    %vm562 = vcmp.gt.f32.partialorder %v480, 0.0
    %vm563 = vcmp.gt.f32.partialorder %v485, 0.0
    %vm564 = vcmp.gt.f32.partialorder %v488, 0.0
    %vm565 = vcmp.gt.f32.partialorder %v493, 0.0
    %vm566 = vcmp.gt.f32.partialorder %v496, 0.0
    %vm567 = vcmp.gt.f32.partialorder %v501, 0.0
    %vm568 = vcmp.gt.f32.partialorder %v504, 0.0
    %vm569 = vcmp.gt.f32.partialorder %v509, 0.0
    %vm570 = vcmp.gt.f32.partialorder %v512, 0.0
    %vm571 = vcmp.gt.f32.partialorder %v517, 0.0
    %vm572 = vcmp.gt.f32.partialorder %v520, 0.0
    %vm573 = vcmp.gt.f32.partialorder %v525, 0.0
    %vm574 = vcmp.gt.f32.partialorder %v528, 0.0
    %vm575 = vcmp.gt.f32.partialorder %v533, 0.0
    %vm576 = vcmp.gt.f32.partialorder %v536, 0.0
    %vm577 = vcmp.gt.f32.partialorder %v541, 0.0
    %vm578 = vcmp.gt.f32.partialorder %v544, 0.0
    %v579 = vmul.f32 %v421, 0.2
    %v580 = vmul.f32 %v424, 0.2
    %v581 = vmul.f32 %v429, 0.2
    %v582 = vmul.f32 %v432, 0.2
    %v583 = vmul.f32 %v437, 0.2
    %v584 = vmul.f32 %v440, 0.2
    %v585 = vmul.f32 %v445, 0.2
    %v586 = vmul.f32 %v448, 0.2
    %v587 = vmul.f32 %v453, 0.2
    %v588 = vmul.f32 %v456, 0.2
    %v589 = vmul.f32 %v461, 0.2
    %v590 = vmul.f32 %v464, 0.2
    %v591 = vmul.f32 %v469, 0.2
    %v592 = vmul.f32 %v472, 0.2
    %v593 = vmul.f32 %v477, 0.2
    %v594 = vmul.f32 %v480, 0.2
    %v595 = vmul.f32 %v485, 0.2
    %v596 = vmul.f32 %v488, 0.2
    %v597 = vmul.f32 %v493, 0.2
    %v598 = vmul.f32 %v496, 0.2
    %v599 = vmul.f32 %v501, 0.2
    %v600 = vmul.f32 %v504, 0.2
    %v601 = vmul.f32 %v509, 0.2
    %v602 = vmul.f32 %v512, 0.2
    %v603 = vmul.f32 %v517, 0.2
    %v604 = vmul.f32 %v520, 0.2
    %v605 = vmul.f32 %v525, 0.2
    %v606 = vmul.f32 %v528, 0.2
    %v607 = vmul.f32 %v533, 0.2
    %v608 = vmul.f32 %v536, 0.2
    %v609 = vmul.f32 %v541, 0.2
    %v610 = vmul.f32 %v544, 0.2
    %v611 = vsel %vm547, %v421, %v579
    %v612 = vsel %vm548, %v424, %v580
    %v613 = vsel %vm549, %v429, %v581
    %v614 = vsel %vm550, %v432, %v582
    %v615 = vsel %vm551, %v437, %v583
    %v616 = vsel %vm552, %v440, %v584
    %v617 = vsel %vm553, %v445, %v585
    %v618 = vsel %vm554, %v448, %v586
    %v619 = vsel %vm555, %v453, %v587
    %v620 = vsel %vm556, %v456, %v588
    %v621 = vsel %vm557, %v461, %v589
    %v622 = vsel %vm558, %v464, %v590
    %v623 = vsel %vm559, %v469, %v591
    %v624 = vsel %vm560, %v472, %v592
    %v625 = vsel %vm561, %v477, %v593
    %v626 = vsel %vm562, %v480, %v594
    %v627 = vsel %vm563, %v485, %v595
    %v628 = vsel %vm564, %v488, %v596
    %v629 = vsel %vm565, %v493, %v597
    %v630 = vsel %vm566, %v496, %v598
    %v631 = vsel %vm567, %v501, %v599
    %v632 = vsel %vm568, %v504, %v600
    %v633 = vsel %vm569, %v509, %v601
    %v634 = vsel %vm570, %v512, %v602
    %v635 = vsel %vm571, %v517, %v603
    %v636 = vsel %vm572, %v520, %v604
    %v637 = vsel %vm573, %v525, %v605
    %v638 = vsel %vm574, %v528, %v606
    %v639 = vsel %vm575, %v533, %v607
    %v640 = vsel %vm576, %v536, %v608
    %v641 = vsel %vm577, %v541, %v609
    %v642 = vsel %vm578, %v544, %v610
    %v643 = vpack.c.bf16 %v612, %v611
    %v644 = vpack.c.bf16 %v614, %v613
    %v645 = vpack.c.bf16 %v616, %v615
    %v646 = vpack.c.bf16 %v618, %v617
    %v647 = vpack.c.bf16 %v620, %v619
    %v648 = vpack.c.bf16 %v622, %v621
    %v649 = vpack.c.bf16 %v624, %v623
    %v650 = vpack.c.bf16 %v626, %v625
    %v651 = vpack.c.bf16 %v628, %v627
    %v652 = vpack.c.bf16 %v630, %v629
    %v653 = vpack.c.bf16 %v632, %v631
    %v654 = vpack.c.bf16 %v634, %v633
    %v655 = vpack.c.bf16 %v636, %v635
    %v656 = vpack.c.bf16 %v638, %v637
    %v657 = vpack.c.bf16 %v640, %v639
    %v658 = vpack.c.bf16 %v642, %v641
    %v659 = vld [vmem:[#allocation12] sm:$0xff]
    %v660 = vld [vmem:[#allocation12 + $0x8] sm:$0xff]
    %v661 = vld [vmem:[#allocation12 + $0x10] sm:$0xff]
    %v662 = vld [vmem:[#allocation12 + $0x18] sm:$0xff]
    %v663 = vld [vmem:[#allocation12 + $0x20] sm:$0xff]
    %v664 = vld [vmem:[#allocation12 + $0x28] sm:$0xff]
    %v665 = vld [vmem:[#allocation12 + $0x30] sm:$0xff]
    %v666 = vld [vmem:[#allocation12 + $0x38] sm:$0xff]
    %v667 = vld [vmem:[#allocation12 + $0x40] sm:$0xff]
    %v668 = vld [vmem:[#allocation12 + $0x48] sm:$0xff]
    %v669 = vld [vmem:[#allocation12 + $0x50] sm:$0xff]
    %v670 = vld [vmem:[#allocation12 + $0x58] sm:$0xff]
    %v671 = vld [vmem:[#allocation12 + $0x60] sm:$0xff]
    %v672 = vld [vmem:[#allocation12 + $0x68] sm:$0xff]
    %v673 = vld [vmem:[#allocation12 + $0x70] sm:$0xff]
    %v674 = vld [vmem:[#allocation12 + $0x78] sm:$0xff]
    %v691 = vunpack.c.l.b16 %v659
    %v692 = vunpack.c.h.b16 %v659
    %v693 = vunpack.c.l.b16 %v660
    %v694 = vunpack.c.h.b16 %v660
    %v695 = vunpack.c.l.b16 %v661
    %v696 = vunpack.c.h.b16 %v661
    %v697 = vunpack.c.l.b16 %v662
    %v698 = vunpack.c.h.b16 %v662
    %v699 = vunpack.c.l.b16 %v663
    %v700 = vunpack.c.h.b16 %v663
    %v701 = vunpack.c.l.b16 %v664
    %v702 = vunpack.c.h.b16 %v664
    %v703 = vunpack.c.l.b16 %v665
    %v704 = vunpack.c.h.b16 %v665
    %v705 = vunpack.c.l.b16 %v666
    %v706 = vunpack.c.h.b16 %v666
    %v707 = vunpack.c.l.b16 %v667
    %v708 = vunpack.c.h.b16 %v667
    %v709 = vunpack.c.l.b16 %v668
    %v710 = vunpack.c.h.b16 %v668
    %v711 = vunpack.c.l.b16 %v669
    %v712 = vunpack.c.h.b16 %v669
    %v713 = vunpack.c.l.b16 %v670
    %v714 = vunpack.c.h.b16 %v670
    %v715 = vunpack.c.l.b16 %v671
    %v716 = vunpack.c.h.b16 %v671
    %v717 = vunpack.c.l.b16 %v672
    %v718 = vunpack.c.h.b16 %v672
    %v719 = vunpack.c.l.b16 %v673
    %v720 = vunpack.c.h.b16 %v673
    %v721 = vunpack.c.l.b16 %v674
    %v722 = vunpack.c.h.b16 %v674
    %v723 = vpack.c.b16 %v693, %v691
    %v724 = vpack.c.b16 %v694, %v692
    %v725 = vpack.c.b16 %v697, %v695
    %v726 = vpack.c.b16 %v698, %v696
    %v727 = vpack.c.b16 %v701, %v699
    %v728 = vpack.c.b16 %v702, %v700
    %v729 = vpack.c.b16 %v705, %v703
    %v730 = vpack.c.b16 %v706, %v704
    %v731 = vpack.c.b16 %v709, %v707
    %v732 = vpack.c.b16 %v710, %v708
    %v733 = vpack.c.b16 %v713, %v711
    %v734 = vpack.c.b16 %v714, %v712
    %v735 = vpack.c.b16 %v717, %v715
    %v736 = vpack.c.b16 %v718, %v716
    %v737 = vpack.c.b16 %v721, %v719
    %v738 = vpack.c.b16 %v722, %v720
    %755 = vmatprep.subr.bf16.mxu0 %v724
    %756 = vmatpush1.bf16.msra.mxu0 %v723
    %757 = vmatprep.subr.bf16.mxu0 %v726
    %758 = vmatpush1.bf16.msra.mxu0 %v725
    %759 = vmatprep.subr.bf16.mxu0 %v728
    %760 = vmatpush1.bf16.msra.mxu0 %v727
    %761 = vmatprep.subr.bf16.mxu0 %v730
    %762 = vmatpush1.bf16.msra.mxu0 %v729
    %763 = vmatprep.subr.bf16.mxu0 %v732
    %764 = vmatpush1.bf16.msra.mxu0 %v731
    %765 = vmatprep.subr.bf16.mxu0 %v734
    %766 = vmatpush1.bf16.msra.mxu0 %v733
    %767 = vmatprep.subr.bf16.mxu0 %v736
    %768 = vmatpush1.bf16.msra.mxu0 %v735
    %769 = vmatprep.subr.bf16.mxu0 %v738
    %770 = vmatpush1.bf16.msra.mxu0 %v737
    %771 = vmatprep.subr.bf16.mxu0 0
    %772 = vmatpush1.bf16.msra.mxu0 0
    %773 = vmatprep.subr.bf16.mxu0 0
    %774 = vmatpush1.bf16.msra.mxu0 0
    %775 = vmatprep.subr.bf16.mxu0 0
    %776 = vmatpush1.bf16.msra.mxu0 0
    %777 = vmatprep.subr.bf16.mxu0 0
    %778 = vmatpush1.bf16.msra.mxu0 0
    %779 = vmatprep.subr.bf16.mxu0 0
    %780 = vmatpush1.bf16.msra.mxu0 0
    %781 = vmatprep.subr.bf16.mxu0 0
    %782 = vmatpush1.bf16.msra.mxu0 0
    %783 = vmatprep.subr.bf16.mxu0 0
    %784 = vmatpush1.bf16.msra.mxu0 0
    %785 = vmatprep.subr.bf16.mxu0 0
    %786 = vmatpush1.bf16.msra.mxu0 0
    %787 = vmatprep.mubr.bf16.mxu0 0
    %788 = vmatmul.mubr.bf16.gmra.mrb[0].mxu0 %v643
    %v789 = vpop.f32.mrb[0].mxu0
    %v790 = vadd.f32 0.0, %v789
    %v791 = vpop.f32.mrb[0].mxu0
    %v792 = vadd.f32 0.0, %v791
    %v793 = vpop.f32.mrb[0].mxu0
    %v794 = vadd.f32 0.0, %v793
    %v795 = vpop.f32.mrb[0].mxu0
    %v796 = vadd.f32 0.0, %v795
    %797 = vmatprep.mubr.bf16.mxu0 0
    %798 = vmatmul.mubr.bf16.gmra.mrb[0].mxu0 %v644
    %v799 = vpop.f32.mrb[0].mxu0
    %v800 = vadd.f32 0.0, %v799
    %v801 = vpop.f32.mrb[0].mxu0
    %v802 = vadd.f32 0.0, %v801
    %v803 = vpop.f32.mrb[0].mxu0
    %v804 = vadd.f32 0.0, %v803
    %v805 = vpop.f32.mrb[0].mxu0
    %v806 = vadd.f32 0.0, %v805
    %807 = vmatprep.mubr.bf16.mxu0 0
    %808 = vmatmul.mubr.bf16.gmra.mrb[0].mxu0 %v645
    %v809 = vpop.f32.mrb[0].mxu0
    %v810 = vadd.f32 0.0, %v809
    %v811 = vpop.f32.mrb[0].mxu0
    %v812 = vadd.f32 0.0, %v811
    %v813 = vpop.f32.mrb[0].mxu0
    %v814 = vadd.f32 0.0, %v813
    %v815 = vpop.f32.mrb[0].mxu0
    %v816 = vadd.f32 0.0, %v815
    %817 = vmatprep.mubr.bf16.mxu0 0
    %818 = vmatmul.mubr.bf16.gmra.mrb[0].mxu0 %v646
    %v819 = vpop.f32.mrb[0].mxu0
    %v820 = vadd.f32 0.0, %v819
    %v821 = vpop.f32.mrb[0].mxu0
    %v822 = vadd.f32 0.0, %v821
    %v823 = vpop.f32.mrb[0].mxu0
    %v824 = vadd.f32 0.0, %v823
    %v825 = vpop.f32.mrb[0].mxu0
    %v826 = vadd.f32 0.0, %v825
    %827 = vmatprep.mubr.bf16.mxu0 0
    %828 = vmatmul.mubr.bf16.gmra.mrb[0].mxu0 %v647
    %v829 = vpop.f32.mrb[0].mxu0
    %v830 = vadd.f32 0.0, %v829
    %v831 = vpop.f32.mrb[0].mxu0
    %v832 = vadd.f32 0.0, %v831
    %v833 = vpop.f32.mrb[0].mxu0
    %v834 = vadd.f32 0.0, %v833
    %v835 = vpop.f32.mrb[0].mxu0
    %v836 = vadd.f32 0.0, %v835
    %837 = vmatprep.mubr.bf16.mxu0 0
    %838 = vmatmul.mubr.bf16.gmra.mrb[0].mxu0 %v648
    %v839 = vpop.f32.mrb[0].mxu0
    %v840 = vadd.f32 0.0, %v839
    %v841 = vpop.f32.mrb[0].mxu0
    %v842 = vadd.f32 0.0, %v841
    %v843 = vpop.f32.mrb[0].mxu0
    %v844 = vadd.f32 0.0, %v843
    %v845 = vpop.f32.mrb[0].mxu0
    %v846 = vadd.f32 0.0, %v845
    %847 = vmatprep.mubr.bf16.mxu0 0
    %848 = vmatmul.mubr.bf16.gmra.mrb[0].mxu0 %v649
    %v849 = vpop.f32.mrb[0].mxu0
    %v850 = vadd.f32 0.0, %v849
    %v851 = vpop.f32.mrb[0].mxu0
    %v852 = vadd.f32 0.0, %v851
    %v853 = vpop.f32.mrb[0].mxu0
    %v854 = vadd.f32 0.0, %v853
    %v855 = vpop.f32.mrb[0].mxu0
    %v856 = vadd.f32 0.0, %v855
    %857 = vmatprep.mubr.bf16.mxu0 0
    %858 = vmatmul.mubr.bf16.gmra.mrb[0].mxu0 %v650
    %v859 = vpop.f32.mrb[0].mxu0
    %v860 = vadd.f32 0.0, %v859
    %v861 = vpop.f32.mrb[0].mxu0
    %v862 = vadd.f32 0.0, %v861
    %v863 = vpop.f32.mrb[0].mxu0
    %v864 = vadd.f32 0.0, %v863
    %v865 = vpop.f32.mrb[0].mxu0
    %v866 = vadd.f32 0.0, %v865
    %867 = vmatprep.mubr.bf16.mxu0 0
    %868 = vmatmul.mubr.bf16.gmra.mrb[0].mxu0 %v651
    %v869 = vpop.f32.mrb[0].mxu0
    %v870 = vadd.f32 0.0, %v869
    %v871 = vpop.f32.mrb[0].mxu0
    %v872 = vadd.f32 0.0, %v871
    %v873 = vpop.f32.mrb[0].mxu0
    %v874 = vadd.f32 0.0, %v873
    %v875 = vpop.f32.mrb[0].mxu0
    %v876 = vadd.f32 0.0, %v875
    %877 = vmatprep.mubr.bf16.mxu0 0
    %878 = vmatmul.mubr.bf16.gmra.mrb[0].mxu0 %v652
    %v879 = vpop.f32.mrb[0].mxu0
    %v880 = vadd.f32 0.0, %v879
    %v881 = vpop.f32.mrb[0].mxu0
    %v882 = vadd.f32 0.0, %v881
    %v883 = vpop.f32.mrb[0].mxu0
    %v884 = vadd.f32 0.0, %v883
    %v885 = vpop.f32.mrb[0].mxu0
    %v886 = vadd.f32 0.0, %v885
    %887 = vmatprep.mubr.bf16.mxu0 0
    %888 = vmatmul.mubr.bf16.gmra.mrb[0].mxu0 %v653
    %v889 = vpop.f32.mrb[0].mxu0
    %v890 = vadd.f32 0.0, %v889
    %v891 = vpop.f32.mrb[0].mxu0
    %v892 = vadd.f32 0.0, %v891
    %v893 = vpop.f32.mrb[0].mxu0
    %v894 = vadd.f32 0.0, %v893
    %v895 = vpop.f32.mrb[0].mxu0
    %v896 = vadd.f32 0.0, %v895
    %897 = vmatprep.mubr.bf16.mxu0 0
    %898 = vmatmul.mubr.bf16.gmra.mrb[0].mxu0 %v654
    %v899 = vpop.f32.mrb[0].mxu0
    %v900 = vadd.f32 0.0, %v899
    %v901 = vpop.f32.mrb[0].mxu0
    %v902 = vadd.f32 0.0, %v901
    %v903 = vpop.f32.mrb[0].mxu0
    %v904 = vadd.f32 0.0, %v903
    %v905 = vpop.f32.mrb[0].mxu0
    %v906 = vadd.f32 0.0, %v905
    %907 = vmatprep.mubr.bf16.mxu0 0
    %908 = vmatmul.mubr.bf16.gmra.mrb[0].mxu0 %v655
    %v909 = vpop.f32.mrb[0].mxu0
    %v910 = vadd.f32 0.0, %v909
    %v911 = vpop.f32.mrb[0].mxu0
    %v912 = vadd.f32 0.0, %v911
    %v913 = vpop.f32.mrb[0].mxu0
    %v914 = vadd.f32 0.0, %v913
    %v915 = vpop.f32.mrb[0].mxu0
    %v916 = vadd.f32 0.0, %v915
    %917 = vmatprep.mubr.bf16.mxu0 0
    %918 = vmatmul.mubr.bf16.gmra.mrb[0].mxu0 %v656
    %v919 = vpop.f32.mrb[0].mxu0
    %v920 = vadd.f32 0.0, %v919
    %v921 = vpop.f32.mrb[0].mxu0
    %v922 = vadd.f32 0.0, %v921
    %v923 = vpop.f32.mrb[0].mxu0
    %v924 = vadd.f32 0.0, %v923
    %v925 = vpop.f32.mrb[0].mxu0
    %v926 = vadd.f32 0.0, %v925
    %927 = vmatprep.mubr.bf16.mxu0 0
    %928 = vmatmul.mubr.bf16.gmra.mrb[0].mxu0 %v657
    %v929 = vpop.f32.mrb[0].mxu0
    %v930 = vadd.f32 0.0, %v929
    %v931 = vpop.f32.mrb[0].mxu0
    %v932 = vadd.f32 0.0, %v931
    %v933 = vpop.f32.mrb[0].mxu0
    %v934 = vadd.f32 0.0, %v933
    %v935 = vpop.f32.mrb[0].mxu0
    %v936 = vadd.f32 0.0, %v935
    %937 = vmatprep.mubr.bf16.mxu0 0
    %938 = vmatmul.mubr.bf16.gmra.mrb[0].mxu0 %v658
    %v939 = vpop.f32.mrb[0].mxu0
    %v940 = vadd.f32 0.0, %v939
    %v941 = vpop.f32.mrb[0].mxu0
    %v942 = vadd.f32 0.0, %v941
    %v943 = vpop.f32.mrb[0].mxu0
    %v944 = vadd.f32 0.0, %v943
    %v945 = vpop.f32.mrb[0].mxu0
    %v946 = vadd.f32 0.0, %v945
    %947 = vdwg.mxu0
    %v948 = vadd.f32 %v790, %v794
    %v949 = vadd.f32 %v948, %v800
    %v950 = vadd.f32 %v949, %v804
    %v951 = vadd.f32 %v950, %v810
    %v952 = vadd.f32 %v951, %v814
    %v953 = vadd.f32 %v952, %v820
    %v954 = vadd.f32 %v953, %v824
    %v955 = vadd.f32 %v954, %v830
    %v956 = vadd.f32 %v955, %v834
    %v957 = vadd.f32 %v956, %v840
    %v958 = vadd.f32 %v957, %v844
    %v959 = vadd.f32 %v958, %v850
    %v960 = vadd.f32 %v959, %v854
    %v961 = vadd.f32 %v960, %v860
    %v962 = vadd.f32 %v961, %v864
    %v963 = vadd.f32 %v962, %v870
    %v964 = vadd.f32 %v963, %v874
    %v965 = vadd.f32 %v964, %v880
    %v966 = vadd.f32 %v965, %v884
    %v967 = vadd.f32 %v966, %v890
    %v968 = vadd.f32 %v967, %v894
    %v969 = vadd.f32 %v968, %v900
    %v970 = vadd.f32 %v969, %v904
    %v971 = vadd.f32 %v970, %v910
    %v972 = vadd.f32 %v971, %v914
    %v973 = vadd.f32 %v972, %v920
    %v974 = vadd.f32 %v973, %v924
    %v975 = vadd.f32 %v974, %v930
    %v976 = vadd.f32 %v975, %v934
    %v977 = vadd.f32 %v976, %v940
    %v978 = vadd.f32 %v977, %v944
    %v979 = vrot.slane %v978, 4
    %v980 = vadd.f32 %v978, %v979
    %v981 = vrot.slane %v980, 2
    %v982 = vadd.f32 %v980, %v981
    %v983 = vrot.slane %v982, 1
    %v984 = vadd.f32 %v982, %v983
    %v985 = vadd.f32 %v792, %v796
    %v986 = vadd.f32 %v985, %v802
    %v987 = vadd.f32 %v986, %v806
    %v988 = vadd.f32 %v987, %v812
    %v989 = vadd.f32 %v988, %v816
    %v990 = vadd.f32 %v989, %v822
    %v991 = vadd.f32 %v990, %v826
    %v992 = vadd.f32 %v991, %v832
    %v993 = vadd.f32 %v992, %v836
    %v994 = vadd.f32 %v993, %v842
    %v995 = vadd.f32 %v994, %v846
    %v996 = vadd.f32 %v995, %v852
    %v997 = vadd.f32 %v996, %v856
    %v998 = vadd.f32 %v997, %v862
    %v999 = vadd.f32 %v998, %v866
    %v1000 = vadd.f32 %v999, %v872
    %v1001 = vadd.f32 %v1000, %v876
    %v1002 = vadd.f32 %v1001, %v882
    %v1003 = vadd.f32 %v1002, %v886
    %v1004 = vadd.f32 %v1003, %v892
    %v1005 = vadd.f32 %v1004, %v896
    %v1006 = vadd.f32 %v1005, %v902
    %v1007 = vadd.f32 %v1006, %v906
    %v1008 = vadd.f32 %v1007, %v912
    %v1009 = vadd.f32 %v1008, %v916
    %v1010 = vadd.f32 %v1009, %v922
    %v1011 = vadd.f32 %v1010, %v926
    %v1012 = vadd.f32 %v1011, %v932
    %v1013 = vadd.f32 %v1012, %v936
    %v1014 = vadd.f32 %v1013, %v942
    %v1015 = vadd.f32 %v1014, %v946
    %v1016 = vrot.slane %v1015, 4
    %v1017 = vadd.f32 %v1015, %v1016
    %v1018 = vrot.slane %v1017, 2
    %v1019 = vadd.f32 %v1017, %v1018
    %v1020 = vrot.slane %v1019, 1
    %v1021 = vadd.f32 %v1019, %v1020
    %v1022 = vrcp.pop 256.0
    %v1023 = vmul.f32 %v984, %v1022
    %v1024 = vmul.f32 %v1021, %v1022
    %v1025 = vmul.f32 %v790, %v790
    %v1026 = vmul.f32 %v792, %v792
    %v1027 = vmul.f32 %v794, %v794
    %v1028 = vmul.f32 %v796, %v796
    %v1029 = vmul.f32 %v800, %v800
    %v1030 = vmul.f32 %v802, %v802
    %v1031 = vmul.f32 %v804, %v804
    %v1032 = vmul.f32 %v806, %v806
    %v1033 = vmul.f32 %v810, %v810
    %v1034 = vmul.f32 %v812, %v812
    %v1035 = vmul.f32 %v814, %v814
    %v1036 = vmul.f32 %v816, %v816
    %v1037 = vmul.f32 %v820, %v820
    %v1038 = vmul.f32 %v822, %v822
    %v1039 = vmul.f32 %v824, %v824
    %v1040 = vmul.f32 %v826, %v826
    %v1041 = vmul.f32 %v830, %v830
    %v1042 = vmul.f32 %v832, %v832
    %v1043 = vmul.f32 %v834, %v834
    %v1044 = vmul.f32 %v836, %v836
    %v1045 = vmul.f32 %v840, %v840
    %v1046 = vmul.f32 %v842, %v842
    %v1047 = vmul.f32 %v844, %v844
    %v1048 = vmul.f32 %v846, %v846
    %v1049 = vmul.f32 %v850, %v850
    %v1050 = vmul.f32 %v852, %v852
    %v1051 = vmul.f32 %v854, %v854
    %v1052 = vmul.f32 %v856, %v856
    %v1053 = vmul.f32 %v860, %v860
    %v1054 = vmul.f32 %v862, %v862
    %v1055 = vmul.f32 %v864, %v864
    %v1056 = vmul.f32 %v866, %v866
    %v1057 = vmul.f32 %v870, %v870
    %v1058 = vmul.f32 %v872, %v872
    %v1059 = vmul.f32 %v874, %v874
    %v1060 = vmul.f32 %v876, %v876
    %v1061 = vmul.f32 %v880, %v880
    %v1062 = vmul.f32 %v882, %v882
    %v1063 = vmul.f32 %v884, %v884
    %v1064 = vmul.f32 %v886, %v886
    %v1065 = vmul.f32 %v890, %v890
    %v1066 = vmul.f32 %v892, %v892
    %v1067 = vmul.f32 %v894, %v894
    %v1068 = vmul.f32 %v896, %v896
    %v1069 = vmul.f32 %v900, %v900
    %v1070 = vmul.f32 %v902, %v902
    %v1071 = vmul.f32 %v904, %v904
    %v1072 = vmul.f32 %v906, %v906
    %v1073 = vmul.f32 %v910, %v910
    %v1074 = vmul.f32 %v912, %v912
    %v1075 = vmul.f32 %v914, %v914
    %v1076 = vmul.f32 %v916, %v916
    %v1077 = vmul.f32 %v920, %v920
    %v1078 = vmul.f32 %v922, %v922
    %v1079 = vmul.f32 %v924, %v924
    %v1080 = vmul.f32 %v926, %v926
    %v1081 = vmul.f32 %v930, %v930
    %v1082 = vmul.f32 %v932, %v932
    %v1083 = vmul.f32 %v934, %v934
    %v1084 = vmul.f32 %v936, %v936
    %v1085 = vmul.f32 %v940, %v940
    %v1086 = vmul.f32 %v942, %v942
    %v1087 = vmul.f32 %v944, %v944
    %v1088 = vmul.f32 %v946, %v946
    %v1089 = vadd.f32 %v1025, %v1027
    %v1090 = vadd.f32 %v1089, %v1029
    %v1091 = vadd.f32 %v1090, %v1031
    %v1092 = vadd.f32 %v1091, %v1033
    %v1093 = vadd.f32 %v1092, %v1035
    %v1094 = vadd.f32 %v1093, %v1037
    %v1095 = vadd.f32 %v1094, %v1039
    %v1096 = vadd.f32 %v1095, %v1041
    %v1097 = vadd.f32 %v1096, %v1043
    %v1098 = vadd.f32 %v1097, %v1045
    %v1099 = vadd.f32 %v1098, %v1047
    %v1100 = vadd.f32 %v1099, %v1049
    %v1101 = vadd.f32 %v1100, %v1051
    %v1102 = vadd.f32 %v1101, %v1053
    %v1103 = vadd.f32 %v1102, %v1055
    %v1104 = vadd.f32 %v1103, %v1057
    %v1105 = vadd.f32 %v1104, %v1059
    %v1106 = vadd.f32 %v1105, %v1061
    %v1107 = vadd.f32 %v1106, %v1063
    %v1108 = vadd.f32 %v1107, %v1065
    %v1109 = vadd.f32 %v1108, %v1067
    %v1110 = vadd.f32 %v1109, %v1069
    %v1111 = vadd.f32 %v1110, %v1071
    %v1112 = vadd.f32 %v1111, %v1073
    %v1113 = vadd.f32 %v1112, %v1075
    %v1114 = vadd.f32 %v1113, %v1077
    %v1115 = vadd.f32 %v1114, %v1079
    %v1116 = vadd.f32 %v1115, %v1081
    %v1117 = vadd.f32 %v1116, %v1083
    %v1118 = vadd.f32 %v1117, %v1085
    %v1119 = vadd.f32 %v1118, %v1087
    %v1120 = vrot.slane %v1119, 4
    %v1121 = vadd.f32 %v1119, %v1120
    %v1122 = vrot.slane %v1121, 2
    %v1123 = vadd.f32 %v1121, %v1122
    %v1124 = vrot.slane %v1123, 1
    %v1125 = vadd.f32 %v1123, %v1124
    %v1126 = vadd.f32 %v1026, %v1028
    %v1127 = vadd.f32 %v1126, %v1030
    %v1128 = vadd.f32 %v1127, %v1032
    %v1129 = vadd.f32 %v1128, %v1034
    %v1130 = vadd.f32 %v1129, %v1036
    %v1131 = vadd.f32 %v1130, %v1038
    %v1132 = vadd.f32 %v1131, %v1040
    %v1133 = vadd.f32 %v1132, %v1042
    %v1134 = vadd.f32 %v1133, %v1044
    %v1135 = vadd.f32 %v1134, %v1046
    %v1136 = vadd.f32 %v1135, %v1048
    %v1137 = vadd.f32 %v1136, %v1050
    %v1138 = vadd.f32 %v1137, %v1052
    %v1139 = vadd.f32 %v1138, %v1054
    %v1140 = vadd.f32 %v1139, %v1056
    %v1141 = vadd.f32 %v1140, %v1058
    %v1142 = vadd.f32 %v1141, %v1060
    %v1143 = vadd.f32 %v1142, %v1062
    %v1144 = vadd.f32 %v1143, %v1064
    %v1145 = vadd.f32 %v1144, %v1066
    %v1146 = vadd.f32 %v1145, %v1068
    %v1147 = vadd.f32 %v1146, %v1070
    %v1148 = vadd.f32 %v1147, %v1072
    %v1149 = vadd.f32 %v1148, %v1074
    %v1150 = vadd.f32 %v1149, %v1076
    %v1151 = vadd.f32 %v1150, %v1078
    %v1152 = vadd.f32 %v1151, %v1080
    %v1153 = vadd.f32 %v1152, %v1082
    %v1154 = vadd.f32 %v1153, %v1084
    %v1155 = vadd.f32 %v1154, %v1086
    %v1156 = vadd.f32 %v1155, %v1088
    %v1157 = vrot.slane %v1156, 4
    %v1158 = vadd.f32 %v1156, %v1157
    %v1159 = vrot.slane %v1158, 2
    %v1160 = vadd.f32 %v1158, %v1159
    %v1161 = vrot.slane %v1160, 1
    %v1162 = vadd.f32 %v1160, %v1161
    %v1163 = vmul.f32 %v1125, %v1022
    %v1164 = vmul.f32 %v1162, %v1022
    %v1165 = vmul.f32 %v1023, %v1023
    %v1166 = vmul.f32 %v1024, %v1024
    %v1167 = vsub.f32 %v1163, %v1165
    %v1168 = vsub.f32 %v1164, %v1166
    %v1169 = vadd.f32 %v1167, 0.8
    %v1170 = vadd.f32 %v1168, 0.8
    %v1171 = vrsqrt.pop %v1169
    %v1172 = vrsqrt.pop %v1170
    %v1175 = vcombine.low %v1171, %v1172
    %v1177 = vunpack.c.l.s4 1966171168
    %v1178 = vunpack.c.0.s8 %v1177
    %v1179 = vlaneseq
    %v1180 = vshrl.u32 %v1179, 7
    %v1181 = vsub.s32 %v1178, %v1180
    %v1182 = vrot.slane %v1175, %v1181
    %v1184 = vunpack.c.l.s4 1966171168
    %v1185 = vunpack.c.0.s8 %v1184
    %v1186 = vlaneseq
    %v1187 = vshrl.u32 %v1186, 7
    %v1188 = vsub.s32 %v1185, %v1187
    %v1189 = vrot.slane %v1182, %v1188
    %v1191 = vmul.f32 %v181, %v1189
    %v1193 = vlaneseq
    %v1194 = vshrl.u32 %v1193, 7
    %v1195 = vsub.s32 0, %v1194
    %v1196 = vrot.slane %v1191, %v1195
    %v1197 = vlaneseq
    %v1198 = vshrl.u32 %v1197, 7
    %v1199 = vsub.s32 1, %v1198
    %v1200 = vrot.slane %v1191, %v1199
    %v1203 = vmul.f32 %v1023, %v1196
    %v1204 = vmul.f32 %v1024, %v1200
    %v1207 = vcombine.low %v1203, %v1204
    %v1209 = vunpack.c.l.s4 1966171168
    %v1210 = vunpack.c.0.s8 %v1209
    %v1211 = vlaneseq
    %v1212 = vshrl.u32 %v1211, 7
    %v1213 = vsub.s32 %v1210, %v1212
    %v1214 = vrot.slane %v1207, %v1213
    %v1216 = vunpack.c.l.s4 1966171168
    %v1217 = vunpack.c.0.s8 %v1216
    %v1218 = vlaneseq
    %v1219 = vshrl.u32 %v1218, 7
    %v1220 = vsub.s32 %v1217, %v1219
    %v1221 = vrot.slane %v1214, %v1220
    %v1223 = vsub.f32 %v182, %v1221
    %v1224 = vmul.f32 %v790, %v1196
    %v1225 = vmul.f32 %v792, %v1200
    %v1226 = vmul.f32 %v794, %v1196
    %v1227 = vmul.f32 %v796, %v1200
    %v1228 = vmul.f32 %v800, %v1196
    %v1229 = vmul.f32 %v802, %v1200
    %v1230 = vmul.f32 %v804, %v1196
    %v1231 = vmul.f32 %v806, %v1200
    %v1232 = vmul.f32 %v810, %v1196
    %v1233 = vmul.f32 %v812, %v1200
    %v1234 = vmul.f32 %v814, %v1196
    %v1235 = vmul.f32 %v816, %v1200
    %v1236 = vmul.f32 %v820, %v1196
    %v1237 = vmul.f32 %v822, %v1200
    %v1238 = vmul.f32 %v824, %v1196
    %v1239 = vmul.f32 %v826, %v1200
    %v1240 = vmul.f32 %v830, %v1196
    %v1241 = vmul.f32 %v832, %v1200
    %v1242 = vmul.f32 %v834, %v1196
    %v1243 = vmul.f32 %v836, %v1200
    %v1244 = vmul.f32 %v840, %v1196
    %v1245 = vmul.f32 %v842, %v1200
    %v1246 = vmul.f32 %v844, %v1196
    %v1247 = vmul.f32 %v846, %v1200
    %v1248 = vmul.f32 %v850, %v1196
    %v1249 = vmul.f32 %v852, %v1200
    %v1250 = vmul.f32 %v854, %v1196
    %v1251 = vmul.f32 %v856, %v1200
    %v1252 = vmul.f32 %v860, %v1196
    %v1253 = vmul.f32 %v862, %v1200
    %v1254 = vmul.f32 %v864, %v1196
    %v1255 = vmul.f32 %v866, %v1200
    %v1256 = vmul.f32 %v870, %v1196
    %v1257 = vmul.f32 %v872, %v1200
    %v1258 = vmul.f32 %v874, %v1196
    %v1259 = vmul.f32 %v876, %v1200
    %v1260 = vmul.f32 %v880, %v1196
    %v1261 = vmul.f32 %v882, %v1200
    %v1262 = vmul.f32 %v884, %v1196
    %v1263 = vmul.f32 %v886, %v1200
    %v1264 = vmul.f32 %v890, %v1196
    %v1265 = vmul.f32 %v892, %v1200
    %v1266 = vmul.f32 %v894, %v1196
    %v1267 = vmul.f32 %v896, %v1200
    %v1268 = vmul.f32 %v900, %v1196
    %v1269 = vmul.f32 %v902, %v1200
    %v1270 = vmul.f32 %v904, %v1196
    %v1271 = vmul.f32 %v906, %v1200
    %v1272 = vmul.f32 %v910, %v1196
    %v1273 = vmul.f32 %v912, %v1200
    %v1274 = vmul.f32 %v914, %v1196
    %v1275 = vmul.f32 %v916, %v1200
    %v1276 = vmul.f32 %v920, %v1196
    %v1277 = vmul.f32 %v922, %v1200
    %v1278 = vmul.f32 %v924, %v1196
    %v1279 = vmul.f32 %v926, %v1200
    %v1280 = vmul.f32 %v930, %v1196
    %v1281 = vmul.f32 %v932, %v1200
    %v1282 = vmul.f32 %v934, %v1196
    %v1283 = vmul.f32 %v936, %v1200
    %v1284 = vmul.f32 %v940, %v1196
    %v1285 = vmul.f32 %v942, %v1200
    %v1286 = vmul.f32 %v944, %v1196
    %v1287 = vmul.f32 %v946, %v1200
    %v1289 = vlaneseq
    %v1290 = vshrl.u32 %v1289, 7
    %v1291 = vsub.s32 0, %v1290
    %v1292 = vrot.slane %v1223, %v1291
    %v1293 = vlaneseq
    %v1294 = vshrl.u32 %v1293, 7
    %v1295 = vsub.s32 1, %v1294
    %v1296 = vrot.slane %v1223, %v1295
    %v1299 = vadd.f32 %v1224, %v1292
    %v1300 = vadd.f32 %v1225, %v1296
    %v1301 = vadd.f32 %v1226, %v1292
    %v1302 = vadd.f32 %v1227, %v1296
    %v1303 = vadd.f32 %v1228, %v1292
    %v1304 = vadd.f32 %v1229, %v1296
    %v1305 = vadd.f32 %v1230, %v1292
    %v1306 = vadd.f32 %v1231, %v1296
    %v1307 = vadd.f32 %v1232, %v1292
    %v1308 = vadd.f32 %v1233, %v1296
    %v1309 = vadd.f32 %v1234, %v1292
    %v1310 = vadd.f32 %v1235, %v1296
    %v1311 = vadd.f32 %v1236, %v1292
    %v1312 = vadd.f32 %v1237, %v1296
    %v1313 = vadd.f32 %v1238, %v1292
    %v1314 = vadd.f32 %v1239, %v1296
    %v1315 = vadd.f32 %v1240, %v1292
    %v1316 = vadd.f32 %v1241, %v1296
    %v1317 = vadd.f32 %v1242, %v1292
    %v1318 = vadd.f32 %v1243, %v1296
    %v1319 = vadd.f32 %v1244, %v1292
    %v1320 = vadd.f32 %v1245, %v1296
    %v1321 = vadd.f32 %v1246, %v1292
    %v1322 = vadd.f32 %v1247, %v1296
    %v1323 = vadd.f32 %v1248, %v1292
    %v1324 = vadd.f32 %v1249, %v1296
    %v1325 = vadd.f32 %v1250, %v1292
    %v1326 = vadd.f32 %v1251, %v1296
    %v1327 = vadd.f32 %v1252, %v1292
    %v1328 = vadd.f32 %v1253, %v1296
    %v1329 = vadd.f32 %v1254, %v1292
    %v1330 = vadd.f32 %v1255, %v1296
    %v1331 = vadd.f32 %v1256, %v1292
    %v1332 = vadd.f32 %v1257, %v1296
    %v1333 = vadd.f32 %v1258, %v1292
    %v1334 = vadd.f32 %v1259, %v1296
    %v1335 = vadd.f32 %v1260, %v1292
    %v1336 = vadd.f32 %v1261, %v1296
    %v1337 = vadd.f32 %v1262, %v1292
    %v1338 = vadd.f32 %v1263, %v1296
    %v1339 = vadd.f32 %v1264, %v1292
    %v1340 = vadd.f32 %v1265, %v1296
    %v1341 = vadd.f32 %v1266, %v1292
    %v1342 = vadd.f32 %v1267, %v1296
    %v1343 = vadd.f32 %v1268, %v1292
    %v1344 = vadd.f32 %v1269, %v1296
    %v1345 = vadd.f32 %v1270, %v1292
    %v1346 = vadd.f32 %v1271, %v1296
    %v1347 = vadd.f32 %v1272, %v1292
    %v1348 = vadd.f32 %v1273, %v1296
    %v1349 = vadd.f32 %v1274, %v1292
    %v1350 = vadd.f32 %v1275, %v1296
    %v1351 = vadd.f32 %v1276, %v1292
    %v1352 = vadd.f32 %v1277, %v1296
    %v1353 = vadd.f32 %v1278, %v1292
    %v1354 = vadd.f32 %v1279, %v1296
    %v1355 = vadd.f32 %v1280, %v1292
    %v1356 = vadd.f32 %v1281, %v1296
    %v1357 = vadd.f32 %v1282, %v1292
    %v1358 = vadd.f32 %v1283, %v1296
    %v1359 = vadd.f32 %v1284, %v1292
    %v1360 = vadd.f32 %v1285, %v1296
    %v1361 = vadd.f32 %v1286, %v1292
    %v1362 = vadd.f32 %v1287, %v1296
    %vm1363 = vcmp.gt.f32.partialorder %v1299, 0.0
    %vm1364 = vcmp.gt.f32.partialorder %v1300, 0.0
    %vm1365 = vcmp.gt.f32.partialorder %v1301, 0.0
    %vm1366 = vcmp.gt.f32.partialorder %v1302, 0.0
    %vm1367 = vcmp.gt.f32.partialorder %v1303, 0.0
    %vm1368 = vcmp.gt.f32.partialorder %v1304, 0.0
    %vm1369 = vcmp.gt.f32.partialorder %v1305, 0.0
    %vm1370 = vcmp.gt.f32.partialorder %v1306, 0.0
    %vm1371 = vcmp.gt.f32.partialorder %v1307, 0.0
    %vm1372 = vcmp.gt.f32.partialorder %v1308, 0.0
    %vm1373 = vcmp.gt.f32.partialorder %v1309, 0.0
    %vm1374 = vcmp.gt.f32.partialorder %v1310, 0.0
    %vm1375 = vcmp.gt.f32.partialorder %v1311, 0.0
    %vm1376 = vcmp.gt.f32.partialorder %v1312, 0.0
    %vm1377 = vcmp.gt.f32.partialorder %v1313, 0.0
    %vm1378 = vcmp.gt.f32.partialorder %v1314, 0.0
    %vm1379 = vcmp.gt.f32.partialorder %v1315, 0.0
    %vm1380 = vcmp.gt.f32.partialorder %v1316, 0.0
    %vm1381 = vcmp.gt.f32.partialorder %v1317, 0.0
    %vm1382 = vcmp.gt.f32.partialorder %v1318, 0.0
    %vm1383 = vcmp.gt.f32.partialorder %v1319, 0.0
    %vm1384 = vcmp.gt.f32.partialorder %v1320, 0.0
    %vm1385 = vcmp.gt.f32.partialorder %v1321, 0.0
    %vm1386 = vcmp.gt.f32.partialorder %v1322, 0.0
    %vm1387 = vcmp.gt.f32.partialorder %v1323, 0.0
    %vm1388 = vcmp.gt.f32.partialorder %v1324, 0.0
    %vm1389 = vcmp.gt.f32.partialorder %v1325, 0.0
    %vm1390 = vcmp.gt.f32.partialorder %v1326, 0.0
    %vm1391 = vcmp.gt.f32.partialorder %v1327, 0.0
    %vm1392 = vcmp.gt.f32.partialorder %v1328, 0.0
    %vm1393 = vcmp.gt.f32.partialorder %v1329, 0.0
    %vm1394 = vcmp.gt.f32.partialorder %v1330, 0.0
    %vm1395 = vcmp.gt.f32.partialorder %v1331, 0.0
    %vm1396 = vcmp.gt.f32.partialorder %v1332, 0.0
    %vm1397 = vcmp.gt.f32.partialorder %v1333, 0.0
    %vm1398 = vcmp.gt.f32.partialorder %v1334, 0.0
    %vm1399 = vcmp.gt.f32.partialorder %v1335, 0.0
    %vm1400 = vcmp.gt.f32.partialorder %v1336, 0.0
    %vm1401 = vcmp.gt.f32.partialorder %v1337, 0.0
    %vm1402 = vcmp.gt.f32.partialorder %v1338, 0.0
    %vm1403 = vcmp.gt.f32.partialorder %v1339, 0.0
    %vm1404 = vcmp.gt.f32.partialorder %v1340, 0.0
    %vm1405 = vcmp.gt.f32.partialorder %v1341, 0.0
    %vm1406 = vcmp.gt.f32.partialorder %v1342, 0.0
    %vm1407 = vcmp.gt.f32.partialorder %v1343, 0.0
    %vm1408 = vcmp.gt.f32.partialorder %v1344, 0.0
    %vm1409 = vcmp.gt.f32.partialorder %v1345, 0.0
    %vm1410 = vcmp.gt.f32.partialorder %v1346, 0.0
    %vm1411 = vcmp.gt.f32.partialorder %v1347, 0.0
    %vm1412 = vcmp.gt.f32.partialorder %v1348, 0.0
    %vm1413 = vcmp.gt.f32.partialorder %v1349, 0.0
    %vm1414 = vcmp.gt.f32.partialorder %v1350, 0.0
    %vm1415 = vcmp.gt.f32.partialorder %v1351, 0.0
    %vm1416 = vcmp.gt.f32.partialorder %v1352, 0.0
    %vm1417 = vcmp.gt.f32.partialorder %v1353, 0.0
    %vm1418 = vcmp.gt.f32.partialorder %v1354, 0.0
    %vm1419 = vcmp.gt.f32.partialorder %v1355, 0.0
    %vm1420 = vcmp.gt.f32.partialorder %v1356, 0.0
    %vm1421 = vcmp.gt.f32.partialorder %v1357, 0.0
    %vm1422 = vcmp.gt.f32.partialorder %v1358, 0.0
    %vm1423 = vcmp.gt.f32.partialorder %v1359, 0.0
    %vm1424 = vcmp.gt.f32.partialorder %v1360, 0.0
    %vm1425 = vcmp.gt.f32.partialorder %v1361, 0.0
    %vm1426 = vcmp.gt.f32.partialorder %v1362, 0.0
    %v1427 = vmul.f32 %v1299, 0.2
    %v1428 = vmul.f32 %v1300, 0.2
    %v1429 = vmul.f32 %v1301, 0.2
    %v1430 = vmul.f32 %v1302, 0.2
    %v1431 = vmul.f32 %v1303, 0.2
    %v1432 = vmul.f32 %v1304, 0.2
    %v1433 = vmul.f32 %v1305, 0.2
    %v1434 = vmul.f32 %v1306, 0.2
    %v1435 = vmul.f32 %v1307, 0.2
    %v1436 = vmul.f32 %v1308, 0.2
    %v1437 = vmul.f32 %v1309, 0.2
    %v1438 = vmul.f32 %v1310, 0.2
    %v1439 = vmul.f32 %v1311, 0.2
    %v1440 = vmul.f32 %v1312, 0.2
    %v1441 = vmul.f32 %v1313, 0.2
    %v1442 = vmul.f32 %v1314, 0.2
    %v1443 = vmul.f32 %v1315, 0.2
    %v1444 = vmul.f32 %v1316, 0.2
    %v1445 = vmul.f32 %v1317, 0.2
    %v1446 = vmul.f32 %v1318, 0.2
    %v1447 = vmul.f32 %v1319, 0.2
    %v1448 = vmul.f32 %v1320, 0.2
    %v1449 = vmul.f32 %v1321, 0.2
    %v1450 = vmul.f32 %v1322, 0.2
    %v1451 = vmul.f32 %v1323, 0.2
    %v1452 = vmul.f32 %v1324, 0.2
    %v1453 = vmul.f32 %v1325, 0.2
    %v1454 = vmul.f32 %v1326, 0.2
    %v1455 = vmul.f32 %v1327, 0.2
    %v1456 = vmul.f32 %v1328, 0.2
    %v1457 = vmul.f32 %v1329, 0.2
    %v1458 = vmul.f32 %v1330, 0.2
    %v1459 = vmul.f32 %v1331, 0.2
    %v1460 = vmul.f32 %v1332, 0.2
    %v1461 = vmul.f32 %v1333, 0.2
    %v1462 = vmul.f32 %v1334, 0.2
    %v1463 = vmul.f32 %v1335, 0.2
    %v1464 = vmul.f32 %v1336, 0.2
    %v1465 = vmul.f32 %v1337, 0.2
    %v1466 = vmul.f32 %v1338, 0.2
    %v1467 = vmul.f32 %v1339, 0.2
    %v1468 = vmul.f32 %v1340, 0.2
    %v1469 = vmul.f32 %v1341, 0.2
    %v1470 = vmul.f32 %v1342, 0.2
    %v1471 = vmul.f32 %v1343, 0.2
    %v1472 = vmul.f32 %v1344, 0.2
    %v1473 = vmul.f32 %v1345, 0.2
    %v1474 = vmul.f32 %v1346, 0.2
    %v1475 = vmul.f32 %v1347, 0.2
    %v1476 = vmul.f32 %v1348, 0.2
    %v1477 = vmul.f32 %v1349, 0.2
    %v1478 = vmul.f32 %v1350, 0.2
    %v1479 = vmul.f32 %v1351, 0.2
    %v1480 = vmul.f32 %v1352, 0.2
    %v1481 = vmul.f32 %v1353, 0.2
    %v1482 = vmul.f32 %v1354, 0.2
    %v1483 = vmul.f32 %v1355, 0.2
    %v1484 = vmul.f32 %v1356, 0.2
    %v1485 = vmul.f32 %v1357, 0.2
    %v1486 = vmul.f32 %v1358, 0.2
    %v1487 = vmul.f32 %v1359, 0.2
    %v1488 = vmul.f32 %v1360, 0.2
    %v1489 = vmul.f32 %v1361, 0.2
    %v1490 = vmul.f32 %v1362, 0.2
    %v1491 = vsel %vm1363, %v1299, %v1427
    %v1492 = vsel %vm1364, %v1300, %v1428
    %v1493 = vsel %vm1365, %v1301, %v1429
    %v1494 = vsel %vm1366, %v1302, %v1430
    %v1495 = vsel %vm1367, %v1303, %v1431
    %v1496 = vsel %vm1368, %v1304, %v1432
    %v1497 = vsel %vm1369, %v1305, %v1433
    %v1498 = vsel %vm1370, %v1306, %v1434
    %v1499 = vsel %vm1371, %v1307, %v1435
    %v1500 = vsel %vm1372, %v1308, %v1436
    %v1501 = vsel %vm1373, %v1309, %v1437
    %v1502 = vsel %vm1374, %v1310, %v1438
    %v1503 = vsel %vm1375, %v1311, %v1439
    %v1504 = vsel %vm1376, %v1312, %v1440
    %v1505 = vsel %vm1377, %v1313, %v1441
    %v1506 = vsel %vm1378, %v1314, %v1442
    %v1507 = vsel %vm1379, %v1315, %v1443
    %v1508 = vsel %vm1380, %v1316, %v1444
    %v1509 = vsel %vm1381, %v1317, %v1445
    %v1510 = vsel %vm1382, %v1318, %v1446
    %v1511 = vsel %vm1383, %v1319, %v1447
    %v1512 = vsel %vm1384, %v1320, %v1448
    %v1513 = vsel %vm1385, %v1321, %v1449
    %v1514 = vsel %vm1386, %v1322, %v1450
    %v1515 = vsel %vm1387, %v1323, %v1451
    %v1516 = vsel %vm1388, %v1324, %v1452
    %v1517 = vsel %vm1389, %v1325, %v1453
    %v1518 = vsel %vm1390, %v1326, %v1454
    %v1519 = vsel %vm1391, %v1327, %v1455
    %v1520 = vsel %vm1392, %v1328, %v1456
    %v1521 = vsel %vm1393, %v1329, %v1457
    %v1522 = vsel %vm1394, %v1330, %v1458
    %v1523 = vsel %vm1395, %v1331, %v1459
    %v1524 = vsel %vm1396, %v1332, %v1460
    %v1525 = vsel %vm1397, %v1333, %v1461
    %v1526 = vsel %vm1398, %v1334, %v1462
    %v1527 = vsel %vm1399, %v1335, %v1463
    %v1528 = vsel %vm1400, %v1336, %v1464
    %v1529 = vsel %vm1401, %v1337, %v1465
    %v1530 = vsel %vm1402, %v1338, %v1466
    %v1531 = vsel %vm1403, %v1339, %v1467
    %v1532 = vsel %vm1404, %v1340, %v1468
    %v1533 = vsel %vm1405, %v1341, %v1469
    %v1534 = vsel %vm1406, %v1342, %v1470
    %v1535 = vsel %vm1407, %v1343, %v1471
    %v1536 = vsel %vm1408, %v1344, %v1472
    %v1537 = vsel %vm1409, %v1345, %v1473
    %v1538 = vsel %vm1410, %v1346, %v1474
    %v1539 = vsel %vm1411, %v1347, %v1475
    %v1540 = vsel %vm1412, %v1348, %v1476
    %v1541 = vsel %vm1413, %v1349, %v1477
    %v1542 = vsel %vm1414, %v1350, %v1478
    %v1543 = vsel %vm1415, %v1351, %v1479
    %v1544 = vsel %vm1416, %v1352, %v1480
    %v1545 = vsel %vm1417, %v1353, %v1481
    %v1546 = vsel %vm1418, %v1354, %v1482
    %v1547 = vsel %vm1419, %v1355, %v1483
    %v1548 = vsel %vm1420, %v1356, %v1484
    %v1549 = vsel %vm1421, %v1357, %v1485
    %v1550 = vsel %vm1422, %v1358, %v1486
    %v1551 = vsel %vm1423, %v1359, %v1487
    %v1552 = vsel %vm1424, %v1360, %v1488
    %v1553 = vsel %vm1425, %v1361, %v1489
    %v1554 = vsel %vm1426, %v1362, %v1490
    %s1555 = smul.u32 4, 32
    %s1556 = smul.u32 %s1555, 4
    %s1557 = sshll.u32 %s1556, 4
    %1558 = dma.done [#allocation5], %s1557
    %v1559 = vpack.c.bf16 %v1493, %v1491
    %v1560 = vpack.c.bf16 %v1494, %v1492
    %v1561 = vpack.c.bf16 %v1497, %v1495
    %v1562 = vpack.c.bf16 %v1498, %v1496
    %v1563 = vpack.c.bf16 %v1501, %v1499
    %v1564 = vpack.c.bf16 %v1502, %v1500
    %v1565 = vpack.c.bf16 %v1505, %v1503
    %v1566 = vpack.c.bf16 %v1506, %v1504
    %v1567 = vpack.c.bf16 %v1509, %v1507
    %v1568 = vpack.c.bf16 %v1510, %v1508
    %v1569 = vpack.c.bf16 %v1513, %v1511
    %v1570 = vpack.c.bf16 %v1514, %v1512
    %v1571 = vpack.c.bf16 %v1517, %v1515
    %v1572 = vpack.c.bf16 %v1518, %v1516
    %v1573 = vpack.c.bf16 %v1521, %v1519
    %v1574 = vpack.c.bf16 %v1522, %v1520
    %v1575 = vpack.c.bf16 %v1525, %v1523
    %v1576 = vpack.c.bf16 %v1526, %v1524
    %v1577 = vpack.c.bf16 %v1529, %v1527
    %v1578 = vpack.c.bf16 %v1530, %v1528
    %v1579 = vpack.c.bf16 %v1533, %v1531
    %v1580 = vpack.c.bf16 %v1534, %v1532
    %v1581 = vpack.c.bf16 %v1537, %v1535
    %v1582 = vpack.c.bf16 %v1538, %v1536
    %v1583 = vpack.c.bf16 %v1541, %v1539
    %v1584 = vpack.c.bf16 %v1542, %v1540
    %v1585 = vpack.c.bf16 %v1545, %v1543
    %v1586 = vpack.c.bf16 %v1546, %v1544
    %v1587 = vpack.c.bf16 %v1549, %v1547
    %v1588 = vpack.c.bf16 %v1550, %v1548
    %v1589 = vpack.c.bf16 %v1553, %v1551
    %v1590 = vpack.c.bf16 %v1554, %v1552
    %v1591 = vld [vmem:[#allocation2] sm:$0xff]
    %v1592 = vld [vmem:[#allocation2 + $0x8] sm:$0xff]
    %v1593 = vld [vmem:[#allocation2 + $0x10] sm:$0xff]
    %v1594 = vld [vmem:[#allocation2 + $0x18] sm:$0xff]
    %v1595 = vld [vmem:[#allocation2 + $0x20] sm:$0xff]
    %v1596 = vld [vmem:[#allocation2 + $0x28] sm:$0xff]
    %v1597 = vld [vmem:[#allocation2 + $0x30] sm:$0xff]
    %v1598 = vld [vmem:[#allocation2 + $0x38] sm:$0xff]
    %v1599 = vld [vmem:[#allocation2 + $0x40] sm:$0xff]
    %v1600 = vld [vmem:[#allocation2 + $0x48] sm:$0xff]
    %v1601 = vld [vmem:[#allocation2 + $0x50] sm:$0xff]
    %v1602 = vld [vmem:[#allocation2 + $0x58] sm:$0xff]
    %v1603 = vld [vmem:[#allocation2 + $0x60] sm:$0xff]
    %v1604 = vld [vmem:[#allocation2 + $0x68] sm:$0xff]
    %v1605 = vld [vmem:[#allocation2 + $0x70] sm:$0xff]
    %v1606 = vld [vmem:[#allocation2 + $0x78] sm:$0xff]
    %v1607 = vld [vmem:[#allocation2 + $0x80] sm:$0xff]
    %v1608 = vld [vmem:[#allocation2 + $0x88] sm:$0xff]
    %v1609 = vld [vmem:[#allocation2 + $0x90] sm:$0xff]
    %v1610 = vld [vmem:[#allocation2 + $0x98] sm:$0xff]
    %v1611 = vld [vmem:[#allocation2 + $0xa0] sm:$0xff]
    %v1612 = vld [vmem:[#allocation2 + $0xa8] sm:$0xff]
    %v1613 = vld [vmem:[#allocation2 + $0xb0] sm:$0xff]
    %v1614 = vld [vmem:[#allocation2 + $0xb8] sm:$0xff]
    %v1615 = vld [vmem:[#allocation2 + $0xc0] sm:$0xff]
    %v1616 = vld [vmem:[#allocation2 + $0xc8] sm:$0xff]
    %v1617 = vld [vmem:[#allocation2 + $0xd0] sm:$0xff]
    %v1618 = vld [vmem:[#allocation2 + $0xd8] sm:$0xff]
    %v1619 = vld [vmem:[#allocation2 + $0xe0] sm:$0xff]
    %v1620 = vld [vmem:[#allocation2 + $0xe8] sm:$0xff]
    %v1621 = vld [vmem:[#allocation2 + $0xf0] sm:$0xff]
    %v1622 = vld [vmem:[#allocation2 + $0xf8] sm:$0xff]
    %v1623 = vld [vmem:[#allocation2 + $0x100] sm:$0xff]
    %v1624 = vld [vmem:[#allocation2 + $0x108] sm:$0xff]
    %v1625 = vld [vmem:[#allocation2 + $0x110] sm:$0xff]
    %v1626 = vld [vmem:[#allocation2 + $0x118] sm:$0xff]
    %v1627 = vld [vmem:[#allocation2 + $0x120] sm:$0xff]
    %v1628 = vld [vmem:[#allocation2 + $0x128] sm:$0xff]
    %v1629 = vld [vmem:[#allocation2 + $0x130] sm:$0xff]
    %v1630 = vld [vmem:[#allocation2 + $0x138] sm:$0xff]
    %v1631 = vld [vmem:[#allocation2 + $0x140] sm:$0xff]
    %v1632 = vld [vmem:[#allocation2 + $0x148] sm:$0xff]
    %v1633 = vld [vmem:[#allocation2 + $0x150] sm:$0xff]
    %v1634 = vld [vmem:[#allocation2 + $0x158] sm:$0xff]
    %v1635 = vld [vmem:[#allocation2 + $0x160] sm:$0xff]
    %v1636 = vld [vmem:[#allocation2 + $0x168] sm:$0xff]
    %v1637 = vld [vmem:[#allocation2 + $0x170] sm:$0xff]
    %v1638 = vld [vmem:[#allocation2 + $0x178] sm:$0xff]
    %v1639 = vld [vmem:[#allocation2 + $0x180] sm:$0xff]
    %v1640 = vld [vmem:[#allocation2 + $0x188] sm:$0xff]
    %v1641 = vld [vmem:[#allocation2 + $0x190] sm:$0xff]
    %v1642 = vld [vmem:[#allocation2 + $0x198] sm:$0xff]
    %v1643 = vld [vmem:[#allocation2 + $0x1a0] sm:$0xff]
    %v1644 = vld [vmem:[#allocation2 + $0x1a8] sm:$0xff]
    %v1645 = vld [vmem:[#allocation2 + $0x1b0] sm:$0xff]
    %v1646 = vld [vmem:[#allocation2 + $0x1b8] sm:$0xff]
    %v1647 = vld [vmem:[#allocation2 + $0x1c0] sm:$0xff]
    %v1648 = vld [vmem:[#allocation2 + $0x1c8] sm:$0xff]
    %v1649 = vld [vmem:[#allocation2 + $0x1d0] sm:$0xff]
    %v1650 = vld [vmem:[#allocation2 + $0x1d8] sm:$0xff]
    %v1651 = vld [vmem:[#allocation2 + $0x1e0] sm:$0xff]
    %v1652 = vld [vmem:[#allocation2 + $0x1e8] sm:$0xff]
    %v1653 = vld [vmem:[#allocation2 + $0x1f0] sm:$0xff]
    %v1654 = vld [vmem:[#allocation2 + $0x1f8] sm:$0xff]
    %1655 = vmatprep.subr.bf16.mxu0 %v1592
    %1656 = vmatpush1.bf16.msra.mxu0 %v1591
    %1657 = vmatprep.subr.bf16.mxu0 %v1596
    %1658 = vmatpush1.bf16.msra.mxu0 %v1595
    %1659 = vmatprep.subr.bf16.mxu0 %v1600
    %1660 = vmatpush1.bf16.msra.mxu0 %v1599
    %1661 = vmatprep.subr.bf16.mxu0 %v1604
    %1662 = vmatpush1.bf16.msra.mxu0 %v1603
    %1663 = vmatprep.subr.bf16.mxu0 %v1608
    %1664 = vmatpush1.bf16.msra.mxu0 %v1607
    %1665 = vmatprep.subr.bf16.mxu0 %v1612
    %1666 = vmatpush1.bf16.msra.mxu0 %v1611
    %1667 = vmatprep.subr.bf16.mxu0 %v1616
    %1668 = vmatpush1.bf16.msra.mxu0 %v1615
    %1669 = vmatprep.subr.bf16.mxu0 %v1620
    %1670 = vmatpush1.bf16.msra.mxu0 %v1619
    %1671 = vmatprep.subr.bf16.mxu0 %v1624
    %1672 = vmatpush1.bf16.msra.mxu0 %v1623
    %1673 = vmatprep.subr.bf16.mxu0 %v1628
    %1674 = vmatpush1.bf16.msra.mxu0 %v1627
    %1675 = vmatprep.subr.bf16.mxu0 %v1632
    %1676 = vmatpush1.bf16.msra.mxu0 %v1631
    %1677 = vmatprep.subr.bf16.mxu0 %v1636
    %1678 = vmatpush1.bf16.msra.mxu0 %v1635
    %1679 = vmatprep.subr.bf16.mxu0 %v1640
    %1680 = vmatpush1.bf16.msra.mxu0 %v1639
    %1681 = vmatprep.subr.bf16.mxu0 %v1644
    %1682 = vmatpush1.bf16.msra.mxu0 %v1643
    %1683 = vmatprep.subr.bf16.mxu0 %v1648
    %1684 = vmatpush1.bf16.msra.mxu0 %v1647
    %1685 = vmatprep.subr.bf16.mxu0 %v1652
    %1686 = vmatpush1.bf16.msra.mxu0 %v1651
    %1687 = vmatprep.mubr.bf16.mxu0 %v1560
    %1688 = vmatmul.mubr.bf16.gmra.mrb[0].mxu0 %v1559
    %v1689 = vpop.f32.mrb[0].mxu0
    %v1690 = vadd.f32 0.0, %v1689
    %v1691 = vpop.f32.mrb[0].mxu0
    %v1692 = vadd.f32 0.0, %v1691
    %v1693 = vpop.f32.mrb[0].mxu0
    %v1694 = vadd.f32 0.0, %v1693
    %v1695 = vpop.f32.mrb[0].mxu0
    %v1696 = vadd.f32 0.0, %v1695
    %1697 = vmatprep.mubr.bf16.mxu0 %v1562
    %1698 = vmatmul.mubr.bf16.gmra.mrb[0].mxu0 %v1561
    %v1699 = vpop.f32.mrb[0].mxu0
    %v1700 = vadd.f32 0.0, %v1699
    %v1701 = vpop.f32.mrb[0].mxu0
    %v1702 = vadd.f32 0.0, %v1701
    %v1703 = vpop.f32.mrb[0].mxu0
    %v1704 = vadd.f32 0.0, %v1703
    %v1705 = vpop.f32.mrb[0].mxu0
    %v1706 = vadd.f32 0.0, %v1705
    %1707 = vmatprep.mubr.bf16.mxu0 %v1564
    %1708 = vmatmul.mubr.bf16.gmra.mrb[0].mxu0 %v1563
    %v1709 = vpop.f32.mrb[0].mxu0
    %v1710 = vadd.f32 0.0, %v1709
    %v1711 = vpop.f32.mrb[0].mxu0
    %v1712 = vadd.f32 0.0, %v1711
    %v1713 = vpop.f32.mrb[0].mxu0
    %v1714 = vadd.f32 0.0, %v1713
    %v1715 = vpop.f32.mrb[0].mxu0
    %v1716 = vadd.f32 0.0, %v1715
    %1717 = vmatprep.mubr.bf16.mxu0 %v1566
    %1718 = vmatmul.mubr.bf16.gmra.mrb[0].mxu0 %v1565
    %v1719 = vpop.f32.mrb[0].mxu0
    %v1720 = vadd.f32 0.0, %v1719
    %v1721 = vpop.f32.mrb[0].mxu0
    %v1722 = vadd.f32 0.0, %v1721
    %v1723 = vpop.f32.mrb[0].mxu0
    %v1724 = vadd.f32 0.0, %v1723
    %v1725 = vpop.f32.mrb[0].mxu0
    %v1726 = vadd.f32 0.0, %v1725
    %1727 = vmatprep.mubr.bf16.mxu0 %v1568
    %1728 = vmatmul.mubr.bf16.gmra.mrb[0].mxu0 %v1567
    %v1729 = vpop.f32.mrb[0].mxu0
    %v1730 = vadd.f32 0.0, %v1729
    %v1731 = vpop.f32.mrb[0].mxu0
    %v1732 = vadd.f32 0.0, %v1731
    %v1733 = vpop.f32.mrb[0].mxu0
    %v1734 = vadd.f32 0.0, %v1733
    %v1735 = vpop.f32.mrb[0].mxu0
    %v1736 = vadd.f32 0.0, %v1735
    %1737 = vmatprep.mubr.bf16.mxu0 %v1570
    %1738 = vmatmul.mubr.bf16.gmra.mrb[0].mxu0 %v1569
    %v1739 = vpop.f32.mrb[0].mxu0
    %v1740 = vadd.f32 0.0, %v1739
    %v1741 = vpop.f32.mrb[0].mxu0
    %v1742 = vadd.f32 0.0, %v1741
    %v1743 = vpop.f32.mrb[0].mxu0
    %v1744 = vadd.f32 0.0, %v1743
    %v1745 = vpop.f32.mrb[0].mxu0
    %v1746 = vadd.f32 0.0, %v1745
    %1747 = vmatprep.mubr.bf16.mxu0 %v1572
    %1748 = vmatmul.mubr.bf16.gmra.mrb[0].mxu0 %v1571
    %v1749 = vpop.f32.mrb[0].mxu0
    %v1750 = vadd.f32 0.0, %v1749
    %v1751 = vpop.f32.mrb[0].mxu0
    %v1752 = vadd.f32 0.0, %v1751
    %v1753 = vpop.f32.mrb[0].mxu0
    %v1754 = vadd.f32 0.0, %v1753
    %v1755 = vpop.f32.mrb[0].mxu0
    %v1756 = vadd.f32 0.0, %v1755
    %1757 = vmatprep.mubr.bf16.mxu0 %v1574
    %1758 = vmatmul.mubr.bf16.gmra.mrb[0].mxu0 %v1573
    %v1759 = vpop.f32.mrb[0].mxu0
    %v1760 = vadd.f32 0.0, %v1759
    %v1761 = vpop.f32.mrb[0].mxu0
    %v1762 = vadd.f32 0.0, %v1761
    %v1763 = vpop.f32.mrb[0].mxu0
    %v1764 = vadd.f32 0.0, %v1763
    %v1765 = vpop.f32.mrb[0].mxu0
    %v1766 = vadd.f32 0.0, %v1765
    %1767 = vmatprep.mubr.bf16.mxu0 %v1576
    %1768 = vmatmul.mubr.bf16.gmra.mrb[0].mxu0 %v1575
    %v1769 = vpop.f32.mrb[0].mxu0
    %v1770 = vadd.f32 0.0, %v1769
    %v1771 = vpop.f32.mrb[0].mxu0
    %v1772 = vadd.f32 0.0, %v1771
    %v1773 = vpop.f32.mrb[0].mxu0
    %v1774 = vadd.f32 0.0, %v1773
    %v1775 = vpop.f32.mrb[0].mxu0
    %v1776 = vadd.f32 0.0, %v1775
    %1777 = vmatprep.mubr.bf16.mxu0 %v1578
    %1778 = vmatmul.mubr.bf16.gmra.mrb[0].mxu0 %v1577
    %v1779 = vpop.f32.mrb[0].mxu0
    %v1780 = vadd.f32 0.0, %v1779
    %v1781 = vpop.f32.mrb[0].mxu0
    %v1782 = vadd.f32 0.0, %v1781
    %v1783 = vpop.f32.mrb[0].mxu0
    %v1784 = vadd.f32 0.0, %v1783
    %v1785 = vpop.f32.mrb[0].mxu0
    %v1786 = vadd.f32 0.0, %v1785
    %1787 = vmatprep.mubr.bf16.mxu0 %v1580
    %1788 = vmatmul.mubr.bf16.gmra.mrb[0].mxu0 %v1579
    %v1789 = vpop.f32.mrb[0].mxu0
    %v1790 = vadd.f32 0.0, %v1789
    %v1791 = vpop.f32.mrb[0].mxu0
    %v1792 = vadd.f32 0.0, %v1791
    %v1793 = vpop.f32.mrb[0].mxu0
    %v1794 = vadd.f32 0.0, %v1793
    %v1795 = vpop.f32.mrb[0].mxu0
    %v1796 = vadd.f32 0.0, %v1795
    %1797 = vmatprep.mubr.bf16.mxu0 %v1582
    %1798 = vmatmul.mubr.bf16.gmra.mrb[0].mxu0 %v1581
    %v1799 = vpop.f32.mrb[0].mxu0
    %v1800 = vadd.f32 0.0, %v1799
    %v1801 = vpop.f32.mrb[0].mxu0
    %v1802 = vadd.f32 0.0, %v1801
    %v1803 = vpop.f32.mrb[0].mxu0
    %v1804 = vadd.f32 0.0, %v1803
    %v1805 = vpop.f32.mrb[0].mxu0
    %v1806 = vadd.f32 0.0, %v1805
    %1807 = vmatprep.mubr.bf16.mxu0 %v1584
    %1808 = vmatmul.mubr.bf16.gmra.mrb[0].mxu0 %v1583
    %v1809 = vpop.f32.mrb[0].mxu0
    %v1810 = vadd.f32 0.0, %v1809
    %v1811 = vpop.f32.mrb[0].mxu0
    %v1812 = vadd.f32 0.0, %v1811
    %v1813 = vpop.f32.mrb[0].mxu0
    %v1814 = vadd.f32 0.0, %v1813
    %v1815 = vpop.f32.mrb[0].mxu0
    %v1816 = vadd.f32 0.0, %v1815
    %1817 = vmatprep.mubr.bf16.mxu0 %v1586
    %1818 = vmatmul.mubr.bf16.gmra.mrb[0].mxu0 %v1585
    %v1819 = vpop.f32.mrb[0].mxu0
    %v1820 = vadd.f32 0.0, %v1819
    %v1821 = vpop.f32.mrb[0].mxu0
    %v1822 = vadd.f32 0.0, %v1821
    %v1823 = vpop.f32.mrb[0].mxu0
    %v1824 = vadd.f32 0.0, %v1823
    %v1825 = vpop.f32.mrb[0].mxu0
    %v1826 = vadd.f32 0.0, %v1825
    %1827 = vmatprep.mubr.bf16.mxu0 %v1588
    %1828 = vmatmul.mubr.bf16.gmra.mrb[0].mxu0 %v1587
    %v1829 = vpop.f32.mrb[0].mxu0
    %v1830 = vadd.f32 0.0, %v1829
    %v1831 = vpop.f32.mrb[0].mxu0
    %v1832 = vadd.f32 0.0, %v1831
    %v1833 = vpop.f32.mrb[0].mxu0
    %v1834 = vadd.f32 0.0, %v1833
    %v1835 = vpop.f32.mrb[0].mxu0
    %v1836 = vadd.f32 0.0, %v1835
    %1837 = vmatprep.mubr.bf16.mxu0 %v1590
    %1838 = vmatmul.mubr.bf16.gmra.mrb[0].mxu0 %v1589
    %v1839 = vpop.f32.mrb[0].mxu0
    %v1840 = vadd.f32 0.0, %v1839
    %v1841 = vpop.f32.mrb[0].mxu0
    %v1842 = vadd.f32 0.0, %v1841
    %v1843 = vpop.f32.mrb[0].mxu0
    %v1844 = vadd.f32 0.0, %v1843
    %v1845 = vpop.f32.mrb[0].mxu0
    %v1846 = vadd.f32 0.0, %v1845
    %1847 = vdwg.mxu0
    %1848 = vmatprep.subr.bf16.mxu0 %v1594
    %1849 = vmatpush1.bf16.msra.mxu0 %v1593
    %1850 = vmatprep.subr.bf16.mxu0 %v1598
    %1851 = vmatpush1.bf16.msra.mxu0 %v1597
    %1852 = vmatprep.subr.bf16.mxu0 %v1602
    %1853 = vmatpush1.bf16.msra.mxu0 %v1601
    %1854 = vmatprep.subr.bf16.mxu0 %v1606
    %1855 = vmatpush1.bf16.msra.mxu0 %v1605
    %1856 = vmatprep.subr.bf16.mxu0 %v1610
    %1857 = vmatpush1.bf16.msra.mxu0 %v1609
    %1858 = vmatprep.subr.bf16.mxu0 %v1614
    %1859 = vmatpush1.bf16.msra.mxu0 %v1613
    %1860 = vmatprep.subr.bf16.mxu0 %v1618
    %1861 = vmatpush1.bf16.msra.mxu0 %v1617
    %1862 = vmatprep.subr.bf16.mxu0 %v1622
    %1863 = vmatpush1.bf16.msra.mxu0 %v1621
    %1864 = vmatprep.subr.bf16.mxu0 %v1626
    %1865 = vmatpush1.bf16.msra.mxu0 %v1625
    %1866 = vmatprep.subr.bf16.mxu0 %v1630
    %1867 = vmatpush1.bf16.msra.mxu0 %v1629
    %1868 = vmatprep.subr.bf16.mxu0 %v1634
    %1869 = vmatpush1.bf16.msra.mxu0 %v1633
    %1870 = vmatprep.subr.bf16.mxu0 %v1638
    %1871 = vmatpush1.bf16.msra.mxu0 %v1637
    %1872 = vmatprep.subr.bf16.mxu0 %v1642
    %1873 = vmatpush1.bf16.msra.mxu0 %v1641
    %1874 = vmatprep.subr.bf16.mxu0 %v1646
    %1875 = vmatpush1.bf16.msra.mxu0 %v1645
    %1876 = vmatprep.subr.bf16.mxu0 %v1650
    %1877 = vmatpush1.bf16.msra.mxu0 %v1649
    %1878 = vmatprep.subr.bf16.mxu0 %v1654
    %1879 = vmatpush1.bf16.msra.mxu0 %v1653
    %1880 = vmatprep.mubr.bf16.mxu0 %v1560
    %1881 = vmatmul.mubr.bf16.gmra.mrb[0].mxu0 %v1559
    %v1882 = vpop.f32.mrb[0].mxu0
    %v1883 = vadd.f32 0.0, %v1882
    %v1884 = vpop.f32.mrb[0].mxu0
    %v1885 = vadd.f32 0.0, %v1884
    %v1886 = vpop.f32.mrb[0].mxu0
    %v1887 = vadd.f32 0.0, %v1886
    %v1888 = vpop.f32.mrb[0].mxu0
    %v1889 = vadd.f32 0.0, %v1888
    %1890 = vmatprep.mubr.bf16.mxu0 %v1562
    %1891 = vmatmul.mubr.bf16.gmra.mrb[0].mxu0 %v1561
    %v1892 = vpop.f32.mrb[0].mxu0
    %v1893 = vadd.f32 0.0, %v1892
    %v1894 = vpop.f32.mrb[0].mxu0
    %v1895 = vadd.f32 0.0, %v1894
    %v1896 = vpop.f32.mrb[0].mxu0
    %v1897 = vadd.f32 0.0, %v1896
    %v1898 = vpop.f32.mrb[0].mxu0
    %v1899 = vadd.f32 0.0, %v1898
    %1900 = vmatprep.mubr.bf16.mxu0 %v1564
    %1901 = vmatmul.mubr.bf16.gmra.mrb[0].mxu0 %v1563
    %v1902 = vpop.f32.mrb[0].mxu0
    %v1903 = vadd.f32 0.0, %v1902
    %v1904 = vpop.f32.mrb[0].mxu0
    %v1905 = vadd.f32 0.0, %v1904
    %v1906 = vpop.f32.mrb[0].mxu0
    %v1907 = vadd.f32 0.0, %v1906
    %v1908 = vpop.f32.mrb[0].mxu0
    %v1909 = vadd.f32 0.0, %v1908
    %1910 = vmatprep.mubr.bf16.mxu0 %v1566
    %1911 = vmatmul.mubr.bf16.gmra.mrb[0].mxu0 %v1565
    %v1912 = vpop.f32.mrb[0].mxu0
    %v1913 = vadd.f32 0.0, %v1912
    %v1914 = vpop.f32.mrb[0].mxu0
    %v1915 = vadd.f32 0.0, %v1914
    %v1916 = vpop.f32.mrb[0].mxu0
    %v1917 = vadd.f32 0.0, %v1916
    %v1918 = vpop.f32.mrb[0].mxu0
    %v1919 = vadd.f32 0.0, %v1918
    %1920 = vmatprep.mubr.bf16.mxu0 %v1568
    %1921 = vmatmul.mubr.bf16.gmra.mrb[0].mxu0 %v1567
    %v1922 = vpop.f32.mrb[0].mxu0
    %v1923 = vadd.f32 0.0, %v1922
    %v1924 = vpop.f32.mrb[0].mxu0
    %v1925 = vadd.f32 0.0, %v1924
    %v1926 = vpop.f32.mrb[0].mxu0
    %v1927 = vadd.f32 0.0, %v1926
    %v1928 = vpop.f32.mrb[0].mxu0
    %v1929 = vadd.f32 0.0, %v1928
    %1930 = vmatprep.mubr.bf16.mxu0 %v1570
    %1931 = vmatmul.mubr.bf16.gmra.mrb[0].mxu0 %v1569
    %v1932 = vpop.f32.mrb[0].mxu0
    %v1933 = vadd.f32 0.0, %v1932
    %v1934 = vpop.f32.mrb[0].mxu0
    %v1935 = vadd.f32 0.0, %v1934
    %v1936 = vpop.f32.mrb[0].mxu0
    %v1937 = vadd.f32 0.0, %v1936
    %v1938 = vpop.f32.mrb[0].mxu0
    %v1939 = vadd.f32 0.0, %v1938
    %1940 = vmatprep.mubr.bf16.mxu0 %v1572
    %1941 = vmatmul.mubr.bf16.gmra.mrb[0].mxu0 %v1571
    %v1942 = vpop.f32.mrb[0].mxu0
    %v1943 = vadd.f32 0.0, %v1942
    %v1944 = vpop.f32.mrb[0].mxu0
    %v1945 = vadd.f32 0.0, %v1944
    %v1946 = vpop.f32.mrb[0].mxu0
    %v1947 = vadd.f32 0.0, %v1946
    %v1948 = vpop.f32.mrb[0].mxu0
    %v1949 = vadd.f32 0.0, %v1948
    %1950 = vmatprep.mubr.bf16.mxu0 %v1574
    %1951 = vmatmul.mubr.bf16.gmra.mrb[0].mxu0 %v1573
    %v1952 = vpop.f32.mrb[0].mxu0
    %v1953 = vadd.f32 0.0, %v1952
    %v1954 = vpop.f32.mrb[0].mxu0
    %v1955 = vadd.f32 0.0, %v1954
    %v1956 = vpop.f32.mrb[0].mxu0
    %v1957 = vadd.f32 0.0, %v1956
    %v1958 = vpop.f32.mrb[0].mxu0
    %v1959 = vadd.f32 0.0, %v1958
    %1960 = vmatprep.mubr.bf16.mxu0 %v1576
    %1961 = vmatmul.mubr.bf16.gmra.mrb[0].mxu0 %v1575
    %v1962 = vpop.f32.mrb[0].mxu0
    %v1963 = vadd.f32 0.0, %v1962
    %v1964 = vpop.f32.mrb[0].mxu0
    %v1965 = vadd.f32 0.0, %v1964
    %v1966 = vpop.f32.mrb[0].mxu0
    %v1967 = vadd.f32 0.0, %v1966
    %v1968 = vpop.f32.mrb[0].mxu0
    %v1969 = vadd.f32 0.0, %v1968
    %1970 = vmatprep.mubr.bf16.mxu0 %v1578
    %1971 = vmatmul.mubr.bf16.gmra.mrb[0].mxu0 %v1577
    %v1972 = vpop.f32.mrb[0].mxu0
    %v1973 = vadd.f32 0.0, %v1972
    %v1974 = vpop.f32.mrb[0].mxu0
    %v1975 = vadd.f32 0.0, %v1974
    %v1976 = vpop.f32.mrb[0].mxu0
    %v1977 = vadd.f32 0.0, %v1976
    %v1978 = vpop.f32.mrb[0].mxu0
    %v1979 = vadd.f32 0.0, %v1978
    %1980 = vmatprep.mubr.bf16.mxu0 %v1580
    %1981 = vmatmul.mubr.bf16.gmra.mrb[0].mxu0 %v1579
    %v1982 = vpop.f32.mrb[0].mxu0
    %v1983 = vadd.f32 0.0, %v1982
    %v1984 = vpop.f32.mrb[0].mxu0
    %v1985 = vadd.f32 0.0, %v1984
    %v1986 = vpop.f32.mrb[0].mxu0
    %v1987 = vadd.f32 0.0, %v1986
    %v1988 = vpop.f32.mrb[0].mxu0
    %v1989 = vadd.f32 0.0, %v1988
    %1990 = vmatprep.mubr.bf16.mxu0 %v1582
    %1991 = vmatmul.mubr.bf16.gmra.mrb[0].mxu0 %v1581
    %v1992 = vpop.f32.mrb[0].mxu0
    %v1993 = vadd.f32 0.0, %v1992
    %v1994 = vpop.f32.mrb[0].mxu0
    %v1995 = vadd.f32 0.0, %v1994
    %v1996 = vpop.f32.mrb[0].mxu0
    %v1997 = vadd.f32 0.0, %v1996
    %v1998 = vpop.f32.mrb[0].mxu0
    %v1999 = vadd.f32 0.0, %v1998
    %2000 = vmatprep.mubr.bf16.mxu0 %v1584
    %2001 = vmatmul.mubr.bf16.gmra.mrb[0].mxu0 %v1583
    %v2002 = vpop.f32.mrb[0].mxu0
    %v2003 = vadd.f32 0.0, %v2002
    %v2004 = vpop.f32.mrb[0].mxu0
    %v2005 = vadd.f32 0.0, %v2004
    %v2006 = vpop.f32.mrb[0].mxu0
    %v2007 = vadd.f32 0.0, %v2006
    %v2008 = vpop.f32.mrb[0].mxu0
    %v2009 = vadd.f32 0.0, %v2008
    %2010 = vmatprep.mubr.bf16.mxu0 %v1586
    %2011 = vmatmul.mubr.bf16.gmra.mrb[0].mxu0 %v1585
    %v2012 = vpop.f32.mrb[0].mxu0
    %v2013 = vadd.f32 0.0, %v2012
    %v2014 = vpop.f32.mrb[0].mxu0
    %v2015 = vadd.f32 0.0, %v2014
    %v2016 = vpop.f32.mrb[0].mxu0
    %v2017 = vadd.f32 0.0, %v2016
    %v2018 = vpop.f32.mrb[0].mxu0
    %v2019 = vadd.f32 0.0, %v2018
    %2020 = vmatprep.mubr.bf16.mxu0 %v1588
    %2021 = vmatmul.mubr.bf16.gmra.mrb[0].mxu0 %v1587
    %v2022 = vpop.f32.mrb[0].mxu0
    %v2023 = vadd.f32 0.0, %v2022
    %v2024 = vpop.f32.mrb[0].mxu0
    %v2025 = vadd.f32 0.0, %v2024
    %v2026 = vpop.f32.mrb[0].mxu0
    %v2027 = vadd.f32 0.0, %v2026
    %v2028 = vpop.f32.mrb[0].mxu0
    %v2029 = vadd.f32 0.0, %v2028
    %2030 = vmatprep.mubr.bf16.mxu0 %v1590
    %2031 = vmatmul.mubr.bf16.gmra.mrb[0].mxu0 %v1589
    %v2032 = vpop.f32.mrb[0].mxu0
    %v2033 = vadd.f32 0.0, %v2032
    %v2034 = vpop.f32.mrb[0].mxu0
    %v2035 = vadd.f32 0.0, %v2034
    %v2036 = vpop.f32.mrb[0].mxu0
    %v2037 = vadd.f32 0.0, %v2036
    %v2038 = vpop.f32.mrb[0].mxu0
    %v2039 = vadd.f32 0.0, %v2038
    %2040 = vdwg.mxu0
    %v2041 = vadd.f32 %v1690, %v1694
    %v2042 = vadd.f32 %v2041, %v1700
    %v2043 = vadd.f32 %v2042, %v1704
    %v2044 = vadd.f32 %v2043, %v1710
    %v2045 = vadd.f32 %v2044, %v1714
    %v2046 = vadd.f32 %v2045, %v1720
    %v2047 = vadd.f32 %v2046, %v1724
    %v2048 = vadd.f32 %v2047, %v1730
    %v2049 = vadd.f32 %v2048, %v1734
    %v2050 = vadd.f32 %v2049, %v1740
    %v2051 = vadd.f32 %v2050, %v1744
    %v2052 = vadd.f32 %v2051, %v1750
    %v2053 = vadd.f32 %v2052, %v1754
    %v2054 = vadd.f32 %v2053, %v1760
    %v2055 = vadd.f32 %v2054, %v1764
    %v2056 = vadd.f32 %v2055, %v1770
    %v2057 = vadd.f32 %v2056, %v1774
    %v2058 = vadd.f32 %v2057, %v1780
    %v2059 = vadd.f32 %v2058, %v1784
    %v2060 = vadd.f32 %v2059, %v1790
    %v2061 = vadd.f32 %v2060, %v1794
    %v2062 = vadd.f32 %v2061, %v1800
    %v2063 = vadd.f32 %v2062, %v1804
    %v2064 = vadd.f32 %v2063, %v1810
    %v2065 = vadd.f32 %v2064, %v1814
    %v2066 = vadd.f32 %v2065, %v1820
    %v2067 = vadd.f32 %v2066, %v1824
    %v2068 = vadd.f32 %v2067, %v1830
    %v2069 = vadd.f32 %v2068, %v1834
    %v2070 = vadd.f32 %v2069, %v1840
    %v2071 = vadd.f32 %v2070, %v1844
    %v2072 = vrot.slane %v2071, 4
    %v2073 = vadd.f32 %v2071, %v2072
    %v2074 = vrot.slane %v2073, 2
    %v2075 = vadd.f32 %v2073, %v2074
    %v2076 = vrot.slane %v2075, 1
    %v2077 = vadd.f32 %v2075, %v2076
    %v2078 = vadd.f32 %v1692, %v1696
    %v2079 = vadd.f32 %v2078, %v1702
    %v2080 = vadd.f32 %v2079, %v1706
    %v2081 = vadd.f32 %v2080, %v1712
    %v2082 = vadd.f32 %v2081, %v1716
    %v2083 = vadd.f32 %v2082, %v1722
    %v2084 = vadd.f32 %v2083, %v1726
    %v2085 = vadd.f32 %v2084, %v1732
    %v2086 = vadd.f32 %v2085, %v1736
    %v2087 = vadd.f32 %v2086, %v1742
    %v2088 = vadd.f32 %v2087, %v1746
    %v2089 = vadd.f32 %v2088, %v1752
    %v2090 = vadd.f32 %v2089, %v1756
    %v2091 = vadd.f32 %v2090, %v1762
    %v2092 = vadd.f32 %v2091, %v1766
    %v2093 = vadd.f32 %v2092, %v1772
    %v2094 = vadd.f32 %v2093, %v1776
    %v2095 = vadd.f32 %v2094, %v1782
    %v2096 = vadd.f32 %v2095, %v1786
    %v2097 = vadd.f32 %v2096, %v1792
    %v2098 = vadd.f32 %v2097, %v1796
    %v2099 = vadd.f32 %v2098, %v1802
    %v2100 = vadd.f32 %v2099, %v1806
    %v2101 = vadd.f32 %v2100, %v1812
    %v2102 = vadd.f32 %v2101, %v1816
    %v2103 = vadd.f32 %v2102, %v1822
    %v2104 = vadd.f32 %v2103, %v1826
    %v2105 = vadd.f32 %v2104, %v1832
    %v2106 = vadd.f32 %v2105, %v1836
    %v2107 = vadd.f32 %v2106, %v1842
    %v2108 = vadd.f32 %v2107, %v1846
    %v2109 = vrot.slane %v2108, 4
    %v2110 = vadd.f32 %v2108, %v2109
    %v2111 = vrot.slane %v2110, 2
    %v2112 = vadd.f32 %v2110, %v2111
    %v2113 = vrot.slane %v2112, 1
    %v2114 = vadd.f32 %v2112, %v2113
    %v2115 = vadd.f32 %v1883, %v1887
    %v2116 = vadd.f32 %v2115, %v1893
    %v2117 = vadd.f32 %v2116, %v1897
    %v2118 = vadd.f32 %v2117, %v1903
    %v2119 = vadd.f32 %v2118, %v1907
    %v2120 = vadd.f32 %v2119, %v1913
    %v2121 = vadd.f32 %v2120, %v1917
    %v2122 = vadd.f32 %v2121, %v1923
    %v2123 = vadd.f32 %v2122, %v1927
    %v2124 = vadd.f32 %v2123, %v1933
    %v2125 = vadd.f32 %v2124, %v1937
    %v2126 = vadd.f32 %v2125, %v1943
    %v2127 = vadd.f32 %v2126, %v1947
    %v2128 = vadd.f32 %v2127, %v1953
    %v2129 = vadd.f32 %v2128, %v1957
    %v2130 = vadd.f32 %v2129, %v1963
    %v2131 = vadd.f32 %v2130, %v1967
    %v2132 = vadd.f32 %v2131, %v1973
    %v2133 = vadd.f32 %v2132, %v1977
    %v2134 = vadd.f32 %v2133, %v1983
    %v2135 = vadd.f32 %v2134, %v1987
    %v2136 = vadd.f32 %v2135, %v1993
    %v2137 = vadd.f32 %v2136, %v1997
    %v2138 = vadd.f32 %v2137, %v2003
    %v2139 = vadd.f32 %v2138, %v2007
    %v2140 = vadd.f32 %v2139, %v2013
    %v2141 = vadd.f32 %v2140, %v2017
    %v2142 = vadd.f32 %v2141, %v2023
    %v2143 = vadd.f32 %v2142, %v2027
    %v2144 = vadd.f32 %v2143, %v2033
    %v2145 = vadd.f32 %v2144, %v2037
    %v2146 = vrot.slane %v2145, 4
    %v2147 = vadd.f32 %v2145, %v2146
    %v2148 = vrot.slane %v2147, 2
    %v2149 = vadd.f32 %v2147, %v2148
    %v2150 = vrot.slane %v2149, 1
    %v2151 = vadd.f32 %v2149, %v2150
    %v2152 = vadd.f32 %v1885, %v1889
    %v2153 = vadd.f32 %v2152, %v1895
    %v2154 = vadd.f32 %v2153, %v1899
    %v2155 = vadd.f32 %v2154, %v1905
    %v2156 = vadd.f32 %v2155, %v1909
    %v2157 = vadd.f32 %v2156, %v1915
    %v2158 = vadd.f32 %v2157, %v1919
    %v2159 = vadd.f32 %v2158, %v1925
    %v2160 = vadd.f32 %v2159, %v1929
    %v2161 = vadd.f32 %v2160, %v1935
    %v2162 = vadd.f32 %v2161, %v1939
    %v2163 = vadd.f32 %v2162, %v1945
    %v2164 = vadd.f32 %v2163, %v1949
    %v2165 = vadd.f32 %v2164, %v1955
    %v2166 = vadd.f32 %v2165, %v1959
    %v2167 = vadd.f32 %v2166, %v1965
    %v2168 = vadd.f32 %v2167, %v1969
    %v2169 = vadd.f32 %v2168, %v1975
    %v2170 = vadd.f32 %v2169, %v1979
    %v2171 = vadd.f32 %v2170, %v1985
    %v2172 = vadd.f32 %v2171, %v1989
    %v2173 = vadd.f32 %v2172, %v1995
    %v2174 = vadd.f32 %v2173, %v1999
    %v2175 = vadd.f32 %v2174, %v2005
    %v2176 = vadd.f32 %v2175, %v2009
    %v2177 = vadd.f32 %v2176, %v2015
    %v2178 = vadd.f32 %v2177, %v2019
    %v2179 = vadd.f32 %v2178, %v2025
    %v2180 = vadd.f32 %v2179, %v2029
    %v2181 = vadd.f32 %v2180, %v2035
    %v2182 = vadd.f32 %v2181, %v2039
    %v2183 = vrot.slane %v2182, 4
    %v2184 = vadd.f32 %v2182, %v2183
    %v2185 = vrot.slane %v2184, 2
    %v2186 = vadd.f32 %v2184, %v2185
    %v2187 = vrot.slane %v2186, 1
    %v2188 = vadd.f32 %v2186, %v2187
    %v2189 = vmul.f32 %v2077, %v1022
    %v2190 = vmul.f32 %v2114, %v1022
    %v2191 = vmul.f32 %v2151, %v1022
    %v2192 = vmul.f32 %v2188, %v1022
    %v2193 = vmul.f32 %v1690, %v1690
    %v2194 = vmul.f32 %v1692, %v1692
    %v2195 = vmul.f32 %v1883, %v1883
    %v2196 = vmul.f32 %v1885, %v1885
    %v2197 = vmul.f32 %v1694, %v1694
    %v2198 = vmul.f32 %v1696, %v1696
    %v2199 = vmul.f32 %v1887, %v1887
    %v2200 = vmul.f32 %v1889, %v1889
    %v2201 = vmul.f32 %v1700, %v1700
    %v2202 = vmul.f32 %v1702, %v1702
    %v2203 = vmul.f32 %v1893, %v1893
    %v2204 = vmul.f32 %v1895, %v1895
    %v2205 = vmul.f32 %v1704, %v1704
    %v2206 = vmul.f32 %v1706, %v1706
    %v2207 = vmul.f32 %v1897, %v1897
    %v2208 = vmul.f32 %v1899, %v1899
    %v2209 = vmul.f32 %v1710, %v1710
    %v2210 = vmul.f32 %v1712, %v1712
    %v2211 = vmul.f32 %v1903, %v1903
    %v2212 = vmul.f32 %v1905, %v1905
    %v2213 = vmul.f32 %v1714, %v1714
    %v2214 = vmul.f32 %v1716, %v1716
    %v2215 = vmul.f32 %v1907, %v1907
    %v2216 = vmul.f32 %v1909, %v1909
    %v2217 = vmul.f32 %v1720, %v1720
    %v2218 = vmul.f32 %v1722, %v1722
    %v2219 = vmul.f32 %v1913, %v1913
    %v2220 = vmul.f32 %v1915, %v1915
    %v2221 = vmul.f32 %v1724, %v1724
    %v2222 = vmul.f32 %v1726, %v1726
    %v2223 = vmul.f32 %v1917, %v1917
    %v2224 = vmul.f32 %v1919, %v1919
    %v2225 = vmul.f32 %v1730, %v1730
    %v2226 = vmul.f32 %v1732, %v1732
    %v2227 = vmul.f32 %v1923, %v1923
    %v2228 = vmul.f32 %v1925, %v1925
    %v2229 = vmul.f32 %v1734, %v1734
    %v2230 = vmul.f32 %v1736, %v1736
    %v2231 = vmul.f32 %v1927, %v1927
    %v2232 = vmul.f32 %v1929, %v1929
    %v2233 = vmul.f32 %v1740, %v1740
    %v2234 = vmul.f32 %v1742, %v1742
    %v2235 = vmul.f32 %v1933, %v1933
    %v2236 = vmul.f32 %v1935, %v1935
    %v2237 = vmul.f32 %v1744, %v1744
    %v2238 = vmul.f32 %v1746, %v1746
    %v2239 = vmul.f32 %v1937, %v1937
    %v2240 = vmul.f32 %v1939, %v1939
    %v2241 = vmul.f32 %v1750, %v1750
    %v2242 = vmul.f32 %v1752, %v1752
    %v2243 = vmul.f32 %v1943, %v1943
    %v2244 = vmul.f32 %v1945, %v1945
    %v2245 = vmul.f32 %v1754, %v1754
    %v2246 = vmul.f32 %v1756, %v1756
    %v2247 = vmul.f32 %v1947, %v1947
    %v2248 = vmul.f32 %v1949, %v1949
    %v2249 = vmul.f32 %v1760, %v1760
    %v2250 = vmul.f32 %v1762, %v1762
    %v2251 = vmul.f32 %v1953, %v1953
    %v2252 = vmul.f32 %v1955, %v1955
    %v2253 = vmul.f32 %v1764, %v1764
    %v2254 = vmul.f32 %v1766, %v1766
    %v2255 = vmul.f32 %v1957, %v1957
    %v2256 = vmul.f32 %v1959, %v1959
    %v2257 = vmul.f32 %v1770, %v1770
    %v2258 = vmul.f32 %v1772, %v1772
    %v2259 = vmul.f32 %v1963, %v1963
    %v2260 = vmul.f32 %v1965, %v1965
    %v2261 = vmul.f32 %v1774, %v1774
    %v2262 = vmul.f32 %v1776, %v1776
    %v2263 = vmul.f32 %v1967, %v1967
    %v2264 = vmul.f32 %v1969, %v1969
    %v2265 = vmul.f32 %v1780, %v1780
    %v2266 = vmul.f32 %v1782, %v1782
    %v2267 = vmul.f32 %v1973, %v1973
    %v2268 = vmul.f32 %v1975, %v1975
    %v2269 = vmul.f32 %v1784, %v1784
    %v2270 = vmul.f32 %v1786, %v1786
    %v2271 = vmul.f32 %v1977, %v1977
    %v2272 = vmul.f32 %v1979, %v1979
    %v2273 = vmul.f32 %v1790, %v1790
    %v2274 = vmul.f32 %v1792, %v1792
    %v2275 = vmul.f32 %v1983, %v1983
    %v2276 = vmul.f32 %v1985, %v1985
    %v2277 = vmul.f32 %v1794, %v1794
    %v2278 = vmul.f32 %v1796, %v1796
    %v2279 = vmul.f32 %v1987, %v1987
    %v2280 = vmul.f32 %v1989, %v1989
    %v2281 = vmul.f32 %v1800, %v1800
    %v2282 = vmul.f32 %v1802, %v1802
    %v2283 = vmul.f32 %v1993, %v1993
    %v2284 = vmul.f32 %v1995, %v1995
    %v2285 = vmul.f32 %v1804, %v1804
    %v2286 = vmul.f32 %v1806, %v1806
    %v2287 = vmul.f32 %v1997, %v1997
    %v2288 = vmul.f32 %v1999, %v1999
    %v2289 = vmul.f32 %v1810, %v1810
    %v2290 = vmul.f32 %v1812, %v1812
    %v2291 = vmul.f32 %v2003, %v2003
    %v2292 = vmul.f32 %v2005, %v2005
    %v2293 = vmul.f32 %v1814, %v1814
    %v2294 = vmul.f32 %v1816, %v1816
    %v2295 = vmul.f32 %v2007, %v2007
    %v2296 = vmul.f32 %v2009, %v2009
    %v2297 = vmul.f32 %v1820, %v1820
    %v2298 = vmul.f32 %v1822, %v1822
    %v2299 = vmul.f32 %v2013, %v2013
    %v2300 = vmul.f32 %v2015, %v2015
    %v2301 = vmul.f32 %v1824, %v1824
    %v2302 = vmul.f32 %v1826, %v1826
    %v2303 = vmul.f32 %v2017, %v2017
    %v2304 = vmul.f32 %v2019, %v2019
    %v2305 = vmul.f32 %v1830, %v1830
    %v2306 = vmul.f32 %v1832, %v1832
    %v2307 = vmul.f32 %v2023, %v2023
    %v2308 = vmul.f32 %v2025, %v2025
    %v2309 = vmul.f32 %v1834, %v1834
    %v2310 = vmul.f32 %v1836, %v1836
    %v2311 = vmul.f32 %v2027, %v2027
    %v2312 = vmul.f32 %v2029, %v2029
    %v2313 = vmul.f32 %v1840, %v1840
    %v2314 = vmul.f32 %v1842, %v1842
    %v2315 = vmul.f32 %v2033, %v2033
    %v2316 = vmul.f32 %v2035, %v2035
    %v2317 = vmul.f32 %v1844, %v1844
    %v2318 = vmul.f32 %v1846, %v1846
    %v2319 = vmul.f32 %v2037, %v2037
    %v2320 = vmul.f32 %v2039, %v2039
    %v2321 = vadd.f32 %v2193, %v2197
    %v2322 = vadd.f32 %v2321, %v2201
    %v2323 = vadd.f32 %v2322, %v2205
    %v2324 = vadd.f32 %v2323, %v2209
    %v2325 = vadd.f32 %v2324, %v2213
    %v2326 = vadd.f32 %v2325, %v2217
    %v2327 = vadd.f32 %v2326, %v2221
    %v2328 = vadd.f32 %v2327, %v2225
    %v2329 = vadd.f32 %v2328, %v2229
    %v2330 = vadd.f32 %v2329, %v2233
    %v2331 = vadd.f32 %v2330, %v2237
    %v2332 = vadd.f32 %v2331, %v2241
    %v2333 = vadd.f32 %v2332, %v2245
    %v2334 = vadd.f32 %v2333, %v2249
    %v2335 = vadd.f32 %v2334, %v2253
    %v2336 = vadd.f32 %v2335, %v2257
    %v2337 = vadd.f32 %v2336, %v2261
    %v2338 = vadd.f32 %v2337, %v2265
    %v2339 = vadd.f32 %v2338, %v2269
    %v2340 = vadd.f32 %v2339, %v2273
    %v2341 = vadd.f32 %v2340, %v2277
    %v2342 = vadd.f32 %v2341, %v2281
    %v2343 = vadd.f32 %v2342, %v2285
    %v2344 = vadd.f32 %v2343, %v2289
    %v2345 = vadd.f32 %v2344, %v2293
    %v2346 = vadd.f32 %v2345, %v2297
    %v2347 = vadd.f32 %v2346, %v2301
    %v2348 = vadd.f32 %v2347, %v2305
    %v2349 = vadd.f32 %v2348, %v2309
    %v2350 = vadd.f32 %v2349, %v2313
    %v2351 = vadd.f32 %v2350, %v2317
    %v2352 = vrot.slane %v2351, 4
    %v2353 = vadd.f32 %v2351, %v2352
    %v2354 = vrot.slane %v2353, 2
    %v2355 = vadd.f32 %v2353, %v2354
    %v2356 = vrot.slane %v2355, 1
    %v2357 = vadd.f32 %v2355, %v2356
    %v2358 = vadd.f32 %v2194, %v2198
    %v2359 = vadd.f32 %v2358, %v2202
    %v2360 = vadd.f32 %v2359, %v2206
    %v2361 = vadd.f32 %v2360, %v2210
    %v2362 = vadd.f32 %v2361, %v2214
    %v2363 = vadd.f32 %v2362, %v2218
    %v2364 = vadd.f32 %v2363, %v2222
    %v2365 = vadd.f32 %v2364, %v2226
    %v2366 = vadd.f32 %v2365, %v2230
    %v2367 = vadd.f32 %v2366, %v2234
    %v2368 = vadd.f32 %v2367, %v2238
    %v2369 = vadd.f32 %v2368, %v2242
    %v2370 = vadd.f32 %v2369, %v2246
    %v2371 = vadd.f32 %v2370, %v2250
    %v2372 = vadd.f32 %v2371, %v2254
    %v2373 = vadd.f32 %v2372, %v2258
    %v2374 = vadd.f32 %v2373, %v2262
    %v2375 = vadd.f32 %v2374, %v2266
    %v2376 = vadd.f32 %v2375, %v2270
    %v2377 = vadd.f32 %v2376, %v2274
    %v2378 = vadd.f32 %v2377, %v2278
    %v2379 = vadd.f32 %v2378, %v2282
    %v2380 = vadd.f32 %v2379, %v2286
    %v2381 = vadd.f32 %v2380, %v2290
    %v2382 = vadd.f32 %v2381, %v2294
    %v2383 = vadd.f32 %v2382, %v2298
    %v2384 = vadd.f32 %v2383, %v2302
    %v2385 = vadd.f32 %v2384, %v2306
    %v2386 = vadd.f32 %v2385, %v2310
    %v2387 = vadd.f32 %v2386, %v2314
    %v2388 = vadd.f32 %v2387, %v2318
    %v2389 = vrot.slane %v2388, 4
    %v2390 = vadd.f32 %v2388, %v2389
    %v2391 = vrot.slane %v2390, 2
    %v2392 = vadd.f32 %v2390, %v2391
    %v2393 = vrot.slane %v2392, 1
    %v2394 = vadd.f32 %v2392, %v2393
    %v2395 = vadd.f32 %v2195, %v2199
    %v2396 = vadd.f32 %v2395, %v2203
    %v2397 = vadd.f32 %v2396, %v2207
    %v2398 = vadd.f32 %v2397, %v2211
    %v2399 = vadd.f32 %v2398, %v2215
    %v2400 = vadd.f32 %v2399, %v2219
    %v2401 = vadd.f32 %v2400, %v2223
    %v2402 = vadd.f32 %v2401, %v2227
    %v2403 = vadd.f32 %v2402, %v2231
    %v2404 = vadd.f32 %v2403, %v2235
    %v2405 = vadd.f32 %v2404, %v2239
    %v2406 = vadd.f32 %v2405, %v2243
    %v2407 = vadd.f32 %v2406, %v2247
    %v2408 = vadd.f32 %v2407, %v2251
    %v2409 = vadd.f32 %v2408, %v2255
    %v2410 = vadd.f32 %v2409, %v2259
    %v2411 = vadd.f32 %v2410, %v2263
    %v2412 = vadd.f32 %v2411, %v2267
    %v2413 = vadd.f32 %v2412, %v2271
    %v2414 = vadd.f32 %v2413, %v2275
    %v2415 = vadd.f32 %v2414, %v2279
    %v2416 = vadd.f32 %v2415, %v2283
    %v2417 = vadd.f32 %v2416, %v2287
    %v2418 = vadd.f32 %v2417, %v2291
    %v2419 = vadd.f32 %v2418, %v2295
    %v2420 = vadd.f32 %v2419, %v2299
    %v2421 = vadd.f32 %v2420, %v2303
    %v2422 = vadd.f32 %v2421, %v2307
    %v2423 = vadd.f32 %v2422, %v2311
    %v2424 = vadd.f32 %v2423, %v2315
    %v2425 = vadd.f32 %v2424, %v2319
    %v2426 = vrot.slane %v2425, 4
    %v2427 = vadd.f32 %v2425, %v2426
    %v2428 = vrot.slane %v2427, 2
    %v2429 = vadd.f32 %v2427, %v2428
    %v2430 = vrot.slane %v2429, 1
    %v2431 = vadd.f32 %v2429, %v2430
    %v2432 = vadd.f32 %v2196, %v2200
    %v2433 = vadd.f32 %v2432, %v2204
    %v2434 = vadd.f32 %v2433, %v2208
    %v2435 = vadd.f32 %v2434, %v2212
    %v2436 = vadd.f32 %v2435, %v2216
    %v2437 = vadd.f32 %v2436, %v2220
    %v2438 = vadd.f32 %v2437, %v2224
    %v2439 = vadd.f32 %v2438, %v2228
    %v2440 = vadd.f32 %v2439, %v2232
    %v2441 = vadd.f32 %v2440, %v2236
    %v2442 = vadd.f32 %v2441, %v2240
    %v2443 = vadd.f32 %v2442, %v2244
    %v2444 = vadd.f32 %v2443, %v2248
    %v2445 = vadd.f32 %v2444, %v2252
    %v2446 = vadd.f32 %v2445, %v2256
    %v2447 = vadd.f32 %v2446, %v2260
    %v2448 = vadd.f32 %v2447, %v2264
    %v2449 = vadd.f32 %v2448, %v2268
    %v2450 = vadd.f32 %v2449, %v2272
    %v2451 = vadd.f32 %v2450, %v2276
    %v2452 = vadd.f32 %v2451, %v2280
    %v2453 = vadd.f32 %v2452, %v2284
    %v2454 = vadd.f32 %v2453, %v2288
    %v2455 = vadd.f32 %v2454, %v2292
    %v2456 = vadd.f32 %v2455, %v2296
    %v2457 = vadd.f32 %v2456, %v2300
    %v2458 = vadd.f32 %v2457, %v2304
    %v2459 = vadd.f32 %v2458, %v2308
    %v2460 = vadd.f32 %v2459, %v2312
    %v2461 = vadd.f32 %v2460, %v2316
    %v2462 = vadd.f32 %v2461, %v2320
    %v2463 = vrot.slane %v2462, 4
    %v2464 = vadd.f32 %v2462, %v2463
    %v2465 = vrot.slane %v2464, 2
    %v2466 = vadd.f32 %v2464, %v2465
    %v2467 = vrot.slane %v2466, 1
    %v2468 = vadd.f32 %v2466, %v2467
    %v2469 = vmul.f32 %v2357, %v1022
    %v2470 = vmul.f32 %v2394, %v1022
    %v2471 = vmul.f32 %v2431, %v1022
    %v2472 = vmul.f32 %v2468, %v1022
    %v2473 = vmul.f32 %v2189, %v2189
    %v2474 = vmul.f32 %v2190, %v2190
    %v2475 = vmul.f32 %v2191, %v2191
    %v2476 = vmul.f32 %v2192, %v2192
    %v2477 = vsub.f32 %v2469, %v2473
    %v2478 = vsub.f32 %v2470, %v2474
    %v2479 = vsub.f32 %v2471, %v2475
    %v2480 = vsub.f32 %v2472, %v2476
    %v2481 = vadd.f32 %v2477, 0.8
    %v2482 = vadd.f32 %v2478, 0.8
    %v2483 = vadd.f32 %v2479, 0.8
    %v2484 = vadd.f32 %v2480, 0.8
    %v2485 = vrsqrt.pop %v2481
    %v2486 = vrsqrt.pop %v2482
    %v2487 = vrsqrt.pop %v2483
    %v2488 = vrsqrt.pop %v2484
    %v2493 = vcombine.low %v2485, %v2486
    %v2494 = vcombine.low %v2487, %v2488
    %v2496 = vunpack.c.l.s4 1966171168
    %v2497 = vunpack.c.0.s8 %v2496
    %v2498 = vlaneseq
    %v2499 = vshrl.u32 %v2498, 7
    %v2500 = vsub.s32 %v2497, %v2499
    %v2501 = vrot.slane %v2493, %v2500
    %v2503 = vunpack.c.l.s4 1966171168
    %v2504 = vunpack.c.0.s8 %v2503
    %v2505 = vlaneseq
    %v2506 = vshrl.u32 %v2505, 7
    %v2507 = vsub.s32 %v2504, %v2506
    %v2508 = vrot.slane %v2494, %v2507
    %v2509 = vcombine.low %v2501, %v2508
    %v2511 = vunpack.c.l.s4 1966171168
    %v2512 = vunpack.c.0.s8 %v2511
    %v2513 = vlaneseq
    %v2514 = vshrl.u32 %v2513, 7
    %v2515 = vsub.s32 %v2512, %v2514
    %v2516 = vrot.slane %v2509, %v2515
    %v2518 = vmul.f32 %v183, %v2516
    %v2520 = vlaneseq
    %v2521 = vshrl.u32 %v2520, 7
    %v2522 = vsub.s32 0, %v2521
    %v2523 = vrot.slane %v2518, %v2522
    %v2524 = vlaneseq
    %v2525 = vshrl.u32 %v2524, 7
    %v2526 = vsub.s32 1, %v2525
    %v2527 = vrot.slane %v2518, %v2526
    %v2528 = vlaneseq
    %v2529 = vshrl.u32 %v2528, 7
    %v2530 = vsub.s32 2, %v2529
    %v2531 = vrot.slane %v2518, %v2530
    %v2532 = vlaneseq
    %v2533 = vshrl.u32 %v2532, 7
    %v2534 = vsub.s32 3, %v2533
    %v2535 = vrot.slane %v2518, %v2534
    %v2540 = vmul.f32 %v2189, %v2523
    %v2541 = vmul.f32 %v2190, %v2527
    %v2542 = vmul.f32 %v2191, %v2531
    %v2543 = vmul.f32 %v2192, %v2535
    %v2548 = vcombine.low %v2540, %v2541
    %v2549 = vcombine.low %v2542, %v2543
    %v2551 = vunpack.c.l.s4 1966171168
    %v2552 = vunpack.c.0.s8 %v2551
    %v2553 = vlaneseq
    %v2554 = vshrl.u32 %v2553, 7
    %v2555 = vsub.s32 %v2552, %v2554
    %v2556 = vrot.slane %v2548, %v2555
    %v2558 = vunpack.c.l.s4 1966171168
    %v2559 = vunpack.c.0.s8 %v2558
    %v2560 = vlaneseq
    %v2561 = vshrl.u32 %v2560, 7
    %v2562 = vsub.s32 %v2559, %v2561
    %v2563 = vrot.slane %v2549, %v2562
    %v2564 = vcombine.low %v2556, %v2563
    %v2566 = vunpack.c.l.s4 1966171168
    %v2567 = vunpack.c.0.s8 %v2566
    %v2568 = vlaneseq
    %v2569 = vshrl.u32 %v2568, 7
    %v2570 = vsub.s32 %v2567, %v2569
    %v2571 = vrot.slane %v2564, %v2570
    %v2573 = vsub.f32 %v184, %v2571
    %v2574 = vmul.f32 %v1690, %v2523
    %v2575 = vmul.f32 %v1692, %v2527
    %v2576 = vmul.f32 %v1883, %v2531
    %v2577 = vmul.f32 %v1885, %v2535
    %v2578 = vmul.f32 %v1694, %v2523
    %v2579 = vmul.f32 %v1696, %v2527
    %v2580 = vmul.f32 %v1887, %v2531
    %v2581 = vmul.f32 %v1889, %v2535
    %v2582 = vmul.f32 %v1700, %v2523
    %v2583 = vmul.f32 %v1702, %v2527
    %v2584 = vmul.f32 %v1893, %v2531
    %v2585 = vmul.f32 %v1895, %v2535
    %v2586 = vmul.f32 %v1704, %v2523
    %v2587 = vmul.f32 %v1706, %v2527
    %v2588 = vmul.f32 %v1897, %v2531
    %v2589 = vmul.f32 %v1899, %v2535
    %v2590 = vmul.f32 %v1710, %v2523
    %v2591 = vmul.f32 %v1712, %v2527
    %v2592 = vmul.f32 %v1903, %v2531
    %v2593 = vmul.f32 %v1905, %v2535
    %v2594 = vmul.f32 %v1714, %v2523
    %v2595 = vmul.f32 %v1716, %v2527
    %v2596 = vmul.f32 %v1907, %v2531
    %v2597 = vmul.f32 %v1909, %v2535
    %v2598 = vmul.f32 %v1720, %v2523
    %v2599 = vmul.f32 %v1722, %v2527
    %v2600 = vmul.f32 %v1913, %v2531
    %v2601 = vmul.f32 %v1915, %v2535
    %v2602 = vmul.f32 %v1724, %v2523
    %v2603 = vmul.f32 %v1726, %v2527
    %v2604 = vmul.f32 %v1917, %v2531
    %v2605 = vmul.f32 %v1919, %v2535
    %v2606 = vmul.f32 %v1730, %v2523
    %v2607 = vmul.f32 %v1732, %v2527
    %v2608 = vmul.f32 %v1923, %v2531
    %v2609 = vmul.f32 %v1925, %v2535
    %v2610 = vmul.f32 %v1734, %v2523
    %v2611 = vmul.f32 %v1736, %v2527
    %v2612 = vmul.f32 %v1927, %v2531
    %v2613 = vmul.f32 %v1929, %v2535
    %v2614 = vmul.f32 %v1740, %v2523
    %v2615 = vmul.f32 %v1742, %v2527
    %v2616 = vmul.f32 %v1933, %v2531
    %v2617 = vmul.f32 %v1935, %v2535
    %v2618 = vmul.f32 %v1744, %v2523
    %v2619 = vmul.f32 %v1746, %v2527
    %v2620 = vmul.f32 %v1937, %v2531
    %v2621 = vmul.f32 %v1939, %v2535
    %v2622 = vmul.f32 %v1750, %v2523
    %v2623 = vmul.f32 %v1752, %v2527
    %v2624 = vmul.f32 %v1943, %v2531
    %v2625 = vmul.f32 %v1945, %v2535
    %v2626 = vmul.f32 %v1754, %v2523
    %v2627 = vmul.f32 %v1756, %v2527
    %v2628 = vmul.f32 %v1947, %v2531
    %v2629 = vmul.f32 %v1949, %v2535
    %v2630 = vmul.f32 %v1760, %v2523
    %v2631 = vmul.f32 %v1762, %v2527
    %v2632 = vmul.f32 %v1953, %v2531
    %v2633 = vmul.f32 %v1955, %v2535
    %v2634 = vmul.f32 %v1764, %v2523
    %v2635 = vmul.f32 %v1766, %v2527
    %v2636 = vmul.f32 %v1957, %v2531
    %v2637 = vmul.f32 %v1959, %v2535
    %v2638 = vmul.f32 %v1770, %v2523
    %v2639 = vmul.f32 %v1772, %v2527
    %v2640 = vmul.f32 %v1963, %v2531
    %v2641 = vmul.f32 %v1965, %v2535
    %v2642 = vmul.f32 %v1774, %v2523
    %v2643 = vmul.f32 %v1776, %v2527
    %v2644 = vmul.f32 %v1967, %v2531
    %v2645 = vmul.f32 %v1969, %v2535
    %v2646 = vmul.f32 %v1780, %v2523
    %v2647 = vmul.f32 %v1782, %v2527
    %v2648 = vmul.f32 %v1973, %v2531
    %v2649 = vmul.f32 %v1975, %v2535
    %v2650 = vmul.f32 %v1784, %v2523
    %v2651 = vmul.f32 %v1786, %v2527
    %v2652 = vmul.f32 %v1977, %v2531
    %v2653 = vmul.f32 %v1979, %v2535
    %v2654 = vmul.f32 %v1790, %v2523
    %v2655 = vmul.f32 %v1792, %v2527
    %v2656 = vmul.f32 %v1983, %v2531
    %v2657 = vmul.f32 %v1985, %v2535
    %v2658 = vmul.f32 %v1794, %v2523
    %v2659 = vmul.f32 %v1796, %v2527
    %v2660 = vmul.f32 %v1987, %v2531
    %v2661 = vmul.f32 %v1989, %v2535
    %v2662 = vmul.f32 %v1800, %v2523
    %v2663 = vmul.f32 %v1802, %v2527
    %v2664 = vmul.f32 %v1993, %v2531
    %v2665 = vmul.f32 %v1995, %v2535
    %v2666 = vmul.f32 %v1804, %v2523
    %v2667 = vmul.f32 %v1806, %v2527
    %v2668 = vmul.f32 %v1997, %v2531
    %v2669 = vmul.f32 %v1999, %v2535
    %v2670 = vmul.f32 %v1810, %v2523
    %v2671 = vmul.f32 %v1812, %v2527
    %v2672 = vmul.f32 %v2003, %v2531
    %v2673 = vmul.f32 %v2005, %v2535
    %v2674 = vmul.f32 %v1814, %v2523
    %v2675 = vmul.f32 %v1816, %v2527
    %v2676 = vmul.f32 %v2007, %v2531
    %v2677 = vmul.f32 %v2009, %v2535
    %v2678 = vmul.f32 %v1820, %v2523
    %v2679 = vmul.f32 %v1822, %v2527
    %v2680 = vmul.f32 %v2013, %v2531
    %v2681 = vmul.f32 %v2015, %v2535
    %v2682 = vmul.f32 %v1824, %v2523
    %v2683 = vmul.f32 %v1826, %v2527
    %v2684 = vmul.f32 %v2017, %v2531
    %v2685 = vmul.f32 %v2019, %v2535
    %v2686 = vmul.f32 %v1830, %v2523
    %v2687 = vmul.f32 %v1832, %v2527
    %v2688 = vmul.f32 %v2023, %v2531
    %v2689 = vmul.f32 %v2025, %v2535
    %v2690 = vmul.f32 %v1834, %v2523
    %v2691 = vmul.f32 %v1836, %v2527
    %v2692 = vmul.f32 %v2027, %v2531
    %v2693 = vmul.f32 %v2029, %v2535
    %v2694 = vmul.f32 %v1840, %v2523
    %v2695 = vmul.f32 %v1842, %v2527
    %v2696 = vmul.f32 %v2033, %v2531
    %v2697 = vmul.f32 %v2035, %v2535
    %v2698 = vmul.f32 %v1844, %v2523
    %v2699 = vmul.f32 %v1846, %v2527
    %v2700 = vmul.f32 %v2037, %v2531
    %v2701 = vmul.f32 %v2039, %v2535
    %v2703 = vlaneseq
    %v2704 = vshrl.u32 %v2703, 7
    %v2705 = vsub.s32 0, %v2704
    %v2706 = vrot.slane %v2573, %v2705
    %v2707 = vlaneseq
    %v2708 = vshrl.u32 %v2707, 7
    %v2709 = vsub.s32 1, %v2708
    %v2710 = vrot.slane %v2573, %v2709
    %v2711 = vlaneseq
    %v2712 = vshrl.u32 %v2711, 7
    %v2713 = vsub.s32 2, %v2712
    %v2714 = vrot.slane %v2573, %v2713
    %v2715 = vlaneseq
    %v2716 = vshrl.u32 %v2715, 7
    %v2717 = vsub.s32 3, %v2716
    %v2718 = vrot.slane %v2573, %v2717
    %v2723 = vadd.f32 %v2574, %v2706
    %v2724 = vadd.f32 %v2575, %v2710
    %v2725 = vadd.f32 %v2576, %v2714
    %v2726 = vadd.f32 %v2577, %v2718
    %v2727 = vadd.f32 %v2578, %v2706
    %v2728 = vadd.f32 %v2579, %v2710
    %v2729 = vadd.f32 %v2580, %v2714
    %v2730 = vadd.f32 %v2581, %v2718
    %v2731 = vadd.f32 %v2582, %v2706
    %v2732 = vadd.f32 %v2583, %v2710
    %v2733 = vadd.f32 %v2584, %v2714
    %v2734 = vadd.f32 %v2585, %v2718
    %v2735 = vadd.f32 %v2586, %v2706
    %v2736 = vadd.f32 %v2587, %v2710
    %v2737 = vadd.f32 %v2588, %v2714
    %v2738 = vadd.f32 %v2589, %v2718
    %v2739 = vadd.f32 %v2590, %v2706
    %v2740 = vadd.f32 %v2591, %v2710
    %v2741 = vadd.f32 %v2592, %v2714
    %v2742 = vadd.f32 %v2593, %v2718
    %v2743 = vadd.f32 %v2594, %v2706
    %v2744 = vadd.f32 %v2595, %v2710
    %v2745 = vadd.f32 %v2596, %v2714
    %v2746 = vadd.f32 %v2597, %v2718
    %v2747 = vadd.f32 %v2598, %v2706
    %v2748 = vadd.f32 %v2599, %v2710
    %v2749 = vadd.f32 %v2600, %v2714
    %v2750 = vadd.f32 %v2601, %v2718
    %v2751 = vadd.f32 %v2602, %v2706
    %v2752 = vadd.f32 %v2603, %v2710
    %v2753 = vadd.f32 %v2604, %v2714
    %v2754 = vadd.f32 %v2605, %v2718
    %v2755 = vadd.f32 %v2606, %v2706
    %v2756 = vadd.f32 %v2607, %v2710
    %v2757 = vadd.f32 %v2608, %v2714
    %v2758 = vadd.f32 %v2609, %v2718
    %v2759 = vadd.f32 %v2610, %v2706
    %v2760 = vadd.f32 %v2611, %v2710
    %v2761 = vadd.f32 %v2612, %v2714
    %v2762 = vadd.f32 %v2613, %v2718
    %v2763 = vadd.f32 %v2614, %v2706
    %v2764 = vadd.f32 %v2615, %v2710
    %v2765 = vadd.f32 %v2616, %v2714
    %v2766 = vadd.f32 %v2617, %v2718
    %v2767 = vadd.f32 %v2618, %v2706
    %v2768 = vadd.f32 %v2619, %v2710
    %v2769 = vadd.f32 %v2620, %v2714
    %v2770 = vadd.f32 %v2621, %v2718
    %v2771 = vadd.f32 %v2622, %v2706
    %v2772 = vadd.f32 %v2623, %v2710
    %v2773 = vadd.f32 %v2624, %v2714
    %v2774 = vadd.f32 %v2625, %v2718
    %v2775 = vadd.f32 %v2626, %v2706
    %v2776 = vadd.f32 %v2627, %v2710
    %v2777 = vadd.f32 %v2628, %v2714
    %v2778 = vadd.f32 %v2629, %v2718
    %v2779 = vadd.f32 %v2630, %v2706
    %v2780 = vadd.f32 %v2631, %v2710
    %v2781 = vadd.f32 %v2632, %v2714
    %v2782 = vadd.f32 %v2633, %v2718
    %v2783 = vadd.f32 %v2634, %v2706
    %v2784 = vadd.f32 %v2635, %v2710
    %v2785 = vadd.f32 %v2636, %v2714
    %v2786 = vadd.f32 %v2637, %v2718
    %v2787 = vadd.f32 %v2638, %v2706
    %v2788 = vadd.f32 %v2639, %v2710
    %v2789 = vadd.f32 %v2640, %v2714
    %v2790 = vadd.f32 %v2641, %v2718
    %v2791 = vadd.f32 %v2642, %v2706
    %v2792 = vadd.f32 %v2643, %v2710
    %v2793 = vadd.f32 %v2644, %v2714
    %v2794 = vadd.f32 %v2645, %v2718
    %v2795 = vadd.f32 %v2646, %v2706
    %v2796 = vadd.f32 %v2647, %v2710
    %v2797 = vadd.f32 %v2648, %v2714
    %v2798 = vadd.f32 %v2649, %v2718
    %v2799 = vadd.f32 %v2650, %v2706
    %v2800 = vadd.f32 %v2651, %v2710
    %v2801 = vadd.f32 %v2652, %v2714
    %v2802 = vadd.f32 %v2653, %v2718
    %v2803 = vadd.f32 %v2654, %v2706
    %v2804 = vadd.f32 %v2655, %v2710
    %v2805 = vadd.f32 %v2656, %v2714
    %v2806 = vadd.f32 %v2657, %v2718
    %v2807 = vadd.f32 %v2658, %v2706
    %v2808 = vadd.f32 %v2659, %v2710
    %v2809 = vadd.f32 %v2660, %v2714
    %v2810 = vadd.f32 %v2661, %v2718
    %v2811 = vadd.f32 %v2662, %v2706
    %v2812 = vadd.f32 %v2663, %v2710
    %v2813 = vadd.f32 %v2664, %v2714
    %v2814 = vadd.f32 %v2665, %v2718
    %v2815 = vadd.f32 %v2666, %v2706
    %v2816 = vadd.f32 %v2667, %v2710
    %v2817 = vadd.f32 %v2668, %v2714
    %v2818 = vadd.f32 %v2669, %v2718
    %v2819 = vadd.f32 %v2670, %v2706
    %v2820 = vadd.f32 %v2671, %v2710
    %v2821 = vadd.f32 %v2672, %v2714
    %v2822 = vadd.f32 %v2673, %v2718
    %v2823 = vadd.f32 %v2674, %v2706
    %v2824 = vadd.f32 %v2675, %v2710
    %v2825 = vadd.f32 %v2676, %v2714
    %v2826 = vadd.f32 %v2677, %v2718
    %v2827 = vadd.f32 %v2678, %v2706
    %v2828 = vadd.f32 %v2679, %v2710
    %v2829 = vadd.f32 %v2680, %v2714
    %v2830 = vadd.f32 %v2681, %v2718
    %v2831 = vadd.f32 %v2682, %v2706
    %v2832 = vadd.f32 %v2683, %v2710
    %v2833 = vadd.f32 %v2684, %v2714
    %v2834 = vadd.f32 %v2685, %v2718
    %v2835 = vadd.f32 %v2686, %v2706
    %v2836 = vadd.f32 %v2687, %v2710
    %v2837 = vadd.f32 %v2688, %v2714
    %v2838 = vadd.f32 %v2689, %v2718
    %v2839 = vadd.f32 %v2690, %v2706
    %v2840 = vadd.f32 %v2691, %v2710
    %v2841 = vadd.f32 %v2692, %v2714
    %v2842 = vadd.f32 %v2693, %v2718
    %v2843 = vadd.f32 %v2694, %v2706
    %v2844 = vadd.f32 %v2695, %v2710
    %v2845 = vadd.f32 %v2696, %v2714
    %v2846 = vadd.f32 %v2697, %v2718
    %v2847 = vadd.f32 %v2698, %v2706
    %v2848 = vadd.f32 %v2699, %v2710
    %v2849 = vadd.f32 %v2700, %v2714
    %v2850 = vadd.f32 %v2701, %v2718
    %vm2851 = vcmp.gt.f32.partialorder %v2723, 0.0
    %vm2852 = vcmp.gt.f32.partialorder %v2724, 0.0
    %vm2853 = vcmp.gt.f32.partialorder %v2725, 0.0
    %vm2854 = vcmp.gt.f32.partialorder %v2726, 0.0
    %vm2855 = vcmp.gt.f32.partialorder %v2727, 0.0
    %vm2856 = vcmp.gt.f32.partialorder %v2728, 0.0
    %vm2857 = vcmp.gt.f32.partialorder %v2729, 0.0
    %vm2858 = vcmp.gt.f32.partialorder %v2730, 0.0
    %vm2859 = vcmp.gt.f32.partialorder %v2731, 0.0
    %vm2860 = vcmp.gt.f32.partialorder %v2732, 0.0
    %vm2861 = vcmp.gt.f32.partialorder %v2733, 0.0
    %vm2862 = vcmp.gt.f32.partialorder %v2734, 0.0
    %vm2863 = vcmp.gt.f32.partialorder %v2735, 0.0
    %vm2864 = vcmp.gt.f32.partialorder %v2736, 0.0
    %vm2865 = vcmp.gt.f32.partialorder %v2737, 0.0
    %vm2866 = vcmp.gt.f32.partialorder %v2738, 0.0
    %vm2867 = vcmp.gt.f32.partialorder %v2739, 0.0
    %vm2868 = vcmp.gt.f32.partialorder %v2740, 0.0
    %vm2869 = vcmp.gt.f32.partialorder %v2741, 0.0
    %vm2870 = vcmp.gt.f32.partialorder %v2742, 0.0
    %vm2871 = vcmp.gt.f32.partialorder %v2743, 0.0
    %vm2872 = vcmp.gt.f32.partialorder %v2744, 0.0
    %vm2873 = vcmp.gt.f32.partialorder %v2745, 0.0
    %vm2874 = vcmp.gt.f32.partialorder %v2746, 0.0
    %vm2875 = vcmp.gt.f32.partialorder %v2747, 0.0
    %vm2876 = vcmp.gt.f32.partialorder %v2748, 0.0
    %vm2877 = vcmp.gt.f32.partialorder %v2749, 0.0
    %vm2878 = vcmp.gt.f32.partialorder %v2750, 0.0
    %vm2879 = vcmp.gt.f32.partialorder %v2751, 0.0
    %vm2880 = vcmp.gt.f32.partialorder %v2752, 0.0
    %vm2881 = vcmp.gt.f32.partialorder %v2753, 0.0
    %vm2882 = vcmp.gt.f32.partialorder %v2754, 0.0
    %vm2883 = vcmp.gt.f32.partialorder %v2755, 0.0
    %vm2884 = vcmp.gt.f32.partialorder %v2756, 0.0
    %vm2885 = vcmp.gt.f32.partialorder %v2757, 0.0
    %vm2886 = vcmp.gt.f32.partialorder %v2758, 0.0
    %vm2887 = vcmp.gt.f32.partialorder %v2759, 0.0
    %vm2888 = vcmp.gt.f32.partialorder %v2760, 0.0
    %vm2889 = vcmp.gt.f32.partialorder %v2761, 0.0
    %vm2890 = vcmp.gt.f32.partialorder %v2762, 0.0
    %vm2891 = vcmp.gt.f32.partialorder %v2763, 0.0
    %vm2892 = vcmp.gt.f32.partialorder %v2764, 0.0
    %vm2893 = vcmp.gt.f32.partialorder %v2765, 0.0
    %vm2894 = vcmp.gt.f32.partialorder %v2766, 0.0
    %vm2895 = vcmp.gt.f32.partialorder %v2767, 0.0
    %vm2896 = vcmp.gt.f32.partialorder %v2768, 0.0
    %vm2897 = vcmp.gt.f32.partialorder %v2769, 0.0
    %vm2898 = vcmp.gt.f32.partialorder %v2770, 0.0
    %vm2899 = vcmp.gt.f32.partialorder %v2771, 0.0
    %vm2900 = vcmp.gt.f32.partialorder %v2772, 0.0
    %vm2901 = vcmp.gt.f32.partialorder %v2773, 0.0
    %vm2902 = vcmp.gt.f32.partialorder %v2774, 0.0
    %vm2903 = vcmp.gt.f32.partialorder %v2775, 0.0
    %vm2904 = vcmp.gt.f32.partialorder %v2776, 0.0
    %vm2905 = vcmp.gt.f32.partialorder %v2777, 0.0
    %vm2906 = vcmp.gt.f32.partialorder %v2778, 0.0
    %vm2907 = vcmp.gt.f32.partialorder %v2779, 0.0
    %vm2908 = vcmp.gt.f32.partialorder %v2780, 0.0
    %vm2909 = vcmp.gt.f32.partialorder %v2781, 0.0
    %vm2910 = vcmp.gt.f32.partialorder %v2782, 0.0
    %vm2911 = vcmp.gt.f32.partialorder %v2783, 0.0
    %vm2912 = vcmp.gt.f32.partialorder %v2784, 0.0
    %vm2913 = vcmp.gt.f32.partialorder %v2785, 0.0
    %vm2914 = vcmp.gt.f32.partialorder %v2786, 0.0
    %vm2915 = vcmp.gt.f32.partialorder %v2787, 0.0
    %vm2916 = vcmp.gt.f32.partialorder %v2788, 0.0
    %vm2917 = vcmp.gt.f32.partialorder %v2789, 0.0
    %vm2918 = vcmp.gt.f32.partialorder %v2790, 0.0
    %vm2919 = vcmp.gt.f32.partialorder %v2791, 0.0
    %vm2920 = vcmp.gt.f32.partialorder %v2792, 0.0
    %vm2921 = vcmp.gt.f32.partialorder %v2793, 0.0
    %vm2922 = vcmp.gt.f32.partialorder %v2794, 0.0
    %vm2923 = vcmp.gt.f32.partialorder %v2795, 0.0
    %vm2924 = vcmp.gt.f32.partialorder %v2796, 0.0
    %vm2925 = vcmp.gt.f32.partialorder %v2797, 0.0
    %vm2926 = vcmp.gt.f32.partialorder %v2798, 0.0
    %vm2927 = vcmp.gt.f32.partialorder %v2799, 0.0
    %vm2928 = vcmp.gt.f32.partialorder %v2800, 0.0
    %vm2929 = vcmp.gt.f32.partialorder %v2801, 0.0
    %vm2930 = vcmp.gt.f32.partialorder %v2802, 0.0
    %vm2931 = vcmp.gt.f32.partialorder %v2803, 0.0
    %vm2932 = vcmp.gt.f32.partialorder %v2804, 0.0
    %vm2933 = vcmp.gt.f32.partialorder %v2805, 0.0
    %vm2934 = vcmp.gt.f32.partialorder %v2806, 0.0
    %vm2935 = vcmp.gt.f32.partialorder %v2807, 0.0
    %vm2936 = vcmp.gt.f32.partialorder %v2808, 0.0
    %vm2937 = vcmp.gt.f32.partialorder %v2809, 0.0
    %vm2938 = vcmp.gt.f32.partialorder %v2810, 0.0
    %vm2939 = vcmp.gt.f32.partialorder %v2811, 0.0
    %vm2940 = vcmp.gt.f32.partialorder %v2812, 0.0
    %vm2941 = vcmp.gt.f32.partialorder %v2813, 0.0
    %vm2942 = vcmp.gt.f32.partialorder %v2814, 0.0
    %vm2943 = vcmp.gt.f32.partialorder %v2815, 0.0
    %vm2944 = vcmp.gt.f32.partialorder %v2816, 0.0
    %vm2945 = vcmp.gt.f32.partialorder %v2817, 0.0
    %vm2946 = vcmp.gt.f32.partialorder %v2818, 0.0
    %vm2947 = vcmp.gt.f32.partialorder %v2819, 0.0
    %vm2948 = vcmp.gt.f32.partialorder %v2820, 0.0
    %vm2949 = vcmp.gt.f32.partialorder %v2821, 0.0
    %vm2950 = vcmp.gt.f32.partialorder %v2822, 0.0
    %vm2951 = vcmp.gt.f32.partialorder %v2823, 0.0
    %vm2952 = vcmp.gt.f32.partialorder %v2824, 0.0
    %vm2953 = vcmp.gt.f32.partialorder %v2825, 0.0
    %vm2954 = vcmp.gt.f32.partialorder %v2826, 0.0
    %vm2955 = vcmp.gt.f32.partialorder %v2827, 0.0
    %vm2956 = vcmp.gt.f32.partialorder %v2828, 0.0
    %vm2957 = vcmp.gt.f32.partialorder %v2829, 0.0
    %vm2958 = vcmp.gt.f32.partialorder %v2830, 0.0
    %vm2959 = vcmp.gt.f32.partialorder %v2831, 0.0
    %vm2960 = vcmp.gt.f32.partialorder %v2832, 0.0
    %vm2961 = vcmp.gt.f32.partialorder %v2833, 0.0
    %vm2962 = vcmp.gt.f32.partialorder %v2834, 0.0
    %vm2963 = vcmp.gt.f32.partialorder %v2835, 0.0
    %vm2964 = vcmp.gt.f32.partialorder %v2836, 0.0
    %vm2965 = vcmp.gt.f32.partialorder %v2837, 0.0
    %vm2966 = vcmp.gt.f32.partialorder %v2838, 0.0
    %vm2967 = vcmp.gt.f32.partialorder %v2839, 0.0
    %vm2968 = vcmp.gt.f32.partialorder %v2840, 0.0
    %vm2969 = vcmp.gt.f32.partialorder %v2841, 0.0
    %vm2970 = vcmp.gt.f32.partialorder %v2842, 0.0
    %vm2971 = vcmp.gt.f32.partialorder %v2843, 0.0
    %vm2972 = vcmp.gt.f32.partialorder %v2844, 0.0
    %vm2973 = vcmp.gt.f32.partialorder %v2845, 0.0
    %vm2974 = vcmp.gt.f32.partialorder %v2846, 0.0
    %vm2975 = vcmp.gt.f32.partialorder %v2847, 0.0
    %vm2976 = vcmp.gt.f32.partialorder %v2848, 0.0
    %vm2977 = vcmp.gt.f32.partialorder %v2849, 0.0
    %vm2978 = vcmp.gt.f32.partialorder %v2850, 0.0
    %v2979 = vmul.f32 %v2723, 0.2
    %v2980 = vmul.f32 %v2724, 0.2
    %v2981 = vmul.f32 %v2725, 0.2
    %v2982 = vmul.f32 %v2726, 0.2
    %v2983 = vmul.f32 %v2727, 0.2
    %v2984 = vmul.f32 %v2728, 0.2
    %v2985 = vmul.f32 %v2729, 0.2
    %v2986 = vmul.f32 %v2730, 0.2
    %v2987 = vmul.f32 %v2731, 0.2
    %v2988 = vmul.f32 %v2732, 0.2
    %v2989 = vmul.f32 %v2733, 0.2
    %v2990 = vmul.f32 %v2734, 0.2
    %v2991 = vmul.f32 %v2735, 0.2
    %v2992 = vmul.f32 %v2736, 0.2
    %v2993 = vmul.f32 %v2737, 0.2
    %v2994 = vmul.f32 %v2738, 0.2
    %v2995 = vmul.f32 %v2739, 0.2
    %v2996 = vmul.f32 %v2740, 0.2
    %v2997 = vmul.f32 %v2741, 0.2
    %v2998 = vmul.f32 %v2742, 0.2
    %v2999 = vmul.f32 %v2743, 0.2
    %v3000 = vmul.f32 %v2744, 0.2
    %v3001 = vmul.f32 %v2745, 0.2
    %v3002 = vmul.f32 %v2746, 0.2
    %v3003 = vmul.f32 %v2747, 0.2
    %v3004 = vmul.f32 %v2748, 0.2
    %v3005 = vmul.f32 %v2749, 0.2
    %v3006 = vmul.f32 %v2750, 0.2
    %v3007 = vmul.f32 %v2751, 0.2
    %v3008 = vmul.f32 %v2752, 0.2
    %v3009 = vmul.f32 %v2753, 0.2
    %v3010 = vmul.f32 %v2754, 0.2
    %v3011 = vmul.f32 %v2755, 0.2
    %v3012 = vmul.f32 %v2756, 0.2
    %v3013 = vmul.f32 %v2757, 0.2
    %v3014 = vmul.f32 %v2758, 0.2
    %v3015 = vmul.f32 %v2759, 0.2
    %v3016 = vmul.f32 %v2760, 0.2
    %v3017 = vmul.f32 %v2761, 0.2
    %v3018 = vmul.f32 %v2762, 0.2
    %v3019 = vmul.f32 %v2763, 0.2
    %v3020 = vmul.f32 %v2764, 0.2
    %v3021 = vmul.f32 %v2765, 0.2
    %v3022 = vmul.f32 %v2766, 0.2
    %v3023 = vmul.f32 %v2767, 0.2
    %v3024 = vmul.f32 %v2768, 0.2
    %v3025 = vmul.f32 %v2769, 0.2
    %v3026 = vmul.f32 %v2770, 0.2
    %v3027 = vmul.f32 %v2771, 0.2
    %v3028 = vmul.f32 %v2772, 0.2
    %v3029 = vmul.f32 %v2773, 0.2
    %v3030 = vmul.f32 %v2774, 0.2
    %v3031 = vmul.f32 %v2775, 0.2
    %v3032 = vmul.f32 %v2776, 0.2
    %v3033 = vmul.f32 %v2777, 0.2
    %v3034 = vmul.f32 %v2778, 0.2
    %v3035 = vmul.f32 %v2779, 0.2
    %v3036 = vmul.f32 %v2780, 0.2
    %v3037 = vmul.f32 %v2781, 0.2
    %v3038 = vmul.f32 %v2782, 0.2
    %v3039 = vmul.f32 %v2783, 0.2
    %v3040 = vmul.f32 %v2784, 0.2
    %v3041 = vmul.f32 %v2785, 0.2
    %v3042 = vmul.f32 %v2786, 0.2
    %v3043 = vmul.f32 %v2787, 0.2
    %v3044 = vmul.f32 %v2788, 0.2
    %v3045 = vmul.f32 %v2789, 0.2
    %v3046 = vmul.f32 %v2790, 0.2
    %v3047 = vmul.f32 %v2791, 0.2
    %v3048 = vmul.f32 %v2792, 0.2
    %v3049 = vmul.f32 %v2793, 0.2
    %v3050 = vmul.f32 %v2794, 0.2
    %v3051 = vmul.f32 %v2795, 0.2
    %v3052 = vmul.f32 %v2796, 0.2
    %v3053 = vmul.f32 %v2797, 0.2
    %v3054 = vmul.f32 %v2798, 0.2
    %v3055 = vmul.f32 %v2799, 0.2
    %v3056 = vmul.f32 %v2800, 0.2
    %v3057 = vmul.f32 %v2801, 0.2
    %v3058 = vmul.f32 %v2802, 0.2
    %v3059 = vmul.f32 %v2803, 0.2
    %v3060 = vmul.f32 %v2804, 0.2
    %v3061 = vmul.f32 %v2805, 0.2
    %v3062 = vmul.f32 %v2806, 0.2
    %v3063 = vmul.f32 %v2807, 0.2
    %v3064 = vmul.f32 %v2808, 0.2
    %v3065 = vmul.f32 %v2809, 0.2
    %v3066 = vmul.f32 %v2810, 0.2
    %v3067 = vmul.f32 %v2811, 0.2
    %v3068 = vmul.f32 %v2812, 0.2
    %v3069 = vmul.f32 %v2813, 0.2
    %v3070 = vmul.f32 %v2814, 0.2
    %v3071 = vmul.f32 %v2815, 0.2
    %v3072 = vmul.f32 %v2816, 0.2
    %v3073 = vmul.f32 %v2817, 0.2
    %v3074 = vmul.f32 %v2818, 0.2
    %v3075 = vmul.f32 %v2819, 0.2
    %v3076 = vmul.f32 %v2820, 0.2
    %v3077 = vmul.f32 %v2821, 0.2
    %v3078 = vmul.f32 %v2822, 0.2
    %v3079 = vmul.f32 %v2823, 0.2
    %v3080 = vmul.f32 %v2824, 0.2
    %v3081 = vmul.f32 %v2825, 0.2
    %v3082 = vmul.f32 %v2826, 0.2
    %v3083 = vmul.f32 %v2827, 0.2
    %v3084 = vmul.f32 %v2828, 0.2
    %v3085 = vmul.f32 %v2829, 0.2
    %v3086 = vmul.f32 %v2830, 0.2
    %v3087 = vmul.f32 %v2831, 0.2
    %v3088 = vmul.f32 %v2832, 0.2
    %v3089 = vmul.f32 %v2833, 0.2
    %v3090 = vmul.f32 %v2834, 0.2
    %v3091 = vmul.f32 %v2835, 0.2
    %v3092 = vmul.f32 %v2836, 0.2
    %v3093 = vmul.f32 %v2837, 0.2
    %v3094 = vmul.f32 %v2838, 0.2
    %v3095 = vmul.f32 %v2839, 0.2
    %v3096 = vmul.f32 %v2840, 0.2
    %v3097 = vmul.f32 %v2841, 0.2
    %v3098 = vmul.f32 %v2842, 0.2
    %v3099 = vmul.f32 %v2843, 0.2
    %v3100 = vmul.f32 %v2844, 0.2
    %v3101 = vmul.f32 %v2845, 0.2
    %v3102 = vmul.f32 %v2846, 0.2
    %v3103 = vmul.f32 %v2847, 0.2
    %v3104 = vmul.f32 %v2848, 0.2
    %v3105 = vmul.f32 %v2849, 0.2
    %v3106 = vmul.f32 %v2850, 0.2
    %v3107 = vsel %vm2851, %v2723, %v2979
    %v3108 = vsel %vm2852, %v2724, %v2980
    %v3109 = vsel %vm2853, %v2725, %v2981
    %v3110 = vsel %vm2854, %v2726, %v2982
    %v3111 = vsel %vm2855, %v2727, %v2983
    %v3112 = vsel %vm2856, %v2728, %v2984
    %v3113 = vsel %vm2857, %v2729, %v2985
    %v3114 = vsel %vm2858, %v2730, %v2986
    %v3115 = vsel %vm2859, %v2731, %v2987
    %v3116 = vsel %vm2860, %v2732, %v2988
    %v3117 = vsel %vm2861, %v2733, %v2989
    %v3118 = vsel %vm2862, %v2734, %v2990
    %v3119 = vsel %vm2863, %v2735, %v2991
    %v3120 = vsel %vm2864, %v2736, %v2992
    %v3121 = vsel %vm2865, %v2737, %v2993
    %v3122 = vsel %vm2866, %v2738, %v2994
    %v3123 = vsel %vm2867, %v2739, %v2995
    %v3124 = vsel %vm2868, %v2740, %v2996
    %v3125 = vsel %vm2869, %v2741, %v2997
    %v3126 = vsel %vm2870, %v2742, %v2998
    %v3127 = vsel %vm2871, %v2743, %v2999
    %v3128 = vsel %vm2872, %v2744, %v3000
    %v3129 = vsel %vm2873, %v2745, %v3001
    %v3130 = vsel %vm2874, %v2746, %v3002
    %v3131 = vsel %vm2875, %v2747, %v3003
    %v3132 = vsel %vm2876, %v2748, %v3004
    %v3133 = vsel %vm2877, %v2749, %v3005
    %v3134 = vsel %vm2878, %v2750, %v3006
    %v3135 = vsel %vm2879, %v2751, %v3007
    %v3136 = vsel %vm2880, %v2752, %v3008
    %v3137 = vsel %vm2881, %v2753, %v3009
    %v3138 = vsel %vm2882, %v2754, %v3010
    %v3139 = vsel %vm2883, %v2755, %v3011
    %v3140 = vsel %vm2884, %v2756, %v3012
    %v3141 = vsel %vm2885, %v2757, %v3013
    %v3142 = vsel %vm2886, %v2758, %v3014
    %v3143 = vsel %vm2887, %v2759, %v3015
    %v3144 = vsel %vm2888, %v2760, %v3016
    %v3145 = vsel %vm2889, %v2761, %v3017
    %v3146 = vsel %vm2890, %v2762, %v3018
    %v3147 = vsel %vm2891, %v2763, %v3019
    %v3148 = vsel %vm2892, %v2764, %v3020
    %v3149 = vsel %vm2893, %v2765, %v3021
    %v3150 = vsel %vm2894, %v2766, %v3022
    %v3151 = vsel %vm2895, %v2767, %v3023
    %v3152 = vsel %vm2896, %v2768, %v3024
    %v3153 = vsel %vm2897, %v2769, %v3025
    %v3154 = vsel %vm2898, %v2770, %v3026
    %v3155 = vsel %vm2899, %v2771, %v3027
    %v3156 = vsel %vm2900, %v2772, %v3028
    %v3157 = vsel %vm2901, %v2773, %v3029
    %v3158 = vsel %vm2902, %v2774, %v3030
    %v3159 = vsel %vm2903, %v2775, %v3031
    %v3160 = vsel %vm2904, %v2776, %v3032
    %v3161 = vsel %vm2905, %v2777, %v3033
    %v3162 = vsel %vm2906, %v2778, %v3034
    %v3163 = vsel %vm2907, %v2779, %v3035
    %v3164 = vsel %vm2908, %v2780, %v3036
    %v3165 = vsel %vm2909, %v2781, %v3037
    %v3166 = vsel %vm2910, %v2782, %v3038
    %v3167 = vsel %vm2911, %v2783, %v3039
    %v3168 = vsel %vm2912, %v2784, %v3040
    %v3169 = vsel %vm2913, %v2785, %v3041
    %v3170 = vsel %vm2914, %v2786, %v3042
    %v3171 = vsel %vm2915, %v2787, %v3043
    %v3172 = vsel %vm2916, %v2788, %v3044
    %v3173 = vsel %vm2917, %v2789, %v3045
    %v3174 = vsel %vm2918, %v2790, %v3046
    %v3175 = vsel %vm2919, %v2791, %v3047
    %v3176 = vsel %vm2920, %v2792, %v3048
    %v3177 = vsel %vm2921, %v2793, %v3049
    %v3178 = vsel %vm2922, %v2794, %v3050
    %v3179 = vsel %vm2923, %v2795, %v3051
    %v3180 = vsel %vm2924, %v2796, %v3052
    %v3181 = vsel %vm2925, %v2797, %v3053
    %v3182 = vsel %vm2926, %v2798, %v3054
    %v3183 = vsel %vm2927, %v2799, %v3055
    %v3184 = vsel %vm2928, %v2800, %v3056
    %v3185 = vsel %vm2929, %v2801, %v3057
    %v3186 = vsel %vm2930, %v2802, %v3058
    %v3187 = vsel %vm2931, %v2803, %v3059
    %v3188 = vsel %vm2932, %v2804, %v3060
    %v3189 = vsel %vm2933, %v2805, %v3061
    %v3190 = vsel %vm2934, %v2806, %v3062
    %v3191 = vsel %vm2935, %v2807, %v3063
    %v3192 = vsel %vm2936, %v2808, %v3064
    %v3193 = vsel %vm2937, %v2809, %v3065
    %v3194 = vsel %vm2938, %v2810, %v3066
    %v3195 = vsel %vm2939, %v2811, %v3067
    %v3196 = vsel %vm2940, %v2812, %v3068
    %v3197 = vsel %vm2941, %v2813, %v3069
    %v3198 = vsel %vm2942, %v2814, %v3070
    %v3199 = vsel %vm2943, %v2815, %v3071
    %v3200 = vsel %vm2944, %v2816, %v3072
    %v3201 = vsel %vm2945, %v2817, %v3073
    %v3202 = vsel %vm2946, %v2818, %v3074
    %v3203 = vsel %vm2947, %v2819, %v3075
    %v3204 = vsel %vm2948, %v2820, %v3076
    %v3205 = vsel %vm2949, %v2821, %v3077
    %v3206 = vsel %vm2950, %v2822, %v3078
    %v3207 = vsel %vm2951, %v2823, %v3079
    %v3208 = vsel %vm2952, %v2824, %v3080
    %v3209 = vsel %vm2953, %v2825, %v3081
    %v3210 = vsel %vm2954, %v2826, %v3082
    %v3211 = vsel %vm2955, %v2827, %v3083
    %v3212 = vsel %vm2956, %v2828, %v3084
    %v3213 = vsel %vm2957, %v2829, %v3085
    %v3214 = vsel %vm2958, %v2830, %v3086
    %v3215 = vsel %vm2959, %v2831, %v3087
    %v3216 = vsel %vm2960, %v2832, %v3088
    %v3217 = vsel %vm2961, %v2833, %v3089
    %v3218 = vsel %vm2962, %v2834, %v3090
    %v3219 = vsel %vm2963, %v2835, %v3091
    %v3220 = vsel %vm2964, %v2836, %v3092
    %v3221 = vsel %vm2965, %v2837, %v3093
    %v3222 = vsel %vm2966, %v2838, %v3094
    %v3223 = vsel %vm2967, %v2839, %v3095
    %v3224 = vsel %vm2968, %v2840, %v3096
    %v3225 = vsel %vm2969, %v2841, %v3097
    %v3226 = vsel %vm2970, %v2842, %v3098
    %v3227 = vsel %vm2971, %v2843, %v3099
    %v3228 = vsel %vm2972, %v2844, %v3100
    %v3229 = vsel %vm2973, %v2845, %v3101
    %v3230 = vsel %vm2974, %v2846, %v3102
    %v3231 = vsel %vm2975, %v2847, %v3103
    %v3232 = vsel %vm2976, %v2848, %v3104
    %v3233 = vsel %vm2977, %v2849, %v3105
    %v3234 = vsel %vm2978, %v2850, %v3106
    %s3235 = smul.u32 4, 64
    %s3236 = smul.u32 %s3235, 8
    %s3237 = sshll.u32 %s3236, 4
    %3238 = dma.done %s110, %s3237
    %v3239 = vpack.c.bf16 %v3111, %v3107
    %v3240 = vpack.c.bf16 %v3112, %v3108
    %v3241 = vpack.c.bf16 %v3113, %v3109
    %v3242 = vpack.c.bf16 %v3114, %v3110
    %v3243 = vpack.c.bf16 %v3119, %v3115
    %v3244 = vpack.c.bf16 %v3120, %v3116
    %v3245 = vpack.c.bf16 %v3121, %v3117
    %v3246 = vpack.c.bf16 %v3122, %v3118
    %v3247 = vpack.c.bf16 %v3127, %v3123
    %v3248 = vpack.c.bf16 %v3128, %v3124
    %v3249 = vpack.c.bf16 %v3129, %v3125
    %v3250 = vpack.c.bf16 %v3130, %v3126
    %v3251 = vpack.c.bf16 %v3135, %v3131
    %v3252 = vpack.c.bf16 %v3136, %v3132
    %v3253 = vpack.c.bf16 %v3137, %v3133
    %v3254 = vpack.c.bf16 %v3138, %v3134
    %v3255 = vpack.c.bf16 %v3143, %v3139
    %v3256 = vpack.c.bf16 %v3144, %v3140
    %v3257 = vpack.c.bf16 %v3145, %v3141
    %v3258 = vpack.c.bf16 %v3146, %v3142
    %v3259 = vpack.c.bf16 %v3151, %v3147
    %v3260 = vpack.c.bf16 %v3152, %v3148
    %v3261 = vpack.c.bf16 %v3153, %v3149
    %v3262 = vpack.c.bf16 %v3154, %v3150
    %v3263 = vpack.c.bf16 %v3159, %v3155
    %v3264 = vpack.c.bf16 %v3160, %v3156
    %v3265 = vpack.c.bf16 %v3161, %v3157
    %v3266 = vpack.c.bf16 %v3162, %v3158
    %v3267 = vpack.c.bf16 %v3167, %v3163
    %v3268 = vpack.c.bf16 %v3168, %v3164
    %v3269 = vpack.c.bf16 %v3169, %v3165
    %v3270 = vpack.c.bf16 %v3170, %v3166
    %v3271 = vpack.c.bf16 %v3175, %v3171
    %v3272 = vpack.c.bf16 %v3176, %v3172
    %v3273 = vpack.c.bf16 %v3177, %v3173
    %v3274 = vpack.c.bf16 %v3178, %v3174
    %v3275 = vpack.c.bf16 %v3183, %v3179
    %v3276 = vpack.c.bf16 %v3184, %v3180
    %v3277 = vpack.c.bf16 %v3185, %v3181
    %v3278 = vpack.c.bf16 %v3186, %v3182
    %v3279 = vpack.c.bf16 %v3191, %v3187
    %v3280 = vpack.c.bf16 %v3192, %v3188
    %v3281 = vpack.c.bf16 %v3193, %v3189
    %v3282 = vpack.c.bf16 %v3194, %v3190
    %v3283 = vpack.c.bf16 %v3199, %v3195
    %v3284 = vpack.c.bf16 %v3200, %v3196
    %v3285 = vpack.c.bf16 %v3201, %v3197
    %v3286 = vpack.c.bf16 %v3202, %v3198
    %v3287 = vpack.c.bf16 %v3207, %v3203
    %v3288 = vpack.c.bf16 %v3208, %v3204
    %v3289 = vpack.c.bf16 %v3209, %v3205
    %v3290 = vpack.c.bf16 %v3210, %v3206
    %v3291 = vpack.c.bf16 %v3215, %v3211
    %v3292 = vpack.c.bf16 %v3216, %v3212
    %v3293 = vpack.c.bf16 %v3217, %v3213
    %v3294 = vpack.c.bf16 %v3218, %v3214
    %v3295 = vpack.c.bf16 %v3223, %v3219
    %v3296 = vpack.c.bf16 %v3224, %v3220
    %v3297 = vpack.c.bf16 %v3225, %v3221
    %v3298 = vpack.c.bf16 %v3226, %v3222
    %v3299 = vpack.c.bf16 %v3231, %v3227
    %v3300 = vpack.c.bf16 %v3232, %v3228
    %v3301 = vpack.c.bf16 %v3233, %v3229
    %v3302 = vpack.c.bf16 %v3234, %v3230
    %v3303 = vld [vmem:[#allocation3] sm:$0xff]
    %v3304 = vld [vmem:[#allocation3 + $0x8] sm:$0xff]
    %v3305 = vld [vmem:[#allocation3 + $0x10] sm:$0xff]
    %v3306 = vld [vmem:[#allocation3 + $0x18] sm:$0xff]
    %v3307 = vld [vmem:[#allocation3 + $0x20] sm:$0xff]
    %v3308 = vld [vmem:[#allocation3 + $0x28] sm:$0xff]
    %v3309 = vld [vmem:[#allocation3 + $0x30] sm:$0xff]
    %v3310 = vld [vmem:[#allocation3 + $0x38] sm:$0xff]
    %v3311 = vld [vmem:[#allocation3 + $0x40] sm:$0xff]
    %v3312 = vld [vmem:[#allocation3 + $0x48] sm:$0xff]
    %v3313 = vld [vmem:[#allocation3 + $0x50] sm:$0xff]
    %v3314 = vld [vmem:[#allocation3 + $0x58] sm:$0xff]
    %v3315 = vld [vmem:[#allocation3 + $0x60] sm:$0xff]
    %v3316 = vld [vmem:[#allocation3 + $0x68] sm:$0xff]
    %v3317 = vld [vmem:[#allocation3 + $0x70] sm:$0xff]
    %v3318 = vld [vmem:[#allocation3 + $0x78] sm:$0xff]
    %v3319 = vld [vmem:[#allocation3 + $0x80] sm:$0xff]
    %v3320 = vld [vmem:[#allocation3 + $0x88] sm:$0xff]
    %v3321 = vld [vmem:[#allocation3 + $0x90] sm:$0xff]
    %v3322 = vld [vmem:[#allocation3 + $0x98] sm:$0xff]
    %v3323 = vld [vmem:[#allocation3 + $0xa0] sm:$0xff]
    %v3324 = vld [vmem:[#allocation3 + $0xa8] sm:$0xff]
    %v3325 = vld [vmem:[#allocation3 + $0xb0] sm:$0xff]
    %v3326 = vld [vmem:[#allocation3 + $0xb8] sm:$0xff]
    %v3327 = vld [vmem:[#allocation3 + $0xc0] sm:$0xff]
    %v3328 = vld [vmem:[#allocation3 + $0xc8] sm:$0xff]
    %v3329 = vld [vmem:[#allocation3 + $0xd0] sm:$0xff]
    %v3330 = vld [vmem:[#allocation3 + $0xd8] sm:$0xff]
    %v3331 = vld [vmem:[#allocation3 + $0xe0] sm:$0xff]
    %v3332 = vld [vmem:[#allocation3 + $0xe8] sm:$0xff]
    %v3333 = vld [vmem:[#allocation3 + $0xf0] sm:$0xff]
    %v3334 = vld [vmem:[#allocation3 + $0xf8] sm:$0xff]
    %v3335 = vld [vmem:[#allocation3 + $0x100] sm:$0xff]
    %v3336 = vld [vmem:[#allocation3 + $0x108] sm:$0xff]
    %v3337 = vld [vmem:[#allocation3 + $0x110] sm:$0xff]
    %v3338 = vld [vmem:[#allocation3 + $0x118] sm:$0xff]
    %v3339 = vld [vmem:[#allocation3 + $0x120] sm:$0xff]
    %v3340 = vld [vmem:[#allocation3 + $0x128] sm:$0xff]
    %v3341 = vld [vmem:[#allocation3 + $0x130] sm:$0xff]
    %v3342 = vld [vmem:[#allocation3 + $0x138] sm:$0xff]
    %v3343 = vld [vmem:[#allocation3 + $0x140] sm:$0xff]
    %v3344 = vld [vmem:[#allocation3 + $0x148] sm:$0xff]
    %v3345 = vld [vmem:[#allocation3 + $0x150] sm:$0xff]
    %v3346 = vld [vmem:[#allocation3 + $0x158] sm:$0xff]
    %v3347 = vld [vmem:[#allocation3 + $0x160] sm:$0xff]
    %v3348 = vld [vmem:[#allocation3 + $0x168] sm:$0xff]
    %v3349 = vld [vmem:[#allocation3 + $0x170] sm:$0xff]
    %v3350 = vld [vmem:[#allocation3 + $0x178] sm:$0xff]
    %v3351 = vld [vmem:[#allocation3 + $0x180] sm:$0xff]
    %v3352 = vld [vmem:[#allocation3 + $0x188] sm:$0xff]
    %v3353 = vld [vmem:[#allocation3 + $0x190] sm:$0xff]
    %v3354 = vld [vmem:[#allocation3 + $0x198] sm:$0xff]
    %v3355 = vld [vmem:[#allocation3 + $0x1a0] sm:$0xff]
    %v3356 = vld [vmem:[#allocation3 + $0x1a8] sm:$0xff]
    %v3357 = vld [vmem:[#allocation3 + $0x1b0] sm:$0xff]
    %v3358 = vld [vmem:[#allocation3 + $0x1b8] sm:$0xff]
    %v3359 = vld [vmem:[#allocation3 + $0x1c0] sm:$0xff]
    %v3360 = vld [vmem:[#allocation3 + $0x1c8] sm:$0xff]
    %v3361 = vld [vmem:[#allocation3 + $0x1d0] sm:$0xff]
    %v3362 = vld [vmem:[#allocation3 + $0x1d8] sm:$0xff]
    %v3363 = vld [vmem:[#allocation3 + $0x1e0] sm:$0xff]
    %v3364 = vld [vmem:[#allocation3 + $0x1e8] sm:$0xff]
    %v3365 = vld [vmem:[#allocation3 + $0x1f0] sm:$0xff]
    %v3366 = vld [vmem:[#allocation3 + $0x1f8] sm:$0xff]
    %v3367 = vld [vmem:[#allocation3 + $0x200] sm:$0xff]
    %v3368 = vld [vmem:[#allocation3 + $0x208] sm:$0xff]
    %v3369 = vld [vmem:[#allocation3 + $0x210] sm:$0xff]
    %v3370 = vld [vmem:[#allocation3 + $0x218] sm:$0xff]
    %v3371 = vld [vmem:[#allocation3 + $0x220] sm:$0xff]
    %v3372 = vld [vmem:[#allocation3 + $0x228] sm:$0xff]
    %v3373 = vld [vmem:[#allocation3 + $0x230] sm:$0xff]
    %v3374 = vld [vmem:[#allocation3 + $0x238] sm:$0xff]
    %v3375 = vld [vmem:[#allocation3 + $0x240] sm:$0xff]
    %v3376 = vld [vmem:[#allocation3 + $0x248] sm:$0xff]
    %v3377 = vld [vmem:[#allocation3 + $0x250] sm:$0xff]
    %v3378 = vld [vmem:[#allocation3 + $0x258] sm:$0xff]
    %v3379 = vld [vmem:[#allocation3 + $0x260] sm:$0xff]
    %v3380 = vld [vmem:[#allocation3 + $0x268] sm:$0xff]
    %v3381 = vld [vmem:[#allocation3 + $0x270] sm:$0xff]
    %v3382 = vld [vmem:[#allocation3 + $0x278] sm:$0xff]
    %v3383 = vld [vmem:[#allocation3 + $0x280] sm:$0xff]
    %v3384 = vld [vmem:[#allocation3 + $0x288] sm:$0xff]
    %v3385 = vld [vmem:[#allocation3 + $0x290] sm:$0xff]
    %v3386 = vld [vmem:[#allocation3 + $0x298] sm:$0xff]
    %v3387 = vld [vmem:[#allocation3 + $0x2a0] sm:$0xff]
    %v3388 = vld [vmem:[#allocation3 + $0x2a8] sm:$0xff]
    %v3389 = vld [vmem:[#allocation3 + $0x2b0] sm:$0xff]
    %v3390 = vld [vmem:[#allocation3 + $0x2b8] sm:$0xff]
    %v3391 = vld [vmem:[#allocation3 + $0x2c0] sm:$0xff]
    %v3392 = vld [vmem:[#allocation3 + $0x2c8] sm:$0xff]
    %v3393 = vld [vmem:[#allocation3 + $0x2d0] sm:$0xff]
    %v3394 = vld [vmem:[#allocation3 + $0x2d8] sm:$0xff]
    %v3395 = vld [vmem:[#allocation3 + $0x2e0] sm:$0xff]
    %v3396 = vld [vmem:[#allocation3 + $0x2e8] sm:$0xff]
    %v3397 = vld [vmem:[#allocation3 + $0x2f0] sm:$0xff]
    %v3398 = vld [vmem:[#allocation3 + $0x2f8] sm:$0xff]
    %v3399 = vld [vmem:[#allocation3 + $0x300] sm:$0xff]
    %v3400 = vld [vmem:[#allocation3 + $0x308] sm:$0xff]
    %v3401 = vld [vmem:[#allocation3 + $0x310] sm:$0xff]
    %v3402 = vld [vmem:[#allocation3 + $0x318] sm:$0xff]
    %v3403 = vld [vmem:[#allocation3 + $0x320] sm:$0xff]
    %v3404 = vld [vmem:[#allocation3 + $0x328] sm:$0xff]
    %v3405 = vld [vmem:[#allocation3 + $0x330] sm:$0xff]
    %v3406 = vld [vmem:[#allocation3 + $0x338] sm:$0xff]
    %v3407 = vld [vmem:[#allocation3 + $0x340] sm:$0xff]
    %v3408 = vld [vmem:[#allocation3 + $0x348] sm:$0xff]
    %v3409 = vld [vmem:[#allocation3 + $0x350] sm:$0xff]
    %v3410 = vld [vmem:[#allocation3 + $0x358] sm:$0xff]
    %v3411 = vld [vmem:[#allocation3 + $0x360] sm:$0xff]
    %v3412 = vld [vmem:[#allocation3 + $0x368] sm:$0xff]
    %v3413 = vld [vmem:[#allocation3 + $0x370] sm:$0xff]
    %v3414 = vld [vmem:[#allocation3 + $0x378] sm:$0xff]
    %v3415 = vld [vmem:[#allocation3 + $0x380] sm:$0xff]
    %v3416 = vld [vmem:[#allocation3 + $0x388] sm:$0xff]
    %v3417 = vld [vmem:[#allocation3 + $0x390] sm:$0xff]
    %v3418 = vld [vmem:[#allocation3 + $0x398] sm:$0xff]
    %v3419 = vld [vmem:[#allocation3 + $0x3a0] sm:$0xff]
    %v3420 = vld [vmem:[#allocation3 + $0x3a8] sm:$0xff]
    %v3421 = vld [vmem:[#allocation3 + $0x3b0] sm:$0xff]
    %v3422 = vld [vmem:[#allocation3 + $0x3b8] sm:$0xff]
    %v3423 = vld [vmem:[#allocation3 + $0x3c0] sm:$0xff]
    %v3424 = vld [vmem:[#allocation3 + $0x3c8] sm:$0xff]
    %v3425 = vld [vmem:[#allocation3 + $0x3d0] sm:$0xff]
    %v3426 = vld [vmem:[#allocation3 + $0x3d8] sm:$0xff]
    %v3427 = vld [vmem:[#allocation3 + $0x3e0] sm:$0xff]
    %v3428 = vld [vmem:[#allocation3 + $0x3e8] sm:$0xff]
    %v3429 = vld [vmem:[#allocation3 + $0x3f0] sm:$0xff]
    %v3430 = vld [vmem:[#allocation3 + $0x3f8] sm:$0xff]
    %v3431 = vld [vmem:[#allocation3 + $0x400] sm:$0xff]
    %v3432 = vld [vmem:[#allocation3 + $0x408] sm:$0xff]
    %v3433 = vld [vmem:[#allocation3 + $0x410] sm:$0xff]
    %v3434 = vld [vmem:[#allocation3 + $0x418] sm:$0xff]
    %v3435 = vld [vmem:[#allocation3 + $0x420] sm:$0xff]
    %v3436 = vld [vmem:[#allocation3 + $0x428] sm:$0xff]
    %v3437 = vld [vmem:[#allocation3 + $0x430] sm:$0xff]
    %v3438 = vld [vmem:[#allocation3 + $0x438] sm:$0xff]
    %v3439 = vld [vmem:[#allocation3 + $0x440] sm:$0xff]
    %v3440 = vld [vmem:[#allocation3 + $0x448] sm:$0xff]
    %v3441 = vld [vmem:[#allocation3 + $0x450] sm:$0xff]
    %v3442 = vld [vmem:[#allocation3 + $0x458] sm:$0xff]
    %v3443 = vld [vmem:[#allocation3 + $0x460] sm:$0xff]
    %v3444 = vld [vmem:[#allocation3 + $0x468] sm:$0xff]
    %v3445 = vld [vmem:[#allocation3 + $0x470] sm:$0xff]
    %v3446 = vld [vmem:[#allocation3 + $0x478] sm:$0xff]
    %v3447 = vld [vmem:[#allocation3 + $0x480] sm:$0xff]
    %v3448 = vld [vmem:[#allocation3 + $0x488] sm:$0xff]
    %v3449 = vld [vmem:[#allocation3 + $0x490] sm:$0xff]
    %v3450 = vld [vmem:[#allocation3 + $0x498] sm:$0xff]
    %v3451 = vld [vmem:[#allocation3 + $0x4a0] sm:$0xff]
    %v3452 = vld [vmem:[#allocation3 + $0x4a8] sm:$0xff]
    %v3453 = vld [vmem:[#allocation3 + $0x4b0] sm:$0xff]
    %v3454 = vld [vmem:[#allocation3 + $0x4b8] sm:$0xff]
    %v3455 = vld [vmem:[#allocation3 + $0x4c0] sm:$0xff]
    %v3456 = vld [vmem:[#allocation3 + $0x4c8] sm:$0xff]
    %v3457 = vld [vmem:[#allocation3 + $0x4d0] sm:$0xff]
    %v3458 = vld [vmem:[#allocation3 + $0x4d8] sm:$0xff]
    %v3459 = vld [vmem:[#allocation3 + $0x4e0] sm:$0xff]
    %v3460 = vld [vmem:[#allocation3 + $0x4e8] sm:$0xff]
    %v3461 = vld [vmem:[#allocation3 + $0x4f0] sm:$0xff]
    %v3462 = vld [vmem:[#allocation3 + $0x4f8] sm:$0xff]
    %v3463 = vld [vmem:[#allocation3 + $0x500] sm:$0xff]
    %v3464 = vld [vmem:[#allocation3 + $0x508] sm:$0xff]
    %v3465 = vld [vmem:[#allocation3 + $0x510] sm:$0xff]
    %v3466 = vld [vmem:[#allocation3 + $0x518] sm:$0xff]
    %v3467 = vld [vmem:[#allocation3 + $0x520] sm:$0xff]
    %v3468 = vld [vmem:[#allocation3 + $0x528] sm:$0xff]
    %v3469 = vld [vmem:[#allocation3 + $0x530] sm:$0xff]
    %v3470 = vld [vmem:[#allocation3 + $0x538] sm:$0xff]
    %v3471 = vld [vmem:[#allocation3 + $0x540] sm:$0xff]
    %v3472 = vld [vmem:[#allocation3 + $0x548] sm:$0xff]
    %v3473 = vld [vmem:[#allocation3 + $0x550] sm:$0xff]
    %v3474 = vld [vmem:[#allocation3 + $0x558] sm:$0xff]
    %v3475 = vld [vmem:[#allocation3 + $0x560] sm:$0xff]
    %v3476 = vld [vmem:[#allocation3 + $0x568] sm:$0xff]
    %v3477 = vld [vmem:[#allocation3 + $0x570] sm:$0xff]
    %v3478 = vld [vmem:[#allocation3 + $0x578] sm:$0xff]
    %v3479 = vld [vmem:[#allocation3 + $0x580] sm:$0xff]
    %v3480 = vld [vmem:[#allocation3 + $0x588] sm:$0xff]
    %v3481 = vld [vmem:[#allocation3 + $0x590] sm:$0xff]
    %v3482 = vld [vmem:[#allocation3 + $0x598] sm:$0xff]
    %v3483 = vld [vmem:[#allocation3 + $0x5a0] sm:$0xff]
    %v3484 = vld [vmem:[#allocation3 + $0x5a8] sm:$0xff]
    %v3485 = vld [vmem:[#allocation3 + $0x5b0] sm:$0xff]
    %v3486 = vld [vmem:[#allocation3 + $0x5b8] sm:$0xff]
    %v3487 = vld [vmem:[#allocation3 + $0x5c0] sm:$0xff]
    %v3488 = vld [vmem:[#allocation3 + $0x5c8] sm:$0xff]
    %v3489 = vld [vmem:[#allocation3 + $0x5d0] sm:$0xff]
    %v3490 = vld [vmem:[#allocation3 + $0x5d8] sm:$0xff]
    %v3491 = vld [vmem:[#allocation3 + $0x5e0] sm:$0xff]
    %v3492 = vld [vmem:[#allocation3 + $0x5e8] sm:$0xff]
    %v3493 = vld [vmem:[#allocation3 + $0x5f0] sm:$0xff]
    %v3494 = vld [vmem:[#allocation3 + $0x5f8] sm:$0xff]
    %v3495 = vld [vmem:[#allocation3 + $0x600] sm:$0xff]
    %v3496 = vld [vmem:[#allocation3 + $0x608] sm:$0xff]
    %v3497 = vld [vmem:[#allocation3 + $0x610] sm:$0xff]
    %v3498 = vld [vmem:[#allocation3 + $0x618] sm:$0xff]
    %v3499 = vld [vmem:[#allocation3 + $0x620] sm:$0xff]
    %v3500 = vld [vmem:[#allocation3 + $0x628] sm:$0xff]
    %v3501 = vld [vmem:[#allocation3 + $0x630] sm:$0xff]
    %v3502 = vld [vmem:[#allocation3 + $0x638] sm:$0xff]
    %v3503 = vld [vmem:[#allocation3 + $0x640] sm:$0xff]
    %v3504 = vld [vmem:[#allocation3 + $0x648] sm:$0xff]
    %v3505 = vld [vmem:[#allocation3 + $0x650] sm:$0xff]
    %v3506 = vld [vmem:[#allocation3 + $0x658] sm:$0xff]
    %v3507 = vld [vmem:[#allocation3 + $0x660] sm:$0xff]
    %v3508 = vld [vmem:[#allocation3 + $0x668] sm:$0xff]
    %v3509 = vld [vmem:[#allocation3 + $0x670] sm:$0xff]
    %v3510 = vld [vmem:[#allocation3 + $0x678] sm:$0xff]
    %v3511 = vld [vmem:[#allocation3 + $0x680] sm:$0xff]
    %v3512 = vld [vmem:[#allocation3 + $0x688] sm:$0xff]
    %v3513 = vld [vmem:[#allocation3 + $0x690] sm:$0xff]
    %v3514 = vld [vmem:[#allocation3 + $0x698] sm:$0xff]
    %v3515 = vld [vmem:[#allocation3 + $0x6a0] sm:$0xff]
    %v3516 = vld [vmem:[#allocation3 + $0x6a8] sm:$0xff]
    %v3517 = vld [vmem:[#allocation3 + $0x6b0] sm:$0xff]
    %v3518 = vld [vmem:[#allocation3 + $0x6b8] sm:$0xff]
    %v3519 = vld [vmem:[#allocation3 + $0x6c0] sm:$0xff]
    %v3520 = vld [vmem:[#allocation3 + $0x6c8] sm:$0xff]
    %v3521 = vld [vmem:[#allocation3 + $0x6d0] sm:$0xff]
    %v3522 = vld [vmem:[#allocation3 + $0x6d8] sm:$0xff]
    %v3523 = vld [vmem:[#allocation3 + $0x6e0] sm:$0xff]
    %v3524 = vld [vmem:[#allocation3 + $0x6e8] sm:$0xff]
    %v3525 = vld [vmem:[#allocation3 + $0x6f0] sm:$0xff]
    %v3526 = vld [vmem:[#allocation3 + $0x6f8] sm:$0xff]
    %v3527 = vld [vmem:[#allocation3 + $0x700] sm:$0xff]
    %v3528 = vld [vmem:[#allocation3 + $0x708] sm:$0xff]
    %v3529 = vld [vmem:[#allocation3 + $0x710] sm:$0xff]
    %v3530 = vld [vmem:[#allocation3 + $0x718] sm:$0xff]
    %v3531 = vld [vmem:[#allocation3 + $0x720] sm:$0xff]
    %v3532 = vld [vmem:[#allocation3 + $0x728] sm:$0xff]
    %v3533 = vld [vmem:[#allocation3 + $0x730] sm:$0xff]
    %v3534 = vld [vmem:[#allocation3 + $0x738] sm:$0xff]
    %v3535 = vld [vmem:[#allocation3 + $0x740] sm:$0xff]
    %v3536 = vld [vmem:[#allocation3 + $0x748] sm:$0xff]
    %v3537 = vld [vmem:[#allocation3 + $0x750] sm:$0xff]
    %v3538 = vld [vmem:[#allocation3 + $0x758] sm:$0xff]
    %v3539 = vld [vmem:[#allocation3 + $0x760] sm:$0xff]
    %v3540 = vld [vmem:[#allocation3 + $0x768] sm:$0xff]
    %v3541 = vld [vmem:[#allocation3 + $0x770] sm:$0xff]
    %v3542 = vld [vmem:[#allocation3 + $0x778] sm:$0xff]
    %v3543 = vld [vmem:[#allocation3 + $0x780] sm:$0xff]
    %v3544 = vld [vmem:[#allocation3 + $0x788] sm:$0xff]
    %v3545 = vld [vmem:[#allocation3 + $0x790] sm:$0xff]
    %v3546 = vld [vmem:[#allocation3 + $0x798] sm:$0xff]
    %v3547 = vld [vmem:[#allocation3 + $0x7a0] sm:$0xff]
    %v3548 = vld [vmem:[#allocation3 + $0x7a8] sm:$0xff]
    %v3549 = vld [vmem:[#allocation3 + $0x7b0] sm:$0xff]
    %v3550 = vld [vmem:[#allocation3 + $0x7b8] sm:$0xff]
    %v3551 = vld [vmem:[#allocation3 + $0x7c0] sm:$0xff]
    %v3552 = vld [vmem:[#allocation3 + $0x7c8] sm:$0xff]
    %v3553 = vld [vmem:[#allocation3 + $0x7d0] sm:$0xff]
    %v3554 = vld [vmem:[#allocation3 + $0x7d8] sm:$0xff]
    %v3555 = vld [vmem:[#allocation3 + $0x7e0] sm:$0xff]
    %v3556 = vld [vmem:[#allocation3 + $0x7e8] sm:$0xff]
    %v3557 = vld [vmem:[#allocation3 + $0x7f0] sm:$0xff]
    %v3558 = vld [vmem:[#allocation3 + $0x7f8] sm:$0xff]
    %3559 = vmatprep.subr.bf16.mxu0 %v3304
    %3560 = vmatpush1.bf16.msra.mxu0 %v3303
    %3561 = vmatprep.subr.bf16.mxu0 %v3312
    %3562 = vmatpush1.bf16.msra.mxu0 %v3311
    %3563 = vmatprep.subr.bf16.mxu0 %v3320
    %3564 = vmatpush1.bf16.msra.mxu0 %v3319
    %3565 = vmatprep.subr.bf16.mxu0 %v3328
    %3566 = vmatpush1.bf16.msra.mxu0 %v3327
    %3567 = vmatprep.subr.bf16.mxu0 %v3336
    %3568 = vmatpush1.bf16.msra.mxu0 %v3335
    %3569 = vmatprep.subr.bf16.mxu0 %v3344
    %3570 = vmatpush1.bf16.msra.mxu0 %v3343
    %3571 = vmatprep.subr.bf16.mxu0 %v3352
    %3572 = vmatpush1.bf16.msra.mxu0 %v3351
    %3573 = vmatprep.subr.bf16.mxu0 %v3360
    %3574 = vmatpush1.bf16.msra.mxu0 %v3359
    %3575 = vmatprep.subr.bf16.mxu0 %v3368
    %3576 = vmatpush1.bf16.msra.mxu0 %v3367
    %3577 = vmatprep.subr.bf16.mxu0 %v3376
    %3578 = vmatpush1.bf16.msra.mxu0 %v3375
    %3579 = vmatprep.subr.bf16.mxu0 %v3384
    %3580 = vmatpush1.bf16.msra.mxu0 %v3383
    %3581 = vmatprep.subr.bf16.mxu0 %v3392
    %3582 = vmatpush1.bf16.msra.mxu0 %v3391
    %3583 = vmatprep.subr.bf16.mxu0 %v3400
    %3584 = vmatpush1.bf16.msra.mxu0 %v3399
    %3585 = vmatprep.subr.bf16.mxu0 %v3408
    %3586 = vmatpush1.bf16.msra.mxu0 %v3407
    %3587 = vmatprep.subr.bf16.mxu0 %v3416
    %3588 = vmatpush1.bf16.msra.mxu0 %v3415
    %3589 = vmatprep.subr.bf16.mxu0 %v3424
    %3590 = vmatpush1.bf16.msra.mxu0 %v3423
    %3591 = vmatprep.mubr.bf16.mxu0 %v3240
    %3592 = vmatmul.mubr.bf16.gmra.mrb[0].mxu0 %v3239
    %v3593 = vpop.f32.mrb[0].mxu0
    %v3594 = vadd.f32 0.0, %v3593
    %v3595 = vpop.f32.mrb[0].mxu0
    %v3596 = vadd.f32 0.0, %v3595
    %v3597 = vpop.f32.mrb[0].mxu0
    %v3598 = vadd.f32 0.0, %v3597
    %v3599 = vpop.f32.mrb[0].mxu0
    %v3600 = vadd.f32 0.0, %v3599
    %3601 = vmatprep.mubr.bf16.mxu0 %v3244
    %3602 = vmatmul.mubr.bf16.gmra.mrb[0].mxu0 %v3243
    %v3603 = vpop.f32.mrb[0].mxu0
    %v3604 = vadd.f32 0.0, %v3603
    %v3605 = vpop.f32.mrb[0].mxu0
    %v3606 = vadd.f32 0.0, %v3605
    %v3607 = vpop.f32.mrb[0].mxu0
    %v3608 = vadd.f32 0.0, %v3607
    %v3609 = vpop.f32.mrb[0].mxu0
    %v3610 = vadd.f32 0.0, %v3609
    %3611 = vmatprep.mubr.bf16.mxu0 %v3248
    %3612 = vmatmul.mubr.bf16.gmra.mrb[0].mxu0 %v3247
    %v3613 = vpop.f32.mrb[0].mxu0
    %v3614 = vadd.f32 0.0, %v3613
    %v3615 = vpop.f32.mrb[0].mxu0
    %v3616 = vadd.f32 0.0, %v3615
    %v3617 = vpop.f32.mrb[0].mxu0
    %v3618 = vadd.f32 0.0, %v3617
    %v3619 = vpop.f32.mrb[0].mxu0
    %v3620 = vadd.f32 0.0, %v3619
    %3621 = vmatprep.mubr.bf16.mxu0 %v3252
    %3622 = vmatmul.mubr.bf16.gmra.mrb[0].mxu0 %v3251
    %v3623 = vpop.f32.mrb[0].mxu0
    %v3624 = vadd.f32 0.0, %v3623
    %v3625 = vpop.f32.mrb[0].mxu0
    %v3626 = vadd.f32 0.0, %v3625
    %v3627 = vpop.f32.mrb[0].mxu0
    %v3628 = vadd.f32 0.0, %v3627
    %v3629 = vpop.f32.mrb[0].mxu0
    %v3630 = vadd.f32 0.0, %v3629
    %3631 = vmatprep.mubr.bf16.mxu0 %v3256
    %3632 = vmatmul.mubr.bf16.gmra.mrb[0].mxu0 %v3255
    %v3633 = vpop.f32.mrb[0].mxu0
    %v3634 = vadd.f32 0.0, %v3633
    %v3635 = vpop.f32.mrb[0].mxu0
    %v3636 = vadd.f32 0.0, %v3635
    %v3637 = vpop.f32.mrb[0].mxu0
    %v3638 = vadd.f32 0.0, %v3637
    %v3639 = vpop.f32.mrb[0].mxu0
    %v3640 = vadd.f32 0.0, %v3639
    %3641 = vmatprep.mubr.bf16.mxu0 %v3260
    %3642 = vmatmul.mubr.bf16.gmra.mrb[0].mxu0 %v3259
    %v3643 = vpop.f32.mrb[0].mxu0
    %v3644 = vadd.f32 0.0, %v3643
    %v3645 = vpop.f32.mrb[0].mxu0
    %v3646 = vadd.f32 0.0, %v3645
    %v3647 = vpop.f32.mrb[0].mxu0
    %v3648 = vadd.f32 0.0, %v3647
    %v3649 = vpop.f32.mrb[0].mxu0
    %v3650 = vadd.f32 0.0, %v3649
    %3651 = vmatprep.mubr.bf16.mxu0 %v3264
    %3652 = vmatmul.mubr.bf16.gmra.mrb[0].mxu0 %v3263
    %v3653 = vpop.f32.mrb[0].mxu0
    %v3654 = vadd.f32 0.0, %v3653
    %v3655 = vpop.f32.mrb[0].mxu0
    %v3656 = vadd.f32 0.0, %v3655
    %v3657 = vpop.f32.mrb[0].mxu0
    %v3658 = vadd.f32 0.0, %v3657
    %v3659 = vpop.f32.mrb[0].mxu0
    %v3660 = vadd.f32 0.0, %v3659
    %3661 = vmatprep.mubr.bf16.mxu0 %v3268
    %3662 = vmatmul.mubr.bf16.gmra.mrb[0].mxu0 %v3267
    %v3663 = vpop.f32.mrb[0].mxu0
    %v3664 = vadd.f32 0.0, %v3663
    %v3665 = vpop.f32.mrb[0].mxu0
    %v3666 = vadd.f32 0.0, %v3665
    %v3667 = vpop.f32.mrb[0].mxu0
    %v3668 = vadd.f32 0.0, %v3667
    %v3669 = vpop.f32.mrb[0].mxu0
    %v3670 = vadd.f32 0.0, %v3669
    %3671 = vmatprep.mubr.bf16.mxu0 %v3272
    %3672 = vmatmul.mubr.bf16.gmra.mrb[0].mxu0 %v3271
    %v3673 = vpop.f32.mrb[0].mxu0
    %v3674 = vadd.f32 0.0, %v3673
    %v3675 = vpop.f32.mrb[0].mxu0
    %v3676 = vadd.f32 0.0, %v3675
    %v3677 = vpop.f32.mrb[0].mxu0
    %v3678 = vadd.f32 0.0, %v3677
    %v3679 = vpop.f32.mrb[0].mxu0
    %v3680 = vadd.f32 0.0, %v3679
    %3681 = vmatprep.mubr.bf16.mxu0 %v3276
    %3682 = vmatmul.mubr.bf16.gmra.mrb[0].mxu0 %v3275
    %v3683 = vpop.f32.mrb[0].mxu0
    %v3684 = vadd.f32 0.0, %v3683
    %v3685 = vpop.f32.mrb[0].mxu0
    %v3686 = vadd.f32 0.0, %v3685
    %v3687 = vpop.f32.mrb[0].mxu0
    %v3688 = vadd.f32 0.0, %v3687
    %v3689 = vpop.f32.mrb[0].mxu0
    %v3690 = vadd.f32 0.0, %v3689
    %3691 = vmatprep.mubr.bf16.mxu0 %v3280
    %3692 = vmatmul.mubr.bf16.gmra.mrb[0].mxu0 %v3279
    %v3693 = vpop.f32.mrb[0].mxu0
    %v3694 = vadd.f32 0.0, %v3693
    %v3695 = vpop.f32.mrb[0].mxu0
    %v3696 = vadd.f32 0.0, %v3695
    %v3697 = vpop.f32.mrb[0].mxu0
    %v3698 = vadd.f32 0.0, %v3697
    %v3699 = vpop.f32.mrb[0].mxu0
    %v3700 = vadd.f32 0.0, %v3699
    %3701 = vmatprep.mubr.bf16.mxu0 %v3284
    %3702 = vmatmul.mubr.bf16.gmra.mrb[0].mxu0 %v3283
    %v3703 = vpop.f32.mrb[0].mxu0
    %v3704 = vadd.f32 0.0, %v3703
    %v3705 = vpop.f32.mrb[0].mxu0
    %v3706 = vadd.f32 0.0, %v3705
    %v3707 = vpop.f32.mrb[0].mxu0
    %v3708 = vadd.f32 0.0, %v3707
    %v3709 = vpop.f32.mrb[0].mxu0
    %v3710 = vadd.f32 0.0, %v3709
    %3711 = vmatprep.mubr.bf16.mxu0 %v3288
    %3712 = vmatmul.mubr.bf16.gmra.mrb[0].mxu0 %v3287
    %v3713 = vpop.f32.mrb[0].mxu0
    %v3714 = vadd.f32 0.0, %v3713
    %v3715 = vpop.f32.mrb[0].mxu0
    %v3716 = vadd.f32 0.0, %v3715
    %v3717 = vpop.f32.mrb[0].mxu0
    %v3718 = vadd.f32 0.0, %v3717
    %v3719 = vpop.f32.mrb[0].mxu0
    %v3720 = vadd.f32 0.0, %v3719
    %3721 = vmatprep.mubr.bf16.mxu0 %v3292
    %3722 = vmatmul.mubr.bf16.gmra.mrb[0].mxu0 %v3291
    %v3723 = vpop.f32.mrb[0].mxu0
    %v3724 = vadd.f32 0.0, %v3723
    %v3725 = vpop.f32.mrb[0].mxu0
    %v3726 = vadd.f32 0.0, %v3725
    %v3727 = vpop.f32.mrb[0].mxu0
    %v3728 = vadd.f32 0.0, %v3727
    %v3729 = vpop.f32.mrb[0].mxu0
    %v3730 = vadd.f32 0.0, %v3729
    %3731 = vmatprep.mubr.bf16.mxu0 %v3296
    %3732 = vmatmul.mubr.bf16.gmra.mrb[0].mxu0 %v3295
    %v3733 = vpop.f32.mrb[0].mxu0
    %v3734 = vadd.f32 0.0, %v3733
    %v3735 = vpop.f32.mrb[0].mxu0
    %v3736 = vadd.f32 0.0, %v3735
    %v3737 = vpop.f32.mrb[0].mxu0
    %v3738 = vadd.f32 0.0, %v3737
    %v3739 = vpop.f32.mrb[0].mxu0
    %v3740 = vadd.f32 0.0, %v3739
    %3741 = vmatprep.mubr.bf16.mxu0 %v3300
    %3742 = vmatmul.mubr.bf16.gmra.mrb[0].mxu0 %v3299
    %v3743 = vpop.f32.mrb[0].mxu0
    %v3744 = vadd.f32 0.0, %v3743
    %v3745 = vpop.f32.mrb[0].mxu0
    %v3746 = vadd.f32 0.0, %v3745
    %v3747 = vpop.f32.mrb[0].mxu0
    %v3748 = vadd.f32 0.0, %v3747
    %v3749 = vpop.f32.mrb[0].mxu0
    %v3750 = vadd.f32 0.0, %v3749
    %3751 = vdwg.mxu0
    %3752 = vmatprep.subr.bf16.mxu0 %v3432
    %3753 = vmatpush1.bf16.msra.mxu0 %v3431
    %3754 = vmatprep.subr.bf16.mxu0 %v3440
    %3755 = vmatpush1.bf16.msra.mxu0 %v3439
    %3756 = vmatprep.subr.bf16.mxu0 %v3448
    %3757 = vmatpush1.bf16.msra.mxu0 %v3447
    %3758 = vmatprep.subr.bf16.mxu0 %v3456
    %3759 = vmatpush1.bf16.msra.mxu0 %v3455
    %3760 = vmatprep.subr.bf16.mxu0 %v3464
    %3761 = vmatpush1.bf16.msra.mxu0 %v3463
    %3762 = vmatprep.subr.bf16.mxu0 %v3472
    %3763 = vmatpush1.bf16.msra.mxu0 %v3471
    %3764 = vmatprep.subr.bf16.mxu0 %v3480
    %3765 = vmatpush1.bf16.msra.mxu0 %v3479
    %3766 = vmatprep.subr.bf16.mxu0 %v3488
    %3767 = vmatpush1.bf16.msra.mxu0 %v3487
    %3768 = vmatprep.subr.bf16.mxu0 %v3496
    %3769 = vmatpush1.bf16.msra.mxu0 %v3495
    %3770 = vmatprep.subr.bf16.mxu0 %v3504
    %3771 = vmatpush1.bf16.msra.mxu0 %v3503
    %3772 = vmatprep.subr.bf16.mxu0 %v3512
    %3773 = vmatpush1.bf16.msra.mxu0 %v3511
    %3774 = vmatprep.subr.bf16.mxu0 %v3520
    %3775 = vmatpush1.bf16.msra.mxu0 %v3519
    %3776 = vmatprep.subr.bf16.mxu0 %v3528
    %3777 = vmatpush1.bf16.msra.mxu0 %v3527
    %3778 = vmatprep.subr.bf16.mxu0 %v3536
    %3779 = vmatpush1.bf16.msra.mxu0 %v3535
    %3780 = vmatprep.subr.bf16.mxu0 %v3544
    %3781 = vmatpush1.bf16.msra.mxu0 %v3543
    %3782 = vmatprep.subr.bf16.mxu0 %v3552
    %3783 = vmatpush1.bf16.msra.mxu0 %v3551
    %3784 = vmatprep.mubr.bf16.mxu0 %v3242
    %3785 = vmatmul.mubr.bf16.gmra.mrb[0].mxu0 %v3241
    %v3786 = vpop.f32.mrb[0].mxu0
    %v3787 = vadd.f32 %v3594, %v3786
    %v3788 = vpop.f32.mrb[0].mxu0
    %v3789 = vadd.f32 %v3596, %v3788
    %v3790 = vpop.f32.mrb[0].mxu0
    %v3791 = vadd.f32 %v3598, %v3790
    %v3792 = vpop.f32.mrb[0].mxu0
    %v3793 = vadd.f32 %v3600, %v3792
    %3794 = vmatprep.mubr.bf16.mxu0 %v3246
    %3795 = vmatmul.mubr.bf16.gmra.mrb[0].mxu0 %v3245
    %v3796 = vpop.f32.mrb[0].mxu0
    %v3797 = vadd.f32 %v3604, %v3796
    %v3798 = vpop.f32.mrb[0].mxu0
    %v3799 = vadd.f32 %v3606, %v3798
    %v3800 = vpop.f32.mrb[0].mxu0
    %v3801 = vadd.f32 %v3608, %v3800
    %v3802 = vpop.f32.mrb[0].mxu0
    %v3803 = vadd.f32 %v3610, %v3802
    %3804 = vmatprep.mubr.bf16.mxu0 %v3250
    %3805 = vmatmul.mubr.bf16.gmra.mrb[0].mxu0 %v3249
    %v3806 = vpop.f32.mrb[0].mxu0
    %v3807 = vadd.f32 %v3614, %v3806
    %v3808 = vpop.f32.mrb[0].mxu0
    %v3809 = vadd.f32 %v3616, %v3808
    %v3810 = vpop.f32.mrb[0].mxu0
    %v3811 = vadd.f32 %v3618, %v3810
    %v3812 = vpop.f32.mrb[0].mxu0
    %v3813 = vadd.f32 %v3620, %v3812
    %3814 = vmatprep.mubr.bf16.mxu0 %v3254
    %3815 = vmatmul.mubr.bf16.gmra.mrb[0].mxu0 %v3253
    %v3816 = vpop.f32.mrb[0].mxu0
    %v3817 = vadd.f32 %v3624, %v3816
    %v3818 = vpop.f32.mrb[0].mxu0
    %v3819 = vadd.f32 %v3626, %v3818
    %v3820 = vpop.f32.mrb[0].mxu0
    %v3821 = vadd.f32 %v3628, %v3820
    %v3822 = vpop.f32.mrb[0].mxu0
    %v3823 = vadd.f32 %v3630, %v3822
    %3824 = vmatprep.mubr.bf16.mxu0 %v3258
    %3825 = vmatmul.mubr.bf16.gmra.mrb[0].mxu0 %v3257
    %v3826 = vpop.f32.mrb[0].mxu0
    %v3827 = vadd.f32 %v3634, %v3826
    %v3828 = vpop.f32.mrb[0].mxu0
    %v3829 = vadd.f32 %v3636, %v3828
    %v3830 = vpop.f32.mrb[0].mxu0
    %v3831 = vadd.f32 %v3638, %v3830
    %v3832 = vpop.f32.mrb[0].mxu0
    %v3833 = vadd.f32 %v3640, %v3832
    %3834 = vmatprep.mubr.bf16.mxu0 %v3262
    %3835 = vmatmul.mubr.bf16.gmra.mrb[0].mxu0 %v3261
    %v3836 = vpop.f32.mrb[0].mxu0
    %v3837 = vadd.f32 %v3644, %v3836
    %v3838 = vpop.f32.mrb[0].mxu0
    %v3839 = vadd.f32 %v3646, %v3838
    %v3840 = vpop.f32.mrb[0].mxu0
    %v3841 = vadd.f32 %v3648, %v3840
    %v3842 = vpop.f32.mrb[0].mxu0
    %v3843 = vadd.f32 %v3650, %v3842
    %3844 = vmatprep.mubr.bf16.mxu0 %v3266
    %3845 = vmatmul.mubr.bf16.gmra.mrb[0].mxu0 %v3265
    %v3846 = vpop.f32.mrb[0].mxu0
    %v3847 = vadd.f32 %v3654, %v3846
    %v3848 = vpop.f32.mrb[0].mxu0
    %v3849 = vadd.f32 %v3656, %v3848
    %v3850 = vpop.f32.mrb[0].mxu0
    %v3851 = vadd.f32 %v3658, %v3850
    %v3852 = vpop.f32.mrb[0].mxu0
    %v3853 = vadd.f32 %v3660, %v3852
    %3854 = vmatprep.mubr.bf16.mxu0 %v3270
    %3855 = vmatmul.mubr.bf16.gmra.mrb[0].mxu0 %v3269
    %v3856 = vpop.f32.mrb[0].mxu0
    %v3857 = vadd.f32 %v3664, %v3856
    %v3858 = vpop.f32.mrb[0].mxu0
    %v3859 = vadd.f32 %v3666, %v3858
    %v3860 = vpop.f32.mrb[0].mxu0
    %v3861 = vadd.f32 %v3668, %v3860
    %v3862 = vpop.f32.mrb[0].mxu0
    %v3863 = vadd.f32 %v3670, %v3862
    %3864 = vmatprep.mubr.bf16.mxu0 %v3274
    %3865 = vmatmul.mubr.bf16.gmra.mrb[0].mxu0 %v3273
    %v3866 = vpop.f32.mrb[0].mxu0
    %v3867 = vadd.f32 %v3674, %v3866
    %v3868 = vpop.f32.mrb[0].mxu0
    %v3869 = vadd.f32 %v3676, %v3868
    %v3870 = vpop.f32.mrb[0].mxu0
    %v3871 = vadd.f32 %v3678, %v3870
    %v3872 = vpop.f32.mrb[0].mxu0
    %v3873 = vadd.f32 %v3680, %v3872
    %3874 = vmatprep.mubr.bf16.mxu0 %v3278
    %3875 = vmatmul.mubr.bf16.gmra.mrb[0].mxu0 %v3277
    %v3876 = vpop.f32.mrb[0].mxu0
    %v3877 = vadd.f32 %v3684, %v3876
    %v3878 = vpop.f32.mrb[0].mxu0
    %v3879 = vadd.f32 %v3686, %v3878
    %v3880 = vpop.f32.mrb[0].mxu0
    %v3881 = vadd.f32 %v3688, %v3880
    %v3882 = vpop.f32.mrb[0].mxu0
    %v3883 = vadd.f32 %v3690, %v3882
    %3884 = vmatprep.mubr.bf16.mxu0 %v3282
    %3885 = vmatmul.mubr.bf16.gmra.mrb[0].mxu0 %v3281
    %v3886 = vpop.f32.mrb[0].mxu0
    %v3887 = vadd.f32 %v3694, %v3886
    %v3888 = vpop.f32.mrb[0].mxu0
    %v3889 = vadd.f32 %v3696, %v3888
    %v3890 = vpop.f32.mrb[0].mxu0
    %v3891 = vadd.f32 %v3698, %v3890
    %v3892 = vpop.f32.mrb[0].mxu0
    %v3893 = vadd.f32 %v3700, %v3892
    %3894 = vmatprep.mubr.bf16.mxu0 %v3286
    %3895 = vmatmul.mubr.bf16.gmra.mrb[0].mxu0 %v3285
    %v3896 = vpop.f32.mrb[0].mxu0
    %v3897 = vadd.f32 %v3704, %v3896
    %v3898 = vpop.f32.mrb[0].mxu0
    %v3899 = vadd.f32 %v3706, %v3898
    %v3900 = vpop.f32.mrb[0].mxu0
    %v3901 = vadd.f32 %v3708, %v3900
    %v3902 = vpop.f32.mrb[0].mxu0
    %v3903 = vadd.f32 %v3710, %v3902
    %3904 = vmatprep.mubr.bf16.mxu0 %v3290
    %3905 = vmatmul.mubr.bf16.gmra.mrb[0].mxu0 %v3289
    %v3906 = vpop.f32.mrb[0].mxu0
    %v3907 = vadd.f32 %v3714, %v3906
    %v3908 = vpop.f32.mrb[0].mxu0
    %v3909 = vadd.f32 %v3716, %v3908
    %v3910 = vpop.f32.mrb[0].mxu0
    %v3911 = vadd.f32 %v3718, %v3910
    %v3912 = vpop.f32.mrb[0].mxu0
    %v3913 = vadd.f32 %v3720, %v3912
    %3914 = vmatprep.mubr.bf16.mxu0 %v3294
    %3915 = vmatmul.mubr.bf16.gmra.mrb[0].mxu0 %v3293
    %v3916 = vpop.f32.mrb[0].mxu0
    %v3917 = vadd.f32 %v3724, %v3916
    %v3918 = vpop.f32.mrb[0].mxu0
    %v3919 = vadd.f32 %v3726, %v3918
    %v3920 = vpop.f32.mrb[0].mxu0
    %v3921 = vadd.f32 %v3728, %v3920
    %v3922 = vpop.f32.mrb[0].mxu0
    %v3923 = vadd.f32 %v3730, %v3922
    %3924 = vmatprep.mubr.bf16.mxu0 %v3298
    %3925 = vmatmul.mubr.bf16.gmra.mrb[0].mxu0 %v3297
    %v3926 = vpop.f32.mrb[0].mxu0
    %v3927 = vadd.f32 %v3734, %v3926
    %v3928 = vpop.f32.mrb[0].mxu0
    %v3929 = vadd.f32 %v3736, %v3928
    %v3930 = vpop.f32.mrb[0].mxu0
    %v3931 = vadd.f32 %v3738, %v3930
    %v3932 = vpop.f32.mrb[0].mxu0
    %v3933 = vadd.f32 %v3740, %v3932
    %3934 = vmatprep.mubr.bf16.mxu0 %v3302
    %3935 = vmatmul.mubr.bf16.gmra.mrb[0].mxu0 %v3301
    %v3936 = vpop.f32.mrb[0].mxu0
    %v3937 = vadd.f32 %v3744, %v3936
    %v3938 = vpop.f32.mrb[0].mxu0
    %v3939 = vadd.f32 %v3746, %v3938
    %v3940 = vpop.f32.mrb[0].mxu0
    %v3941 = vadd.f32 %v3748, %v3940
    %v3942 = vpop.f32.mrb[0].mxu0
    %v3943 = vadd.f32 %v3750, %v3942
    %3944 = vdwg.mxu0
    %3945 = vmatprep.subr.bf16.mxu0 %v3306
    %3946 = vmatpush1.bf16.msra.mxu0 %v3305
    %3947 = vmatprep.subr.bf16.mxu0 %v3314
    %3948 = vmatpush1.bf16.msra.mxu0 %v3313
    %3949 = vmatprep.subr.bf16.mxu0 %v3322
    %3950 = vmatpush1.bf16.msra.mxu0 %v3321
    %3951 = vmatprep.subr.bf16.mxu0 %v3330
    %3952 = vmatpush1.bf16.msra.mxu0 %v3329
    %3953 = vmatprep.subr.bf16.mxu0 %v3338
    %3954 = vmatpush1.bf16.msra.mxu0 %v3337
    %3955 = vmatprep.subr.bf16.mxu0 %v3346
    %3956 = vmatpush1.bf16.msra.mxu0 %v3345
    %3957 = vmatprep.subr.bf16.mxu0 %v3354
    %3958 = vmatpush1.bf16.msra.mxu0 %v3353
    %3959 = vmatprep.subr.bf16.mxu0 %v3362
    %3960 = vmatpush1.bf16.msra.mxu0 %v3361
    %3961 = vmatprep.subr.bf16.mxu0 %v3370
    %3962 = vmatpush1.bf16.msra.mxu0 %v3369
    %3963 = vmatprep.subr.bf16.mxu0 %v3378
    %3964 = vmatpush1.bf16.msra.mxu0 %v3377
    %3965 = vmatprep.subr.bf16.mxu0 %v3386
    %3966 = vmatpush1.bf16.msra.mxu0 %v3385
    %3967 = vmatprep.subr.bf16.mxu0 %v3394
    %3968 = vmatpush1.bf16.msra.mxu0 %v3393
    %3969 = vmatprep.subr.bf16.mxu0 %v3402
    %3970 = vmatpush1.bf16.msra.mxu0 %v3401
    %3971 = vmatprep.subr.bf16.mxu0 %v3410
    %3972 = vmatpush1.bf16.msra.mxu0 %v3409
    %3973 = vmatprep.subr.bf16.mxu0 %v3418
    %3974 = vmatpush1.bf16.msra.mxu0 %v3417
    %3975 = vmatprep.subr.bf16.mxu0 %v3426
    %3976 = vmatpush1.bf16.msra.mxu0 %v3425
    %3977 = vmatprep.mubr.bf16.mxu0 %v3240
    %3978 = vmatmul.mubr.bf16.gmra.mrb[0].mxu0 %v3239
    %v3979 = vpop.f32.mrb[0].mxu0
    %v3980 = vadd.f32 0.0, %v3979
    %v3981 = vpop.f32.mrb[0].mxu0
    %v3982 = vadd.f32 0.0, %v3981
    %v3983 = vpop.f32.mrb[0].mxu0
    %v3984 = vadd.f32 0.0, %v3983
    %v3985 = vpop.f32.mrb[0].mxu0
    %v3986 = vadd.f32 0.0, %v3985
    %3987 = vmatprep.mubr.bf16.mxu0 %v3244
    %3988 = vmatmul.mubr.bf16.gmra.mrb[0].mxu0 %v3243
    %v3989 = vpop.f32.mrb[0].mxu0
    %v3990 = vadd.f32 0.0, %v3989
    %v3991 = vpop.f32.mrb[0].mxu0
    %v3992 = vadd.f32 0.0, %v3991
    %v3993 = vpop.f32.mrb[0].mxu0
    %v3994 = vadd.f32 0.0, %v3993
    %v3995 = vpop.f32.mrb[0].mxu0
    %v3996 = vadd.f32 0.0, %v3995
    %3997 = vmatprep.mubr.bf16.mxu0 %v3248
    %3998 = vmatmul.mubr.bf16.gmra.mrb[0].mxu0 %v3247
    %v3999 = vpop.f32.mrb[0].mxu0
    %v4000 = vadd.f32 0.0, %v3999
    %v4001 = vpop.f32.mrb[0].mxu0
    %v4002 = vadd.f32 0.0, %v4001
    %v4003 = vpop.f32.mrb[0].mxu0
    %v4004 = vadd.f32 0.0, %v4003
    %v4005 = vpop.f32.mrb[0].mxu0
    %v4006 = vadd.f32 0.0, %v4005
    %4007 = vmatprep.mubr.bf16.mxu0 %v3252
    %4008 = vmatmul.mubr.bf16.gmra.mrb[0].mxu0 %v3251
    %v4009 = vpop.f32.mrb[0].mxu0
    %v4010 = vadd.f32 0.0, %v4009
    %v4011 = vpop.f32.mrb[0].mxu0
    %v4012 = vadd.f32 0.0, %v4011
    %v4013 = vpop.f32.mrb[0].mxu0
    %v4014 = vadd.f32 0.0, %v4013
    %v4015 = vpop.f32.mrb[0].mxu0
    %v4016 = vadd.f32 0.0, %v4015
    %4017 = vmatprep.mubr.bf16.mxu0 %v3256
    %4018 = vmatmul.mubr.bf16.gmra.mrb[0].mxu0 %v3255
    %v4019 = vpop.f32.mrb[0].mxu0
    %v4020 = vadd.f32 0.0, %v4019
    %v4021 = vpop.f32.mrb[0].mxu0
    %v4022 = vadd.f32 0.0, %v4021
    %v4023 = vpop.f32.mrb[0].mxu0
    %v4024 = vadd.f32 0.0, %v4023
    %v4025 = vpop.f32.mrb[0].mxu0
    %v4026 = vadd.f32 0.0, %v4025
    %4027 = vmatprep.mubr.bf16.mxu0 %v3260
    %4028 = vmatmul.mubr.bf16.gmra.mrb[0].mxu0 %v3259
    %v4029 = vpop.f32.mrb[0].mxu0
    %v4030 = vadd.f32 0.0, %v4029
    %v4031 = vpop.f32.mrb[0].mxu0
    %v4032 = vadd.f32 0.0, %v4031
    %v4033 = vpop.f32.mrb[0].mxu0
    %v4034 = vadd.f32 0.0, %v4033
    %v4035 = vpop.f32.mrb[0].mxu0
    %v4036 = vadd.f32 0.0, %v4035
    %4037 = vmatprep.mubr.bf16.mxu0 %v3264
    %4038 = vmatmul.mubr.bf16.gmra.mrb[0].mxu0 %v3263
    %v4039 = vpop.f32.mrb[0].mxu0
    %v4040 = vadd.f32 0.0, %v4039
    %v4041 = vpop.f32.mrb[0].mxu0
    %v4042 = vadd.f32 0.0, %v4041
    %v4043 = vpop.f32.mrb[0].mxu0
    %v4044 = vadd.f32 0.0, %v4043
    %v4045 = vpop.f32.mrb[0].mxu0
    %v4046 = vadd.f32 0.0, %v4045
    %4047 = vmatprep.mubr.bf16.mxu0 %v3268
    %4048 = vmatmul.mubr.bf16.gmra.mrb[0].mxu0 %v3267
    %v4049 = vpop.f32.mrb[0].mxu0
    %v4050 = vadd.f32 0.0, %v4049
    %v4051 = vpop.f32.mrb[0].mxu0
    %v4052 = vadd.f32 0.0, %v4051
    %v4053 = vpop.f32.mrb[0].mxu0
    %v4054 = vadd.f32 0.0, %v4053
    %v4055 = vpop.f32.mrb[0].mxu0
    %v4056 = vadd.f32 0.0, %v4055
    %4057 = vmatprep.mubr.bf16.mxu0 %v3272
    %4058 = vmatmul.mubr.bf16.gmra.mrb[0].mxu0 %v3271
    %v4059 = vpop.f32.mrb[0].mxu0
    %v4060 = vadd.f32 0.0, %v4059
    %v4061 = vpop.f32.mrb[0].mxu0
    %v4062 = vadd.f32 0.0, %v4061
    %v4063 = vpop.f32.mrb[0].mxu0
    %v4064 = vadd.f32 0.0, %v4063
    %v4065 = vpop.f32.mrb[0].mxu0
    %v4066 = vadd.f32 0.0, %v4065
    %4067 = vmatprep.mubr.bf16.mxu0 %v3276
    %4068 = vmatmul.mubr.bf16.gmra.mrb[0].mxu0 %v3275
    %v4069 = vpop.f32.mrb[0].mxu0
    %v4070 = vadd.f32 0.0, %v4069
    %v4071 = vpop.f32.mrb[0].mxu0
    %v4072 = vadd.f32 0.0, %v4071
    %v4073 = vpop.f32.mrb[0].mxu0
    %v4074 = vadd.f32 0.0, %v4073
    %v4075 = vpop.f32.mrb[0].mxu0
    %v4076 = vadd.f32 0.0, %v4075
    %4077 = vmatprep.mubr.bf16.mxu0 %v3280
    %4078 = vmatmul.mubr.bf16.gmra.mrb[0].mxu0 %v3279
    %v4079 = vpop.f32.mrb[0].mxu0
    %v4080 = vadd.f32 0.0, %v4079
    %v4081 = vpop.f32.mrb[0].mxu0
    %v4082 = vadd.f32 0.0, %v4081
    %v4083 = vpop.f32.mrb[0].mxu0
    %v4084 = vadd.f32 0.0, %v4083
    %v4085 = vpop.f32.mrb[0].mxu0
    %v4086 = vadd.f32 0.0, %v4085
    %4087 = vmatprep.mubr.bf16.mxu0 %v3284
    %4088 = vmatmul.mubr.bf16.gmra.mrb[0].mxu0 %v3283
    %v4089 = vpop.f32.mrb[0].mxu0
    %v4090 = vadd.f32 0.0, %v4089
    %v4091 = vpop.f32.mrb[0].mxu0
    %v4092 = vadd.f32 0.0, %v4091
    %v4093 = vpop.f32.mrb[0].mxu0
    %v4094 = vadd.f32 0.0, %v4093
    %v4095 = vpop.f32.mrb[0].mxu0
    %v4096 = vadd.f32 0.0, %v4095
    %4097 = vmatprep.mubr.bf16.mxu0 %v3288
    %4098 = vmatmul.mubr.bf16.gmra.mrb[0].mxu0 %v3287
    %v4099 = vpop.f32.mrb[0].mxu0
    %v4100 = vadd.f32 0.0, %v4099
    %v4101 = vpop.f32.mrb[0].mxu0
    %v4102 = vadd.f32 0.0, %v4101
    %v4103 = vpop.f32.mrb[0].mxu0
    %v4104 = vadd.f32 0.0, %v4103
    %v4105 = vpop.f32.mrb[0].mxu0
    %v4106 = vadd.f32 0.0, %v4105
    %4107 = vmatprep.mubr.bf16.mxu0 %v3292
    %4108 = vmatmul.mubr.bf16.gmra.mrb[0].mxu0 %v3291
    %v4109 = vpop.f32.mrb[0].mxu0
    %v4110 = vadd.f32 0.0, %v4109
    %v4111 = vpop.f32.mrb[0].mxu0
    %v4112 = vadd.f32 0.0, %v4111
    %v4113 = vpop.f32.mrb[0].mxu0
    %v4114 = vadd.f32 0.0, %v4113
    %v4115 = vpop.f32.mrb[0].mxu0
    %v4116 = vadd.f32 0.0, %v4115
    %4117 = vmatprep.mubr.bf16.mxu0 %v3296
    %4118 = vmatmul.mubr.bf16.gmra.mrb[0].mxu0 %v3295
    %v4119 = vpop.f32.mrb[0].mxu0
    %v4120 = vadd.f32 0.0, %v4119
    %v4121 = vpop.f32.mrb[0].mxu0
    %v4122 = vadd.f32 0.0, %v4121
    %v4123 = vpop.f32.mrb[0].mxu0
    %v4124 = vadd.f32 0.0, %v4123
    %v4125 = vpop.f32.mrb[0].mxu0
    %v4126 = vadd.f32 0.0, %v4125
    %4127 = vmatprep.mubr.bf16.mxu0 %v3300
    %4128 = vmatmul.mubr.bf16.gmra.mrb[0].mxu0 %v3299
    %v4129 = vpop.f32.mrb[0].mxu0
    %v4130 = vadd.f32 0.0, %v4129
    %v4131 = vpop.f32.mrb[0].mxu0
    %v4132 = vadd.f32 0.0, %v4131
    %v4133 = vpop.f32.mrb[0].mxu0
    %v4134 = vadd.f32 0.0, %v4133
    %v4135 = vpop.f32.mrb[0].mxu0
    %v4136 = vadd.f32 0.0, %v4135
    %4137 = vdwg.mxu0
    %4138 = vmatprep.subr.bf16.mxu0 %v3434
    %4139 = vmatpush1.bf16.msra.mxu0 %v3433
    %4140 = vmatprep.subr.bf16.mxu0 %v3442
    %4141 = vmatpush1.bf16.msra.mxu0 %v3441
    %4142 = vmatprep.subr.bf16.mxu0 %v3450
    %4143 = vmatpush1.bf16.msra.mxu0 %v3449
    %4144 = vmatprep.subr.bf16.mxu0 %v3458
    %4145 = vmatpush1.bf16.msra.mxu0 %v3457
    %4146 = vmatprep.subr.bf16.mxu0 %v3466
    %4147 = vmatpush1.bf16.msra.mxu0 %v3465
    %4148 = vmatprep.subr.bf16.mxu0 %v3474
    %4149 = vmatpush1.bf16.msra.mxu0 %v3473
    %4150 = vmatprep.subr.bf16.mxu0 %v3482
    %4151 = vmatpush1.bf16.msra.mxu0 %v3481
    %4152 = vmatprep.subr.bf16.mxu0 %v3490
    %4153 = vmatpush1.bf16.msra.mxu0 %v3489
    %4154 = vmatprep.subr.bf16.mxu0 %v3498
    %4155 = vmatpush1.bf16.msra.mxu0 %v3497
    %4156 = vmatprep.subr.bf16.mxu0 %v3506
    %4157 = vmatpush1.bf16.msra.mxu0 %v3505
    %4158 = vmatprep.subr.bf16.mxu0 %v3514
    %4159 = vmatpush1.bf16.msra.mxu0 %v3513
    %4160 = vmatprep.subr.bf16.mxu0 %v3522
    %4161 = vmatpush1.bf16.msra.mxu0 %v3521
    %4162 = vmatprep.subr.bf16.mxu0 %v3530
    %4163 = vmatpush1.bf16.msra.mxu0 %v3529
    %4164 = vmatprep.subr.bf16.mxu0 %v3538
    %4165 = vmatpush1.bf16.msra.mxu0 %v3537
    %4166 = vmatprep.subr.bf16.mxu0 %v3546
    %4167 = vmatpush1.bf16.msra.mxu0 %v3545
    %4168 = vmatprep.subr.bf16.mxu0 %v3554
    %4169 = vmatpush1.bf16.msra.mxu0 %v3553
    %4170 = vmatprep.mubr.bf16.mxu0 %v3242
    %4171 = vmatmul.mubr.bf16.gmra.mrb[0].mxu0 %v3241
    %v4172 = vpop.f32.mrb[0].mxu0
    %v4173 = vadd.f32 %v3980, %v4172
    %v4174 = vpop.f32.mrb[0].mxu0
    %v4175 = vadd.f32 %v3982, %v4174
    %v4176 = vpop.f32.mrb[0].mxu0
    %v4177 = vadd.f32 %v3984, %v4176
    %v4178 = vpop.f32.mrb[0].mxu0
    %v4179 = vadd.f32 %v3986, %v4178
    %4180 = vmatprep.mubr.bf16.mxu0 %v3246
    %4181 = vmatmul.mubr.bf16.gmra.mrb[0].mxu0 %v3245
    %v4182 = vpop.f32.mrb[0].mxu0
    %v4183 = vadd.f32 %v3990, %v4182
    %v4184 = vpop.f32.mrb[0].mxu0
    %v4185 = vadd.f32 %v3992, %v4184
    %v4186 = vpop.f32.mrb[0].mxu0
    %v4187 = vadd.f32 %v3994, %v4186
    %v4188 = vpop.f32.mrb[0].mxu0
    %v4189 = vadd.f32 %v3996, %v4188
    %4190 = vmatprep.mubr.bf16.mxu0 %v3250
    %4191 = vmatmul.mubr.bf16.gmra.mrb[0].mxu0 %v3249
    %v4192 = vpop.f32.mrb[0].mxu0
    %v4193 = vadd.f32 %v4000, %v4192
    %v4194 = vpop.f32.mrb[0].mxu0
    %v4195 = vadd.f32 %v4002, %v4194
    %v4196 = vpop.f32.mrb[0].mxu0
    %v4197 = vadd.f32 %v4004, %v4196
    %v4198 = vpop.f32.mrb[0].mxu0
    %v4199 = vadd.f32 %v4006, %v4198
    %4200 = vmatprep.mubr.bf16.mxu0 %v3254
    %4201 = vmatmul.mubr.bf16.gmra.mrb[0].mxu0 %v3253
    %v4202 = vpop.f32.mrb[0].mxu0
    %v4203 = vadd.f32 %v4010, %v4202
    %v4204 = vpop.f32.mrb[0].mxu0
    %v4205 = vadd.f32 %v4012, %v4204
    %v4206 = vpop.f32.mrb[0].mxu0
    %v4207 = vadd.f32 %v4014, %v4206
    %v4208 = vpop.f32.mrb[0].mxu0
    %v4209 = vadd.f32 %v4016, %v4208
    %4210 = vmatprep.mubr.bf16.mxu0 %v3258
    %4211 = vmatmul.mubr.bf16.gmra.mrb[0].mxu0 %v3257
    %v4212 = vpop.f32.mrb[0].mxu0
    %v4213 = vadd.f32 %v4020, %v4212
    %v4214 = vpop.f32.mrb[0].mxu0
    %v4215 = vadd.f32 %v4022, %v4214
    %v4216 = vpop.f32.mrb[0].mxu0
    %v4217 = vadd.f32 %v4024, %v4216
    %v4218 = vpop.f32.mrb[0].mxu0
    %v4219 = vadd.f32 %v4026, %v4218
    %4220 = vmatprep.mubr.bf16.mxu0 %v3262
    %4221 = vmatmul.mubr.bf16.gmra.mrb[0].mxu0 %v3261
    %v4222 = vpop.f32.mrb[0].mxu0
    %v4223 = vadd.f32 %v4030, %v4222
    %v4224 = vpop.f32.mrb[0].mxu0
    %v4225 = vadd.f32 %v4032, %v4224
    %v4226 = vpop.f32.mrb[0].mxu0
    %v4227 = vadd.f32 %v4034, %v4226
    %v4228 = vpop.f32.mrb[0].mxu0
    %v4229 = vadd.f32 %v4036, %v4228
    %4230 = vmatprep.mubr.bf16.mxu0 %v3266
    %4231 = vmatmul.mubr.bf16.gmra.mrb[0].mxu0 %v3265
    %v4232 = vpop.f32.mrb[0].mxu0
    %v4233 = vadd.f32 %v4040, %v4232
    %v4234 = vpop.f32.mrb[0].mxu0
    %v4235 = vadd.f32 %v4042, %v4234
    %v4236 = vpop.f32.mrb[0].mxu0
    %v4237 = vadd.f32 %v4044, %v4236
    %v4238 = vpop.f32.mrb[0].mxu0
    %v4239 = vadd.f32 %v4046, %v4238
    %4240 = vmatprep.mubr.bf16.mxu0 %v3270
    %4241 = vmatmul.mubr.bf16.gmra.mrb[0].mxu0 %v3269
    %v4242 = vpop.f32.mrb[0].mxu0
    %v4243 = vadd.f32 %v4050, %v4242
    %v4244 = vpop.f32.mrb[0].mxu0
    %v4245 = vadd.f32 %v4052, %v4244
    %v4246 = vpop.f32.mrb[0].mxu0
    %v4247 = vadd.f32 %v4054, %v4246
    %v4248 = vpop.f32.mrb[0].mxu0
    %v4249 = vadd.f32 %v4056, %v4248
    %4250 = vmatprep.mubr.bf16.mxu0 %v3274
    %4251 = vmatmul.mubr.bf16.gmra.mrb[0].mxu0 %v3273
    %v4252 = vpop.f32.mrb[0].mxu0
    %v4253 = vadd.f32 %v4060, %v4252
    %v4254 = vpop.f32.mrb[0].mxu0
    %v4255 = vadd.f32 %v4062, %v4254
    %v4256 = vpop.f32.mrb[0].mxu0
    %v4257 = vadd.f32 %v4064, %v4256
    %v4258 = vpop.f32.mrb[0].mxu0
    %v4259 = vadd.f32 %v4066, %v4258
    %4260 = vmatprep.mubr.bf16.mxu0 %v3278
    %4261 = vmatmul.mubr.bf16.gmra.mrb[0].mxu0 %v3277
    %v4262 = vpop.f32.mrb[0].mxu0
    %v4263 = vadd.f32 %v4070, %v4262
    %v4264 = vpop.f32.mrb[0].mxu0
    %v4265 = vadd.f32 %v4072, %v4264
    %v4266 = vpop.f32.mrb[0].mxu0
    %v4267 = vadd.f32 %v4074, %v4266
    %v4268 = vpop.f32.mrb[0].mxu0
    %v4269 = vadd.f32 %v4076, %v4268
    %4270 = vmatprep.mubr.bf16.mxu0 %v3282
    %4271 = vmatmul.mubr.bf16.gmra.mrb[0].mxu0 %v3281
    %v4272 = vpop.f32.mrb[0].mxu0
    %v4273 = vadd.f32 %v4080, %v4272
    %v4274 = vpop.f32.mrb[0].mxu0
    %v4275 = vadd.f32 %v4082, %v4274
    %v4276 = vpop.f32.mrb[0].mxu0
    %v4277 = vadd.f32 %v4084, %v4276
    %v4278 = vpop.f32.mrb[0].mxu0
    %v4279 = vadd.f32 %v4086, %v4278
    %4280 = vmatprep.mubr.bf16.mxu0 %v3286
    %4281 = vmatmul.mubr.bf16.gmra.mrb[0].mxu0 %v3285
    %v4282 = vpop.f32.mrb[0].mxu0
    %v4283 = vadd.f32 %v4090, %v4282
    %v4284 = vpop.f32.mrb[0].mxu0
    %v4285 = vadd.f32 %v4092, %v4284
    %v4286 = vpop.f32.mrb[0].mxu0
    %v4287 = vadd.f32 %v4094, %v4286
    %v4288 = vpop.f32.mrb[0].mxu0
    %v4289 = vadd.f32 %v4096, %v4288
    %4290 = vmatprep.mubr.bf16.mxu0 %v3290
    %4291 = vmatmul.mubr.bf16.gmra.mrb[0].mxu0 %v3289
    %v4292 = vpop.f32.mrb[0].mxu0
    %v4293 = vadd.f32 %v4100, %v4292
    %v4294 = vpop.f32.mrb[0].mxu0
    %v4295 = vadd.f32 %v4102, %v4294
    %v4296 = vpop.f32.mrb[0].mxu0
    %v4297 = vadd.f32 %v4104, %v4296
    %v4298 = vpop.f32.mrb[0].mxu0
    %v4299 = vadd.f32 %v4106, %v4298
    %4300 = vmatprep.mubr.bf16.mxu0 %v3294
    %4301 = vmatmul.mubr.bf16.gmra.mrb[0].mxu0 %v3293
    %v4302 = vpop.f32.mrb[0].mxu0
    %v4303 = vadd.f32 %v4110, %v4302
    %v4304 = vpop.f32.mrb[0].mxu0
    %v4305 = vadd.f32 %v4112, %v4304
    %v4306 = vpop.f32.mrb[0].mxu0
    %v4307 = vadd.f32 %v4114, %v4306
    %v4308 = vpop.f32.mrb[0].mxu0
    %v4309 = vadd.f32 %v4116, %v4308
    %4310 = vmatprep.mubr.bf16.mxu0 %v3298
    %4311 = vmatmul.mubr.bf16.gmra.mrb[0].mxu0 %v3297
    %v4312 = vpop.f32.mrb[0].mxu0
    %v4313 = vadd.f32 %v4120, %v4312
    %v4314 = vpop.f32.mrb[0].mxu0
    %v4315 = vadd.f32 %v4122, %v4314
    %v4316 = vpop.f32.mrb[0].mxu0
    %v4317 = vadd.f32 %v4124, %v4316
    %v4318 = vpop.f32.mrb[0].mxu0
    %v4319 = vadd.f32 %v4126, %v4318
    %4320 = vmatprep.mubr.bf16.mxu0 %v3302
    %4321 = vmatmul.mubr.bf16.gmra.mrb[0].mxu0 %v3301
    %v4322 = vpop.f32.mrb[0].mxu0
    %v4323 = vadd.f32 %v4130, %v4322
    %v4324 = vpop.f32.mrb[0].mxu0
    %v4325 = vadd.f32 %v4132, %v4324
    %v4326 = vpop.f32.mrb[0].mxu0
    %v4327 = vadd.f32 %v4134, %v4326
    %v4328 = vpop.f32.mrb[0].mxu0
    %v4329 = vadd.f32 %v4136, %v4328
    %4330 = vdwg.mxu0
    %4331 = vmatprep.subr.bf16.mxu0 %v3308
    %4332 = vmatpush1.bf16.msra.mxu0 %v3307
    %4333 = vmatprep.subr.bf16.mxu0 %v3316
    %4334 = vmatpush1.bf16.msra.mxu0 %v3315
    %4335 = vmatprep.subr.bf16.mxu0 %v3324
    %4336 = vmatpush1.bf16.msra.mxu0 %v3323
    %4337 = vmatprep.subr.bf16.mxu0 %v3332
    %4338 = vmatpush1.bf16.msra.mxu0 %v3331
    %4339 = vmatprep.subr.bf16.mxu0 %v3340
    %4340 = vmatpush1.bf16.msra.mxu0 %v3339
    %4341 = vmatprep.subr.bf16.mxu0 %v3348
    %4342 = vmatpush1.bf16.msra.mxu0 %v3347
    %4343 = vmatprep.subr.bf16.mxu0 %v3356
    %4344 = vmatpush1.bf16.msra.mxu0 %v3355
    %4345 = vmatprep.subr.bf16.mxu0 %v3364
    %4346 = vmatpush1.bf16.msra.mxu0 %v3363
    %4347 = vmatprep.subr.bf16.mxu0 %v3372
    %4348 = vmatpush1.bf16.msra.mxu0 %v3371
    %4349 = vmatprep.subr.bf16.mxu0 %v3380
    %4350 = vmatpush1.bf16.msra.mxu0 %v3379
    %4351 = vmatprep.subr.bf16.mxu0 %v3388
    %4352 = vmatpush1.bf16.msra.mxu0 %v3387
    %4353 = vmatprep.subr.bf16.mxu0 %v3396
    %4354 = vmatpush1.bf16.msra.mxu0 %v3395
    %4355 = vmatprep.subr.bf16.mxu0 %v3404
    %4356 = vmatpush1.bf16.msra.mxu0 %v3403
    %4357 = vmatprep.subr.bf16.mxu0 %v3412
    %4358 = vmatpush1.bf16.msra.mxu0 %v3411
    %4359 = vmatprep.subr.bf16.mxu0 %v3420
    %4360 = vmatpush1.bf16.msra.mxu0 %v3419
    %4361 = vmatprep.subr.bf16.mxu0 %v3428
    %4362 = vmatpush1.bf16.msra.mxu0 %v3427
    %4363 = vmatprep.mubr.bf16.mxu0 %v3240
    %4364 = vmatmul.mubr.bf16.gmra.mrb[0].mxu0 %v3239
    %v4365 = vpop.f32.mrb[0].mxu0
    %v4366 = vadd.f32 0.0, %v4365
    %v4367 = vpop.f32.mrb[0].mxu0
    %v4368 = vadd.f32 0.0, %v4367
    %v4369 = vpop.f32.mrb[0].mxu0
    %v4370 = vadd.f32 0.0, %v4369
    %v4371 = vpop.f32.mrb[0].mxu0
    %v4372 = vadd.f32 0.0, %v4371
    %4373 = vmatprep.mubr.bf16.mxu0 %v3244
    %4374 = vmatmul.mubr.bf16.gmra.mrb[0].mxu0 %v3243
    %v4375 = vpop.f32.mrb[0].mxu0
    %v4376 = vadd.f32 0.0, %v4375
    %v4377 = vpop.f32.mrb[0].mxu0
    %v4378 = vadd.f32 0.0, %v4377
    %v4379 = vpop.f32.mrb[0].mxu0
    %v4380 = vadd.f32 0.0, %v4379
    %v4381 = vpop.f32.mrb[0].mxu0
    %v4382 = vadd.f32 0.0, %v4381
    %4383 = vmatprep.mubr.bf16.mxu0 %v3248
    %4384 = vmatmul.mubr.bf16.gmra.mrb[0].mxu0 %v3247
    %v4385 = vpop.f32.mrb[0].mxu0
    %v4386 = vadd.f32 0.0, %v4385
    %v4387 = vpop.f32.mrb[0].mxu0
    %v4388 = vadd.f32 0.0, %v4387
    %v4389 = vpop.f32.mrb[0].mxu0
    %v4390 = vadd.f32 0.0, %v4389
    %v4391 = vpop.f32.mrb[0].mxu0
    %v4392 = vadd.f32 0.0, %v4391
    %4393 = vmatprep.mubr.bf16.mxu0 %v3252
    %4394 = vmatmul.mubr.bf16.gmra.mrb[0].mxu0 %v3251
    %v4395 = vpop.f32.mrb[0].mxu0
    %v4396 = vadd.f32 0.0, %v4395
    %v4397 = vpop.f32.mrb[0].mxu0
    %v4398 = vadd.f32 0.0, %v4397
    %v4399 = vpop.f32.mrb[0].mxu0
    %v4400 = vadd.f32 0.0, %v4399
    %v4401 = vpop.f32.mrb[0].mxu0
    %v4402 = vadd.f32 0.0, %v4401
    %4403 = vmatprep.mubr.bf16.mxu0 %v3256
    %4404 = vmatmul.mubr.bf16.gmra.mrb[0].mxu0 %v3255
    %v4405 = vpop.f32.mrb[0].mxu0
    %v4406 = vadd.f32 0.0, %v4405
    %v4407 = vpop.f32.mrb[0].mxu0
    %v4408 = vadd.f32 0.0, %v4407
    %v4409 = vpop.f32.mrb[0].mxu0
    %v4410 = vadd.f32 0.0, %v4409
    %v4411 = vpop.f32.mrb[0].mxu0
    %v4412 = vadd.f32 0.0, %v4411
    %4413 = vmatprep.mubr.bf16.mxu0 %v3260
    %4414 = vmatmul.mubr.bf16.gmra.mrb[0].mxu0 %v3259
    %v4415 = vpop.f32.mrb[0].mxu0
    %v4416 = vadd.f32 0.0, %v4415
    %v4417 = vpop.f32.mrb[0].mxu0
    %v4418 = vadd.f32 0.0, %v4417
    %v4419 = vpop.f32.mrb[0].mxu0
    %v4420 = vadd.f32 0.0, %v4419
    %v4421 = vpop.f32.mrb[0].mxu0
    %v4422 = vadd.f32 0.0, %v4421
    %4423 = vmatprep.mubr.bf16.mxu0 %v3264
    %4424 = vmatmul.mubr.bf16.gmra.mrb[0].mxu0 %v3263
    %v4425 = vpop.f32.mrb[0].mxu0
    %v4426 = vadd.f32 0.0, %v4425
    %v4427 = vpop.f32.mrb[0].mxu0
    %v4428 = vadd.f32 0.0, %v4427
    %v4429 = vpop.f32.mrb[0].mxu0
    %v4430 = vadd.f32 0.0, %v4429
    %v4431 = vpop.f32.mrb[0].mxu0
    %v4432 = vadd.f32 0.0, %v4431
    %4433 = vmatprep.mubr.bf16.mxu0 %v3268
    %4434 = vmatmul.mubr.bf16.gmra.mrb[0].mxu0 %v3267
    %v4435 = vpop.f32.mrb[0].mxu0
    %v4436 = vadd.f32 0.0, %v4435
    %v4437 = vpop.f32.mrb[0].mxu0
    %v4438 = vadd.f32 0.0, %v4437
    %v4439 = vpop.f32.mrb[0].mxu0
    %v4440 = vadd.f32 0.0, %v4439
    %v4441 = vpop.f32.mrb[0].mxu0
    %v4442 = vadd.f32 0.0, %v4441
    %4443 = vmatprep.mubr.bf16.mxu0 %v3272
    %4444 = vmatmul.mubr.bf16.gmra.mrb[0].mxu0 %v3271
    %v4445 = vpop.f32.mrb[0].mxu0
    %v4446 = vadd.f32 0.0, %v4445
    %v4447 = vpop.f32.mrb[0].mxu0
    %v4448 = vadd.f32 0.0, %v4447
    %v4449 = vpop.f32.mrb[0].mxu0
    %v4450 = vadd.f32 0.0, %v4449
    %v4451 = vpop.f32.mrb[0].mxu0
    %v4452 = vadd.f32 0.0, %v4451
    %4453 = vmatprep.mubr.bf16.mxu0 %v3276
    %4454 = vmatmul.mubr.bf16.gmra.mrb[0].mxu0 %v3275
    %v4455 = vpop.f32.mrb[0].mxu0
    %v4456 = vadd.f32 0.0, %v4455
    %v4457 = vpop.f32.mrb[0].mxu0
    %v4458 = vadd.f32 0.0, %v4457
    %v4459 = vpop.f32.mrb[0].mxu0
    %v4460 = vadd.f32 0.0, %v4459
    %v4461 = vpop.f32.mrb[0].mxu0
    %v4462 = vadd.f32 0.0, %v4461
    %4463 = vmatprep.mubr.bf16.mxu0 %v3280
    %4464 = vmatmul.mubr.bf16.gmra.mrb[0].mxu0 %v3279
    %v4465 = vpop.f32.mrb[0].mxu0
    %v4466 = vadd.f32 0.0, %v4465
    %v4467 = vpop.f32.mrb[0].mxu0
    %v4468 = vadd.f32 0.0, %v4467
    %v4469 = vpop.f32.mrb[0].mxu0
    %v4470 = vadd.f32 0.0, %v4469
    %v4471 = vpop.f32.mrb[0].mxu0
    %v4472 = vadd.f32 0.0, %v4471
    %4473 = vmatprep.mubr.bf16.mxu0 %v3284
    %4474 = vmatmul.mubr.bf16.gmra.mrb[0].mxu0 %v3283
    %v4475 = vpop.f32.mrb[0].mxu0
    %v4476 = vadd.f32 0.0, %v4475
    %v4477 = vpop.f32.mrb[0].mxu0
    %v4478 = vadd.f32 0.0, %v4477
    %v4479 = vpop.f32.mrb[0].mxu0
    %v4480 = vadd.f32 0.0, %v4479
    %v4481 = vpop.f32.mrb[0].mxu0
    %v4482 = vadd.f32 0.0, %v4481
    %4483 = vmatprep.mubr.bf16.mxu0 %v3288
    %4484 = vmatmul.mubr.bf16.gmra.mrb[0].mxu0 %v3287
    %v4485 = vpop.f32.mrb[0].mxu0
    %v4486 = vadd.f32 0.0, %v4485
    %v4487 = vpop.f32.mrb[0].mxu0
    %v4488 = vadd.f32 0.0, %v4487
    %v4489 = vpop.f32.mrb[0].mxu0
    %v4490 = vadd.f32 0.0, %v4489
    %v4491 = vpop.f32.mrb[0].mxu0
    %v4492 = vadd.f32 0.0, %v4491
    %4493 = vmatprep.mubr.bf16.mxu0 %v3292
    %4494 = vmatmul.mubr.bf16.gmra.mrb[0].mxu0 %v3291
    %v4495 = vpop.f32.mrb[0].mxu0
    %v4496 = vadd.f32 0.0, %v4495
    %v4497 = vpop.f32.mrb[0].mxu0
    %v4498 = vadd.f32 0.0, %v4497
    %v4499 = vpop.f32.mrb[0].mxu0
    %v4500 = vadd.f32 0.0, %v4499
    %v4501 = vpop.f32.mrb[0].mxu0
    %v4502 = vadd.f32 0.0, %v4501
    %4503 = vmatprep.mubr.bf16.mxu0 %v3296
    %4504 = vmatmul.mubr.bf16.gmra.mrb[0].mxu0 %v3295
    %v4505 = vpop.f32.mrb[0].mxu0
    %v4506 = vadd.f32 0.0, %v4505
    %v4507 = vpop.f32.mrb[0].mxu0
    %v4508 = vadd.f32 0.0, %v4507
    %v4509 = vpop.f32.mrb[0].mxu0
    %v4510 = vadd.f32 0.0, %v4509
    %v4511 = vpop.f32.mrb[0].mxu0
    %v4512 = vadd.f32 0.0, %v4511
    %4513 = vmatprep.mubr.bf16.mxu0 %v3300
    %4514 = vmatmul.mubr.bf16.gmra.mrb[0].mxu0 %v3299
    %v4515 = vpop.f32.mrb[0].mxu0
    %v4516 = vadd.f32 0.0, %v4515
    %v4517 = vpop.f32.mrb[0].mxu0
    %v4518 = vadd.f32 0.0, %v4517
    %v4519 = vpop.f32.mrb[0].mxu0
    %v4520 = vadd.f32 0.0, %v4519
    %v4521 = vpop.f32.mrb[0].mxu0
    %v4522 = vadd.f32 0.0, %v4521
    %4523 = vdwg.mxu0
    %4524 = vmatprep.subr.bf16.mxu0 %v3436
    %4525 = vmatpush1.bf16.msra.mxu0 %v3435
    %4526 = vmatprep.subr.bf16.mxu0 %v3444
    %4527 = vmatpush1.bf16.msra.mxu0 %v3443
    %4528 = vmatprep.subr.bf16.mxu0 %v3452
    %4529 = vmatpush1.bf16.msra.mxu0 %v3451
    %4530 = vmatprep.subr.bf16.mxu0 %v3460
    %4531 = vmatpush1.bf16.msra.mxu0 %v3459
    %4532 = vmatprep.subr.bf16.mxu0 %v3468
    %4533 = vmatpush1.bf16.msra.mxu0 %v3467
    %4534 = vmatprep.subr.bf16.mxu0 %v3476
    %4535 = vmatpush1.bf16.msra.mxu0 %v3475
    %4536 = vmatprep.subr.bf16.mxu0 %v3484
    %4537 = vmatpush1.bf16.msra.mxu0 %v3483
    %4538 = vmatprep.subr.bf16.mxu0 %v3492
    %4539 = vmatpush1.bf16.msra.mxu0 %v3491
    %4540 = vmatprep.subr.bf16.mxu0 %v3500
    %4541 = vmatpush1.bf16.msra.mxu0 %v3499
    %4542 = vmatprep.subr.bf16.mxu0 %v3508
    %4543 = vmatpush1.bf16.msra.mxu0 %v3507
    %4544 = vmatprep.subr.bf16.mxu0 %v3516
    %4545 = vmatpush1.bf16.msra.mxu0 %v3515
    %4546 = vmatprep.subr.bf16.mxu0 %v3524
    %4547 = vmatpush1.bf16.msra.mxu0 %v3523
    %4548 = vmatprep.subr.bf16.mxu0 %v3532
    %4549 = vmatpush1.bf16.msra.mxu0 %v3531
    %4550 = vmatprep.subr.bf16.mxu0 %v3540
    %4551 = vmatpush1.bf16.msra.mxu0 %v3539
    %4552 = vmatprep.subr.bf16.mxu0 %v3548
    %4553 = vmatpush1.bf16.msra.mxu0 %v3547
    %4554 = vmatprep.subr.bf16.mxu0 %v3556
    %4555 = vmatpush1.bf16.msra.mxu0 %v3555
    %4556 = vmatprep.mubr.bf16.mxu0 %v3242
    %4557 = vmatmul.mubr.bf16.gmra.mrb[0].mxu0 %v3241
    %v4558 = vpop.f32.mrb[0].mxu0
    %v4559 = vadd.f32 %v4366, %v4558
    %v4560 = vpop.f32.mrb[0].mxu0
    %v4561 = vadd.f32 %v4368, %v4560
    %v4562 = vpop.f32.mrb[0].mxu0
    %v4563 = vadd.f32 %v4370, %v4562
    %v4564 = vpop.f32.mrb[0].mxu0
    %v4565 = vadd.f32 %v4372, %v4564
    %4566 = vmatprep.mubr.bf16.mxu0 %v3246
    %4567 = vmatmul.mubr.bf16.gmra.mrb[0].mxu0 %v3245
    %v4568 = vpop.f32.mrb[0].mxu0
    %v4569 = vadd.f32 %v4376, %v4568
    %v4570 = vpop.f32.mrb[0].mxu0
    %v4571 = vadd.f32 %v4378, %v4570
    %v4572 = vpop.f32.mrb[0].mxu0
    %v4573 = vadd.f32 %v4380, %v4572
    %v4574 = vpop.f32.mrb[0].mxu0
    %v4575 = vadd.f32 %v4382, %v4574
    %4576 = vmatprep.mubr.bf16.mxu0 %v3250
    %4577 = vmatmul.mubr.bf16.gmra.mrb[0].mxu0 %v3249
    %v4578 = vpop.f32.mrb[0].mxu0
    %v4579 = vadd.f32 %v4386, %v4578
    %v4580 = vpop.f32.mrb[0].mxu0
    %v4581 = vadd.f32 %v4388, %v4580
    %v4582 = vpop.f32.mrb[0].mxu0
    %v4583 = vadd.f32 %v4390, %v4582
    %v4584 = vpop.f32.mrb[0].mxu0
    %v4585 = vadd.f32 %v4392, %v4584
    %4586 = vmatprep.mubr.bf16.mxu0 %v3254
    %4587 = vmatmul.mubr.bf16.gmra.mrb[0].mxu0 %v3253
    %v4588 = vpop.f32.mrb[0].mxu0
    %v4589 = vadd.f32 %v4396, %v4588
    %v4590 = vpop.f32.mrb[0].mxu0
    %v4591 = vadd.f32 %v4398, %v4590
    %v4592 = vpop.f32.mrb[0].mxu0
    %v4593 = vadd.f32 %v4400, %v4592
    %v4594 = vpop.f32.mrb[0].mxu0
    %v4595 = vadd.f32 %v4402, %v4594
    %4596 = vmatprep.mubr.bf16.mxu0 %v3258
    %4597 = vmatmul.mubr.bf16.gmra.mrb[0].mxu0 %v3257
    %v4598 = vpop.f32.mrb[0].mxu0
    %v4599 = vadd.f32 %v4406, %v4598
    %v4600 = vpop.f32.mrb[0].mxu0
    %v4601 = vadd.f32 %v4408, %v4600
    %v4602 = vpop.f32.mrb[0].mxu0
    %v4603 = vadd.f32 %v4410, %v4602
    %v4604 = vpop.f32.mrb[0].mxu0
    %v4605 = vadd.f32 %v4412, %v4604
    %4606 = vmatprep.mubr.bf16.mxu0 %v3262
    %4607 = vmatmul.mubr.bf16.gmra.mrb[0].mxu0 %v3261
    %v4608 = vpop.f32.mrb[0].mxu0
    %v4609 = vadd.f32 %v4416, %v4608
    %v4610 = vpop.f32.mrb[0].mxu0
    %v4611 = vadd.f32 %v4418, %v4610
    %v4612 = vpop.f32.mrb[0].mxu0
    %v4613 = vadd.f32 %v4420, %v4612
    %v4614 = vpop.f32.mrb[0].mxu0
    %v4615 = vadd.f32 %v4422, %v4614
    %4616 = vmatprep.mubr.bf16.mxu0 %v3266
    %4617 = vmatmul.mubr.bf16.gmra.mrb[0].mxu0 %v3265
    %v4618 = vpop.f32.mrb[0].mxu0
    %v4619 = vadd.f32 %v4426, %v4618
    %v4620 = vpop.f32.mrb[0].mxu0
    %v4621 = vadd.f32 %v4428, %v4620
    %v4622 = vpop.f32.mrb[0].mxu0
    %v4623 = vadd.f32 %v4430, %v4622
    %v4624 = vpop.f32.mrb[0].mxu0
    %v4625 = vadd.f32 %v4432, %v4624
    %4626 = vmatprep.mubr.bf16.mxu0 %v3270
    %4627 = vmatmul.mubr.bf16.gmra.mrb[0].mxu0 %v3269
    %v4628 = vpop.f32.mrb[0].mxu0
    %v4629 = vadd.f32 %v4436, %v4628
    %v4630 = vpop.f32.mrb[0].mxu0
    %v4631 = vadd.f32 %v4438, %v4630
    %v4632 = vpop.f32.mrb[0].mxu0
    %v4633 = vadd.f32 %v4440, %v4632
    %v4634 = vpop.f32.mrb[0].mxu0
    %v4635 = vadd.f32 %v4442, %v4634
    %4636 = vmatprep.mubr.bf16.mxu0 %v3274
    %4637 = vmatmul.mubr.bf16.gmra.mrb[0].mxu0 %v3273
    %v4638 = vpop.f32.mrb[0].mxu0
    %v4639 = vadd.f32 %v4446, %v4638
    %v4640 = vpop.f32.mrb[0].mxu0
    %v4641 = vadd.f32 %v4448, %v4640
    %v4642 = vpop.f32.mrb[0].mxu0
    %v4643 = vadd.f32 %v4450, %v4642
    %v4644 = vpop.f32.mrb[0].mxu0
    %v4645 = vadd.f32 %v4452, %v4644
    %4646 = vmatprep.mubr.bf16.mxu0 %v3278
    %4647 = vmatmul.mubr.bf16.gmra.mrb[0].mxu0 %v3277
    %v4648 = vpop.f32.mrb[0].mxu0
    %v4649 = vadd.f32 %v4456, %v4648
    %v4650 = vpop.f32.mrb[0].mxu0
    %v4651 = vadd.f32 %v4458, %v4650
    %v4652 = vpop.f32.mrb[0].mxu0
    %v4653 = vadd.f32 %v4460, %v4652
    %v4654 = vpop.f32.mrb[0].mxu0
    %v4655 = vadd.f32 %v4462, %v4654
    %4656 = vmatprep.mubr.bf16.mxu0 %v3282
    %4657 = vmatmul.mubr.bf16.gmra.mrb[0].mxu0 %v3281
    %v4658 = vpop.f32.mrb[0].mxu0
    %v4659 = vadd.f32 %v4466, %v4658
    %v4660 = vpop.f32.mrb[0].mxu0
    %v4661 = vadd.f32 %v4468, %v4660
    %v4662 = vpop.f32.mrb[0].mxu0
    %v4663 = vadd.f32 %v4470, %v4662
    %v4664 = vpop.f32.mrb[0].mxu0
    %v4665 = vadd.f32 %v4472, %v4664
    %4666 = vmatprep.mubr.bf16.mxu0 %v3286
    %4667 = vmatmul.mubr.bf16.gmra.mrb[0].mxu0 %v3285
    %v4668 = vpop.f32.mrb[0].mxu0
    %v4669 = vadd.f32 %v4476, %v4668
    %v4670 = vpop.f32.mrb[0].mxu0
    %v4671 = vadd.f32 %v4478, %v4670
    %v4672 = vpop.f32.mrb[0].mxu0
    %v4673 = vadd.f32 %v4480, %v4672
    %v4674 = vpop.f32.mrb[0].mxu0
    %v4675 = vadd.f32 %v4482, %v4674
    %4676 = vmatprep.mubr.bf16.mxu0 %v3290
    %4677 = vmatmul.mubr.bf16.gmra.mrb[0].mxu0 %v3289
    %v4678 = vpop.f32.mrb[0].mxu0
    %v4679 = vadd.f32 %v4486, %v4678
    %v4680 = vpop.f32.mrb[0].mxu0
    %v4681 = vadd.f32 %v4488, %v4680
    %v4682 = vpop.f32.mrb[0].mxu0
    %v4683 = vadd.f32 %v4490, %v4682
    %v4684 = vpop.f32.mrb[0].mxu0
    %v4685 = vadd.f32 %v4492, %v4684
    %4686 = vmatprep.mubr.bf16.mxu0 %v3294
    %4687 = vmatmul.mubr.bf16.gmra.mrb[0].mxu0 %v3293
    %v4688 = vpop.f32.mrb[0].mxu0
    %v4689 = vadd.f32 %v4496, %v4688
    %v4690 = vpop.f32.mrb[0].mxu0
    %v4691 = vadd.f32 %v4498, %v4690
    %v4692 = vpop.f32.mrb[0].mxu0
    %v4693 = vadd.f32 %v4500, %v4692
    %v4694 = vpop.f32.mrb[0].mxu0
    %v4695 = vadd.f32 %v4502, %v4694
    %4696 = vmatprep.mubr.bf16.mxu0 %v3298
    %4697 = vmatmul.mubr.bf16.gmra.mrb[0].mxu0 %v3297
    %v4698 = vpop.f32.mrb[0].mxu0
    %v4699 = vadd.f32 %v4506, %v4698
    %v4700 = vpop.f32.mrb[0].mxu0
    %v4701 = vadd.f32 %v4508, %v4700
    %v4702 = vpop.f32.mrb[0].mxu0
    %v4703 = vadd.f32 %v4510, %v4702
    %v4704 = vpop.f32.mrb[0].mxu0
    %v4705 = vadd.f32 %v4512, %v4704
    %4706 = vmatprep.mubr.bf16.mxu0 %v3302
    %4707 = vmatmul.mubr.bf16.gmra.mrb[0].mxu0 %v3301
    %v4708 = vpop.f32.mrb[0].mxu0
    %v4709 = vadd.f32 %v4516, %v4708
    %v4710 = vpop.f32.mrb[0].mxu0
    %v4711 = vadd.f32 %v4518, %v4710
    %v4712 = vpop.f32.mrb[0].mxu0
    %v4713 = vadd.f32 %v4520, %v4712
    %v4714 = vpop.f32.mrb[0].mxu0
    %v4715 = vadd.f32 %v4522, %v4714
    %4716 = vdwg.mxu0
    %4717 = vmatprep.subr.bf16.mxu0 %v3310
    %4718 = vmatpush1.bf16.msra.mxu0 %v3309
    %4719 = vmatprep.subr.bf16.mxu0 %v3318
    %4720 = vmatpush1.bf16.msra.mxu0 %v3317
    %4721 = vmatprep.subr.bf16.mxu0 %v3326
    %4722 = vmatpush1.bf16.msra.mxu0 %v3325
    %4723 = vmatprep.subr.bf16.mxu0 %v3334
    %4724 = vmatpush1.bf16.msra.mxu0 %v3333
    %4725 = vmatprep.subr.bf16.mxu0 %v3342
    %4726 = vmatpush1.bf16.msra.mxu0 %v3341
    %4727 = vmatprep.subr.bf16.mxu0 %v3350
    %4728 = vmatpush1.bf16.msra.mxu0 %v3349
    %4729 = vmatprep.subr.bf16.mxu0 %v3358
    %4730 = vmatpush1.bf16.msra.mxu0 %v3357
    %4731 = vmatprep.subr.bf16.mxu0 %v3366
    %4732 = vmatpush1.bf16.msra.mxu0 %v3365
    %4733 = vmatprep.subr.bf16.mxu0 %v3374
    %4734 = vmatpush1.bf16.msra.mxu0 %v3373
    %4735 = vmatprep.subr.bf16.mxu0 %v3382
    %4736 = vmatpush1.bf16.msra.mxu0 %v3381
    %4737 = vmatprep.subr.bf16.mxu0 %v3390
    %4738 = vmatpush1.bf16.msra.mxu0 %v3389
    %4739 = vmatprep.subr.bf16.mxu0 %v3398
    %4740 = vmatpush1.bf16.msra.mxu0 %v3397
    %4741 = vmatprep.subr.bf16.mxu0 %v3406
    %4742 = vmatpush1.bf16.msra.mxu0 %v3405
    %4743 = vmatprep.subr.bf16.mxu0 %v3414
    %4744 = vmatpush1.bf16.msra.mxu0 %v3413
    %4745 = vmatprep.subr.bf16.mxu0 %v3422
    %4746 = vmatpush1.bf16.msra.mxu0 %v3421
    %4747 = vmatprep.subr.bf16.mxu0 %v3430
    %4748 = vmatpush1.bf16.msra.mxu0 %v3429
    %4749 = vmatprep.mubr.bf16.mxu0 %v3240
    %4750 = vmatmul.mubr.bf16.gmra.mrb[0].mxu0 %v3239
    %v4751 = vpop.f32.mrb[0].mxu0
    %v4752 = vadd.f32 0.0, %v4751
    %v4753 = vpop.f32.mrb[0].mxu0
    %v4754 = vadd.f32 0.0, %v4753
    %v4755 = vpop.f32.mrb[0].mxu0
    %v4756 = vadd.f32 0.0, %v4755
    %v4757 = vpop.f32.mrb[0].mxu0
    %v4758 = vadd.f32 0.0, %v4757
    %4759 = vmatprep.mubr.bf16.mxu0 %v3244
    %4760 = vmatmul.mubr.bf16.gmra.mrb[0].mxu0 %v3243
    %v4761 = vpop.f32.mrb[0].mxu0
    %v4762 = vadd.f32 0.0, %v4761
    %v4763 = vpop.f32.mrb[0].mxu0
    %v4764 = vadd.f32 0.0, %v4763
    %v4765 = vpop.f32.mrb[0].mxu0
    %v4766 = vadd.f32 0.0, %v4765
    %v4767 = vpop.f32.mrb[0].mxu0
    %v4768 = vadd.f32 0.0, %v4767
    %4769 = vmatprep.mubr.bf16.mxu0 %v3248
    %4770 = vmatmul.mubr.bf16.gmra.mrb[0].mxu0 %v3247
    %v4771 = vpop.f32.mrb[0].mxu0
    %v4772 = vadd.f32 0.0, %v4771
    %v4773 = vpop.f32.mrb[0].mxu0
    %v4774 = vadd.f32 0.0, %v4773
    %v4775 = vpop.f32.mrb[0].mxu0
    %v4776 = vadd.f32 0.0, %v4775
    %v4777 = vpop.f32.mrb[0].mxu0
    %v4778 = vadd.f32 0.0, %v4777
    %4779 = vmatprep.mubr.bf16.mxu0 %v3252
    %4780 = vmatmul.mubr.bf16.gmra.mrb[0].mxu0 %v3251
    %v4781 = vpop.f32.mrb[0].mxu0
    %v4782 = vadd.f32 0.0, %v4781
    %v4783 = vpop.f32.mrb[0].mxu0
    %v4784 = vadd.f32 0.0, %v4783
    %v4785 = vpop.f32.mrb[0].mxu0
    %v4786 = vadd.f32 0.0, %v4785
    %v4787 = vpop.f32.mrb[0].mxu0
    %v4788 = vadd.f32 0.0, %v4787
    %4789 = vmatprep.mubr.bf16.mxu0 %v3256
    %4790 = vmatmul.mubr.bf16.gmra.mrb[0].mxu0 %v3255
    %v4791 = vpop.f32.mrb[0].mxu0
    %v4792 = vadd.f32 0.0, %v4791
    %v4793 = vpop.f32.mrb[0].mxu0
    %v4794 = vadd.f32 0.0, %v4793
    %v4795 = vpop.f32.mrb[0].mxu0
    %v4796 = vadd.f32 0.0, %v4795
    %v4797 = vpop.f32.mrb[0].mxu0
    %v4798 = vadd.f32 0.0, %v4797
    %4799 = vmatprep.mubr.bf16.mxu0 %v3260
    %4800 = vmatmul.mubr.bf16.gmra.mrb[0].mxu0 %v3259
    %v4801 = vpop.f32.mrb[0].mxu0
    %v4802 = vadd.f32 0.0, %v4801
    %v4803 = vpop.f32.mrb[0].mxu0
    %v4804 = vadd.f32 0.0, %v4803
    %v4805 = vpop.f32.mrb[0].mxu0
    %v4806 = vadd.f32 0.0, %v4805
    %v4807 = vpop.f32.mrb[0].mxu0
    %v4808 = vadd.f32 0.0, %v4807
    %4809 = vmatprep.mubr.bf16.mxu0 %v3264
    %4810 = vmatmul.mubr.bf16.gmra.mrb[0].mxu0 %v3263
    %v4811 = vpop.f32.mrb[0].mxu0
    %v4812 = vadd.f32 0.0, %v4811
    %v4813 = vpop.f32.mrb[0].mxu0
    %v4814 = vadd.f32 0.0, %v4813
    %v4815 = vpop.f32.mrb[0].mxu0
    %v4816 = vadd.f32 0.0, %v4815
    %v4817 = vpop.f32.mrb[0].mxu0
    %v4818 = vadd.f32 0.0, %v4817
    %4819 = vmatprep.mubr.bf16.mxu0 %v3268
    %4820 = vmatmul.mubr.bf16.gmra.mrb[0].mxu0 %v3267
    %v4821 = vpop.f32.mrb[0].mxu0
    %v4822 = vadd.f32 0.0, %v4821
    %v4823 = vpop.f32.mrb[0].mxu0
    %v4824 = vadd.f32 0.0, %v4823
    %v4825 = vpop.f32.mrb[0].mxu0
    %v4826 = vadd.f32 0.0, %v4825
    %v4827 = vpop.f32.mrb[0].mxu0
    %v4828 = vadd.f32 0.0, %v4827
    %4829 = vmatprep.mubr.bf16.mxu0 %v3272
    %4830 = vmatmul.mubr.bf16.gmra.mrb[0].mxu0 %v3271
    %v4831 = vpop.f32.mrb[0].mxu0
    %v4832 = vadd.f32 0.0, %v4831
    %v4833 = vpop.f32.mrb[0].mxu0
    %v4834 = vadd.f32 0.0, %v4833
    %v4835 = vpop.f32.mrb[0].mxu0
    %v4836 = vadd.f32 0.0, %v4835
    %v4837 = vpop.f32.mrb[0].mxu0
    %v4838 = vadd.f32 0.0, %v4837
    %4839 = vmatprep.mubr.bf16.mxu0 %v3276
    %4840 = vmatmul.mubr.bf16.gmra.mrb[0].mxu0 %v3275
    %v4841 = vpop.f32.mrb[0].mxu0
    %v4842 = vadd.f32 0.0, %v4841
    %v4843 = vpop.f32.mrb[0].mxu0
    %v4844 = vadd.f32 0.0, %v4843
    %v4845 = vpop.f32.mrb[0].mxu0
    %v4846 = vadd.f32 0.0, %v4845
    %v4847 = vpop.f32.mrb[0].mxu0
    %v4848 = vadd.f32 0.0, %v4847
    %4849 = vmatprep.mubr.bf16.mxu0 %v3280
    %4850 = vmatmul.mubr.bf16.gmra.mrb[0].mxu0 %v3279
    %v4851 = vpop.f32.mrb[0].mxu0
    %v4852 = vadd.f32 0.0, %v4851
    %v4853 = vpop.f32.mrb[0].mxu0
    %v4854 = vadd.f32 0.0, %v4853
    %v4855 = vpop.f32.mrb[0].mxu0
    %v4856 = vadd.f32 0.0, %v4855
    %v4857 = vpop.f32.mrb[0].mxu0
    %v4858 = vadd.f32 0.0, %v4857
    %4859 = vmatprep.mubr.bf16.mxu0 %v3284
    %4860 = vmatmul.mubr.bf16.gmra.mrb[0].mxu0 %v3283
    %v4861 = vpop.f32.mrb[0].mxu0
    %v4862 = vadd.f32 0.0, %v4861
    %v4863 = vpop.f32.mrb[0].mxu0
    %v4864 = vadd.f32 0.0, %v4863
    %v4865 = vpop.f32.mrb[0].mxu0
    %v4866 = vadd.f32 0.0, %v4865
    %v4867 = vpop.f32.mrb[0].mxu0
    %v4868 = vadd.f32 0.0, %v4867
    %4869 = vmatprep.mubr.bf16.mxu0 %v3288
    %4870 = vmatmul.mubr.bf16.gmra.mrb[0].mxu0 %v3287
    %v4871 = vpop.f32.mrb[0].mxu0
    %v4872 = vadd.f32 0.0, %v4871
    %v4873 = vpop.f32.mrb[0].mxu0
    %v4874 = vadd.f32 0.0, %v4873
    %v4875 = vpop.f32.mrb[0].mxu0
    %v4876 = vadd.f32 0.0, %v4875
    %v4877 = vpop.f32.mrb[0].mxu0
    %v4878 = vadd.f32 0.0, %v4877
    %4879 = vmatprep.mubr.bf16.mxu0 %v3292
    %4880 = vmatmul.mubr.bf16.gmra.mrb[0].mxu0 %v3291
    %v4881 = vpop.f32.mrb[0].mxu0
    %v4882 = vadd.f32 0.0, %v4881
    %v4883 = vpop.f32.mrb[0].mxu0
    %v4884 = vadd.f32 0.0, %v4883
    %v4885 = vpop.f32.mrb[0].mxu0
    %v4886 = vadd.f32 0.0, %v4885
    %v4887 = vpop.f32.mrb[0].mxu0
    %v4888 = vadd.f32 0.0, %v4887
    %4889 = vmatprep.mubr.bf16.mxu0 %v3296
    %4890 = vmatmul.mubr.bf16.gmra.mrb[0].mxu0 %v3295
    %v4891 = vpop.f32.mrb[0].mxu0
    %v4892 = vadd.f32 0.0, %v4891
    %v4893 = vpop.f32.mrb[0].mxu0
    %v4894 = vadd.f32 0.0, %v4893
    %v4895 = vpop.f32.mrb[0].mxu0
    %v4896 = vadd.f32 0.0, %v4895
    %v4897 = vpop.f32.mrb[0].mxu0
    %v4898 = vadd.f32 0.0, %v4897
    %4899 = vmatprep.mubr.bf16.mxu0 %v3300
    %4900 = vmatmul.mubr.bf16.gmra.mrb[0].mxu0 %v3299
    %v4901 = vpop.f32.mrb[0].mxu0
    %v4902 = vadd.f32 0.0, %v4901
    %v4903 = vpop.f32.mrb[0].mxu0
    %v4904 = vadd.f32 0.0, %v4903
    %v4905 = vpop.f32.mrb[0].mxu0
    %v4906 = vadd.f32 0.0, %v4905
    %v4907 = vpop.f32.mrb[0].mxu0
    %v4908 = vadd.f32 0.0, %v4907
    %4909 = vdwg.mxu0
    %4910 = vmatprep.subr.bf16.mxu0 %v3438
    %4911 = vmatpush1.bf16.msra.mxu0 %v3437
    %4912 = vmatprep.subr.bf16.mxu0 %v3446
    %4913 = vmatpush1.bf16.msra.mxu0 %v3445
    %4914 = vmatprep.subr.bf16.mxu0 %v3454
    %4915 = vmatpush1.bf16.msra.mxu0 %v3453
    %4916 = vmatprep.subr.bf16.mxu0 %v3462
    %4917 = vmatpush1.bf16.msra.mxu0 %v3461
    %4918 = vmatprep.subr.bf16.mxu0 %v3470
    %4919 = vmatpush1.bf16.msra.mxu0 %v3469
    %4920 = vmatprep.subr.bf16.mxu0 %v3478
    %4921 = vmatpush1.bf16.msra.mxu0 %v3477
    %4922 = vmatprep.subr.bf16.mxu0 %v3486
    %4923 = vmatpush1.bf16.msra.mxu0 %v3485
    %4924 = vmatprep.subr.bf16.mxu0 %v3494
    %4925 = vmatpush1.bf16.msra.mxu0 %v3493
    %4926 = vmatprep.subr.bf16.mxu0 %v3502
    %4927 = vmatpush1.bf16.msra.mxu0 %v3501
    %4928 = vmatprep.subr.bf16.mxu0 %v3510
    %4929 = vmatpush1.bf16.msra.mxu0 %v3509
    %4930 = vmatprep.subr.bf16.mxu0 %v3518
    %4931 = vmatpush1.bf16.msra.mxu0 %v3517
    %4932 = vmatprep.subr.bf16.mxu0 %v3526
    %4933 = vmatpush1.bf16.msra.mxu0 %v3525
    %4934 = vmatprep.subr.bf16.mxu0 %v3534
    %4935 = vmatpush1.bf16.msra.mxu0 %v3533
    %4936 = vmatprep.subr.bf16.mxu0 %v3542
    %4937 = vmatpush1.bf16.msra.mxu0 %v3541
    %4938 = vmatprep.subr.bf16.mxu0 %v3550
    %4939 = vmatpush1.bf16.msra.mxu0 %v3549
    %4940 = vmatprep.subr.bf16.mxu0 %v3558
    %4941 = vmatpush1.bf16.msra.mxu0 %v3557
    %4942 = vmatprep.mubr.bf16.mxu0 %v3242
    %4943 = vmatmul.mubr.bf16.gmra.mrb[0].mxu0 %v3241
    %v4944 = vpop.f32.mrb[0].mxu0
    %v4945 = vadd.f32 %v4752, %v4944
    %v4946 = vpop.f32.mrb[0].mxu0
    %v4947 = vadd.f32 %v4754, %v4946
    %v4948 = vpop.f32.mrb[0].mxu0
    %v4949 = vadd.f32 %v4756, %v4948
    %v4950 = vpop.f32.mrb[0].mxu0
    %v4951 = vadd.f32 %v4758, %v4950
    %4952 = vmatprep.mubr.bf16.mxu0 %v3246
    %4953 = vmatmul.mubr.bf16.gmra.mrb[0].mxu0 %v3245
    %v4954 = vpop.f32.mrb[0].mxu0
    %v4955 = vadd.f32 %v4762, %v4954
    %v4956 = vpop.f32.mrb[0].mxu0
    %v4957 = vadd.f32 %v4764, %v4956
    %v4958 = vpop.f32.mrb[0].mxu0
    %v4959 = vadd.f32 %v4766, %v4958
    %v4960 = vpop.f32.mrb[0].mxu0
    %v4961 = vadd.f32 %v4768, %v4960
    %4962 = vmatprep.mubr.bf16.mxu0 %v3250
    %4963 = vmatmul.mubr.bf16.gmra.mrb[0].mxu0 %v3249
    %v4964 = vpop.f32.mrb[0].mxu0
    %v4965 = vadd.f32 %v4772, %v4964
    %v4966 = vpop.f32.mrb[0].mxu0
    %v4967 = vadd.f32 %v4774, %v4966
    %v4968 = vpop.f32.mrb[0].mxu0
    %v4969 = vadd.f32 %v4776, %v4968
    %v4970 = vpop.f32.mrb[0].mxu0
    %v4971 = vadd.f32 %v4778, %v4970
    %4972 = vmatprep.mubr.bf16.mxu0 %v3254
    %4973 = vmatmul.mubr.bf16.gmra.mrb[0].mxu0 %v3253
    %v4974 = vpop.f32.mrb[0].mxu0
    %v4975 = vadd.f32 %v4782, %v4974
    %v4976 = vpop.f32.mrb[0].mxu0
    %v4977 = vadd.f32 %v4784, %v4976
    %v4978 = vpop.f32.mrb[0].mxu0
    %v4979 = vadd.f32 %v4786, %v4978
    %v4980 = vpop.f32.mrb[0].mxu0
    %v4981 = vadd.f32 %v4788, %v4980
    %4982 = vmatprep.mubr.bf16.mxu0 %v3258
    %4983 = vmatmul.mubr.bf16.gmra.mrb[0].mxu0 %v3257
    %v4984 = vpop.f32.mrb[0].mxu0
    %v4985 = vadd.f32 %v4792, %v4984
    %v4986 = vpop.f32.mrb[0].mxu0
    %v4987 = vadd.f32 %v4794, %v4986
    %v4988 = vpop.f32.mrb[0].mxu0
    %v4989 = vadd.f32 %v4796, %v4988
    %v4990 = vpop.f32.mrb[0].mxu0
    %v4991 = vadd.f32 %v4798, %v4990
    %4992 = vmatprep.mubr.bf16.mxu0 %v3262
    %4993 = vmatmul.mubr.bf16.gmra.mrb[0].mxu0 %v3261
    %v4994 = vpop.f32.mrb[0].mxu0
    %v4995 = vadd.f32 %v4802, %v4994
    %v4996 = vpop.f32.mrb[0].mxu0
    %v4997 = vadd.f32 %v4804, %v4996
    %v4998 = vpop.f32.mrb[0].mxu0
    %v4999 = vadd.f32 %v4806, %v4998
    %v5000 = vpop.f32.mrb[0].mxu0
    %v5001 = vadd.f32 %v4808, %v5000
    %5002 = vmatprep.mubr.bf16.mxu0 %v3266
    %5003 = vmatmul.mubr.bf16.gmra.mrb[0].mxu0 %v3265
    %v5004 = vpop.f32.mrb[0].mxu0
    %v5005 = vadd.f32 %v4812, %v5004
    %v5006 = vpop.f32.mrb[0].mxu0
    %v5007 = vadd.f32 %v4814, %v5006
    %v5008 = vpop.f32.mrb[0].mxu0
    %v5009 = vadd.f32 %v4816, %v5008
    %v5010 = vpop.f32.mrb[0].mxu0
    %v5011 = vadd.f32 %v4818, %v5010
    %5012 = vmatprep.mubr.bf16.mxu0 %v3270
    %5013 = vmatmul.mubr.bf16.gmra.mrb[0].mxu0 %v3269
    %v5014 = vpop.f32.mrb[0].mxu0
    %v5015 = vadd.f32 %v4822, %v5014
    %v5016 = vpop.f32.mrb[0].mxu0
    %v5017 = vadd.f32 %v4824, %v5016
    %v5018 = vpop.f32.mrb[0].mxu0
    %v5019 = vadd.f32 %v4826, %v5018
    %v5020 = vpop.f32.mrb[0].mxu0
    %v5021 = vadd.f32 %v4828, %v5020
    %5022 = vmatprep.mubr.bf16.mxu0 %v3274
    %5023 = vmatmul.mubr.bf16.gmra.mrb[0].mxu0 %v3273
    %v5024 = vpop.f32.mrb[0].mxu0
    %v5025 = vadd.f32 %v4832, %v5024
    %v5026 = vpop.f32.mrb[0].mxu0
    %v5027 = vadd.f32 %v4834, %v5026
    %v5028 = vpop.f32.mrb[0].mxu0
    %v5029 = vadd.f32 %v4836, %v5028
    %v5030 = vpop.f32.mrb[0].mxu0
    %v5031 = vadd.f32 %v4838, %v5030
    %5032 = vmatprep.mubr.bf16.mxu0 %v3278
    %5033 = vmatmul.mubr.bf16.gmra.mrb[0].mxu0 %v3277
    %v5034 = vpop.f32.mrb[0].mxu0
    %v5035 = vadd.f32 %v4842, %v5034
    %v5036 = vpop.f32.mrb[0].mxu0
    %v5037 = vadd.f32 %v4844, %v5036
    %v5038 = vpop.f32.mrb[0].mxu0
    %v5039 = vadd.f32 %v4846, %v5038
    %v5040 = vpop.f32.mrb[0].mxu0
    %v5041 = vadd.f32 %v4848, %v5040
    %5042 = vmatprep.mubr.bf16.mxu0 %v3282
    %5043 = vmatmul.mubr.bf16.gmra.mrb[0].mxu0 %v3281
    %v5044 = vpop.f32.mrb[0].mxu0
    %v5045 = vadd.f32 %v4852, %v5044
    %v5046 = vpop.f32.mrb[0].mxu0
    %v5047 = vadd.f32 %v4854, %v5046
    %v5048 = vpop.f32.mrb[0].mxu0
    %v5049 = vadd.f32 %v4856, %v5048
    %v5050 = vpop.f32.mrb[0].mxu0
    %v5051 = vadd.f32 %v4858, %v5050
    %5052 = vmatprep.mubr.bf16.mxu0 %v3286
    %5053 = vmatmul.mubr.bf16.gmra.mrb[0].mxu0 %v3285
    %v5054 = vpop.f32.mrb[0].mxu0
    %v5055 = vadd.f32 %v4862, %v5054
    %v5056 = vpop.f32.mrb[0].mxu0
    %v5057 = vadd.f32 %v4864, %v5056
    %v5058 = vpop.f32.mrb[0].mxu0
    %v5059 = vadd.f32 %v4866, %v5058
    %v5060 = vpop.f32.mrb[0].mxu0
    %v5061 = vadd.f32 %v4868, %v5060
    %5062 = vmatprep.mubr.bf16.mxu0 %v3290
    %5063 = vmatmul.mubr.bf16.gmra.mrb[0].mxu0 %v3289
    %v5064 = vpop.f32.mrb[0].mxu0
    %v5065 = vadd.f32 %v4872, %v5064
    %v5066 = vpop.f32.mrb[0].mxu0
    %v5067 = vadd.f32 %v4874, %v5066
    %v5068 = vpop.f32.mrb[0].mxu0
    %v5069 = vadd.f32 %v4876, %v5068
    %v5070 = vpop.f32.mrb[0].mxu0
    %v5071 = vadd.f32 %v4878, %v5070
    %5072 = vmatprep.mubr.bf16.mxu0 %v3294
    %5073 = vmatmul.mubr.bf16.gmra.mrb[0].mxu0 %v3293
    %v5074 = vpop.f32.mrb[0].mxu0
    %v5075 = vadd.f32 %v4882, %v5074
    %v5076 = vpop.f32.mrb[0].mxu0
    %v5077 = vadd.f32 %v4884, %v5076
    %v5078 = vpop.f32.mrb[0].mxu0
    %v5079 = vadd.f32 %v4886, %v5078
    %v5080 = vpop.f32.mrb[0].mxu0
    %v5081 = vadd.f32 %v4888, %v5080
    %5082 = vmatprep.mubr.bf16.mxu0 %v3298
    %5083 = vmatmul.mubr.bf16.gmra.mrb[0].mxu0 %v3297
    %v5084 = vpop.f32.mrb[0].mxu0
    %v5085 = vadd.f32 %v4892, %v5084
    %v5086 = vpop.f32.mrb[0].mxu0
    %v5087 = vadd.f32 %v4894, %v5086
    %v5088 = vpop.f32.mrb[0].mxu0
    %v5089 = vadd.f32 %v4896, %v5088
    %v5090 = vpop.f32.mrb[0].mxu0
    %v5091 = vadd.f32 %v4898, %v5090
    %5092 = vmatprep.mubr.bf16.mxu0 %v3302
    %5093 = vmatmul.mubr.bf16.gmra.mrb[0].mxu0 %v3301
    %v5094 = vpop.f32.mrb[0].mxu0
    %v5095 = vadd.f32 %v4902, %v5094
    %v5096 = vpop.f32.mrb[0].mxu0
    %v5097 = vadd.f32 %v4904, %v5096
    %v5098 = vpop.f32.mrb[0].mxu0
    %v5099 = vadd.f32 %v4906, %v5098
    %v5100 = vpop.f32.mrb[0].mxu0
    %v5101 = vadd.f32 %v4908, %v5100
    %5102 = vdwg.mxu0
    %v5103 = vadd.f32 %v3787, %v3791
    %v5104 = vadd.f32 %v5103, %v3797
    %v5105 = vadd.f32 %v5104, %v3801
    %v5106 = vadd.f32 %v5105, %v3807
    %v5107 = vadd.f32 %v5106, %v3811
    %v5108 = vadd.f32 %v5107, %v3817
    %v5109 = vadd.f32 %v5108, %v3821
    %v5110 = vadd.f32 %v5109, %v3827
    %v5111 = vadd.f32 %v5110, %v3831
    %v5112 = vadd.f32 %v5111, %v3837
    %v5113 = vadd.f32 %v5112, %v3841
    %v5114 = vadd.f32 %v5113, %v3847
    %v5115 = vadd.f32 %v5114, %v3851
    %v5116 = vadd.f32 %v5115, %v3857
    %v5117 = vadd.f32 %v5116, %v3861
    %v5118 = vadd.f32 %v5117, %v3867
    %v5119 = vadd.f32 %v5118, %v3871
    %v5120 = vadd.f32 %v5119, %v3877
    %v5121 = vadd.f32 %v5120, %v3881
    %v5122 = vadd.f32 %v5121, %v3887
    %v5123 = vadd.f32 %v5122, %v3891
    %v5124 = vadd.f32 %v5123, %v3897
    %v5125 = vadd.f32 %v5124, %v3901
    %v5126 = vadd.f32 %v5125, %v3907
    %v5127 = vadd.f32 %v5126, %v3911
    %v5128 = vadd.f32 %v5127, %v3917
    %v5129 = vadd.f32 %v5128, %v3921
    %v5130 = vadd.f32 %v5129, %v3927
    %v5131 = vadd.f32 %v5130, %v3931
    %v5132 = vadd.f32 %v5131, %v3937
    %v5133 = vadd.f32 %v5132, %v3941
    %v5134 = vrot.slane %v5133, 4
    %v5135 = vadd.f32 %v5133, %v5134
    %v5136 = vrot.slane %v5135, 2
    %v5137 = vadd.f32 %v5135, %v5136
    %v5138 = vrot.slane %v5137, 1
    %v5139 = vadd.f32 %v5137, %v5138
    %v5140 = vadd.f32 %v3789, %v3793
    %v5141 = vadd.f32 %v5140, %v3799
    %v5142 = vadd.f32 %v5141, %v3803
    %v5143 = vadd.f32 %v5142, %v3809
    %v5144 = vadd.f32 %v5143, %v3813
    %v5145 = vadd.f32 %v5144, %v3819
    %v5146 = vadd.f32 %v5145, %v3823
    %v5147 = vadd.f32 %v5146, %v3829
    %v5148 = vadd.f32 %v5147, %v3833
    %v5149 = vadd.f32 %v5148, %v3839
    %v5150 = vadd.f32 %v5149, %v3843
    %v5151 = vadd.f32 %v5150, %v3849
    %v5152 = vadd.f32 %v5151, %v3853
    %v5153 = vadd.f32 %v5152, %v3859
    %v5154 = vadd.f32 %v5153, %v3863
    %v5155 = vadd.f32 %v5154, %v3869
    %v5156 = vadd.f32 %v5155, %v3873
    %v5157 = vadd.f32 %v5156, %v3879
    %v5158 = vadd.f32 %v5157, %v3883
    %v5159 = vadd.f32 %v5158, %v3889
    %v5160 = vadd.f32 %v5159, %v3893
    %v5161 = vadd.f32 %v5160, %v3899
    %v5162 = vadd.f32 %v5161, %v3903
    %v5163 = vadd.f32 %v5162, %v3909
    %v5164 = vadd.f32 %v5163, %v3913
    %v5165 = vadd.f32 %v5164, %v3919
    %v5166 = vadd.f32 %v5165, %v3923
    %v5167 = vadd.f32 %v5166, %v3929
    %v5168 = vadd.f32 %v5167, %v3933
    %v5169 = vadd.f32 %v5168, %v3939
    %v5170 = vadd.f32 %v5169, %v3943
    %v5171 = vrot.slane %v5170, 4
    %v5172 = vadd.f32 %v5170, %v5171
    %v5173 = vrot.slane %v5172, 2
    %v5174 = vadd.f32 %v5172, %v5173
    %v5175 = vrot.slane %v5174, 1
    %v5176 = vadd.f32 %v5174, %v5175
    %v5177 = vadd.f32 %v4173, %v4177
    %v5178 = vadd.f32 %v5177, %v4183
    %v5179 = vadd.f32 %v5178, %v4187
    %v5180 = vadd.f32 %v5179, %v4193
    %v5181 = vadd.f32 %v5180, %v4197
    %v5182 = vadd.f32 %v5181, %v4203
    %v5183 = vadd.f32 %v5182, %v4207
    %v5184 = vadd.f32 %v5183, %v4213
    %v5185 = vadd.f32 %v5184, %v4217
    %v5186 = vadd.f32 %v5185, %v4223
    %v5187 = vadd.f32 %v5186, %v4227
    %v5188 = vadd.f32 %v5187, %v4233
    %v5189 = vadd.f32 %v5188, %v4237
    %v5190 = vadd.f32 %v5189, %v4243
    %v5191 = vadd.f32 %v5190, %v4247
    %v5192 = vadd.f32 %v5191, %v4253
    %v5193 = vadd.f32 %v5192, %v4257
    %v5194 = vadd.f32 %v5193, %v4263
    %v5195 = vadd.f32 %v5194, %v4267
    %v5196 = vadd.f32 %v5195, %v4273
    %v5197 = vadd.f32 %v5196, %v4277
    %v5198 = vadd.f32 %v5197, %v4283
    %v5199 = vadd.f32 %v5198, %v4287
    %v5200 = vadd.f32 %v5199, %v4293
    %v5201 = vadd.f32 %v5200, %v4297
    %v5202 = vadd.f32 %v5201, %v4303
    %v5203 = vadd.f32 %v5202, %v4307
    %v5204 = vadd.f32 %v5203, %v4313
    %v5205 = vadd.f32 %v5204, %v4317
    %v5206 = vadd.f32 %v5205, %v4323
    %v5207 = vadd.f32 %v5206, %v4327
    %v5208 = vrot.slane %v5207, 4
    %v5209 = vadd.f32 %v5207, %v5208
    %v5210 = vrot.slane %v5209, 2
    %v5211 = vadd.f32 %v5209, %v5210
    %v5212 = vrot.slane %v5211, 1
    %v5213 = vadd.f32 %v5211, %v5212
    %v5214 = vadd.f32 %v4175, %v4179
    %v5215 = vadd.f32 %v5214, %v4185
    %v5216 = vadd.f32 %v5215, %v4189
    %v5217 = vadd.f32 %v5216, %v4195
    %v5218 = vadd.f32 %v5217, %v4199
    %v5219 = vadd.f32 %v5218, %v4205
    %v5220 = vadd.f32 %v5219, %v4209
    %v5221 = vadd.f32 %v5220, %v4215
    %v5222 = vadd.f32 %v5221, %v4219
    %v5223 = vadd.f32 %v5222, %v4225
    %v5224 = vadd.f32 %v5223, %v4229
    %v5225 = vadd.f32 %v5224, %v4235
    %v5226 = vadd.f32 %v5225, %v4239
    %v5227 = vadd.f32 %v5226, %v4245
    %v5228 = vadd.f32 %v5227, %v4249
    %v5229 = vadd.f32 %v5228, %v4255
    %v5230 = vadd.f32 %v5229, %v4259
    %v5231 = vadd.f32 %v5230, %v4265
    %v5232 = vadd.f32 %v5231, %v4269
    %v5233 = vadd.f32 %v5232, %v4275
    %v5234 = vadd.f32 %v5233, %v4279
    %v5235 = vadd.f32 %v5234, %v4285
    %v5236 = vadd.f32 %v5235, %v4289
    %v5237 = vadd.f32 %v5236, %v4295
    %v5238 = vadd.f32 %v5237, %v4299
    %v5239 = vadd.f32 %v5238, %v4305
    %v5240 = vadd.f32 %v5239, %v4309
    %v5241 = vadd.f32 %v5240, %v4315
    %v5242 = vadd.f32 %v5241, %v4319
    %v5243 = vadd.f32 %v5242, %v4325
    %v5244 = vadd.f32 %v5243, %v4329
    %v5245 = vrot.slane %v5244, 4
    %v5246 = vadd.f32 %v5244, %v5245
    %v5247 = vrot.slane %v5246, 2
    %v5248 = vadd.f32 %v5246, %v5247
    %v5249 = vrot.slane %v5248, 1
    %v5250 = vadd.f32 %v5248, %v5249
    %v5251 = vadd.f32 %v4559, %v4563
    %v5252 = vadd.f32 %v5251, %v4569
    %v5253 = vadd.f32 %v5252, %v4573
    %v5254 = vadd.f32 %v5253, %v4579
    %v5255 = vadd.f32 %v5254, %v4583
    %v5256 = vadd.f32 %v5255, %v4589
    %v5257 = vadd.f32 %v5256, %v4593
    %v5258 = vadd.f32 %v5257, %v4599
    %v5259 = vadd.f32 %v5258, %v4603
    %v5260 = vadd.f32 %v5259, %v4609
    %v5261 = vadd.f32 %v5260, %v4613
    %v5262 = vadd.f32 %v5261, %v4619
    %v5263 = vadd.f32 %v5262, %v4623
    %v5264 = vadd.f32 %v5263, %v4629
    %v5265 = vadd.f32 %v5264, %v4633
    %v5266 = vadd.f32 %v5265, %v4639
    %v5267 = vadd.f32 %v5266, %v4643
    %v5268 = vadd.f32 %v5267, %v4649
    %v5269 = vadd.f32 %v5268, %v4653
    %v5270 = vadd.f32 %v5269, %v4659
    %v5271 = vadd.f32 %v5270, %v4663
    %v5272 = vadd.f32 %v5271, %v4669
    %v5273 = vadd.f32 %v5272, %v4673
    %v5274 = vadd.f32 %v5273, %v4679
    %v5275 = vadd.f32 %v5274, %v4683
    %v5276 = vadd.f32 %v5275, %v4689
    %v5277 = vadd.f32 %v5276, %v4693
    %v5278 = vadd.f32 %v5277, %v4699
    %v5279 = vadd.f32 %v5278, %v4703
    %v5280 = vadd.f32 %v5279, %v4709
    %v5281 = vadd.f32 %v5280, %v4713
    %v5282 = vrot.slane %v5281, 4
    %v5283 = vadd.f32 %v5281, %v5282
    %v5284 = vrot.slane %v5283, 2
    %v5285 = vadd.f32 %v5283, %v5284
    %v5286 = vrot.slane %v5285, 1
    %v5287 = vadd.f32 %v5285, %v5286
    %v5288 = vadd.f32 %v4561, %v4565
    %v5289 = vadd.f32 %v5288, %v4571
    %v5290 = vadd.f32 %v5289, %v4575
    %v5291 = vadd.f32 %v5290, %v4581
    %v5292 = vadd.f32 %v5291, %v4585
    %v5293 = vadd.f32 %v5292, %v4591
    %v5294 = vadd.f32 %v5293, %v4595
    %v5295 = vadd.f32 %v5294, %v4601
    %v5296 = vadd.f32 %v5295, %v4605
    %v5297 = vadd.f32 %v5296, %v4611
    %v5298 = vadd.f32 %v5297, %v4615
    %v5299 = vadd.f32 %v5298, %v4621
    %v5300 = vadd.f32 %v5299, %v4625
    %v5301 = vadd.f32 %v5300, %v4631
    %v5302 = vadd.f32 %v5301, %v4635
    %v5303 = vadd.f32 %v5302, %v4641
    %v5304 = vadd.f32 %v5303, %v4645
    %v5305 = vadd.f32 %v5304, %v4651
    %v5306 = vadd.f32 %v5305, %v4655
    %v5307 = vadd.f32 %v5306, %v4661
    %v5308 = vadd.f32 %v5307, %v4665
    %v5309 = vadd.f32 %v5308, %v4671
    %v5310 = vadd.f32 %v5309, %v4675
    %v5311 = vadd.f32 %v5310, %v4681
    %v5312 = vadd.f32 %v5311, %v4685
    %v5313 = vadd.f32 %v5312, %v4691
    %v5314 = vadd.f32 %v5313, %v4695
    %v5315 = vadd.f32 %v5314, %v4701
    %v5316 = vadd.f32 %v5315, %v4705
    %v5317 = vadd.f32 %v5316, %v4711
    %v5318 = vadd.f32 %v5317, %v4715
    %v5319 = vrot.slane %v5318, 4
    %v5320 = vadd.f32 %v5318, %v5319
    %v5321 = vrot.slane %v5320, 2
    %v5322 = vadd.f32 %v5320, %v5321
    %v5323 = vrot.slane %v5322, 1
    %v5324 = vadd.f32 %v5322, %v5323
    %v5325 = vadd.f32 %v4945, %v4949
    %v5326 = vadd.f32 %v5325, %v4955
    %v5327 = vadd.f32 %v5326, %v4959
    %v5328 = vadd.f32 %v5327, %v4965
    %v5329 = vadd.f32 %v5328, %v4969
    %v5330 = vadd.f32 %v5329, %v4975
    %v5331 = vadd.f32 %v5330, %v4979
    %v5332 = vadd.f32 %v5331, %v4985
    %v5333 = vadd.f32 %v5332, %v4989
    %v5334 = vadd.f32 %v5333, %v4995
    %v5335 = vadd.f32 %v5334, %v4999
    %v5336 = vadd.f32 %v5335, %v5005
    %v5337 = vadd.f32 %v5336, %v5009
    %v5338 = vadd.f32 %v5337, %v5015
    %v5339 = vadd.f32 %v5338, %v5019
    %v5340 = vadd.f32 %v5339, %v5025
    %v5341 = vadd.f32 %v5340, %v5029
    %v5342 = vadd.f32 %v5341, %v5035
    %v5343 = vadd.f32 %v5342, %v5039
    %v5344 = vadd.f32 %v5343, %v5045
    %v5345 = vadd.f32 %v5344, %v5049
    %v5346 = vadd.f32 %v5345, %v5055
    %v5347 = vadd.f32 %v5346, %v5059
    %v5348 = vadd.f32 %v5347, %v5065
    %v5349 = vadd.f32 %v5348, %v5069
    %v5350 = vadd.f32 %v5349, %v5075
    %v5351 = vadd.f32 %v5350, %v5079
    %v5352 = vadd.f32 %v5351, %v5085
    %v5353 = vadd.f32 %v5352, %v5089
    %v5354 = vadd.f32 %v5353, %v5095
    %v5355 = vadd.f32 %v5354, %v5099
    %v5356 = vrot.slane %v5355, 4
    %v5357 = vadd.f32 %v5355, %v5356
    %v5358 = vrot.slane %v5357, 2
    %v5359 = vadd.f32 %v5357, %v5358
    %v5360 = vrot.slane %v5359, 1
    %v5361 = vadd.f32 %v5359, %v5360
    %v5362 = vadd.f32 %v4947, %v4951
    %v5363 = vadd.f32 %v5362, %v4957
    %v5364 = vadd.f32 %v5363, %v4961
    %v5365 = vadd.f32 %v5364, %v4967
    %v5366 = vadd.f32 %v5365, %v4971
    %v5367 = vadd.f32 %v5366, %v4977
    %v5368 = vadd.f32 %v5367, %v4981
    %v5369 = vadd.f32 %v5368, %v4987
    %v5370 = vadd.f32 %v5369, %v4991
    %v5371 = vadd.f32 %v5370, %v4997
    %v5372 = vadd.f32 %v5371, %v5001
    %v5373 = vadd.f32 %v5372, %v5007
    %v5374 = vadd.f32 %v5373, %v5011
    %v5375 = vadd.f32 %v5374, %v5017
    %v5376 = vadd.f32 %v5375, %v5021
    %v5377 = vadd.f32 %v5376, %v5027
    %v5378 = vadd.f32 %v5377, %v5031
    %v5379 = vadd.f32 %v5378, %v5037
    %v5380 = vadd.f32 %v5379, %v5041
    %v5381 = vadd.f32 %v5380, %v5047
    %v5382 = vadd.f32 %v5381, %v5051
    %v5383 = vadd.f32 %v5382, %v5057
    %v5384 = vadd.f32 %v5383, %v5061
    %v5385 = vadd.f32 %v5384, %v5067
    %v5386 = vadd.f32 %v5385, %v5071
    %v5387 = vadd.f32 %v5386, %v5077
    %v5388 = vadd.f32 %v5387, %v5081
    %v5389 = vadd.f32 %v5388, %v5087
    %v5390 = vadd.f32 %v5389, %v5091
    %v5391 = vadd.f32 %v5390, %v5097
    %v5392 = vadd.f32 %v5391, %v5101
    %v5393 = vrot.slane %v5392, 4
    %v5394 = vadd.f32 %v5392, %v5393
    %v5395 = vrot.slane %v5394, 2
    %v5396 = vadd.f32 %v5394, %v5395
    %v5397 = vrot.slane %v5396, 1
    %v5398 = vadd.f32 %v5396, %v5397
    %v5399 = vmul.f32 %v5139, %v1022
    %v5400 = vmul.f32 %v5176, %v1022
    %v5401 = vmul.f32 %v5213, %v1022
    %v5402 = vmul.f32 %v5250, %v1022
    %v5403 = vmul.f32 %v5287, %v1022
    %v5404 = vmul.f32 %v5324, %v1022
    %v5405 = vmul.f32 %v5361, %v1022
    %v5406 = vmul.f32 %v5398, %v1022
    %v5407 = vmul.f32 %v3787, %v3787
    %v5408 = vmul.f32 %v3789, %v3789
    %v5409 = vmul.f32 %v4173, %v4173
    %v5410 = vmul.f32 %v4175, %v4175
    %v5411 = vmul.f32 %v4559, %v4559
    %v5412 = vmul.f32 %v4561, %v4561
    %v5413 = vmul.f32 %v4945, %v4945
    %v5414 = vmul.f32 %v4947, %v4947
    %v5415 = vmul.f32 %v3791, %v3791
    %v5416 = vmul.f32 %v3793, %v3793
    %v5417 = vmul.f32 %v4177, %v4177
    %v5418 = vmul.f32 %v4179, %v4179
    %v5419 = vmul.f32 %v4563, %v4563
    %v5420 = vmul.f32 %v4565, %v4565
    %v5421 = vmul.f32 %v4949, %v4949
    %v5422 = vmul.f32 %v4951, %v4951
    %v5423 = vmul.f32 %v3797, %v3797
    %v5424 = vmul.f32 %v3799, %v3799
    %v5425 = vmul.f32 %v4183, %v4183
    %v5426 = vmul.f32 %v4185, %v4185
    %v5427 = vmul.f32 %v4569, %v4569
    %v5428 = vmul.f32 %v4571, %v4571
    %v5429 = vmul.f32 %v4955, %v4955
    %v5430 = vmul.f32 %v4957, %v4957
    %v5431 = vmul.f32 %v3801, %v3801
    %v5432 = vmul.f32 %v3803, %v3803
    %v5433 = vmul.f32 %v4187, %v4187
    %v5434 = vmul.f32 %v4189, %v4189
    %v5435 = vmul.f32 %v4573, %v4573
    %v5436 = vmul.f32 %v4575, %v4575
    %v5437 = vmul.f32 %v4959, %v4959
    %v5438 = vmul.f32 %v4961, %v4961
    %v5439 = vmul.f32 %v3807, %v3807
    %v5440 = vmul.f32 %v3809, %v3809
    %v5441 = vmul.f32 %v4193, %v4193
    %v5442 = vmul.f32 %v4195, %v4195
    %v5443 = vmul.f32 %v4579, %v4579
    %v5444 = vmul.f32 %v4581, %v4581
    %v5445 = vmul.f32 %v4965, %v4965
    %v5446 = vmul.f32 %v4967, %v4967
    %v5447 = vmul.f32 %v3811, %v3811
    %v5448 = vmul.f32 %v3813, %v3813
    %v5449 = vmul.f32 %v4197, %v4197
    %v5450 = vmul.f32 %v4199, %v4199
    %v5451 = vmul.f32 %v4583, %v4583
    %v5452 = vmul.f32 %v4585, %v4585
    %v5453 = vmul.f32 %v4969, %v4969
    %v5454 = vmul.f32 %v4971, %v4971
    %v5455 = vmul.f32 %v3817, %v3817
    %v5456 = vmul.f32 %v3819, %v3819
    %v5457 = vmul.f32 %v4203, %v4203
    %v5458 = vmul.f32 %v4205, %v4205
    %v5459 = vmul.f32 %v4589, %v4589
    %v5460 = vmul.f32 %v4591, %v4591
    %v5461 = vmul.f32 %v4975, %v4975
    %v5462 = vmul.f32 %v4977, %v4977
    %v5463 = vmul.f32 %v3821, %v3821
    %v5464 = vmul.f32 %v3823, %v3823
    %v5465 = vmul.f32 %v4207, %v4207
    %v5466 = vmul.f32 %v4209, %v4209
    %v5467 = vmul.f32 %v4593, %v4593
    %v5468 = vmul.f32 %v4595, %v4595
    %v5469 = vmul.f32 %v4979, %v4979
    %v5470 = vmul.f32 %v4981, %v4981
    %v5471 = vmul.f32 %v3827, %v3827
    %v5472 = vmul.f32 %v3829, %v3829
    %v5473 = vmul.f32 %v4213, %v4213
    %v5474 = vmul.f32 %v4215, %v4215
    %v5475 = vmul.f32 %v4599, %v4599
    %v5476 = vmul.f32 %v4601, %v4601
    %v5477 = vmul.f32 %v4985, %v4985
    %v5478 = vmul.f32 %v4987, %v4987
    %v5479 = vmul.f32 %v3831, %v3831
    %v5480 = vmul.f32 %v3833, %v3833
    %v5481 = vmul.f32 %v4217, %v4217
    %v5482 = vmul.f32 %v4219, %v4219
    %v5483 = vmul.f32 %v4603, %v4603
    %v5484 = vmul.f32 %v4605, %v4605
    %v5485 = vmul.f32 %v4989, %v4989
    %v5486 = vmul.f32 %v4991, %v4991
    %v5487 = vmul.f32 %v3837, %v3837
    %v5488 = vmul.f32 %v3839, %v3839
    %v5489 = vmul.f32 %v4223, %v4223
    %v5490 = vmul.f32 %v4225, %v4225
    %v5491 = vmul.f32 %v4609, %v4609
    %v5492 = vmul.f32 %v4611, %v4611
    %v5493 = vmul.f32 %v4995, %v4995
    %v5494 = vmul.f32 %v4997, %v4997
    %v5495 = vmul.f32 %v3841, %v3841
    %v5496 = vmul.f32 %v3843, %v3843
    %v5497 = vmul.f32 %v4227, %v4227
    %v5498 = vmul.f32 %v4229, %v4229
    %v5499 = vmul.f32 %v4613, %v4613
    %v5500 = vmul.f32 %v4615, %v4615
    %v5501 = vmul.f32 %v4999, %v4999
    %v5502 = vmul.f32 %v5001, %v5001
    %v5503 = vmul.f32 %v3847, %v3847
    %v5504 = vmul.f32 %v3849, %v3849
    %v5505 = vmul.f32 %v4233, %v4233
    %v5506 = vmul.f32 %v4235, %v4235
    %v5507 = vmul.f32 %v4619, %v4619
    %v5508 = vmul.f32 %v4621, %v4621
    %v5509 = vmul.f32 %v5005, %v5005
    %v5510 = vmul.f32 %v5007, %v5007
    %v5511 = vmul.f32 %v3851, %v3851
    %v5512 = vmul.f32 %v3853, %v3853
    %v5513 = vmul.f32 %v4237, %v4237
    %v5514 = vmul.f32 %v4239, %v4239
    %v5515 = vmul.f32 %v4623, %v4623
    %v5516 = vmul.f32 %v4625, %v4625
    %v5517 = vmul.f32 %v5009, %v5009
    %v5518 = vmul.f32 %v5011, %v5011
    %v5519 = vmul.f32 %v3857, %v3857
    %v5520 = vmul.f32 %v3859, %v3859
    %v5521 = vmul.f32 %v4243, %v4243
    %v5522 = vmul.f32 %v4245, %v4245
    %v5523 = vmul.f32 %v4629, %v4629
    %v5524 = vmul.f32 %v4631, %v4631
    %v5525 = vmul.f32 %v5015, %v5015
    %v5526 = vmul.f32 %v5017, %v5017
    %v5527 = vmul.f32 %v3861, %v3861
    %v5528 = vmul.f32 %v3863, %v3863
    %v5529 = vmul.f32 %v4247, %v4247
    %v5530 = vmul.f32 %v4249, %v4249
    %v5531 = vmul.f32 %v4633, %v4633
    %v5532 = vmul.f32 %v4635, %v4635
    %v5533 = vmul.f32 %v5019, %v5019
    %v5534 = vmul.f32 %v5021, %v5021
    %v5535 = vmul.f32 %v3867, %v3867
    %v5536 = vmul.f32 %v3869, %v3869
    %v5537 = vmul.f32 %v4253, %v4253
    %v5538 = vmul.f32 %v4255, %v4255
    %v5539 = vmul.f32 %v4639, %v4639
    %v5540 = vmul.f32 %v4641, %v4641
    %v5541 = vmul.f32 %v5025, %v5025
    %v5542 = vmul.f32 %v5027, %v5027
    %v5543 = vmul.f32 %v3871, %v3871
    %v5544 = vmul.f32 %v3873, %v3873
    %v5545 = vmul.f32 %v4257, %v4257
    %v5546 = vmul.f32 %v4259, %v4259
    %v5547 = vmul.f32 %v4643, %v4643
    %v5548 = vmul.f32 %v4645, %v4645
    %v5549 = vmul.f32 %v5029, %v5029
    %v5550 = vmul.f32 %v5031, %v5031
    %v5551 = vmul.f32 %v3877, %v3877
    %v5552 = vmul.f32 %v3879, %v3879
    %v5553 = vmul.f32 %v4263, %v4263
    %v5554 = vmul.f32 %v4265, %v4265
    %v5555 = vmul.f32 %v4649, %v4649
    %v5556 = vmul.f32 %v4651, %v4651
    %v5557 = vmul.f32 %v5035, %v5035
    %v5558 = vmul.f32 %v5037, %v5037
    %v5559 = vmul.f32 %v3881, %v3881
    %v5560 = vmul.f32 %v3883, %v3883
    %v5561 = vmul.f32 %v4267, %v4267
    %v5562 = vmul.f32 %v4269, %v4269
    %v5563 = vmul.f32 %v4653, %v4653
    %v5564 = vmul.f32 %v4655, %v4655
    %v5565 = vmul.f32 %v5039, %v5039
    %v5566 = vmul.f32 %v5041, %v5041
    %v5567 = vmul.f32 %v3887, %v3887
    %v5568 = vmul.f32 %v3889, %v3889
    %v5569 = vmul.f32 %v4273, %v4273
    %v5570 = vmul.f32 %v4275, %v4275
    %v5571 = vmul.f32 %v4659, %v4659
    %v5572 = vmul.f32 %v4661, %v4661
    %v5573 = vmul.f32 %v5045, %v5045
    %v5574 = vmul.f32 %v5047, %v5047
    %v5575 = vmul.f32 %v3891, %v3891
    %v5576 = vmul.f32 %v3893, %v3893
    %v5577 = vmul.f32 %v4277, %v4277
    %v5578 = vmul.f32 %v4279, %v4279
    %v5579 = vmul.f32 %v4663, %v4663
    %v5580 = vmul.f32 %v4665, %v4665
    %v5581 = vmul.f32 %v5049, %v5049
    %v5582 = vmul.f32 %v5051, %v5051
    %v5583 = vmul.f32 %v3897, %v3897
    %v5584 = vmul.f32 %v3899, %v3899
    %v5585 = vmul.f32 %v4283, %v4283
    %v5586 = vmul.f32 %v4285, %v4285
    %v5587 = vmul.f32 %v4669, %v4669
    %v5588 = vmul.f32 %v4671, %v4671
    %v5589 = vmul.f32 %v5055, %v5055
    %v5590 = vmul.f32 %v5057, %v5057
    %v5591 = vmul.f32 %v3901, %v3901
    %v5592 = vmul.f32 %v3903, %v3903
    %v5593 = vmul.f32 %v4287, %v4287
    %v5594 = vmul.f32 %v4289, %v4289
    %v5595 = vmul.f32 %v4673, %v4673
    %v5596 = vmul.f32 %v4675, %v4675
    %v5597 = vmul.f32 %v5059, %v5059
    %v5598 = vmul.f32 %v5061, %v5061
    %v5599 = vmul.f32 %v3907, %v3907
    %v5600 = vmul.f32 %v3909, %v3909
    %v5601 = vmul.f32 %v4293, %v4293
    %v5602 = vmul.f32 %v4295, %v4295
    %v5603 = vmul.f32 %v4679, %v4679
    %v5604 = vmul.f32 %v4681, %v4681
    %v5605 = vmul.f32 %v5065, %v5065
    %v5606 = vmul.f32 %v5067, %v5067
    %v5607 = vmul.f32 %v3911, %v3911
    %v5608 = vmul.f32 %v3913, %v3913
    %v5609 = vmul.f32 %v4297, %v4297
    %v5610 = vmul.f32 %v4299, %v4299
    %v5611 = vmul.f32 %v4683, %v4683
    %v5612 = vmul.f32 %v4685, %v4685
    %v5613 = vmul.f32 %v5069, %v5069
    %v5614 = vmul.f32 %v5071, %v5071
    %v5615 = vmul.f32 %v3917, %v3917
    %v5616 = vmul.f32 %v3919, %v3919
    %v5617 = vmul.f32 %v4303, %v4303
    %v5618 = vmul.f32 %v4305, %v4305
    %v5619 = vmul.f32 %v4689, %v4689
    %v5620 = vmul.f32 %v4691, %v4691
    %v5621 = vmul.f32 %v5075, %v5075
    %v5622 = vmul.f32 %v5077, %v5077
    %v5623 = vmul.f32 %v3921, %v3921
    %v5624 = vmul.f32 %v3923, %v3923
    %v5625 = vmul.f32 %v4307, %v4307
    %v5626 = vmul.f32 %v4309, %v4309
    %v5627 = vmul.f32 %v4693, %v4693
    %v5628 = vmul.f32 %v4695, %v4695
    %v5629 = vmul.f32 %v5079, %v5079
    %v5630 = vmul.f32 %v5081, %v5081
    %v5631 = vmul.f32 %v3927, %v3927
    %v5632 = vmul.f32 %v3929, %v3929
    %v5633 = vmul.f32 %v4313, %v4313
    %v5634 = vmul.f32 %v4315, %v4315
    %v5635 = vmul.f32 %v4699, %v4699
    %v5636 = vmul.f32 %v4701, %v4701
    %v5637 = vmul.f32 %v5085, %v5085
    %v5638 = vmul.f32 %v5087, %v5087
    %v5639 = vmul.f32 %v3931, %v3931
    %v5640 = vmul.f32 %v3933, %v3933
    %v5641 = vmul.f32 %v4317, %v4317
    %v5642 = vmul.f32 %v4319, %v4319
    %v5643 = vmul.f32 %v4703, %v4703
    %v5644 = vmul.f32 %v4705, %v4705
    %v5645 = vmul.f32 %v5089, %v5089
    %v5646 = vmul.f32 %v5091, %v5091
    %v5647 = vmul.f32 %v3937, %v3937
    %v5648 = vmul.f32 %v3939, %v3939
    %v5649 = vmul.f32 %v4323, %v4323
    %v5650 = vmul.f32 %v4325, %v4325
    %v5651 = vmul.f32 %v4709, %v4709
    %v5652 = vmul.f32 %v4711, %v4711
    %v5653 = vmul.f32 %v5095, %v5095
    %v5654 = vmul.f32 %v5097, %v5097
    %v5655 = vmul.f32 %v3941, %v3941
    %v5656 = vmul.f32 %v3943, %v3943
    %v5657 = vmul.f32 %v4327, %v4327
    %v5658 = vmul.f32 %v4329, %v4329
    %v5659 = vmul.f32 %v4713, %v4713
    %v5660 = vmul.f32 %v4715, %v4715
    %v5661 = vmul.f32 %v5099, %v5099
    %v5662 = vmul.f32 %v5101, %v5101
    %v5663 = vadd.f32 %v5407, %v5415
    %v5664 = vadd.f32 %v5663, %v5423
    %v5665 = vadd.f32 %v5664, %v5431
    %v5666 = vadd.f32 %v5665, %v5439
    %v5667 = vadd.f32 %v5666, %v5447
    %v5668 = vadd.f32 %v5667, %v5455
    %v5669 = vadd.f32 %v5668, %v5463
    %v5670 = vadd.f32 %v5669, %v5471
    %v5671 = vadd.f32 %v5670, %v5479
    %v5672 = vadd.f32 %v5671, %v5487
    %v5673 = vadd.f32 %v5672, %v5495
    %v5674 = vadd.f32 %v5673, %v5503
    %v5675 = vadd.f32 %v5674, %v5511
    %v5676 = vadd.f32 %v5675, %v5519
    %v5677 = vadd.f32 %v5676, %v5527
    %v5678 = vadd.f32 %v5677, %v5535
    %v5679 = vadd.f32 %v5678, %v5543
    %v5680 = vadd.f32 %v5679, %v5551
    %v5681 = vadd.f32 %v5680, %v5559
    %v5682 = vadd.f32 %v5681, %v5567
    %v5683 = vadd.f32 %v5682, %v5575
    %v5684 = vadd.f32 %v5683, %v5583
    %v5685 = vadd.f32 %v5684, %v5591
    %v5686 = vadd.f32 %v5685, %v5599
    %v5687 = vadd.f32 %v5686, %v5607
    %v5688 = vadd.f32 %v5687, %v5615
    %v5689 = vadd.f32 %v5688, %v5623
    %v5690 = vadd.f32 %v5689, %v5631
    %v5691 = vadd.f32 %v5690, %v5639
    %v5692 = vadd.f32 %v5691, %v5647
    %v5693 = vadd.f32 %v5692, %v5655
    %v5694 = vrot.slane %v5693, 4
    %v5695 = vadd.f32 %v5693, %v5694
    %v5696 = vrot.slane %v5695, 2
    %v5697 = vadd.f32 %v5695, %v5696
    %v5698 = vrot.slane %v5697, 1
    %v5699 = vadd.f32 %v5697, %v5698
    %v5700 = vadd.f32 %v5408, %v5416
    %v5701 = vadd.f32 %v5700, %v5424
    %v5702 = vadd.f32 %v5701, %v5432
    %v5703 = vadd.f32 %v5702, %v5440
    %v5704 = vadd.f32 %v5703, %v5448
    %v5705 = vadd.f32 %v5704, %v5456
    %v5706 = vadd.f32 %v5705, %v5464
    %v5707 = vadd.f32 %v5706, %v5472
    %v5708 = vadd.f32 %v5707, %v5480
    %v5709 = vadd.f32 %v5708, %v5488
    %v5710 = vadd.f32 %v5709, %v5496
    %v5711 = vadd.f32 %v5710, %v5504
    %v5712 = vadd.f32 %v5711, %v5512
    %v5713 = vadd.f32 %v5712, %v5520
    %v5714 = vadd.f32 %v5713, %v5528
    %v5715 = vadd.f32 %v5714, %v5536
    %v5716 = vadd.f32 %v5715, %v5544
    %v5717 = vadd.f32 %v5716, %v5552
    %v5718 = vadd.f32 %v5717, %v5560
    %v5719 = vadd.f32 %v5718, %v5568
    %v5720 = vadd.f32 %v5719, %v5576
    %v5721 = vadd.f32 %v5720, %v5584
    %v5722 = vadd.f32 %v5721, %v5592
    %v5723 = vadd.f32 %v5722, %v5600
    %v5724 = vadd.f32 %v5723, %v5608
    %v5725 = vadd.f32 %v5724, %v5616
    %v5726 = vadd.f32 %v5725, %v5624
    %v5727 = vadd.f32 %v5726, %v5632
    %v5728 = vadd.f32 %v5727, %v5640
    %v5729 = vadd.f32 %v5728, %v5648
    %v5730 = vadd.f32 %v5729, %v5656
    %v5731 = vrot.slane %v5730, 4
    %v5732 = vadd.f32 %v5730, %v5731
    %v5733 = vrot.slane %v5732, 2
    %v5734 = vadd.f32 %v5732, %v5733
    %v5735 = vrot.slane %v5734, 1
    %v5736 = vadd.f32 %v5734, %v5735
    %v5737 = vadd.f32 %v5409, %v5417
    %v5738 = vadd.f32 %v5737, %v5425
    %v5739 = vadd.f32 %v5738, %v5433
    %v5740 = vadd.f32 %v5739, %v5441
    %v5741 = vadd.f32 %v5740, %v5449
    %v5742 = vadd.f32 %v5741, %v5457
    %v5743 = vadd.f32 %v5742, %v5465
    %v5744 = vadd.f32 %v5743, %v5473
    %v5745 = vadd.f32 %v5744, %v5481
    %v5746 = vadd.f32 %v5745, %v5489
    %v5747 = vadd.f32 %v5746, %v5497
    %v5748 = vadd.f32 %v5747, %v5505
    %v5749 = vadd.f32 %v5748, %v5513
    %v5750 = vadd.f32 %v5749, %v5521
    %v5751 = vadd.f32 %v5750, %v5529
    %v5752 = vadd.f32 %v5751, %v5537
    %v5753 = vadd.f32 %v5752, %v5545
    %v5754 = vadd.f32 %v5753, %v5553
    %v5755 = vadd.f32 %v5754, %v5561
    %v5756 = vadd.f32 %v5755, %v5569
    %v5757 = vadd.f32 %v5756, %v5577
    %v5758 = vadd.f32 %v5757, %v5585
    %v5759 = vadd.f32 %v5758, %v5593
    %v5760 = vadd.f32 %v5759, %v5601
    %v5761 = vadd.f32 %v5760, %v5609
    %v5762 = vadd.f32 %v5761, %v5617
    %v5763 = vadd.f32 %v5762, %v5625
    %v5764 = vadd.f32 %v5763, %v5633
    %v5765 = vadd.f32 %v5764, %v5641
    %v5766 = vadd.f32 %v5765, %v5649
    %v5767 = vadd.f32 %v5766, %v5657
    %v5768 = vrot.slane %v5767, 4
    %v5769 = vadd.f32 %v5767, %v5768
    %v5770 = vrot.slane %v5769, 2
    %v5771 = vadd.f32 %v5769, %v5770
    %v5772 = vrot.slane %v5771, 1
    %v5773 = vadd.f32 %v5771, %v5772
    %v5774 = vadd.f32 %v5410, %v5418
    %v5775 = vadd.f32 %v5774, %v5426
    %v5776 = vadd.f32 %v5775, %v5434
    %v5777 = vadd.f32 %v5776, %v5442
    %v5778 = vadd.f32 %v5777, %v5450
    %v5779 = vadd.f32 %v5778, %v5458
    %v5780 = vadd.f32 %v5779, %v5466
    %v5781 = vadd.f32 %v5780, %v5474
    %v5782 = vadd.f32 %v5781, %v5482
    %v5783 = vadd.f32 %v5782, %v5490
    %v5784 = vadd.f32 %v5783, %v5498
    %v5785 = vadd.f32 %v5784, %v5506
    %v5786 = vadd.f32 %v5785, %v5514
    %v5787 = vadd.f32 %v5786, %v5522
    %v5788 = vadd.f32 %v5787, %v5530
    %v5789 = vadd.f32 %v5788, %v5538
    %v5790 = vadd.f32 %v5789, %v5546
    %v5791 = vadd.f32 %v5790, %v5554
    %v5792 = vadd.f32 %v5791, %v5562
    %v5793 = vadd.f32 %v5792, %v5570
    %v5794 = vadd.f32 %v5793, %v5578
    %v5795 = vadd.f32 %v5794, %v5586
    %v5796 = vadd.f32 %v5795, %v5594
    %v5797 = vadd.f32 %v5796, %v5602
    %v5798 = vadd.f32 %v5797, %v5610
    %v5799 = vadd.f32 %v5798, %v5618
    %v5800 = vadd.f32 %v5799, %v5626
    %v5801 = vadd.f32 %v5800, %v5634
    %v5802 = vadd.f32 %v5801, %v5642
    %v5803 = vadd.f32 %v5802, %v5650
    %v5804 = vadd.f32 %v5803, %v5658
    %v5805 = vrot.slane %v5804, 4
    %v5806 = vadd.f32 %v5804, %v5805
    %v5807 = vrot.slane %v5806, 2
    %v5808 = vadd.f32 %v5806, %v5807
    %v5809 = vrot.slane %v5808, 1
    %v5810 = vadd.f32 %v5808, %v5809
    %v5811 = vadd.f32 %v5411, %v5419
    %v5812 = vadd.f32 %v5811, %v5427
    %v5813 = vadd.f32 %v5812, %v5435
    %v5814 = vadd.f32 %v5813, %v5443
    %v5815 = vadd.f32 %v5814, %v5451
    %v5816 = vadd.f32 %v5815, %v5459
    %v5817 = vadd.f32 %v5816, %v5467
    %v5818 = vadd.f32 %v5817, %v5475
    %v5819 = vadd.f32 %v5818, %v5483
    %v5820 = vadd.f32 %v5819, %v5491
    %v5821 = vadd.f32 %v5820, %v5499
    %v5822 = vadd.f32 %v5821, %v5507
    %v5823 = vadd.f32 %v5822, %v5515
    %v5824 = vadd.f32 %v5823, %v5523
    %v5825 = vadd.f32 %v5824, %v5531
    %v5826 = vadd.f32 %v5825, %v5539
    %v5827 = vadd.f32 %v5826, %v5547
    %v5828 = vadd.f32 %v5827, %v5555
    %v5829 = vadd.f32 %v5828, %v5563
    %v5830 = vadd.f32 %v5829, %v5571
    %v5831 = vadd.f32 %v5830, %v5579
    %v5832 = vadd.f32 %v5831, %v5587
    %v5833 = vadd.f32 %v5832, %v5595
    %v5834 = vadd.f32 %v5833, %v5603
    %v5835 = vadd.f32 %v5834, %v5611
    %v5836 = vadd.f32 %v5835, %v5619
    %v5837 = vadd.f32 %v5836, %v5627
    %v5838 = vadd.f32 %v5837, %v5635
    %v5839 = vadd.f32 %v5838, %v5643
    %v5840 = vadd.f32 %v5839, %v5651
    %v5841 = vadd.f32 %v5840, %v5659
    %v5842 = vrot.slane %v5841, 4
    %v5843 = vadd.f32 %v5841, %v5842
    %v5844 = vrot.slane %v5843, 2
    %v5845 = vadd.f32 %v5843, %v5844
    %v5846 = vrot.slane %v5845, 1
    %v5847 = vadd.f32 %v5845, %v5846
    %v5848 = vadd.f32 %v5412, %v5420
    %v5849 = vadd.f32 %v5848, %v5428
    %v5850 = vadd.f32 %v5849, %v5436
    %v5851 = vadd.f32 %v5850, %v5444
    %v5852 = vadd.f32 %v5851, %v5452
    %v5853 = vadd.f32 %v5852, %v5460
    %v5854 = vadd.f32 %v5853, %v5468
    %v5855 = vadd.f32 %v5854, %v5476
    %v5856 = vadd.f32 %v5855, %v5484
    %v5857 = vadd.f32 %v5856, %v5492
    %v5858 = vadd.f32 %v5857, %v5500
    %v5859 = vadd.f32 %v5858, %v5508
    %v5860 = vadd.f32 %v5859, %v5516
    %v5861 = vadd.f32 %v5860, %v5524
    %v5862 = vadd.f32 %v5861, %v5532
    %v5863 = vadd.f32 %v5862, %v5540
    %v5864 = vadd.f32 %v5863, %v5548
    %v5865 = vadd.f32 %v5864, %v5556
    %v5866 = vadd.f32 %v5865, %v5564
    %v5867 = vadd.f32 %v5866, %v5572
    %v5868 = vadd.f32 %v5867, %v5580
    %v5869 = vadd.f32 %v5868, %v5588
    %v5870 = vadd.f32 %v5869, %v5596
    %v5871 = vadd.f32 %v5870, %v5604
    %v5872 = vadd.f32 %v5871, %v5612
    %v5873 = vadd.f32 %v5872, %v5620
    %v5874 = vadd.f32 %v5873, %v5628
    %v5875 = vadd.f32 %v5874, %v5636
    %v5876 = vadd.f32 %v5875, %v5644
    %v5877 = vadd.f32 %v5876, %v5652
    %v5878 = vadd.f32 %v5877, %v5660
    %v5879 = vrot.slane %v5878, 4
    %v5880 = vadd.f32 %v5878, %v5879
    %v5881 = vrot.slane %v5880, 2
    %v5882 = vadd.f32 %v5880, %v5881
    %v5883 = vrot.slane %v5882, 1
    %v5884 = vadd.f32 %v5882, %v5883
    %v5885 = vadd.f32 %v5413, %v5421
    %v5886 = vadd.f32 %v5885, %v5429
    %v5887 = vadd.f32 %v5886, %v5437
    %v5888 = vadd.f32 %v5887, %v5445
    %v5889 = vadd.f32 %v5888, %v5453
    %v5890 = vadd.f32 %v5889, %v5461
    %v5891 = vadd.f32 %v5890, %v5469
    %v5892 = vadd.f32 %v5891, %v5477
    %v5893 = vadd.f32 %v5892, %v5485
    %v5894 = vadd.f32 %v5893, %v5493
    %v5895 = vadd.f32 %v5894, %v5501
    %v5896 = vadd.f32 %v5895, %v5509
    %v5897 = vadd.f32 %v5896, %v5517
    %v5898 = vadd.f32 %v5897, %v5525
    %v5899 = vadd.f32 %v5898, %v5533
    %v5900 = vadd.f32 %v5899, %v5541
    %v5901 = vadd.f32 %v5900, %v5549
    %v5902 = vadd.f32 %v5901, %v5557
    %v5903 = vadd.f32 %v5902, %v5565
    %v5904 = vadd.f32 %v5903, %v5573
    %v5905 = vadd.f32 %v5904, %v5581
    %v5906 = vadd.f32 %v5905, %v5589
    %v5907 = vadd.f32 %v5906, %v5597
    %v5908 = vadd.f32 %v5907, %v5605
    %v5909 = vadd.f32 %v5908, %v5613
    %v5910 = vadd.f32 %v5909, %v5621
    %v5911 = vadd.f32 %v5910, %v5629
    %v5912 = vadd.f32 %v5911, %v5637
    %v5913 = vadd.f32 %v5912, %v5645
    %v5914 = vadd.f32 %v5913, %v5653
    %v5915 = vadd.f32 %v5914, %v5661
    %v5916 = vrot.slane %v5915, 4
    %v5917 = vadd.f32 %v5915, %v5916
    %v5918 = vrot.slane %v5917, 2
    %v5919 = vadd.f32 %v5917, %v5918
    %v5920 = vrot.slane %v5919, 1
    %v5921 = vadd.f32 %v5919, %v5920
    %v5922 = vadd.f32 %v5414, %v5422
    %v5923 = vadd.f32 %v5922, %v5430
    %v5924 = vadd.f32 %v5923, %v5438
    %v5925 = vadd.f32 %v5924, %v5446
    %v5926 = vadd.f32 %v5925, %v5454
    %v5927 = vadd.f32 %v5926, %v5462
    %v5928 = vadd.f32 %v5927, %v5470
    %v5929 = vadd.f32 %v5928, %v5478
    %v5930 = vadd.f32 %v5929, %v5486
    %v5931 = vadd.f32 %v5930, %v5494
    %v5932 = vadd.f32 %v5931, %v5502
    %v5933 = vadd.f32 %v5932, %v5510
    %v5934 = vadd.f32 %v5933, %v5518
    %v5935 = vadd.f32 %v5934, %v5526
    %v5936 = vadd.f32 %v5935, %v5534
    %v5937 = vadd.f32 %v5936, %v5542
    %v5938 = vadd.f32 %v5937, %v5550
    %v5939 = vadd.f32 %v5938, %v5558
    %v5940 = vadd.f32 %v5939, %v5566
    %v5941 = vadd.f32 %v5940, %v5574
    %v5942 = vadd.f32 %v5941, %v5582
    %v5943 = vadd.f32 %v5942, %v5590
    %v5944 = vadd.f32 %v5943, %v5598
    %v5945 = vadd.f32 %v5944, %v5606
    %v5946 = vadd.f32 %v5945, %v5614
    %v5947 = vadd.f32 %v5946, %v5622
    %v5948 = vadd.f32 %v5947, %v5630
    %v5949 = vadd.f32 %v5948, %v5638
    %v5950 = vadd.f32 %v5949, %v5646
    %v5951 = vadd.f32 %v5950, %v5654
    %v5952 = vadd.f32 %v5951, %v5662
    %v5953 = vrot.slane %v5952, 4
    %v5954 = vadd.f32 %v5952, %v5953
    %v5955 = vrot.slane %v5954, 2
    %v5956 = vadd.f32 %v5954, %v5955
    %v5957 = vrot.slane %v5956, 1
    %v5958 = vadd.f32 %v5956, %v5957
    %v5959 = vmul.f32 %v5699, %v1022
    %v5960 = vmul.f32 %v5736, %v1022
    %v5961 = vmul.f32 %v5773, %v1022
    %v5962 = vmul.f32 %v5810, %v1022
    %v5963 = vmul.f32 %v5847, %v1022
    %v5964 = vmul.f32 %v5884, %v1022
    %v5965 = vmul.f32 %v5921, %v1022
    %v5966 = vmul.f32 %v5958, %v1022
    %v5967 = vmul.f32 %v5399, %v5399
    %v5968 = vmul.f32 %v5400, %v5400
    %v5969 = vmul.f32 %v5401, %v5401
    %v5970 = vmul.f32 %v5402, %v5402
    %v5971 = vmul.f32 %v5403, %v5403
    %v5972 = vmul.f32 %v5404, %v5404
    %v5973 = vmul.f32 %v5405, %v5405
    %v5974 = vmul.f32 %v5406, %v5406
    %v5975 = vsub.f32 %v5959, %v5967
    %v5976 = vsub.f32 %v5960, %v5968
    %v5977 = vsub.f32 %v5961, %v5969
    %v5978 = vsub.f32 %v5962, %v5970
    %v5979 = vsub.f32 %v5963, %v5971
    %v5980 = vsub.f32 %v5964, %v5972
    %v5981 = vsub.f32 %v5965, %v5973
    %v5982 = vsub.f32 %v5966, %v5974
    %v5983 = vadd.f32 %v5975, 0.8
    %v5984 = vadd.f32 %v5976, 0.8
    %v5985 = vadd.f32 %v5977, 0.8
    %v5986 = vadd.f32 %v5978, 0.8
    %v5987 = vadd.f32 %v5979, 0.8
    %v5988 = vadd.f32 %v5980, 0.8
    %v5989 = vadd.f32 %v5981, 0.8
    %v5990 = vadd.f32 %v5982, 0.8
    %v5991 = vrsqrt.pop %v5983
    %v5992 = vrsqrt.pop %v5984
    %v5993 = vrsqrt.pop %v5985
    %v5994 = vrsqrt.pop %v5986
    %v5995 = vrsqrt.pop %v5987
    %v5996 = vrsqrt.pop %v5988
    %v5997 = vrsqrt.pop %v5989
    %v5998 = vrsqrt.pop %v5990
    %v6007 = vcombine.low %v5991, %v5992
    %v6008 = vcombine.low %v5993, %v5994
    %v6009 = vcombine.low %v5995, %v5996
    %v6010 = vcombine.low %v5997, %v5998
    %v6012 = vunpack.c.l.s4 1966171168
    %v6013 = vunpack.c.0.s8 %v6012
    %v6014 = vlaneseq
    %v6015 = vshrl.u32 %v6014, 7
    %v6016 = vsub.s32 %v6013, %v6015
    %v6017 = vrot.slane %v6007, %v6016
    %v6019 = vunpack.c.l.s4 1966171168
    %v6020 = vunpack.c.0.s8 %v6019
    %v6021 = vlaneseq
    %v6022 = vshrl.u32 %v6021, 7
    %v6023 = vsub.s32 %v6020, %v6022
    %v6024 = vrot.slane %v6008, %v6023
    %v6026 = vunpack.c.l.s4 1966171168
    %v6027 = vunpack.c.0.s8 %v6026
    %v6028 = vlaneseq
    %v6029 = vshrl.u32 %v6028, 7
    %v6030 = vsub.s32 %v6027, %v6029
    %v6031 = vrot.slane %v6009, %v6030
    %v6033 = vunpack.c.l.s4 1966171168
    %v6034 = vunpack.c.0.s8 %v6033
    %v6035 = vlaneseq
    %v6036 = vshrl.u32 %v6035, 7
    %v6037 = vsub.s32 %v6034, %v6036
    %v6038 = vrot.slane %v6010, %v6037
    %v6039 = vcombine.low %v6017, %v6024
    %v6040 = vcombine.low %v6031, %v6038
    %v6042 = vunpack.c.l.s4 1966171168
    %v6043 = vunpack.c.0.s8 %v6042
    %v6044 = vlaneseq
    %v6045 = vshrl.u32 %v6044, 7
    %v6046 = vsub.s32 %v6043, %v6045
    %v6047 = vrot.slane %v6039, %v6046
    %v6049 = vunpack.c.l.s4 1966171168
    %v6050 = vunpack.c.0.s8 %v6049
    %v6051 = vlaneseq
    %v6052 = vshrl.u32 %v6051, 7
    %v6053 = vsub.s32 %v6050, %v6052
    %v6054 = vrot.slane %v6040, %v6053
    %v6055 = vcombine.low %v6047, %v6054
    %v6057 = vmul.f32 %v185, %v6055
    %v6059 = vlaneseq
    %v6060 = vshrl.u32 %v6059, 7
    %v6061 = vsub.s32 0, %v6060
    %v6062 = vrot.slane %v6057, %v6061
    %v6063 = vlaneseq
    %v6064 = vshrl.u32 %v6063, 7
    %v6065 = vsub.s32 1, %v6064
    %v6066 = vrot.slane %v6057, %v6065
    %v6067 = vlaneseq
    %v6068 = vshrl.u32 %v6067, 7
    %v6069 = vsub.s32 2, %v6068
    %v6070 = vrot.slane %v6057, %v6069
    %v6071 = vlaneseq
    %v6072 = vshrl.u32 %v6071, 7
    %v6073 = vsub.s32 3, %v6072
    %v6074 = vrot.slane %v6057, %v6073
    %v6075 = vlaneseq
    %v6076 = vshrl.u32 %v6075, 7
    %v6077 = vsub.s32 4, %v6076
    %v6078 = vrot.slane %v6057, %v6077
    %v6079 = vlaneseq
    %v6080 = vshrl.u32 %v6079, 7
    %v6081 = vsub.s32 5, %v6080
    %v6082 = vrot.slane %v6057, %v6081
    %v6083 = vlaneseq
    %v6084 = vshrl.u32 %v6083, 7
    %v6085 = vsub.s32 6, %v6084
    %v6086 = vrot.slane %v6057, %v6085
    %v6087 = vlaneseq
    %v6088 = vshrl.u32 %v6087, 7
    %v6089 = vsub.s32 7, %v6088
    %v6090 = vrot.slane %v6057, %v6089
    %v6099 = vmul.f32 %v5399, %v6062
    %v6100 = vmul.f32 %v5400, %v6066
    %v6101 = vmul.f32 %v5401, %v6070
    %v6102 = vmul.f32 %v5402, %v6074
    %v6103 = vmul.f32 %v5403, %v6078
    %v6104 = vmul.f32 %v5404, %v6082
    %v6105 = vmul.f32 %v5405, %v6086
    %v6106 = vmul.f32 %v5406, %v6090
    %v6115 = vcombine.low %v6099, %v6100
    %v6116 = vcombine.low %v6101, %v6102
    %v6117 = vcombine.low %v6103, %v6104
    %v6118 = vcombine.low %v6105, %v6106
    %v6120 = vunpack.c.l.s4 1966171168
    %v6121 = vunpack.c.0.s8 %v6120
    %v6122 = vlaneseq
    %v6123 = vshrl.u32 %v6122, 7
    %v6124 = vsub.s32 %v6121, %v6123
    %v6125 = vrot.slane %v6115, %v6124
    %v6127 = vunpack.c.l.s4 1966171168
    %v6128 = vunpack.c.0.s8 %v6127
    %v6129 = vlaneseq
    %v6130 = vshrl.u32 %v6129, 7
    %v6131 = vsub.s32 %v6128, %v6130
    %v6132 = vrot.slane %v6116, %v6131
    %v6134 = vunpack.c.l.s4 1966171168
    %v6135 = vunpack.c.0.s8 %v6134
    %v6136 = vlaneseq
    %v6137 = vshrl.u32 %v6136, 7
    %v6138 = vsub.s32 %v6135, %v6137
    %v6139 = vrot.slane %v6117, %v6138
    %v6141 = vunpack.c.l.s4 1966171168
    %v6142 = vunpack.c.0.s8 %v6141
    %v6143 = vlaneseq
    %v6144 = vshrl.u32 %v6143, 7
    %v6145 = vsub.s32 %v6142, %v6144
    %v6146 = vrot.slane %v6118, %v6145
    %v6147 = vcombine.low %v6125, %v6132
    %v6148 = vcombine.low %v6139, %v6146
    %v6150 = vunpack.c.l.s4 1966171168
    %v6151 = vunpack.c.0.s8 %v6150
    %v6152 = vlaneseq
    %v6153 = vshrl.u32 %v6152, 7
    %v6154 = vsub.s32 %v6151, %v6153
    %v6155 = vrot.slane %v6147, %v6154
    %v6157 = vunpack.c.l.s4 1966171168
    %v6158 = vunpack.c.0.s8 %v6157
    %v6159 = vlaneseq
    %v6160 = vshrl.u32 %v6159, 7
    %v6161 = vsub.s32 %v6158, %v6160
    %v6162 = vrot.slane %v6148, %v6161
    %v6163 = vcombine.low %v6155, %v6162
    %v6165 = vsub.f32 %v186, %v6163
    %v6166 = vmul.f32 %v3787, %v6062
    %v6167 = vmul.f32 %v3789, %v6066
    %v6168 = vmul.f32 %v4173, %v6070
    %v6169 = vmul.f32 %v4175, %v6074
    %v6170 = vmul.f32 %v4559, %v6078
    %v6171 = vmul.f32 %v4561, %v6082
    %v6172 = vmul.f32 %v4945, %v6086
    %v6173 = vmul.f32 %v4947, %v6090
    %v6174 = vmul.f32 %v3791, %v6062
    %v6175 = vmul.f32 %v3793, %v6066
    %v6176 = vmul.f32 %v4177, %v6070
    %v6177 = vmul.f32 %v4179, %v6074
    %v6178 = vmul.f32 %v4563, %v6078
    %v6179 = vmul.f32 %v4565, %v6082
    %v6180 = vmul.f32 %v4949, %v6086
    %v6181 = vmul.f32 %v4951, %v6090
    %v6182 = vmul.f32 %v3797, %v6062
    %v6183 = vmul.f32 %v3799, %v6066
    %v6184 = vmul.f32 %v4183, %v6070
    %v6185 = vmul.f32 %v4185, %v6074
    %v6186 = vmul.f32 %v4569, %v6078
    %v6187 = vmul.f32 %v4571, %v6082
    %v6188 = vmul.f32 %v4955, %v6086
    %v6189 = vmul.f32 %v4957, %v6090
    %v6190 = vmul.f32 %v3801, %v6062
    %v6191 = vmul.f32 %v3803, %v6066
    %v6192 = vmul.f32 %v4187, %v6070
    %v6193 = vmul.f32 %v4189, %v6074
    %v6194 = vmul.f32 %v4573, %v6078
    %v6195 = vmul.f32 %v4575, %v6082
    %v6196 = vmul.f32 %v4959, %v6086
    %v6197 = vmul.f32 %v4961, %v6090
    %v6198 = vmul.f32 %v3807, %v6062
    %v6199 = vmul.f32 %v3809, %v6066
    %v6200 = vmul.f32 %v4193, %v6070
    %v6201 = vmul.f32 %v4195, %v6074
    %v6202 = vmul.f32 %v4579, %v6078
    %v6203 = vmul.f32 %v4581, %v6082
    %v6204 = vmul.f32 %v4965, %v6086
    %v6205 = vmul.f32 %v4967, %v6090
    %v6206 = vmul.f32 %v3811, %v6062
    %v6207 = vmul.f32 %v3813, %v6066
    %v6208 = vmul.f32 %v4197, %v6070
    %v6209 = vmul.f32 %v4199, %v6074
    %v6210 = vmul.f32 %v4583, %v6078
    %v6211 = vmul.f32 %v4585, %v6082
    %v6212 = vmul.f32 %v4969, %v6086
    %v6213 = vmul.f32 %v4971, %v6090
    %v6214 = vmul.f32 %v3817, %v6062
    %v6215 = vmul.f32 %v3819, %v6066
    %v6216 = vmul.f32 %v4203, %v6070
    %v6217 = vmul.f32 %v4205, %v6074
    %v6218 = vmul.f32 %v4589, %v6078
    %v6219 = vmul.f32 %v4591, %v6082
    %v6220 = vmul.f32 %v4975, %v6086
    %v6221 = vmul.f32 %v4977, %v6090
    %v6222 = vmul.f32 %v3821, %v6062
    %v6223 = vmul.f32 %v3823, %v6066
    %v6224 = vmul.f32 %v4207, %v6070
    %v6225 = vmul.f32 %v4209, %v6074
    %v6226 = vmul.f32 %v4593, %v6078
    %v6227 = vmul.f32 %v4595, %v6082
    %v6228 = vmul.f32 %v4979, %v6086
    %v6229 = vmul.f32 %v4981, %v6090
    %v6230 = vmul.f32 %v3827, %v6062
    %v6231 = vmul.f32 %v3829, %v6066
    %v6232 = vmul.f32 %v4213, %v6070
    %v6233 = vmul.f32 %v4215, %v6074
    %v6234 = vmul.f32 %v4599, %v6078
    %v6235 = vmul.f32 %v4601, %v6082
    %v6236 = vmul.f32 %v4985, %v6086
    %v6237 = vmul.f32 %v4987, %v6090
    %v6238 = vmul.f32 %v3831, %v6062
    %v6239 = vmul.f32 %v3833, %v6066
    %v6240 = vmul.f32 %v4217, %v6070
    %v6241 = vmul.f32 %v4219, %v6074
    %v6242 = vmul.f32 %v4603, %v6078
    %v6243 = vmul.f32 %v4605, %v6082
    %v6244 = vmul.f32 %v4989, %v6086
    %v6245 = vmul.f32 %v4991, %v6090
    %v6246 = vmul.f32 %v3837, %v6062
    %v6247 = vmul.f32 %v3839, %v6066
    %v6248 = vmul.f32 %v4223, %v6070
    %v6249 = vmul.f32 %v4225, %v6074
    %v6250 = vmul.f32 %v4609, %v6078
    %v6251 = vmul.f32 %v4611, %v6082
    %v6252 = vmul.f32 %v4995, %v6086
    %v6253 = vmul.f32 %v4997, %v6090
    %v6254 = vmul.f32 %v3841, %v6062
    %v6255 = vmul.f32 %v3843, %v6066
    %v6256 = vmul.f32 %v4227, %v6070
    %v6257 = vmul.f32 %v4229, %v6074
    %v6258 = vmul.f32 %v4613, %v6078
    %v6259 = vmul.f32 %v4615, %v6082
    %v6260 = vmul.f32 %v4999, %v6086
    %v6261 = vmul.f32 %v5001, %v6090
    %v6262 = vmul.f32 %v3847, %v6062
    %v6263 = vmul.f32 %v3849, %v6066
    %v6264 = vmul.f32 %v4233, %v6070
    %v6265 = vmul.f32 %v4235, %v6074
    %v6266 = vmul.f32 %v4619, %v6078
    %v6267 = vmul.f32 %v4621, %v6082
    %v6268 = vmul.f32 %v5005, %v6086
    %v6269 = vmul.f32 %v5007, %v6090
    %v6270 = vmul.f32 %v3851, %v6062
    %v6271 = vmul.f32 %v3853, %v6066
    %v6272 = vmul.f32 %v4237, %v6070
    %v6273 = vmul.f32 %v4239, %v6074
    %v6274 = vmul.f32 %v4623, %v6078
    %v6275 = vmul.f32 %v4625, %v6082
    %v6276 = vmul.f32 %v5009, %v6086
    %v6277 = vmul.f32 %v5011, %v6090
    %v6278 = vmul.f32 %v3857, %v6062
    %v6279 = vmul.f32 %v3859, %v6066
    %v6280 = vmul.f32 %v4243, %v6070
    %v6281 = vmul.f32 %v4245, %v6074
    %v6282 = vmul.f32 %v4629, %v6078
    %v6283 = vmul.f32 %v4631, %v6082
    %v6284 = vmul.f32 %v5015, %v6086
    %v6285 = vmul.f32 %v5017, %v6090
    %v6286 = vmul.f32 %v3861, %v6062
    %v6287 = vmul.f32 %v3863, %v6066
    %v6288 = vmul.f32 %v4247, %v6070
    %v6289 = vmul.f32 %v4249, %v6074
    %v6290 = vmul.f32 %v4633, %v6078
    %v6291 = vmul.f32 %v4635, %v6082
    %v6292 = vmul.f32 %v5019, %v6086
    %v6293 = vmul.f32 %v5021, %v6090
    %v6294 = vmul.f32 %v3867, %v6062
    %v6295 = vmul.f32 %v3869, %v6066
    %v6296 = vmul.f32 %v4253, %v6070
    %v6297 = vmul.f32 %v4255, %v6074
    %v6298 = vmul.f32 %v4639, %v6078
    %v6299 = vmul.f32 %v4641, %v6082
    %v6300 = vmul.f32 %v5025, %v6086
    %v6301 = vmul.f32 %v5027, %v6090
    %v6302 = vmul.f32 %v3871, %v6062
    %v6303 = vmul.f32 %v3873, %v6066
    %v6304 = vmul.f32 %v4257, %v6070
    %v6305 = vmul.f32 %v4259, %v6074
    %v6306 = vmul.f32 %v4643, %v6078
    %v6307 = vmul.f32 %v4645, %v6082
    %v6308 = vmul.f32 %v5029, %v6086
    %v6309 = vmul.f32 %v5031, %v6090
    %v6310 = vmul.f32 %v3877, %v6062
    %v6311 = vmul.f32 %v3879, %v6066
    %v6312 = vmul.f32 %v4263, %v6070
    %v6313 = vmul.f32 %v4265, %v6074
    %v6314 = vmul.f32 %v4649, %v6078
    %v6315 = vmul.f32 %v4651, %v6082
    %v6316 = vmul.f32 %v5035, %v6086
    %v6317 = vmul.f32 %v5037, %v6090
    %v6318 = vmul.f32 %v3881, %v6062
    %v6319 = vmul.f32 %v3883, %v6066
    %v6320 = vmul.f32 %v4267, %v6070
    %v6321 = vmul.f32 %v4269, %v6074
    %v6322 = vmul.f32 %v4653, %v6078
    %v6323 = vmul.f32 %v4655, %v6082
    %v6324 = vmul.f32 %v5039, %v6086
    %v6325 = vmul.f32 %v5041, %v6090
    %v6326 = vmul.f32 %v3887, %v6062
    %v6327 = vmul.f32 %v3889, %v6066
    %v6328 = vmul.f32 %v4273, %v6070
    %v6329 = vmul.f32 %v4275, %v6074
    %v6330 = vmul.f32 %v4659, %v6078
    %v6331 = vmul.f32 %v4661, %v6082
    %v6332 = vmul.f32 %v5045, %v6086
    %v6333 = vmul.f32 %v5047, %v6090
    %v6334 = vmul.f32 %v3891, %v6062
    %v6335 = vmul.f32 %v3893, %v6066
    %v6336 = vmul.f32 %v4277, %v6070
    %v6337 = vmul.f32 %v4279, %v6074
    %v6338 = vmul.f32 %v4663, %v6078
    %v6339 = vmul.f32 %v4665, %v6082
    %v6340 = vmul.f32 %v5049, %v6086
    %v6341 = vmul.f32 %v5051, %v6090
    %v6342 = vmul.f32 %v3897, %v6062
    %v6343 = vmul.f32 %v3899, %v6066
    %v6344 = vmul.f32 %v4283, %v6070
    %v6345 = vmul.f32 %v4285, %v6074
    %v6346 = vmul.f32 %v4669, %v6078
    %v6347 = vmul.f32 %v4671, %v6082
    %v6348 = vmul.f32 %v5055, %v6086
    %v6349 = vmul.f32 %v5057, %v6090
    %v6350 = vmul.f32 %v3901, %v6062
    %v6351 = vmul.f32 %v3903, %v6066
    %v6352 = vmul.f32 %v4287, %v6070
    %v6353 = vmul.f32 %v4289, %v6074
    %v6354 = vmul.f32 %v4673, %v6078
    %v6355 = vmul.f32 %v4675, %v6082
    %v6356 = vmul.f32 %v5059, %v6086
    %v6357 = vmul.f32 %v5061, %v6090
    %v6358 = vmul.f32 %v3907, %v6062
    %v6359 = vmul.f32 %v3909, %v6066
    %v6360 = vmul.f32 %v4293, %v6070
    %v6361 = vmul.f32 %v4295, %v6074
    %v6362 = vmul.f32 %v4679, %v6078
    %v6363 = vmul.f32 %v4681, %v6082
    %v6364 = vmul.f32 %v5065, %v6086
    %v6365 = vmul.f32 %v5067, %v6090
    %v6366 = vmul.f32 %v3911, %v6062
    %v6367 = vmul.f32 %v3913, %v6066
    %v6368 = vmul.f32 %v4297, %v6070
    %v6369 = vmul.f32 %v4299, %v6074
    %v6370 = vmul.f32 %v4683, %v6078
    %v6371 = vmul.f32 %v4685, %v6082
    %v6372 = vmul.f32 %v5069, %v6086
    %v6373 = vmul.f32 %v5071, %v6090
    %v6374 = vmul.f32 %v3917, %v6062
    %v6375 = vmul.f32 %v3919, %v6066
    %v6376 = vmul.f32 %v4303, %v6070
    %v6377 = vmul.f32 %v4305, %v6074
    %v6378 = vmul.f32 %v4689, %v6078
    %v6379 = vmul.f32 %v4691, %v6082
    %v6380 = vmul.f32 %v5075, %v6086
    %v6381 = vmul.f32 %v5077, %v6090
    %v6382 = vmul.f32 %v3921, %v6062
    %v6383 = vmul.f32 %v3923, %v6066
    %v6384 = vmul.f32 %v4307, %v6070
    %v6385 = vmul.f32 %v4309, %v6074
    %v6386 = vmul.f32 %v4693, %v6078
    %v6387 = vmul.f32 %v4695, %v6082
    %v6388 = vmul.f32 %v5079, %v6086
    %v6389 = vmul.f32 %v5081, %v6090
    %v6390 = vmul.f32 %v3927, %v6062
    %v6391 = vmul.f32 %v3929, %v6066
    %v6392 = vmul.f32 %v4313, %v6070
    %v6393 = vmul.f32 %v4315, %v6074
    %v6394 = vmul.f32 %v4699, %v6078
    %v6395 = vmul.f32 %v4701, %v6082
    %v6396 = vmul.f32 %v5085, %v6086
    %v6397 = vmul.f32 %v5087, %v6090
    %v6398 = vmul.f32 %v3931, %v6062
    %v6399 = vmul.f32 %v3933, %v6066
    %v6400 = vmul.f32 %v4317, %v6070
    %v6401 = vmul.f32 %v4319, %v6074
    %v6402 = vmul.f32 %v4703, %v6078
    %v6403 = vmul.f32 %v4705, %v6082
    %v6404 = vmul.f32 %v5089, %v6086
    %v6405 = vmul.f32 %v5091, %v6090
    %v6406 = vmul.f32 %v3937, %v6062
    %v6407 = vmul.f32 %v3939, %v6066
    %v6408 = vmul.f32 %v4323, %v6070
    %v6409 = vmul.f32 %v4325, %v6074
    %v6410 = vmul.f32 %v4709, %v6078
    %v6411 = vmul.f32 %v4711, %v6082
    %v6412 = vmul.f32 %v5095, %v6086
    %v6413 = vmul.f32 %v5097, %v6090
    %v6414 = vmul.f32 %v3941, %v6062
    %v6415 = vmul.f32 %v3943, %v6066
    %v6416 = vmul.f32 %v4327, %v6070
    %v6417 = vmul.f32 %v4329, %v6074
    %v6418 = vmul.f32 %v4713, %v6078
    %v6419 = vmul.f32 %v4715, %v6082
    %v6420 = vmul.f32 %v5099, %v6086
    %v6421 = vmul.f32 %v5101, %v6090
    %v6423 = vlaneseq
    %v6424 = vshrl.u32 %v6423, 7
    %v6425 = vsub.s32 0, %v6424
    %v6426 = vrot.slane %v6165, %v6425
    %v6427 = vlaneseq
    %v6428 = vshrl.u32 %v6427, 7
    %v6429 = vsub.s32 1, %v6428
    %v6430 = vrot.slane %v6165, %v6429
    %v6431 = vlaneseq
    %v6432 = vshrl.u32 %v6431, 7
    %v6433 = vsub.s32 2, %v6432
    %v6434 = vrot.slane %v6165, %v6433
    %v6435 = vlaneseq
    %v6436 = vshrl.u32 %v6435, 7
    %v6437 = vsub.s32 3, %v6436
    %v6438 = vrot.slane %v6165, %v6437
    %v6439 = vlaneseq
    %v6440 = vshrl.u32 %v6439, 7
    %v6441 = vsub.s32 4, %v6440
    %v6442 = vrot.slane %v6165, %v6441
    %v6443 = vlaneseq
    %v6444 = vshrl.u32 %v6443, 7
    %v6445 = vsub.s32 5, %v6444
    %v6446 = vrot.slane %v6165, %v6445
    %v6447 = vlaneseq
    %v6448 = vshrl.u32 %v6447, 7
    %v6449 = vsub.s32 6, %v6448
    %v6450 = vrot.slane %v6165, %v6449
    %v6451 = vlaneseq
    %v6452 = vshrl.u32 %v6451, 7
    %v6453 = vsub.s32 7, %v6452
    %v6454 = vrot.slane %v6165, %v6453
    %v6463 = vadd.f32 %v6166, %v6426
    %v6464 = vadd.f32 %v6167, %v6430
    %v6465 = vadd.f32 %v6168, %v6434
    %v6466 = vadd.f32 %v6169, %v6438
    %v6467 = vadd.f32 %v6170, %v6442
    %v6468 = vadd.f32 %v6171, %v6446
    %v6469 = vadd.f32 %v6172, %v6450
    %v6470 = vadd.f32 %v6173, %v6454
    %v6471 = vadd.f32 %v6174, %v6426
    %v6472 = vadd.f32 %v6175, %v6430
    %v6473 = vadd.f32 %v6176, %v6434
    %v6474 = vadd.f32 %v6177, %v6438
    %v6475 = vadd.f32 %v6178, %v6442
    %v6476 = vadd.f32 %v6179, %v6446
    %v6477 = vadd.f32 %v6180, %v6450
    %v6478 = vadd.f32 %v6181, %v6454
    %v6479 = vadd.f32 %v6182, %v6426
    %v6480 = vadd.f32 %v6183, %v6430
    %v6481 = vadd.f32 %v6184, %v6434
    %v6482 = vadd.f32 %v6185, %v6438
    %v6483 = vadd.f32 %v6186, %v6442
    %v6484 = vadd.f32 %v6187, %v6446
    %v6485 = vadd.f32 %v6188, %v6450
    %v6486 = vadd.f32 %v6189, %v6454
    %v6487 = vadd.f32 %v6190, %v6426
    %v6488 = vadd.f32 %v6191, %v6430
    %v6489 = vadd.f32 %v6192, %v6434
    %v6490 = vadd.f32 %v6193, %v6438
    %v6491 = vadd.f32 %v6194, %v6442
    %v6492 = vadd.f32 %v6195, %v6446
    %v6493 = vadd.f32 %v6196, %v6450
    %v6494 = vadd.f32 %v6197, %v6454
    %v6495 = vadd.f32 %v6198, %v6426
    %v6496 = vadd.f32 %v6199, %v6430
    %v6497 = vadd.f32 %v6200, %v6434
    %v6498 = vadd.f32 %v6201, %v6438
    %v6499 = vadd.f32 %v6202, %v6442
    %v6500 = vadd.f32 %v6203, %v6446
    %v6501 = vadd.f32 %v6204, %v6450
    %v6502 = vadd.f32 %v6205, %v6454
    %v6503 = vadd.f32 %v6206, %v6426
    %v6504 = vadd.f32 %v6207, %v6430
    %v6505 = vadd.f32 %v6208, %v6434
    %v6506 = vadd.f32 %v6209, %v6438
    %v6507 = vadd.f32 %v6210, %v6442
    %v6508 = vadd.f32 %v6211, %v6446
    %v6509 = vadd.f32 %v6212, %v6450
    %v6510 = vadd.f32 %v6213, %v6454
    %v6511 = vadd.f32 %v6214, %v6426
    %v6512 = vadd.f32 %v6215, %v6430
    %v6513 = vadd.f32 %v6216, %v6434
    %v6514 = vadd.f32 %v6217, %v6438
    %v6515 = vadd.f32 %v6218, %v6442
    %v6516 = vadd.f32 %v6219, %v6446
    %v6517 = vadd.f32 %v6220, %v6450
    %v6518 = vadd.f32 %v6221, %v6454
    %v6519 = vadd.f32 %v6222, %v6426
    %v6520 = vadd.f32 %v6223, %v6430
    %v6521 = vadd.f32 %v6224, %v6434
    %v6522 = vadd.f32 %v6225, %v6438
    %v6523 = vadd.f32 %v6226, %v6442
    %v6524 = vadd.f32 %v6227, %v6446
    %v6525 = vadd.f32 %v6228, %v6450
    %v6526 = vadd.f32 %v6229, %v6454
    %v6527 = vadd.f32 %v6230, %v6426
    %v6528 = vadd.f32 %v6231, %v6430
    %v6529 = vadd.f32 %v6232, %v6434
    %v6530 = vadd.f32 %v6233, %v6438
    %v6531 = vadd.f32 %v6234, %v6442
    %v6532 = vadd.f32 %v6235, %v6446
    %v6533 = vadd.f32 %v6236, %v6450
    %v6534 = vadd.f32 %v6237, %v6454
    %v6535 = vadd.f32 %v6238, %v6426
    %v6536 = vadd.f32 %v6239, %v6430
    %v6537 = vadd.f32 %v6240, %v6434
    %v6538 = vadd.f32 %v6241, %v6438
    %v6539 = vadd.f32 %v6242, %v6442
    %v6540 = vadd.f32 %v6243, %v6446
    %v6541 = vadd.f32 %v6244, %v6450
    %v6542 = vadd.f32 %v6245, %v6454
    %v6543 = vadd.f32 %v6246, %v6426
    %v6544 = vadd.f32 %v6247, %v6430
    %v6545 = vadd.f32 %v6248, %v6434
    %v6546 = vadd.f32 %v6249, %v6438
    %v6547 = vadd.f32 %v6250, %v6442
    %v6548 = vadd.f32 %v6251, %v6446
    %v6549 = vadd.f32 %v6252, %v6450
    %v6550 = vadd.f32 %v6253, %v6454
    %v6551 = vadd.f32 %v6254, %v6426
    %v6552 = vadd.f32 %v6255, %v6430
    %v6553 = vadd.f32 %v6256, %v6434
    %v6554 = vadd.f32 %v6257, %v6438
    %v6555 = vadd.f32 %v6258, %v6442
    %v6556 = vadd.f32 %v6259, %v6446
    %v6557 = vadd.f32 %v6260, %v6450
    %v6558 = vadd.f32 %v6261, %v6454
    %v6559 = vadd.f32 %v6262, %v6426
    %v6560 = vadd.f32 %v6263, %v6430
    %v6561 = vadd.f32 %v6264, %v6434
    %v6562 = vadd.f32 %v6265, %v6438
    %v6563 = vadd.f32 %v6266, %v6442
    %v6564 = vadd.f32 %v6267, %v6446
    %v6565 = vadd.f32 %v6268, %v6450
    %v6566 = vadd.f32 %v6269, %v6454
    %v6567 = vadd.f32 %v6270, %v6426
    %v6568 = vadd.f32 %v6271, %v6430
    %v6569 = vadd.f32 %v6272, %v6434
    %v6570 = vadd.f32 %v6273, %v6438
    %v6571 = vadd.f32 %v6274, %v6442
    %v6572 = vadd.f32 %v6275, %v6446
    %v6573 = vadd.f32 %v6276, %v6450
    %v6574 = vadd.f32 %v6277, %v6454
    %v6575 = vadd.f32 %v6278, %v6426
    %v6576 = vadd.f32 %v6279, %v6430
    %v6577 = vadd.f32 %v6280, %v6434
    %v6578 = vadd.f32 %v6281, %v6438
    %v6579 = vadd.f32 %v6282, %v6442
    %v6580 = vadd.f32 %v6283, %v6446
    %v6581 = vadd.f32 %v6284, %v6450
    %v6582 = vadd.f32 %v6285, %v6454
    %v6583 = vadd.f32 %v6286, %v6426
    %v6584 = vadd.f32 %v6287, %v6430
    %v6585 = vadd.f32 %v6288, %v6434
    %v6586 = vadd.f32 %v6289, %v6438
    %v6587 = vadd.f32 %v6290, %v6442
    %v6588 = vadd.f32 %v6291, %v6446
    %v6589 = vadd.f32 %v6292, %v6450
    %v6590 = vadd.f32 %v6293, %v6454
    %v6591 = vadd.f32 %v6294, %v6426
    %v6592 = vadd.f32 %v6295, %v6430
    %v6593 = vadd.f32 %v6296, %v6434
    %v6594 = vadd.f32 %v6297, %v6438
    %v6595 = vadd.f32 %v6298, %v6442
    %v6596 = vadd.f32 %v6299, %v6446
    %v6597 = vadd.f32 %v6300, %v6450
    %v6598 = vadd.f32 %v6301, %v6454
    %v6599 = vadd.f32 %v6302, %v6426
    %v6600 = vadd.f32 %v6303, %v6430
    %v6601 = vadd.f32 %v6304, %v6434
    %v6602 = vadd.f32 %v6305, %v6438
    %v6603 = vadd.f32 %v6306, %v6442
    %v6604 = vadd.f32 %v6307, %v6446
    %v6605 = vadd.f32 %v6308, %v6450
    %v6606 = vadd.f32 %v6309, %v6454
    %v6607 = vadd.f32 %v6310, %v6426
    %v6608 = vadd.f32 %v6311, %v6430
    %v6609 = vadd.f32 %v6312, %v6434
    %v6610 = vadd.f32 %v6313, %v6438
    %v6611 = vadd.f32 %v6314, %v6442
    %v6612 = vadd.f32 %v6315, %v6446
    %v6613 = vadd.f32 %v6316, %v6450
    %v6614 = vadd.f32 %v6317, %v6454
    %v6615 = vadd.f32 %v6318, %v6426
    %v6616 = vadd.f32 %v6319, %v6430
    %v6617 = vadd.f32 %v6320, %v6434
    %v6618 = vadd.f32 %v6321, %v6438
    %v6619 = vadd.f32 %v6322, %v6442
    %v6620 = vadd.f32 %v6323, %v6446
    %v6621 = vadd.f32 %v6324, %v6450
    %v6622 = vadd.f32 %v6325, %v6454
    %v6623 = vadd.f32 %v6326, %v6426
    %v6624 = vadd.f32 %v6327, %v6430
    %v6625 = vadd.f32 %v6328, %v6434
    %v6626 = vadd.f32 %v6329, %v6438
    %v6627 = vadd.f32 %v6330, %v6442
    %v6628 = vadd.f32 %v6331, %v6446
    %v6629 = vadd.f32 %v6332, %v6450
    %v6630 = vadd.f32 %v6333, %v6454
    %v6631 = vadd.f32 %v6334, %v6426
    %v6632 = vadd.f32 %v6335, %v6430
    %v6633 = vadd.f32 %v6336, %v6434
    %v6634 = vadd.f32 %v6337, %v6438
    %v6635 = vadd.f32 %v6338, %v6442
    %v6636 = vadd.f32 %v6339, %v6446
    %v6637 = vadd.f32 %v6340, %v6450
    %v6638 = vadd.f32 %v6341, %v6454
    %v6639 = vadd.f32 %v6342, %v6426
    %v6640 = vadd.f32 %v6343, %v6430
    %v6641 = vadd.f32 %v6344, %v6434
    %v6642 = vadd.f32 %v6345, %v6438
    %v6643 = vadd.f32 %v6346, %v6442
    %v6644 = vadd.f32 %v6347, %v6446
    %v6645 = vadd.f32 %v6348, %v6450
    %v6646 = vadd.f32 %v6349, %v6454
    %v6647 = vadd.f32 %v6350, %v6426
    %v6648 = vadd.f32 %v6351, %v6430
    %v6649 = vadd.f32 %v6352, %v6434
    %v6650 = vadd.f32 %v6353, %v6438
    %v6651 = vadd.f32 %v6354, %v6442
    %v6652 = vadd.f32 %v6355, %v6446
    %v6653 = vadd.f32 %v6356, %v6450
    %v6654 = vadd.f32 %v6357, %v6454
    %v6655 = vadd.f32 %v6358, %v6426
    %v6656 = vadd.f32 %v6359, %v6430
    %v6657 = vadd.f32 %v6360, %v6434
    %v6658 = vadd.f32 %v6361, %v6438
    %v6659 = vadd.f32 %v6362, %v6442
    %v6660 = vadd.f32 %v6363, %v6446
    %v6661 = vadd.f32 %v6364, %v6450
    %v6662 = vadd.f32 %v6365, %v6454
    %v6663 = vadd.f32 %v6366, %v6426
    %v6664 = vadd.f32 %v6367, %v6430
    %v6665 = vadd.f32 %v6368, %v6434
    %v6666 = vadd.f32 %v6369, %v6438
    %v6667 = vadd.f32 %v6370, %v6442
    %v6668 = vadd.f32 %v6371, %v6446
    %v6669 = vadd.f32 %v6372, %v6450
    %v6670 = vadd.f32 %v6373, %v6454
    %v6671 = vadd.f32 %v6374, %v6426
    %v6672 = vadd.f32 %v6375, %v6430
    %v6673 = vadd.f32 %v6376, %v6434
    %v6674 = vadd.f32 %v6377, %v6438
    %v6675 = vadd.f32 %v6378, %v6442
    %v6676 = vadd.f32 %v6379, %v6446
    %v6677 = vadd.f32 %v6380, %v6450
    %v6678 = vadd.f32 %v6381, %v6454
    %v6679 = vadd.f32 %v6382, %v6426
    %v6680 = vadd.f32 %v6383, %v6430
    %v6681 = vadd.f32 %v6384, %v6434
    %v6682 = vadd.f32 %v6385, %v6438
    %v6683 = vadd.f32 %v6386, %v6442
    %v6684 = vadd.f32 %v6387, %v6446
    %v6685 = vadd.f32 %v6388, %v6450
    %v6686 = vadd.f32 %v6389, %v6454
    %v6687 = vadd.f32 %v6390, %v6426
    %v6688 = vadd.f32 %v6391, %v6430
    %v6689 = vadd.f32 %v6392, %v6434
    %v6690 = vadd.f32 %v6393, %v6438
    %v6691 = vadd.f32 %v6394, %v6442
    %v6692 = vadd.f32 %v6395, %v6446
    %v6693 = vadd.f32 %v6396, %v6450
    %v6694 = vadd.f32 %v6397, %v6454
    %v6695 = vadd.f32 %v6398, %v6426
    %v6696 = vadd.f32 %v6399, %v6430
    %v6697 = vadd.f32 %v6400, %v6434
    %v6698 = vadd.f32 %v6401, %v6438
    %v6699 = vadd.f32 %v6402, %v6442
    %v6700 = vadd.f32 %v6403, %v6446
    %v6701 = vadd.f32 %v6404, %v6450
    %v6702 = vadd.f32 %v6405, %v6454
    %v6703 = vadd.f32 %v6406, %v6426
    %v6704 = vadd.f32 %v6407, %v6430
    %v6705 = vadd.f32 %v6408, %v6434
    %v6706 = vadd.f32 %v6409, %v6438
    %v6707 = vadd.f32 %v6410, %v6442
    %v6708 = vadd.f32 %v6411, %v6446
    %v6709 = vadd.f32 %v6412, %v6450
    %v6710 = vadd.f32 %v6413, %v6454
    %v6711 = vadd.f32 %v6414, %v6426
    %v6712 = vadd.f32 %v6415, %v6430
    %v6713 = vadd.f32 %v6416, %v6434
    %v6714 = vadd.f32 %v6417, %v6438
    %v6715 = vadd.f32 %v6418, %v6442
    %v6716 = vadd.f32 %v6419, %v6446
    %v6717 = vadd.f32 %v6420, %v6450
    %v6718 = vadd.f32 %v6421, %v6454
    %vm6719 = vcmp.gt.f32.partialorder %v6463, 0.0
    %vm6720 = vcmp.gt.f32.partialorder %v6464, 0.0
    %vm6721 = vcmp.gt.f32.partialorder %v6465, 0.0
    %vm6722 = vcmp.gt.f32.partialorder %v6466, 0.0
    %vm6723 = vcmp.gt.f32.partialorder %v6467, 0.0
    %vm6724 = vcmp.gt.f32.partialorder %v6468, 0.0
    %vm6725 = vcmp.gt.f32.partialorder %v6469, 0.0
    %vm6726 = vcmp.gt.f32.partialorder %v6470, 0.0
    %vm6727 = vcmp.gt.f32.partialorder %v6471, 0.0
    %vm6728 = vcmp.gt.f32.partialorder %v6472, 0.0
    %vm6729 = vcmp.gt.f32.partialorder %v6473, 0.0
    %vm6730 = vcmp.gt.f32.partialorder %v6474, 0.0
    %vm6731 = vcmp.gt.f32.partialorder %v6475, 0.0
    %vm6732 = vcmp.gt.f32.partialorder %v6476, 0.0
    %vm6733 = vcmp.gt.f32.partialorder %v6477, 0.0
    %vm6734 = vcmp.gt.f32.partialorder %v6478, 0.0
    %vm6735 = vcmp.gt.f32.partialorder %v6479, 0.0
    %vm6736 = vcmp.gt.f32.partialorder %v6480, 0.0
    %vm6737 = vcmp.gt.f32.partialorder %v6481, 0.0
    %vm6738 = vcmp.gt.f32.partialorder %v6482, 0.0
    %vm6739 = vcmp.gt.f32.partialorder %v6483, 0.0
    %vm6740 = vcmp.gt.f32.partialorder %v6484, 0.0
    %vm6741 = vcmp.gt.f32.partialorder %v6485, 0.0
    %vm6742 = vcmp.gt.f32.partialorder %v6486, 0.0
    %vm6743 = vcmp.gt.f32.partialorder %v6487, 0.0
    %vm6744 = vcmp.gt.f32.partialorder %v6488, 0.0
    %vm6745 = vcmp.gt.f32.partialorder %v6489, 0.0
    %vm6746 = vcmp.gt.f32.partialorder %v6490, 0.0
    %vm6747 = vcmp.gt.f32.partialorder %v6491, 0.0
    %vm6748 = vcmp.gt.f32.partialorder %v6492, 0.0
    %vm6749 = vcmp.gt.f32.partialorder %v6493, 0.0
    %vm6750 = vcmp.gt.f32.partialorder %v6494, 0.0
    %vm6751 = vcmp.gt.f32.partialorder %v6495, 0.0
    %vm6752 = vcmp.gt.f32.partialorder %v6496, 0.0
    %vm6753 = vcmp.gt.f32.partialorder %v6497, 0.0
    %vm6754 = vcmp.gt.f32.partialorder %v6498, 0.0
    %vm6755 = vcmp.gt.f32.partialorder %v6499, 0.0
    %vm6756 = vcmp.gt.f32.partialorder %v6500, 0.0
    %vm6757 = vcmp.gt.f32.partialorder %v6501, 0.0
    %vm6758 = vcmp.gt.f32.partialorder %v6502, 0.0
    %vm6759 = vcmp.gt.f32.partialorder %v6503, 0.0
    %vm6760 = vcmp.gt.f32.partialorder %v6504, 0.0
    %vm6761 = vcmp.gt.f32.partialorder %v6505, 0.0
    %vm6762 = vcmp.gt.f32.partialorder %v6506, 0.0
    %vm6763 = vcmp.gt.f32.partialorder %v6507, 0.0
    %vm6764 = vcmp.gt.f32.partialorder %v6508, 0.0
    %vm6765 = vcmp.gt.f32.partialorder %v6509, 0.0
    %vm6766 = vcmp.gt.f32.partialorder %v6510, 0.0
    %vm6767 = vcmp.gt.f32.partialorder %v6511, 0.0
    %vm6768 = vcmp.gt.f32.partialorder %v6512, 0.0
    %vm6769 = vcmp.gt.f32.partialorder %v6513, 0.0
    %vm6770 = vcmp.gt.f32.partialorder %v6514, 0.0
    %vm6771 = vcmp.gt.f32.partialorder %v6515, 0.0
    %vm6772 = vcmp.gt.f32.partialorder %v6516, 0.0
    %vm6773 = vcmp.gt.f32.partialorder %v6517, 0.0
    %vm6774 = vcmp.gt.f32.partialorder %v6518, 0.0
    %vm6775 = vcmp.gt.f32.partialorder %v6519, 0.0
    %vm6776 = vcmp.gt.f32.partialorder %v6520, 0.0
    %vm6777 = vcmp.gt.f32.partialorder %v6521, 0.0
    %vm6778 = vcmp.gt.f32.partialorder %v6522, 0.0
    %vm6779 = vcmp.gt.f32.partialorder %v6523, 0.0
    %vm6780 = vcmp.gt.f32.partialorder %v6524, 0.0
    %vm6781 = vcmp.gt.f32.partialorder %v6525, 0.0
    %vm6782 = vcmp.gt.f32.partialorder %v6526, 0.0
    %vm6783 = vcmp.gt.f32.partialorder %v6527, 0.0
    %vm6784 = vcmp.gt.f32.partialorder %v6528, 0.0
    %vm6785 = vcmp.gt.f32.partialorder %v6529, 0.0
    %vm6786 = vcmp.gt.f32.partialorder %v6530, 0.0
    %vm6787 = vcmp.gt.f32.partialorder %v6531, 0.0
    %vm6788 = vcmp.gt.f32.partialorder %v6532, 0.0
    %vm6789 = vcmp.gt.f32.partialorder %v6533, 0.0
    %vm6790 = vcmp.gt.f32.partialorder %v6534, 0.0
    %vm6791 = vcmp.gt.f32.partialorder %v6535, 0.0
    %vm6792 = vcmp.gt.f32.partialorder %v6536, 0.0
    %vm6793 = vcmp.gt.f32.partialorder %v6537, 0.0
    %vm6794 = vcmp.gt.f32.partialorder %v6538, 0.0
    %vm6795 = vcmp.gt.f32.partialorder %v6539, 0.0
    %vm6796 = vcmp.gt.f32.partialorder %v6540, 0.0
    %vm6797 = vcmp.gt.f32.partialorder %v6541, 0.0
    %vm6798 = vcmp.gt.f32.partialorder %v6542, 0.0
    %vm6799 = vcmp.gt.f32.partialorder %v6543, 0.0
    %vm6800 = vcmp.gt.f32.partialorder %v6544, 0.0
    %vm6801 = vcmp.gt.f32.partialorder %v6545, 0.0
    %vm6802 = vcmp.gt.f32.partialorder %v6546, 0.0
    %vm6803 = vcmp.gt.f32.partialorder %v6547, 0.0
    %vm6804 = vcmp.gt.f32.partialorder %v6548, 0.0
    %vm6805 = vcmp.gt.f32.partialorder %v6549, 0.0
    %vm6806 = vcmp.gt.f32.partialorder %v6550, 0.0
    %vm6807 = vcmp.gt.f32.partialorder %v6551, 0.0
    %vm6808 = vcmp.gt.f32.partialorder %v6552, 0.0
    %vm6809 = vcmp.gt.f32.partialorder %v6553, 0.0
    %vm6810 = vcmp.gt.f32.partialorder %v6554, 0.0
    %vm6811 = vcmp.gt.f32.partialorder %v6555, 0.0
    %vm6812 = vcmp.gt.f32.partialorder %v6556, 0.0
    %vm6813 = vcmp.gt.f32.partialorder %v6557, 0.0
    %vm6814 = vcmp.gt.f32.partialorder %v6558, 0.0
    %vm6815 = vcmp.gt.f32.partialorder %v6559, 0.0
    %vm6816 = vcmp.gt.f32.partialorder %v6560, 0.0
    %vm6817 = vcmp.gt.f32.partialorder %v6561, 0.0
    %vm6818 = vcmp.gt.f32.partialorder %v6562, 0.0
    %vm6819 = vcmp.gt.f32.partialorder %v6563, 0.0
    %vm6820 = vcmp.gt.f32.partialorder %v6564, 0.0
    %vm6821 = vcmp.gt.f32.partialorder %v6565, 0.0
    %vm6822 = vcmp.gt.f32.partialorder %v6566, 0.0
    %vm6823 = vcmp.gt.f32.partialorder %v6567, 0.0
    %vm6824 = vcmp.gt.f32.partialorder %v6568, 0.0
    %vm6825 = vcmp.gt.f32.partialorder %v6569, 0.0
    %vm6826 = vcmp.gt.f32.partialorder %v6570, 0.0
    %vm6827 = vcmp.gt.f32.partialorder %v6571, 0.0
    %vm6828 = vcmp.gt.f32.partialorder %v6572, 0.0
    %vm6829 = vcmp.gt.f32.partialorder %v6573, 0.0
    %vm6830 = vcmp.gt.f32.partialorder %v6574, 0.0
    %vm6831 = vcmp.gt.f32.partialorder %v6575, 0.0
    %vm6832 = vcmp.gt.f32.partialorder %v6576, 0.0
    %vm6833 = vcmp.gt.f32.partialorder %v6577, 0.0
    %vm6834 = vcmp.gt.f32.partialorder %v6578, 0.0
    %vm6835 = vcmp.gt.f32.partialorder %v6579, 0.0
    %vm6836 = vcmp.gt.f32.partialorder %v6580, 0.0
    %vm6837 = vcmp.gt.f32.partialorder %v6581, 0.0
    %vm6838 = vcmp.gt.f32.partialorder %v6582, 0.0
    %vm6839 = vcmp.gt.f32.partialorder %v6583, 0.0
    %vm6840 = vcmp.gt.f32.partialorder %v6584, 0.0
    %vm6841 = vcmp.gt.f32.partialorder %v6585, 0.0
    %vm6842 = vcmp.gt.f32.partialorder %v6586, 0.0
    %vm6843 = vcmp.gt.f32.partialorder %v6587, 0.0
    %vm6844 = vcmp.gt.f32.partialorder %v6588, 0.0
    %vm6845 = vcmp.gt.f32.partialorder %v6589, 0.0
    %vm6846 = vcmp.gt.f32.partialorder %v6590, 0.0
    %vm6847 = vcmp.gt.f32.partialorder %v6591, 0.0
    %vm6848 = vcmp.gt.f32.partialorder %v6592, 0.0
    %vm6849 = vcmp.gt.f32.partialorder %v6593, 0.0
    %vm6850 = vcmp.gt.f32.partialorder %v6594, 0.0
    %vm6851 = vcmp.gt.f32.partialorder %v6595, 0.0
    %vm6852 = vcmp.gt.f32.partialorder %v6596, 0.0
    %vm6853 = vcmp.gt.f32.partialorder %v6597, 0.0
    %vm6854 = vcmp.gt.f32.partialorder %v6598, 0.0
    %vm6855 = vcmp.gt.f32.partialorder %v6599, 0.0
    %vm6856 = vcmp.gt.f32.partialorder %v6600, 0.0
    %vm6857 = vcmp.gt.f32.partialorder %v6601, 0.0
    %vm6858 = vcmp.gt.f32.partialorder %v6602, 0.0
    %vm6859 = vcmp.gt.f32.partialorder %v6603, 0.0
    %vm6860 = vcmp.gt.f32.partialorder %v6604, 0.0
    %vm6861 = vcmp.gt.f32.partialorder %v6605, 0.0
    %vm6862 = vcmp.gt.f32.partialorder %v6606, 0.0
    %vm6863 = vcmp.gt.f32.partialorder %v6607, 0.0
    %vm6864 = vcmp.gt.f32.partialorder %v6608, 0.0
    %vm6865 = vcmp.gt.f32.partialorder %v6609, 0.0
    %vm6866 = vcmp.gt.f32.partialorder %v6610, 0.0
    %vm6867 = vcmp.gt.f32.partialorder %v6611, 0.0
    %vm6868 = vcmp.gt.f32.partialorder %v6612, 0.0
    %vm6869 = vcmp.gt.f32.partialorder %v6613, 0.0
    %vm6870 = vcmp.gt.f32.partialorder %v6614, 0.0
    %vm6871 = vcmp.gt.f32.partialorder %v6615, 0.0
    %vm6872 = vcmp.gt.f32.partialorder %v6616, 0.0
    %vm6873 = vcmp.gt.f32.partialorder %v6617, 0.0
    %vm6874 = vcmp.gt.f32.partialorder %v6618, 0.0
    %vm6875 = vcmp.gt.f32.partialorder %v6619, 0.0
    %vm6876 = vcmp.gt.f32.partialorder %v6620, 0.0
    %vm6877 = vcmp.gt.f32.partialorder %v6621, 0.0
    %vm6878 = vcmp.gt.f32.partialorder %v6622, 0.0
    %vm6879 = vcmp.gt.f32.partialorder %v6623, 0.0
    %vm6880 = vcmp.gt.f32.partialorder %v6624, 0.0
    %vm6881 = vcmp.gt.f32.partialorder %v6625, 0.0
    %vm6882 = vcmp.gt.f32.partialorder %v6626, 0.0
    %vm6883 = vcmp.gt.f32.partialorder %v6627, 0.0
    %vm6884 = vcmp.gt.f32.partialorder %v6628, 0.0
    %vm6885 = vcmp.gt.f32.partialorder %v6629, 0.0
    %vm6886 = vcmp.gt.f32.partialorder %v6630, 0.0
    %vm6887 = vcmp.gt.f32.partialorder %v6631, 0.0
    %vm6888 = vcmp.gt.f32.partialorder %v6632, 0.0
    %vm6889 = vcmp.gt.f32.partialorder %v6633, 0.0
    %vm6890 = vcmp.gt.f32.partialorder %v6634, 0.0
    %vm6891 = vcmp.gt.f32.partialorder %v6635, 0.0
    %vm6892 = vcmp.gt.f32.partialorder %v6636, 0.0
    %vm6893 = vcmp.gt.f32.partialorder %v6637, 0.0
    %vm6894 = vcmp.gt.f32.partialorder %v6638, 0.0
    %vm6895 = vcmp.gt.f32.partialorder %v6639, 0.0
    %vm6896 = vcmp.gt.f32.partialorder %v6640, 0.0
    %vm6897 = vcmp.gt.f32.partialorder %v6641, 0.0
    %vm6898 = vcmp.gt.f32.partialorder %v6642, 0.0
    %vm6899 = vcmp.gt.f32.partialorder %v6643, 0.0
    %vm6900 = vcmp.gt.f32.partialorder %v6644, 0.0
    %vm6901 = vcmp.gt.f32.partialorder %v6645, 0.0
    %vm6902 = vcmp.gt.f32.partialorder %v6646, 0.0
    %vm6903 = vcmp.gt.f32.partialorder %v6647, 0.0
    %vm6904 = vcmp.gt.f32.partialorder %v6648, 0.0
    %vm6905 = vcmp.gt.f32.partialorder %v6649, 0.0
    %vm6906 = vcmp.gt.f32.partialorder %v6650, 0.0
    %vm6907 = vcmp.gt.f32.partialorder %v6651, 0.0
    %vm6908 = vcmp.gt.f32.partialorder %v6652, 0.0
    %vm6909 = vcmp.gt.f32.partialorder %v6653, 0.0
    %vm6910 = vcmp.gt.f32.partialorder %v6654, 0.0
    %vm6911 = vcmp.gt.f32.partialorder %v6655, 0.0
    %vm6912 = vcmp.gt.f32.partialorder %v6656, 0.0
    %vm6913 = vcmp.gt.f32.partialorder %v6657, 0.0
    %vm6914 = vcmp.gt.f32.partialorder %v6658, 0.0
    %vm6915 = vcmp.gt.f32.partialorder %v6659, 0.0
    %vm6916 = vcmp.gt.f32.partialorder %v6660, 0.0
    %vm6917 = vcmp.gt.f32.partialorder %v6661, 0.0
    %vm6918 = vcmp.gt.f32.partialorder %v6662, 0.0
    %vm6919 = vcmp.gt.f32.partialorder %v6663, 0.0
    %vm6920 = vcmp.gt.f32.partialorder %v6664, 0.0
    %vm6921 = vcmp.gt.f32.partialorder %v6665, 0.0
    %vm6922 = vcmp.gt.f32.partialorder %v6666, 0.0
    %vm6923 = vcmp.gt.f32.partialorder %v6667, 0.0
    %vm6924 = vcmp.gt.f32.partialorder %v6668, 0.0
    %vm6925 = vcmp.gt.f32.partialorder %v6669, 0.0
    %vm6926 = vcmp.gt.f32.partialorder %v6670, 0.0
    %vm6927 = vcmp.gt.f32.partialorder %v6671, 0.0
    %vm6928 = vcmp.gt.f32.partialorder %v6672, 0.0
    %vm6929 = vcmp.gt.f32.partialorder %v6673, 0.0
    %vm6930 = vcmp.gt.f32.partialorder %v6674, 0.0
    %vm6931 = vcmp.gt.f32.partialorder %v6675, 0.0
    %vm6932 = vcmp.gt.f32.partialorder %v6676, 0.0
    %vm6933 = vcmp.gt.f32.partialorder %v6677, 0.0
    %vm6934 = vcmp.gt.f32.partialorder %v6678, 0.0
    %vm6935 = vcmp.gt.f32.partialorder %v6679, 0.0
    %vm6936 = vcmp.gt.f32.partialorder %v6680, 0.0
    %vm6937 = vcmp.gt.f32.partialorder %v6681, 0.0
    %vm6938 = vcmp.gt.f32.partialorder %v6682, 0.0
    %vm6939 = vcmp.gt.f32.partialorder %v6683, 0.0
    %vm6940 = vcmp.gt.f32.partialorder %v6684, 0.0
    %vm6941 = vcmp.gt.f32.partialorder %v6685, 0.0
    %vm6942 = vcmp.gt.f32.partialorder %v6686, 0.0
    %vm6943 = vcmp.gt.f32.partialorder %v6687, 0.0
    %vm6944 = vcmp.gt.f32.partialorder %v6688, 0.0
    %vm6945 = vcmp.gt.f32.partialorder %v6689, 0.0
    %vm6946 = vcmp.gt.f32.partialorder %v6690, 0.0
    %vm6947 = vcmp.gt.f32.partialorder %v6691, 0.0
    %vm6948 = vcmp.gt.f32.partialorder %v6692, 0.0
    %vm6949 = vcmp.gt.f32.partialorder %v6693, 0.0
    %vm6950 = vcmp.gt.f32.partialorder %v6694, 0.0
    %vm6951 = vcmp.gt.f32.partialorder %v6695, 0.0
    %vm6952 = vcmp.gt.f32.partialorder %v6696, 0.0
    %vm6953 = vcmp.gt.f32.partialorder %v6697, 0.0
    %vm6954 = vcmp.gt.f32.partialorder %v6698, 0.0
    %vm6955 = vcmp.gt.f32.partialorder %v6699, 0.0
    %vm6956 = vcmp.gt.f32.partialorder %v6700, 0.0
    %vm6957 = vcmp.gt.f32.partialorder %v6701, 0.0
    %vm6958 = vcmp.gt.f32.partialorder %v6702, 0.0
    %vm6959 = vcmp.gt.f32.partialorder %v6703, 0.0
    %vm6960 = vcmp.gt.f32.partialorder %v6704, 0.0
    %vm6961 = vcmp.gt.f32.partialorder %v6705, 0.0
    %vm6962 = vcmp.gt.f32.partialorder %v6706, 0.0
    %vm6963 = vcmp.gt.f32.partialorder %v6707, 0.0
    %vm6964 = vcmp.gt.f32.partialorder %v6708, 0.0
    %vm6965 = vcmp.gt.f32.partialorder %v6709, 0.0
    %vm6966 = vcmp.gt.f32.partialorder %v6710, 0.0
    %vm6967 = vcmp.gt.f32.partialorder %v6711, 0.0
    %vm6968 = vcmp.gt.f32.partialorder %v6712, 0.0
    %vm6969 = vcmp.gt.f32.partialorder %v6713, 0.0
    %vm6970 = vcmp.gt.f32.partialorder %v6714, 0.0
    %vm6971 = vcmp.gt.f32.partialorder %v6715, 0.0
    %vm6972 = vcmp.gt.f32.partialorder %v6716, 0.0
    %vm6973 = vcmp.gt.f32.partialorder %v6717, 0.0
    %vm6974 = vcmp.gt.f32.partialorder %v6718, 0.0
    %v6975 = vmul.f32 %v6463, 0.2
    %v6976 = vmul.f32 %v6464, 0.2
    %v6977 = vmul.f32 %v6465, 0.2
    %v6978 = vmul.f32 %v6466, 0.2
    %v6979 = vmul.f32 %v6467, 0.2
    %v6980 = vmul.f32 %v6468, 0.2
    %v6981 = vmul.f32 %v6469, 0.2
    %v6982 = vmul.f32 %v6470, 0.2
    %v6983 = vmul.f32 %v6471, 0.2
    %v6984 = vmul.f32 %v6472, 0.2
    %v6985 = vmul.f32 %v6473, 0.2
    %v6986 = vmul.f32 %v6474, 0.2
    %v6987 = vmul.f32 %v6475, 0.2
    %v6988 = vmul.f32 %v6476, 0.2
    %v6989 = vmul.f32 %v6477, 0.2
    %v6990 = vmul.f32 %v6478, 0.2
    %v6991 = vmul.f32 %v6479, 0.2
    %v6992 = vmul.f32 %v6480, 0.2
    %v6993 = vmul.f32 %v6481, 0.2
    %v6994 = vmul.f32 %v6482, 0.2
    %v6995 = vmul.f32 %v6483, 0.2
    %v6996 = vmul.f32 %v6484, 0.2
    %v6997 = vmul.f32 %v6485, 0.2
    %v6998 = vmul.f32 %v6486, 0.2
    %v6999 = vmul.f32 %v6487, 0.2
    %v7000 = vmul.f32 %v6488, 0.2
    %v7001 = vmul.f32 %v6489, 0.2
    %v7002 = vmul.f32 %v6490, 0.2
    %v7003 = vmul.f32 %v6491, 0.2
    %v7004 = vmul.f32 %v6492, 0.2
    %v7005 = vmul.f32 %v6493, 0.2
    %v7006 = vmul.f32 %v6494, 0.2
    %v7007 = vmul.f32 %v6495, 0.2
    %v7008 = vmul.f32 %v6496, 0.2
    %v7009 = vmul.f32 %v6497, 0.2
    %v7010 = vmul.f32 %v6498, 0.2
    %v7011 = vmul.f32 %v6499, 0.2
    %v7012 = vmul.f32 %v6500, 0.2
    %v7013 = vmul.f32 %v6501, 0.2
    %v7014 = vmul.f32 %v6502, 0.2
    %v7015 = vmul.f32 %v6503, 0.2
    %v7016 = vmul.f32 %v6504, 0.2
    %v7017 = vmul.f32 %v6505, 0.2
    %v7018 = vmul.f32 %v6506, 0.2
    %v7019 = vmul.f32 %v6507, 0.2
    %v7020 = vmul.f32 %v6508, 0.2
    %v7021 = vmul.f32 %v6509, 0.2
    %v7022 = vmul.f32 %v6510, 0.2
    %v7023 = vmul.f32 %v6511, 0.2
    %v7024 = vmul.f32 %v6512, 0.2
    %v7025 = vmul.f32 %v6513, 0.2
    %v7026 = vmul.f32 %v6514, 0.2
    %v7027 = vmul.f32 %v6515, 0.2
    %v7028 = vmul.f32 %v6516, 0.2
    %v7029 = vmul.f32 %v6517, 0.2
    %v7030 = vmul.f32 %v6518, 0.2
    %v7031 = vmul.f32 %v6519, 0.2
    %v7032 = vmul.f32 %v6520, 0.2
    %v7033 = vmul.f32 %v6521, 0.2
    %v7034 = vmul.f32 %v6522, 0.2
    %v7035 = vmul.f32 %v6523, 0.2
    %v7036 = vmul.f32 %v6524, 0.2
    %v7037 = vmul.f32 %v6525, 0.2
    %v7038 = vmul.f32 %v6526, 0.2
    %v7039 = vmul.f32 %v6527, 0.2
    %v7040 = vmul.f32 %v6528, 0.2
    %v7041 = vmul.f32 %v6529, 0.2
    %v7042 = vmul.f32 %v6530, 0.2
    %v7043 = vmul.f32 %v6531, 0.2
    %v7044 = vmul.f32 %v6532, 0.2
    %v7045 = vmul.f32 %v6533, 0.2
    %v7046 = vmul.f32 %v6534, 0.2
    %v7047 = vmul.f32 %v6535, 0.2
    %v7048 = vmul.f32 %v6536, 0.2
    %v7049 = vmul.f32 %v6537, 0.2
    %v7050 = vmul.f32 %v6538, 0.2
    %v7051 = vmul.f32 %v6539, 0.2
    %v7052 = vmul.f32 %v6540, 0.2
    %v7053 = vmul.f32 %v6541, 0.2
    %v7054 = vmul.f32 %v6542, 0.2
    %v7055 = vmul.f32 %v6543, 0.2
    %v7056 = vmul.f32 %v6544, 0.2
    %v7057 = vmul.f32 %v6545, 0.2
    %v7058 = vmul.f32 %v6546, 0.2
    %v7059 = vmul.f32 %v6547, 0.2
    %v7060 = vmul.f32 %v6548, 0.2
    %v7061 = vmul.f32 %v6549, 0.2
    %v7062 = vmul.f32 %v6550, 0.2
    %v7063 = vmul.f32 %v6551, 0.2
    %v7064 = vmul.f32 %v6552, 0.2
    %v7065 = vmul.f32 %v6553, 0.2
    %v7066 = vmul.f32 %v6554, 0.2
    %v7067 = vmul.f32 %v6555, 0.2
    %v7068 = vmul.f32 %v6556, 0.2
    %v7069 = vmul.f32 %v6557, 0.2
    %v7070 = vmul.f32 %v6558, 0.2
    %v7071 = vmul.f32 %v6559, 0.2
    %v7072 = vmul.f32 %v6560, 0.2
    %v7073 = vmul.f32 %v6561, 0.2
    %v7074 = vmul.f32 %v6562, 0.2
    %v7075 = vmul.f32 %v6563, 0.2
    %v7076 = vmul.f32 %v6564, 0.2
    %v7077 = vmul.f32 %v6565, 0.2
    %v7078 = vmul.f32 %v6566, 0.2
    %v7079 = vmul.f32 %v6567, 0.2
    %v7080 = vmul.f32 %v6568, 0.2
    %v7081 = vmul.f32 %v6569, 0.2
    %v7082 = vmul.f32 %v6570, 0.2
    %v7083 = vmul.f32 %v6571, 0.2
    %v7084 = vmul.f32 %v6572, 0.2
    %v7085 = vmul.f32 %v6573, 0.2
    %v7086 = vmul.f32 %v6574, 0.2
    %v7087 = vmul.f32 %v6575, 0.2
    %v7088 = vmul.f32 %v6576, 0.2
    %v7089 = vmul.f32 %v6577, 0.2
    %v7090 = vmul.f32 %v6578, 0.2
    %v7091 = vmul.f32 %v6579, 0.2
    %v7092 = vmul.f32 %v6580, 0.2
    %v7093 = vmul.f32 %v6581, 0.2
    %v7094 = vmul.f32 %v6582, 0.2
    %v7095 = vmul.f32 %v6583, 0.2
    %v7096 = vmul.f32 %v6584, 0.2
    %v7097 = vmul.f32 %v6585, 0.2
    %v7098 = vmul.f32 %v6586, 0.2
    %v7099 = vmul.f32 %v6587, 0.2
    %v7100 = vmul.f32 %v6588, 0.2
    %v7101 = vmul.f32 %v6589, 0.2
    %v7102 = vmul.f32 %v6590, 0.2
    %v7103 = vmul.f32 %v6591, 0.2
    %v7104 = vmul.f32 %v6592, 0.2
    %v7105 = vmul.f32 %v6593, 0.2
    %v7106 = vmul.f32 %v6594, 0.2
    %v7107 = vmul.f32 %v6595, 0.2
    %v7108 = vmul.f32 %v6596, 0.2
    %v7109 = vmul.f32 %v6597, 0.2
    %v7110 = vmul.f32 %v6598, 0.2
    %v7111 = vmul.f32 %v6599, 0.2
    %v7112 = vmul.f32 %v6600, 0.2
    %v7113 = vmul.f32 %v6601, 0.2
    %v7114 = vmul.f32 %v6602, 0.2
    %v7115 = vmul.f32 %v6603, 0.2
    %v7116 = vmul.f32 %v6604, 0.2
    %v7117 = vmul.f32 %v6605, 0.2
    %v7118 = vmul.f32 %v6606, 0.2
    %v7119 = vmul.f32 %v6607, 0.2
    %v7120 = vmul.f32 %v6608, 0.2
    %v7121 = vmul.f32 %v6609, 0.2
    %v7122 = vmul.f32 %v6610, 0.2
    %v7123 = vmul.f32 %v6611, 0.2
    %v7124 = vmul.f32 %v6612, 0.2
    %v7125 = vmul.f32 %v6613, 0.2
    %v7126 = vmul.f32 %v6614, 0.2
    %v7127 = vmul.f32 %v6615, 0.2
    %v7128 = vmul.f32 %v6616, 0.2
    %v7129 = vmul.f32 %v6617, 0.2
    %v7130 = vmul.f32 %v6618, 0.2
    %v7131 = vmul.f32 %v6619, 0.2
    %v7132 = vmul.f32 %v6620, 0.2
    %v7133 = vmul.f32 %v6621, 0.2
    %v7134 = vmul.f32 %v6622, 0.2
    %v7135 = vmul.f32 %v6623, 0.2
    %v7136 = vmul.f32 %v6624, 0.2
    %v7137 = vmul.f32 %v6625, 0.2
    %v7138 = vmul.f32 %v6626, 0.2
    %v7139 = vmul.f32 %v6627, 0.2
    %v7140 = vmul.f32 %v6628, 0.2
    %v7141 = vmul.f32 %v6629, 0.2
    %v7142 = vmul.f32 %v6630, 0.2
    %v7143 = vmul.f32 %v6631, 0.2
    %v7144 = vmul.f32 %v6632, 0.2
    %v7145 = vmul.f32 %v6633, 0.2
    %v7146 = vmul.f32 %v6634, 0.2
    %v7147 = vmul.f32 %v6635, 0.2
    %v7148 = vmul.f32 %v6636, 0.2
    %v7149 = vmul.f32 %v6637, 0.2
    %v7150 = vmul.f32 %v6638, 0.2
    %v7151 = vmul.f32 %v6639, 0.2
    %v7152 = vmul.f32 %v6640, 0.2
    %v7153 = vmul.f32 %v6641, 0.2
    %v7154 = vmul.f32 %v6642, 0.2
    %v7155 = vmul.f32 %v6643, 0.2
    %v7156 = vmul.f32 %v6644, 0.2
    %v7157 = vmul.f32 %v6645, 0.2
    %v7158 = vmul.f32 %v6646, 0.2
    %v7159 = vmul.f32 %v6647, 0.2
    %v7160 = vmul.f32 %v6648, 0.2
    %v7161 = vmul.f32 %v6649, 0.2
    %v7162 = vmul.f32 %v6650, 0.2
    %v7163 = vmul.f32 %v6651, 0.2
    %v7164 = vmul.f32 %v6652, 0.2
    %v7165 = vmul.f32 %v6653, 0.2
    %v7166 = vmul.f32 %v6654, 0.2
    %v7167 = vmul.f32 %v6655, 0.2
    %v7168 = vmul.f32 %v6656, 0.2
    %v7169 = vmul.f32 %v6657, 0.2
    %v7170 = vmul.f32 %v6658, 0.2
    %v7171 = vmul.f32 %v6659, 0.2
    %v7172 = vmul.f32 %v6660, 0.2
    %v7173 = vmul.f32 %v6661, 0.2
    %v7174 = vmul.f32 %v6662, 0.2
    %v7175 = vmul.f32 %v6663, 0.2
    %v7176 = vmul.f32 %v6664, 0.2
    %v7177 = vmul.f32 %v6665, 0.2
    %v7178 = vmul.f32 %v6666, 0.2
    %v7179 = vmul.f32 %v6667, 0.2
    %v7180 = vmul.f32 %v6668, 0.2
    %v7181 = vmul.f32 %v6669, 0.2
    %v7182 = vmul.f32 %v6670, 0.2
    %v7183 = vmul.f32 %v6671, 0.2
    %v7184 = vmul.f32 %v6672, 0.2
    %v7185 = vmul.f32 %v6673, 0.2
    %v7186 = vmul.f32 %v6674, 0.2
    %v7187 = vmul.f32 %v6675, 0.2
    %v7188 = vmul.f32 %v6676, 0.2
    %v7189 = vmul.f32 %v6677, 0.2
    %v7190 = vmul.f32 %v6678, 0.2
    %v7191 = vmul.f32 %v6679, 0.2
    %v7192 = vmul.f32 %v6680, 0.2
    %v7193 = vmul.f32 %v6681, 0.2
    %v7194 = vmul.f32 %v6682, 0.2
    %v7195 = vmul.f32 %v6683, 0.2
    %v7196 = vmul.f32 %v6684, 0.2
    %v7197 = vmul.f32 %v6685, 0.2
    %v7198 = vmul.f32 %v6686, 0.2
    %v7199 = vmul.f32 %v6687, 0.2
    %v7200 = vmul.f32 %v6688, 0.2
    %v7201 = vmul.f32 %v6689, 0.2
    %v7202 = vmul.f32 %v6690, 0.2
    %v7203 = vmul.f32 %v6691, 0.2
    %v7204 = vmul.f32 %v6692, 0.2
    %v7205 = vmul.f32 %v6693, 0.2
    %v7206 = vmul.f32 %v6694, 0.2
    %v7207 = vmul.f32 %v6695, 0.2
    %v7208 = vmul.f32 %v6696, 0.2
    %v7209 = vmul.f32 %v6697, 0.2
    %v7210 = vmul.f32 %v6698, 0.2
    %v7211 = vmul.f32 %v6699, 0.2
    %v7212 = vmul.f32 %v6700, 0.2
    %v7213 = vmul.f32 %v6701, 0.2
    %v7214 = vmul.f32 %v6702, 0.2
    %v7215 = vmul.f32 %v6703, 0.2
    %v7216 = vmul.f32 %v6704, 0.2
    %v7217 = vmul.f32 %v6705, 0.2
    %v7218 = vmul.f32 %v6706, 0.2
    %v7219 = vmul.f32 %v6707, 0.2
    %v7220 = vmul.f32 %v6708, 0.2
    %v7221 = vmul.f32 %v6709, 0.2
    %v7222 = vmul.f32 %v6710, 0.2
    %v7223 = vmul.f32 %v6711, 0.2
    %v7224 = vmul.f32 %v6712, 0.2
    %v7225 = vmul.f32 %v6713, 0.2
    %v7226 = vmul.f32 %v6714, 0.2
    %v7227 = vmul.f32 %v6715, 0.2
    %v7228 = vmul.f32 %v6716, 0.2
    %v7229 = vmul.f32 %v6717, 0.2
    %v7230 = vmul.f32 %v6718, 0.2
    %v7231 = vsel %vm6719, %v6463, %v6975
    %v7232 = vsel %vm6720, %v6464, %v6976
    %v7233 = vsel %vm6721, %v6465, %v6977
    %v7234 = vsel %vm6722, %v6466, %v6978
    %v7235 = vsel %vm6723, %v6467, %v6979
    %v7236 = vsel %vm6724, %v6468, %v6980
    %v7237 = vsel %vm6725, %v6469, %v6981
    %v7238 = vsel %vm6726, %v6470, %v6982
    %v7239 = vsel %vm6727, %v6471, %v6983
    %v7240 = vsel %vm6728, %v6472, %v6984
    %v7241 = vsel %vm6729, %v6473, %v6985
    %v7242 = vsel %vm6730, %v6474, %v6986
    %v7243 = vsel %vm6731, %v6475, %v6987
    %v7244 = vsel %vm6732, %v6476, %v6988
    %v7245 = vsel %vm6733, %v6477, %v6989
    %v7246 = vsel %vm6734, %v6478, %v6990
    %v7247 = vsel %vm6735, %v6479, %v6991
    %v7248 = vsel %vm6736, %v6480, %v6992
    %v7249 = vsel %vm6737, %v6481, %v6993
    %v7250 = vsel %vm6738, %v6482, %v6994
    %v7251 = vsel %vm6739, %v6483, %v6995
    %v7252 = vsel %vm6740, %v6484, %v6996
    %v7253 = vsel %vm6741, %v6485, %v6997
    %v7254 = vsel %vm6742, %v6486, %v6998
    %v7255 = vsel %vm6743, %v6487, %v6999
    %v7256 = vsel %vm6744, %v6488, %v7000
    %v7257 = vsel %vm6745, %v6489, %v7001
    %v7258 = vsel %vm6746, %v6490, %v7002
    %v7259 = vsel %vm6747, %v6491, %v7003
    %v7260 = vsel %vm6748, %v6492, %v7004
    %v7261 = vsel %vm6749, %v6493, %v7005
    %v7262 = vsel %vm6750, %v6494, %v7006
    %v7263 = vsel %vm6751, %v6495, %v7007
    %v7264 = vsel %vm6752, %v6496, %v7008
    %v7265 = vsel %vm6753, %v6497, %v7009
    %v7266 = vsel %vm6754, %v6498, %v7010
    %v7267 = vsel %vm6755, %v6499, %v7011
    %v7268 = vsel %vm6756, %v6500, %v7012
    %v7269 = vsel %vm6757, %v6501, %v7013
    %v7270 = vsel %vm6758, %v6502, %v7014
    %v7271 = vsel %vm6759, %v6503, %v7015
    %v7272 = vsel %vm6760, %v6504, %v7016
    %v7273 = vsel %vm6761, %v6505, %v7017
    %v7274 = vsel %vm6762, %v6506, %v7018
    %v7275 = vsel %vm6763, %v6507, %v7019
    %v7276 = vsel %vm6764, %v6508, %v7020
    %v7277 = vsel %vm6765, %v6509, %v7021
    %v7278 = vsel %vm6766, %v6510, %v7022
    %v7279 = vsel %vm6767, %v6511, %v7023
    %v7280 = vsel %vm6768, %v6512, %v7024
    %v7281 = vsel %vm6769, %v6513, %v7025
    %v7282 = vsel %vm6770, %v6514, %v7026
    %v7283 = vsel %vm6771, %v6515, %v7027
    %v7284 = vsel %vm6772, %v6516, %v7028
    %v7285 = vsel %vm6773, %v6517, %v7029
    %v7286 = vsel %vm6774, %v6518, %v7030
    %v7287 = vsel %vm6775, %v6519, %v7031
    %v7288 = vsel %vm6776, %v6520, %v7032
    %v7289 = vsel %vm6777, %v6521, %v7033
    %v7290 = vsel %vm6778, %v6522, %v7034
    %v7291 = vsel %vm6779, %v6523, %v7035
    %v7292 = vsel %vm6780, %v6524, %v7036
    %v7293 = vsel %vm6781, %v6525, %v7037
    %v7294 = vsel %vm6782, %v6526, %v7038
    %v7295 = vsel %vm6783, %v6527, %v7039
    %v7296 = vsel %vm6784, %v6528, %v7040
    %v7297 = vsel %vm6785, %v6529, %v7041
    %v7298 = vsel %vm6786, %v6530, %v7042
    %v7299 = vsel %vm6787, %v6531, %v7043
    %v7300 = vsel %vm6788, %v6532, %v7044
    %v7301 = vsel %vm6789, %v6533, %v7045
    %v7302 = vsel %vm6790, %v6534, %v7046
    %v7303 = vsel %vm6791, %v6535, %v7047
    %v7304 = vsel %vm6792, %v6536, %v7048
    %v7305 = vsel %vm6793, %v6537, %v7049
    %v7306 = vsel %vm6794, %v6538, %v7050
    %v7307 = vsel %vm6795, %v6539, %v7051
    %v7308 = vsel %vm6796, %v6540, %v7052
    %v7309 = vsel %vm6797, %v6541, %v7053
    %v7310 = vsel %vm6798, %v6542, %v7054
    %v7311 = vsel %vm6799, %v6543, %v7055
    %v7312 = vsel %vm6800, %v6544, %v7056
    %v7313 = vsel %vm6801, %v6545, %v7057
    %v7314 = vsel %vm6802, %v6546, %v7058
    %v7315 = vsel %vm6803, %v6547, %v7059
    %v7316 = vsel %vm6804, %v6548, %v7060
    %v7317 = vsel %vm6805, %v6549, %v7061
    %v7318 = vsel %vm6806, %v6550, %v7062
    %v7319 = vsel %vm6807, %v6551, %v7063
    %v7320 = vsel %vm6808, %v6552, %v7064
    %v7321 = vsel %vm6809, %v6553, %v7065
    %v7322 = vsel %vm6810, %v6554, %v7066
    %v7323 = vsel %vm6811, %v6555, %v7067
    %v7324 = vsel %vm6812, %v6556, %v7068
    %v7325 = vsel %vm6813, %v6557, %v7069
    %v7326 = vsel %vm6814, %v6558, %v7070
    %v7327 = vsel %vm6815, %v6559, %v7071
    %v7328 = vsel %vm6816, %v6560, %v7072
    %v7329 = vsel %vm6817, %v6561, %v7073
    %v7330 = vsel %vm6818, %v6562, %v7074
    %v7331 = vsel %vm6819, %v6563, %v7075
    %v7332 = vsel %vm6820, %v6564, %v7076
    %v7333 = vsel %vm6821, %v6565, %v7077
    %v7334 = vsel %vm6822, %v6566, %v7078
    %v7335 = vsel %vm6823, %v6567, %v7079
    %v7336 = vsel %vm6824, %v6568, %v7080
    %v7337 = vsel %vm6825, %v6569, %v7081
    %v7338 = vsel %vm6826, %v6570, %v7082
    %v7339 = vsel %vm6827, %v6571, %v7083
    %v7340 = vsel %vm6828, %v6572, %v7084
    %v7341 = vsel %vm6829, %v6573, %v7085
    %v7342 = vsel %vm6830, %v6574, %v7086
    %v7343 = vsel %vm6831, %v6575, %v7087
    %v7344 = vsel %vm6832, %v6576, %v7088
    %v7345 = vsel %vm6833, %v6577, %v7089
    %v7346 = vsel %vm6834, %v6578, %v7090
    %v7347 = vsel %vm6835, %v6579, %v7091
    %v7348 = vsel %vm6836, %v6580, %v7092
    %v7349 = vsel %vm6837, %v6581, %v7093
    %v7350 = vsel %vm6838, %v6582, %v7094
    %v7351 = vsel %vm6839, %v6583, %v7095
    %v7352 = vsel %vm6840, %v6584, %v7096
    %v7353 = vsel %vm6841, %v6585, %v7097
    %v7354 = vsel %vm6842, %v6586, %v7098
    %v7355 = vsel %vm6843, %v6587, %v7099
    %v7356 = vsel %vm6844, %v6588, %v7100
    %v7357 = vsel %vm6845, %v6589, %v7101
    %v7358 = vsel %vm6846, %v6590, %v7102
    %v7359 = vsel %vm6847, %v6591, %v7103
    %v7360 = vsel %vm6848, %v6592, %v7104
    %v7361 = vsel %vm6849, %v6593, %v7105
    %v7362 = vsel %vm6850, %v6594, %v7106
    %v7363 = vsel %vm6851, %v6595, %v7107
    %v7364 = vsel %vm6852, %v6596, %v7108
    %v7365 = vsel %vm6853, %v6597, %v7109
    %v7366 = vsel %vm6854, %v6598, %v7110
    %v7367 = vsel %vm6855, %v6599, %v7111
    %v7368 = vsel %vm6856, %v6600, %v7112
    %v7369 = vsel %vm6857, %v6601, %v7113
    %v7370 = vsel %vm6858, %v6602, %v7114
    %v7371 = vsel %vm6859, %v6603, %v7115
    %v7372 = vsel %vm6860, %v6604, %v7116
    %v7373 = vsel %vm6861, %v6605, %v7117
    %v7374 = vsel %vm6862, %v6606, %v7118
    %v7375 = vsel %vm6863, %v6607, %v7119
    %v7376 = vsel %vm6864, %v6608, %v7120
    %v7377 = vsel %vm6865, %v6609, %v7121
    %v7378 = vsel %vm6866, %v6610, %v7122
    %v7379 = vsel %vm6867, %v6611, %v7123
    %v7380 = vsel %vm6868, %v6612, %v7124
    %v7381 = vsel %vm6869, %v6613, %v7125
    %v7382 = vsel %vm6870, %v6614, %v7126
    %v7383 = vsel %vm6871, %v6615, %v7127
    %v7384 = vsel %vm6872, %v6616, %v7128
    %v7385 = vsel %vm6873, %v6617, %v7129
    %v7386 = vsel %vm6874, %v6618, %v7130
    %v7387 = vsel %vm6875, %v6619, %v7131
    %v7388 = vsel %vm6876, %v6620, %v7132
    %v7389 = vsel %vm6877, %v6621, %v7133
    %v7390 = vsel %vm6878, %v6622, %v7134
    %v7391 = vsel %vm6879, %v6623, %v7135
    %v7392 = vsel %vm6880, %v6624, %v7136
    %v7393 = vsel %vm6881, %v6625, %v7137
    %v7394 = vsel %vm6882, %v6626, %v7138
    %v7395 = vsel %vm6883, %v6627, %v7139
    %v7396 = vsel %vm6884, %v6628, %v7140
    %v7397 = vsel %vm6885, %v6629, %v7141
    %v7398 = vsel %vm6886, %v6630, %v7142
    %v7399 = vsel %vm6887, %v6631, %v7143
    %v7400 = vsel %vm6888, %v6632, %v7144
    %v7401 = vsel %vm6889, %v6633, %v7145
    %v7402 = vsel %vm6890, %v6634, %v7146
    %v7403 = vsel %vm6891, %v6635, %v7147
    %v7404 = vsel %vm6892, %v6636, %v7148
    %v7405 = vsel %vm6893, %v6637, %v7149
    %v7406 = vsel %vm6894, %v6638, %v7150
    %v7407 = vsel %vm6895, %v6639, %v7151
    %v7408 = vsel %vm6896, %v6640, %v7152
    %v7409 = vsel %vm6897, %v6641, %v7153
    %v7410 = vsel %vm6898, %v6642, %v7154
    %v7411 = vsel %vm6899, %v6643, %v7155
    %v7412 = vsel %vm6900, %v6644, %v7156
    %v7413 = vsel %vm6901, %v6645, %v7157
    %v7414 = vsel %vm6902, %v6646, %v7158
    %v7415 = vsel %vm6903, %v6647, %v7159
    %v7416 = vsel %vm6904, %v6648, %v7160
    %v7417 = vsel %vm6905, %v6649, %v7161
    %v7418 = vsel %vm6906, %v6650, %v7162
    %v7419 = vsel %vm6907, %v6651, %v7163
    %v7420 = vsel %vm6908, %v6652, %v7164
    %v7421 = vsel %vm6909, %v6653, %v7165
    %v7422 = vsel %vm6910, %v6654, %v7166
    %v7423 = vsel %vm6911, %v6655, %v7167
    %v7424 = vsel %vm6912, %v6656, %v7168
    %v7425 = vsel %vm6913, %v6657, %v7169
    %v7426 = vsel %vm6914, %v6658, %v7170
    %v7427 = vsel %vm6915, %v6659, %v7171
    %v7428 = vsel %vm6916, %v6660, %v7172
    %v7429 = vsel %vm6917, %v6661, %v7173
    %v7430 = vsel %vm6918, %v6662, %v7174
    %v7431 = vsel %vm6919, %v6663, %v7175
    %v7432 = vsel %vm6920, %v6664, %v7176
    %v7433 = vsel %vm6921, %v6665, %v7177
    %v7434 = vsel %vm6922, %v6666, %v7178
    %v7435 = vsel %vm6923, %v6667, %v7179
    %v7436 = vsel %vm6924, %v6668, %v7180
    %v7437 = vsel %vm6925, %v6669, %v7181
    %v7438 = vsel %vm6926, %v6670, %v7182
    %v7439 = vsel %vm6927, %v6671, %v7183
    %v7440 = vsel %vm6928, %v6672, %v7184
    %v7441 = vsel %vm6929, %v6673, %v7185
    %v7442 = vsel %vm6930, %v6674, %v7186
    %v7443 = vsel %vm6931, %v6675, %v7187
    %v7444 = vsel %vm6932, %v6676, %v7188
    %v7445 = vsel %vm6933, %v6677, %v7189
    %v7446 = vsel %vm6934, %v6678, %v7190
    %v7447 = vsel %vm6935, %v6679, %v7191
    %v7448 = vsel %vm6936, %v6680, %v7192
    %v7449 = vsel %vm6937, %v6681, %v7193
    %v7450 = vsel %vm6938, %v6682, %v7194
    %v7451 = vsel %vm6939, %v6683, %v7195
    %v7452 = vsel %vm6940, %v6684, %v7196
    %v7453 = vsel %vm6941, %v6685, %v7197
    %v7454 = vsel %vm6942, %v6686, %v7198
    %v7455 = vsel %vm6943, %v6687, %v7199
    %v7456 = vsel %vm6944, %v6688, %v7200
    %v7457 = vsel %vm6945, %v6689, %v7201
    %v7458 = vsel %vm6946, %v6690, %v7202
    %v7459 = vsel %vm6947, %v6691, %v7203
    %v7460 = vsel %vm6948, %v6692, %v7204
    %v7461 = vsel %vm6949, %v6693, %v7205
    %v7462 = vsel %vm6950, %v6694, %v7206
    %v7463 = vsel %vm6951, %v6695, %v7207
    %v7464 = vsel %vm6952, %v6696, %v7208
    %v7465 = vsel %vm6953, %v6697, %v7209
    %v7466 = vsel %vm6954, %v6698, %v7210
    %v7467 = vsel %vm6955, %v6699, %v7211
    %v7468 = vsel %vm6956, %v6700, %v7212
    %v7469 = vsel %vm6957, %v6701, %v7213
    %v7470 = vsel %vm6958, %v6702, %v7214
    %v7471 = vsel %vm6959, %v6703, %v7215
    %v7472 = vsel %vm6960, %v6704, %v7216
    %v7473 = vsel %vm6961, %v6705, %v7217
    %v7474 = vsel %vm6962, %v6706, %v7218
    %v7475 = vsel %vm6963, %v6707, %v7219
    %v7476 = vsel %vm6964, %v6708, %v7220
    %v7477 = vsel %vm6965, %v6709, %v7221
    %v7478 = vsel %vm6966, %v6710, %v7222
    %v7479 = vsel %vm6967, %v6711, %v7223
    %v7480 = vsel %vm6968, %v6712, %v7224
    %v7481 = vsel %vm6969, %v6713, %v7225
    %v7482 = vsel %vm6970, %v6714, %v7226
    %v7483 = vsel %vm6971, %v6715, %v7227
    %v7484 = vsel %vm6972, %v6716, %v7228
    %v7485 = vsel %vm6973, %v6717, %v7229
    %v7486 = vsel %vm6974, %v6718, %v7230
    %s7487 = smul.u32 4, 128
    %s7488 = smul.u32 %s7487, 7
    %s7489 = sshll.u32 %s7488, 4
    %7490 = dma.done %s145, %s7489
    %v7491 = vpack.c.bf16 %v7239, %v7231
    %v7492 = vpack.c.bf16 %v7240, %v7232
    %v7493 = vpack.c.bf16 %v7241, %v7233
    %v7494 = vpack.c.bf16 %v7242, %v7234
    %v7495 = vpack.c.bf16 %v7243, %v7235
    %v7496 = vpack.c.bf16 %v7244, %v7236
    %v7497 = vpack.c.bf16 %v7245, %v7237
    %v7498 = vpack.c.bf16 %v7246, %v7238
    %v7499 = vpack.c.bf16 %v7255, %v7247
    %v7500 = vpack.c.bf16 %v7256, %v7248
    %v7501 = vpack.c.bf16 %v7257, %v7249
    %v7502 = vpack.c.bf16 %v7258, %v7250
    %v7503 = vpack.c.bf16 %v7259, %v7251
    %v7504 = vpack.c.bf16 %v7260, %v7252
    %v7505 = vpack.c.bf16 %v7261, %v7253
    %v7506 = vpack.c.bf16 %v7262, %v7254
    %v7507 = vpack.c.bf16 %v7271, %v7263
    %v7508 = vpack.c.bf16 %v7272, %v7264
    %v7509 = vpack.c.bf16 %v7273, %v7265
    %v7510 = vpack.c.bf16 %v7274, %v7266
    %v7511 = vpack.c.bf16 %v7275, %v7267
    %v7512 = vpack.c.bf16 %v7276, %v7268
    %v7513 = vpack.c.bf16 %v7277, %v7269
    %v7514 = vpack.c.bf16 %v7278, %v7270
    %v7515 = vpack.c.bf16 %v7287, %v7279
    %v7516 = vpack.c.bf16 %v7288, %v7280
    %v7517 = vpack.c.bf16 %v7289, %v7281
    %v7518 = vpack.c.bf16 %v7290, %v7282
    %v7519 = vpack.c.bf16 %v7291, %v7283
    %v7520 = vpack.c.bf16 %v7292, %v7284
    %v7521 = vpack.c.bf16 %v7293, %v7285
    %v7522 = vpack.c.bf16 %v7294, %v7286
    %v7523 = vpack.c.bf16 %v7303, %v7295
    %v7524 = vpack.c.bf16 %v7304, %v7296
    %v7525 = vpack.c.bf16 %v7305, %v7297
    %v7526 = vpack.c.bf16 %v7306, %v7298
    %v7527 = vpack.c.bf16 %v7307, %v7299
    %v7528 = vpack.c.bf16 %v7308, %v7300
    %v7529 = vpack.c.bf16 %v7309, %v7301
    %v7530 = vpack.c.bf16 %v7310, %v7302
    %v7531 = vpack.c.bf16 %v7319, %v7311
    %v7532 = vpack.c.bf16 %v7320, %v7312
    %v7533 = vpack.c.bf16 %v7321, %v7313
    %v7534 = vpack.c.bf16 %v7322, %v7314
    %v7535 = vpack.c.bf16 %v7323, %v7315
    %v7536 = vpack.c.bf16 %v7324, %v7316
    %v7537 = vpack.c.bf16 %v7325, %v7317
    %v7538 = vpack.c.bf16 %v7326, %v7318
    %v7539 = vpack.c.bf16 %v7335, %v7327
    %v7540 = vpack.c.bf16 %v7336, %v7328
    %v7541 = vpack.c.bf16 %v7337, %v7329
    %v7542 = vpack.c.bf16 %v7338, %v7330
    %v7543 = vpack.c.bf16 %v7339, %v7331
    %v7544 = vpack.c.bf16 %v7340, %v7332
    %v7545 = vpack.c.bf16 %v7341, %v7333
    %v7546 = vpack.c.bf16 %v7342, %v7334
    %v7547 = vpack.c.bf16 %v7351, %v7343
    %v7548 = vpack.c.bf16 %v7352, %v7344
    %v7549 = vpack.c.bf16 %v7353, %v7345
    %v7550 = vpack.c.bf16 %v7354, %v7346
    %v7551 = vpack.c.bf16 %v7355, %v7347
    %v7552 = vpack.c.bf16 %v7356, %v7348
    %v7553 = vpack.c.bf16 %v7357, %v7349
    %v7554 = vpack.c.bf16 %v7358, %v7350
    %v7555 = vpack.c.bf16 %v7367, %v7359
    %v7556 = vpack.c.bf16 %v7368, %v7360
    %v7557 = vpack.c.bf16 %v7369, %v7361
    %v7558 = vpack.c.bf16 %v7370, %v7362
    %v7559 = vpack.c.bf16 %v7371, %v7363
    %v7560 = vpack.c.bf16 %v7372, %v7364
    %v7561 = vpack.c.bf16 %v7373, %v7365
    %v7562 = vpack.c.bf16 %v7374, %v7366
    %v7563 = vpack.c.bf16 %v7383, %v7375
    %v7564 = vpack.c.bf16 %v7384, %v7376
    %v7565 = vpack.c.bf16 %v7385, %v7377
    %v7566 = vpack.c.bf16 %v7386, %v7378
    %v7567 = vpack.c.bf16 %v7387, %v7379
    %v7568 = vpack.c.bf16 %v7388, %v7380
    %v7569 = vpack.c.bf16 %v7389, %v7381
    %v7570 = vpack.c.bf16 %v7390, %v7382
    %v7571 = vpack.c.bf16 %v7399, %v7391
    %v7572 = vpack.c.bf16 %v7400, %v7392
    %v7573 = vpack.c.bf16 %v7401, %v7393
    %v7574 = vpack.c.bf16 %v7402, %v7394
    %v7575 = vpack.c.bf16 %v7403, %v7395
    %v7576 = vpack.c.bf16 %v7404, %v7396
    %v7577 = vpack.c.bf16 %v7405, %v7397
    %v7578 = vpack.c.bf16 %v7406, %v7398
    %v7579 = vpack.c.bf16 %v7415, %v7407
    %v7580 = vpack.c.bf16 %v7416, %v7408
    %v7581 = vpack.c.bf16 %v7417, %v7409
    %v7582 = vpack.c.bf16 %v7418, %v7410
    %v7583 = vpack.c.bf16 %v7419, %v7411
    %v7584 = vpack.c.bf16 %v7420, %v7412
    %v7585 = vpack.c.bf16 %v7421, %v7413
    %v7586 = vpack.c.bf16 %v7422, %v7414
    %v7587 = vpack.c.bf16 %v7431, %v7423
    %v7588 = vpack.c.bf16 %v7432, %v7424
    %v7589 = vpack.c.bf16 %v7433, %v7425
    %v7590 = vpack.c.bf16 %v7434, %v7426
    %v7591 = vpack.c.bf16 %v7435, %v7427
    %v7592 = vpack.c.bf16 %v7436, %v7428
    %v7593 = vpack.c.bf16 %v7437, %v7429
    %v7594 = vpack.c.bf16 %v7438, %v7430
    %v7595 = vpack.c.bf16 %v7447, %v7439
    %v7596 = vpack.c.bf16 %v7448, %v7440
    %v7597 = vpack.c.bf16 %v7449, %v7441
    %v7598 = vpack.c.bf16 %v7450, %v7442
    %v7599 = vpack.c.bf16 %v7451, %v7443
    %v7600 = vpack.c.bf16 %v7452, %v7444
    %v7601 = vpack.c.bf16 %v7453, %v7445
    %v7602 = vpack.c.bf16 %v7454, %v7446
    %v7603 = vpack.c.bf16 %v7463, %v7455
    %v7604 = vpack.c.bf16 %v7464, %v7456
    %v7605 = vpack.c.bf16 %v7465, %v7457
    %v7606 = vpack.c.bf16 %v7466, %v7458
    %v7607 = vpack.c.bf16 %v7467, %v7459
    %v7608 = vpack.c.bf16 %v7468, %v7460
    %v7609 = vpack.c.bf16 %v7469, %v7461
    %v7610 = vpack.c.bf16 %v7470, %v7462
    %v7611 = vpack.c.bf16 %v7479, %v7471
    %v7612 = vpack.c.bf16 %v7480, %v7472
    %v7613 = vpack.c.bf16 %v7481, %v7473
    %v7614 = vpack.c.bf16 %v7482, %v7474
    %v7615 = vpack.c.bf16 %v7483, %v7475
    %v7616 = vpack.c.bf16 %v7484, %v7476
    %v7617 = vpack.c.bf16 %v7485, %v7477
    %v7618 = vpack.c.bf16 %v7486, %v7478
    %v7619 = vld [vmem:[#allocation4] sm:$0xff]
    %v7620 = vld [vmem:[#allocation4 + $0x8] sm:$0xff]
    %v7621 = vld [vmem:[#allocation4 + $0x10] sm:$0xff]
    %v7622 = vld [vmem:[#allocation4 + $0x18] sm:$0xff]
    %v7623 = vld [vmem:[#allocation4 + $0x20] sm:$0xff]
    %v7624 = vld [vmem:[#allocation4 + $0x28] sm:$0xff]
    %v7625 = vld [vmem:[#allocation4 + $0x30] sm:$0xff]
    %v7626 = vld [vmem:[#allocation4 + $0x38] sm:$0xff]
    %v7627 = vld [vmem:[#allocation4 + $0x40] sm:$0xff]
    %v7628 = vld [vmem:[#allocation4 + $0x48] sm:$0xff]
    %v7629 = vld [vmem:[#allocation4 + $0x50] sm:$0xff]
    %v7630 = vld [vmem:[#allocation4 + $0x58] sm:$0xff]
    %v7631 = vld [vmem:[#allocation4 + $0x60] sm:$0xff]
    %v7632 = vld [vmem:[#allocation4 + $0x68] sm:$0xff]
    %v7633 = vld [vmem:[#allocation4 + $0x70] sm:$0xff]
    %v7634 = vld [vmem:[#allocation4 + $0x78] sm:$0xff]
    %v7635 = vld [vmem:[#allocation4 + $0x80] sm:$0xff]
    %v7636 = vld [vmem:[#allocation4 + $0x88] sm:$0xff]
    %v7637 = vld [vmem:[#allocation4 + $0x90] sm:$0xff]
    %v7638 = vld [vmem:[#allocation4 + $0x98] sm:$0xff]
    %v7639 = vld [vmem:[#allocation4 + $0xa0] sm:$0xff]
    %v7640 = vld [vmem:[#allocation4 + $0xa8] sm:$0xff]
    %v7641 = vld [vmem:[#allocation4 + $0xb0] sm:$0xff]
    %v7642 = vld [vmem:[#allocation4 + $0xb8] sm:$0xff]
    %v7643 = vld [vmem:[#allocation4 + $0xc0] sm:$0xff]
    %v7644 = vld [vmem:[#allocation4 + $0xc8] sm:$0xff]
    %v7645 = vld [vmem:[#allocation4 + $0xd0] sm:$0xff]
    %v7646 = vld [vmem:[#allocation4 + $0xd8] sm:$0xff]
    %v7647 = vld [vmem:[#allocation4 + $0xe0] sm:$0xff]
    %v7648 = vld [vmem:[#allocation4 + $0xe8] sm:$0xff]
    %v7649 = vld [vmem:[#allocation4 + $0xf0] sm:$0xff]
    %v7650 = vld [vmem:[#allocation4 + $0xf8] sm:$0xff]
    %v7651 = vld [vmem:[#allocation4 + $0x100] sm:$0xff]
    %v7652 = vld [vmem:[#allocation4 + $0x108] sm:$0xff]
    %v7653 = vld [vmem:[#allocation4 + $0x110] sm:$0xff]
    %v7654 = vld [vmem:[#allocation4 + $0x118] sm:$0xff]
    %v7655 = vld [vmem:[#allocation4 + $0x120] sm:$0xff]
    %v7656 = vld [vmem:[#allocation4 + $0x128] sm:$0xff]
    %v7657 = vld [vmem:[#allocation4 + $0x130] sm:$0xff]
    %v7658 = vld [vmem:[#allocation4 + $0x138] sm:$0xff]
    %v7659 = vld [vmem:[#allocation4 + $0x140] sm:$0xff]
    %v7660 = vld [vmem:[#allocation4 + $0x148] sm:$0xff]
    %v7661 = vld [vmem:[#allocation4 + $0x150] sm:$0xff]
    %v7662 = vld [vmem:[#allocation4 + $0x158] sm:$0xff]
    %v7663 = vld [vmem:[#allocation4 + $0x160] sm:$0xff]
    %v7664 = vld [vmem:[#allocation4 + $0x168] sm:$0xff]
    %v7665 = vld [vmem:[#allocation4 + $0x170] sm:$0xff]
    %v7666 = vld [vmem:[#allocation4 + $0x178] sm:$0xff]
    %v7667 = vld [vmem:[#allocation4 + $0x180] sm:$0xff]
    %v7668 = vld [vmem:[#allocation4 + $0x188] sm:$0xff]
    %v7669 = vld [vmem:[#allocation4 + $0x190] sm:$0xff]
    %v7670 = vld [vmem:[#allocation4 + $0x198] sm:$0xff]
    %v7671 = vld [vmem:[#allocation4 + $0x1a0] sm:$0xff]
    %v7672 = vld [vmem:[#allocation4 + $0x1a8] sm:$0xff]
    %v7673 = vld [vmem:[#allocation4 + $0x1b0] sm:$0xff]
    %v7674 = vld [vmem:[#allocation4 + $0x1b8] sm:$0xff]
    %v7675 = vld [vmem:[#allocation4 + $0x1c0] sm:$0xff]
    %v7676 = vld [vmem:[#allocation4 + $0x1c8] sm:$0xff]
    %v7677 = vld [vmem:[#allocation4 + $0x1d0] sm:$0xff]
    %v7678 = vld [vmem:[#allocation4 + $0x1d8] sm:$0xff]
    %v7679 = vld [vmem:[#allocation4 + $0x1e0] sm:$0xff]
    %v7680 = vld [vmem:[#allocation4 + $0x1e8] sm:$0xff]
    %v7681 = vld [vmem:[#allocation4 + $0x1f0] sm:$0xff]
    %v7682 = vld [vmem:[#allocation4 + $0x1f8] sm:$0xff]
    %v7683 = vld [vmem:[#allocation4 + $0x200] sm:$0xff]
    %v7684 = vld [vmem:[#allocation4 + $0x208] sm:$0xff]
    %v7685 = vld [vmem:[#allocation4 + $0x210] sm:$0xff]
    %v7686 = vld [vmem:[#allocation4 + $0x218] sm:$0xff]
    %v7687 = vld [vmem:[#allocation4 + $0x220] sm:$0xff]
    %v7688 = vld [vmem:[#allocation4 + $0x228] sm:$0xff]
    %v7689 = vld [vmem:[#allocation4 + $0x230] sm:$0xff]
    %v7690 = vld [vmem:[#allocation4 + $0x238] sm:$0xff]
    %v7691 = vld [vmem:[#allocation4 + $0x240] sm:$0xff]
    %v7692 = vld [vmem:[#allocation4 + $0x248] sm:$0xff]
    %v7693 = vld [vmem:[#allocation4 + $0x250] sm:$0xff]
    %v7694 = vld [vmem:[#allocation4 + $0x258] sm:$0xff]
    %v7695 = vld [vmem:[#allocation4 + $0x260] sm:$0xff]
    %v7696 = vld [vmem:[#allocation4 + $0x268] sm:$0xff]
    %v7697 = vld [vmem:[#allocation4 + $0x270] sm:$0xff]
    %v7698 = vld [vmem:[#allocation4 + $0x278] sm:$0xff]
    %v7699 = vld [vmem:[#allocation4 + $0x280] sm:$0xff]
    %v7700 = vld [vmem:[#allocation4 + $0x288] sm:$0xff]
    %v7701 = vld [vmem:[#allocation4 + $0x290] sm:$0xff]
    %v7702 = vld [vmem:[#allocation4 + $0x298] sm:$0xff]
    %v7703 = vld [vmem:[#allocation4 + $0x2a0] sm:$0xff]
    %v7704 = vld [vmem:[#allocation4 + $0x2a8] sm:$0xff]
    %v7705 = vld [vmem:[#allocation4 + $0x2b0] sm:$0xff]
    %v7706 = vld [vmem:[#allocation4 + $0x2b8] sm:$0xff]
    %v7707 = vld [vmem:[#allocation4 + $0x2c0] sm:$0xff]
    %v7708 = vld [vmem:[#allocation4 + $0x2c8] sm:$0xff]
    %v7709 = vld [vmem:[#allocation4 + $0x2d0] sm:$0xff]
    %v7710 = vld [vmem:[#allocation4 + $0x2d8] sm:$0xff]
    %v7711 = vld [vmem:[#allocation4 + $0x2e0] sm:$0xff]
    %v7712 = vld [vmem:[#allocation4 + $0x2e8] sm:$0xff]
    %v7713 = vld [vmem:[#allocation4 + $0x2f0] sm:$0xff]
    %v7714 = vld [vmem:[#allocation4 + $0x2f8] sm:$0xff]
    %v7715 = vld [vmem:[#allocation4 + $0x300] sm:$0xff]
    %v7716 = vld [vmem:[#allocation4 + $0x308] sm:$0xff]
    %v7717 = vld [vmem:[#allocation4 + $0x310] sm:$0xff]
    %v7718 = vld [vmem:[#allocation4 + $0x318] sm:$0xff]
    %v7719 = vld [vmem:[#allocation4 + $0x320] sm:$0xff]
    %v7720 = vld [vmem:[#allocation4 + $0x328] sm:$0xff]
    %v7721 = vld [vmem:[#allocation4 + $0x330] sm:$0xff]
    %v7722 = vld [vmem:[#allocation4 + $0x338] sm:$0xff]
    %v7723 = vld [vmem:[#allocation4 + $0x340] sm:$0xff]
    %v7724 = vld [vmem:[#allocation4 + $0x348] sm:$0xff]
    %v7725 = vld [vmem:[#allocation4 + $0x350] sm:$0xff]
    %v7726 = vld [vmem:[#allocation4 + $0x358] sm:$0xff]
    %v7727 = vld [vmem:[#allocation4 + $0x360] sm:$0xff]
    %v7728 = vld [vmem:[#allocation4 + $0x368] sm:$0xff]
    %v7729 = vld [vmem:[#allocation4 + $0x370] sm:$0xff]
    %v7730 = vld [vmem:[#allocation4 + $0x378] sm:$0xff]
    %v7731 = vld [vmem:[#allocation4 + $0x380] sm:$0xff]
    %v7732 = vld [vmem:[#allocation4 + $0x388] sm:$0xff]
    %v7733 = vld [vmem:[#allocation4 + $0x390] sm:$0xff]
    %v7734 = vld [vmem:[#allocation4 + $0x398] sm:$0xff]
    %v7735 = vld [vmem:[#allocation4 + $0x3a0] sm:$0xff]
    %v7736 = vld [vmem:[#allocation4 + $0x3a8] sm:$0xff]
    %v7737 = vld [vmem:[#allocation4 + $0x3b0] sm:$0xff]
    %v7738 = vld [vmem:[#allocation4 + $0x3b8] sm:$0xff]
    %v7739 = vld [vmem:[#allocation4 + $0x3c0] sm:$0xff]
    %v7740 = vld [vmem:[#allocation4 + $0x3c8] sm:$0xff]
    %v7741 = vld [vmem:[#allocation4 + $0x3d0] sm:$0xff]
    %v7742 = vld [vmem:[#allocation4 + $0x3d8] sm:$0xff]
    %v7743 = vld [vmem:[#allocation4 + $0x3e0] sm:$0xff]
    %v7744 = vld [vmem:[#allocation4 + $0x3e8] sm:$0xff]
    %v7745 = vld [vmem:[#allocation4 + $0x3f0] sm:$0xff]
    %v7746 = vld [vmem:[#allocation4 + $0x3f8] sm:$0xff]
    %v7747 = vld [vmem:[#allocation4 + $0x400] sm:$0xff]
    %v7748 = vld [vmem:[#allocation4 + $0x408] sm:$0xff]
    %v7749 = vld [vmem:[#allocation4 + $0x410] sm:$0xff]
    %v7750 = vld [vmem:[#allocation4 + $0x418] sm:$0xff]
    %v7751 = vld [vmem:[#allocation4 + $0x420] sm:$0xff]
    %v7752 = vld [vmem:[#allocation4 + $0x428] sm:$0xff]
    %v7753 = vld [vmem:[#allocation4 + $0x430] sm:$0xff]
    %v7754 = vld [vmem:[#allocation4 + $0x438] sm:$0xff]
    %v7755 = vld [vmem:[#allocation4 + $0x440] sm:$0xff]
    %v7756 = vld [vmem:[#allocation4 + $0x448] sm:$0xff]
    %v7757 = vld [vmem:[#allocation4 + $0x450] sm:$0xff]
    %v7758 = vld [vmem:[#allocation4 + $0x458] sm:$0xff]
    %v7759 = vld [vmem:[#allocation4 + $0x460] sm:$0xff]
    %v7760 = vld [vmem:[#allocation4 + $0x468] sm:$0xff]
    %v7761 = vld [vmem:[#allocation4 + $0x470] sm:$0xff]
    %v7762 = vld [vmem:[#allocation4 + $0x478] sm:$0xff]
    %v7763 = vld [vmem:[#allocation4 + $0x480] sm:$0xff]
    %v7764 = vld [vmem:[#allocation4 + $0x488] sm:$0xff]
    %v7765 = vld [vmem:[#allocation4 + $0x490] sm:$0xff]
    %v7766 = vld [vmem:[#allocation4 + $0x498] sm:$0xff]
    %v7767 = vld [vmem:[#allocation4 + $0x4a0] sm:$0xff]
    %v7768 = vld [vmem:[#allocation4 + $0x4a8] sm:$0xff]
    %v7769 = vld [vmem:[#allocation4 + $0x4b0] sm:$0xff]
    %v7770 = vld [vmem:[#allocation4 + $0x4b8] sm:$0xff]
    %v7771 = vld [vmem:[#allocation4 + $0x4c0] sm:$0xff]
    %v7772 = vld [vmem:[#allocation4 + $0x4c8] sm:$0xff]
    %v7773 = vld [vmem:[#allocation4 + $0x4d0] sm:$0xff]
    %v7774 = vld [vmem:[#allocation4 + $0x4d8] sm:$0xff]
    %v7775 = vld [vmem:[#allocation4 + $0x4e0] sm:$0xff]
    %v7776 = vld [vmem:[#allocation4 + $0x4e8] sm:$0xff]
    %v7777 = vld [vmem:[#allocation4 + $0x4f0] sm:$0xff]
    %v7778 = vld [vmem:[#allocation4 + $0x4f8] sm:$0xff]
    %v7779 = vld [vmem:[#allocation4 + $0x500] sm:$0xff]
    %v7780 = vld [vmem:[#allocation4 + $0x508] sm:$0xff]
    %v7781 = vld [vmem:[#allocation4 + $0x510] sm:$0xff]
    %v7782 = vld [vmem:[#allocation4 + $0x518] sm:$0xff]
    %v7783 = vld [vmem:[#allocation4 + $0x520] sm:$0xff]
    %v7784 = vld [vmem:[#allocation4 + $0x528] sm:$0xff]
    %v7785 = vld [vmem:[#allocation4 + $0x530] sm:$0xff]
    %v7786 = vld [vmem:[#allocation4 + $0x538] sm:$0xff]
    %v7787 = vld [vmem:[#allocation4 + $0x540] sm:$0xff]
    %v7788 = vld [vmem:[#allocation4 + $0x548] sm:$0xff]
    %v7789 = vld [vmem:[#allocation4 + $0x550] sm:$0xff]
    %v7790 = vld [vmem:[#allocation4 + $0x558] sm:$0xff]
    %v7791 = vld [vmem:[#allocation4 + $0x560] sm:$0xff]
    %v7792 = vld [vmem:[#allocation4 + $0x568] sm:$0xff]
    %v7793 = vld [vmem:[#allocation4 + $0x570] sm:$0xff]
    %v7794 = vld [vmem:[#allocation4 + $0x578] sm:$0xff]
    %v7795 = vld [vmem:[#allocation4 + $0x580] sm:$0xff]
    %v7796 = vld [vmem:[#allocation4 + $0x588] sm:$0xff]
    %v7797 = vld [vmem:[#allocation4 + $0x590] sm:$0xff]
    %v7798 = vld [vmem:[#allocation4 + $0x598] sm:$0xff]
    %v7799 = vld [vmem:[#allocation4 + $0x5a0] sm:$0xff]
    %v7800 = vld [vmem:[#allocation4 + $0x5a8] sm:$0xff]
    %v7801 = vld [vmem:[#allocation4 + $0x5b0] sm:$0xff]
    %v7802 = vld [vmem:[#allocation4 + $0x5b8] sm:$0xff]
    %v7803 = vld [vmem:[#allocation4 + $0x5c0] sm:$0xff]
    %v7804 = vld [vmem:[#allocation4 + $0x5c8] sm:$0xff]
    %v7805 = vld [vmem:[#allocation4 + $0x5d0] sm:$0xff]
    %v7806 = vld [vmem:[#allocation4 + $0x5d8] sm:$0xff]
    %v7807 = vld [vmem:[#allocation4 + $0x5e0] sm:$0xff]
    %v7808 = vld [vmem:[#allocation4 + $0x5e8] sm:$0xff]
    %v7809 = vld [vmem:[#allocation4 + $0x5f0] sm:$0xff]
    %v7810 = vld [vmem:[#allocation4 + $0x5f8] sm:$0xff]
    %v7811 = vld [vmem:[#allocation4 + $0x600] sm:$0xff]
    %v7812 = vld [vmem:[#allocation4 + $0x608] sm:$0xff]
    %v7813 = vld [vmem:[#allocation4 + $0x610] sm:$0xff]
    %v7814 = vld [vmem:[#allocation4 + $0x618] sm:$0xff]
    %v7815 = vld [vmem:[#allocation4 + $0x620] sm:$0xff]
    %v7816 = vld [vmem:[#allocation4 + $0x628] sm:$0xff]
    %v7817 = vld [vmem:[#allocation4 + $0x630] sm:$0xff]
    %v7818 = vld [vmem:[#allocation4 + $0x638] sm:$0xff]
    %v7819 = vld [vmem:[#allocation4 + $0x640] sm:$0xff]
    %v7820 = vld [vmem:[#allocation4 + $0x648] sm:$0xff]
    %v7821 = vld [vmem:[#allocation4 + $0x650] sm:$0xff]
    %v7822 = vld [vmem:[#allocation4 + $0x658] sm:$0xff]
    %v7823 = vld [vmem:[#allocation4 + $0x660] sm:$0xff]
    %v7824 = vld [vmem:[#allocation4 + $0x668] sm:$0xff]
    %v7825 = vld [vmem:[#allocation4 + $0x670] sm:$0xff]
    %v7826 = vld [vmem:[#allocation4 + $0x678] sm:$0xff]
    %v7827 = vld [vmem:[#allocation4 + $0x680] sm:$0xff]
    %v7828 = vld [vmem:[#allocation4 + $0x688] sm:$0xff]
    %v7829 = vld [vmem:[#allocation4 + $0x690] sm:$0xff]
    %v7830 = vld [vmem:[#allocation4 + $0x698] sm:$0xff]
    %v7831 = vld [vmem:[#allocation4 + $0x6a0] sm:$0xff]
    %v7832 = vld [vmem:[#allocation4 + $0x6a8] sm:$0xff]
    %v7833 = vld [vmem:[#allocation4 + $0x6b0] sm:$0xff]
    %v7834 = vld [vmem:[#allocation4 + $0x6b8] sm:$0xff]
    %v7835 = vld [vmem:[#allocation4 + $0x6c0] sm:$0xff]
    %v7836 = vld [vmem:[#allocation4 + $0x6c8] sm:$0xff]
    %v7837 = vld [vmem:[#allocation4 + $0x6d0] sm:$0xff]
    %v7838 = vld [vmem:[#allocation4 + $0x6d8] sm:$0xff]
    %v7839 = vld [vmem:[#allocation4 + $0x6e0] sm:$0xff]
    %v7840 = vld [vmem:[#allocation4 + $0x6e8] sm:$0xff]
    %v7841 = vld [vmem:[#allocation4 + $0x6f0] sm:$0xff]
    %v7842 = vld [vmem:[#allocation4 + $0x6f8] sm:$0xff]
    %v7843 = vld [vmem:[#allocation4 + $0x700] sm:$0xff]
    %v7844 = vld [vmem:[#allocation4 + $0x708] sm:$0xff]
    %v7845 = vld [vmem:[#allocation4 + $0x710] sm:$0xff]
    %v7846 = vld [vmem:[#allocation4 + $0x718] sm:$0xff]
    %v7847 = vld [vmem:[#allocation4 + $0x720] sm:$0xff]
    %v7848 = vld [vmem:[#allocation4 + $0x728] sm:$0xff]
    %v7849 = vld [vmem:[#allocation4 + $0x730] sm:$0xff]
    %v7850 = vld [vmem:[#allocation4 + $0x738] sm:$0xff]
    %v7851 = vld [vmem:[#allocation4 + $0x740] sm:$0xff]
    %v7852 = vld [vmem:[#allocation4 + $0x748] sm:$0xff]
    %v7853 = vld [vmem:[#allocation4 + $0x750] sm:$0xff]
    %v7854 = vld [vmem:[#allocation4 + $0x758] sm:$0xff]
    %v7855 = vld [vmem:[#allocation4 + $0x760] sm:$0xff]
    %v7856 = vld [vmem:[#allocation4 + $0x768] sm:$0xff]
    %v7857 = vld [vmem:[#allocation4 + $0x770] sm:$0xff]
    %v7858 = vld [vmem:[#allocation4 + $0x778] sm:$0xff]
    %v7859 = vld [vmem:[#allocation4 + $0x780] sm:$0xff]
    %v7860 = vld [vmem:[#allocation4 + $0x788] sm:$0xff]
    %v7861 = vld [vmem:[#allocation4 + $0x790] sm:$0xff]
    %v7862 = vld [vmem:[#allocation4 + $0x798] sm:$0xff]
    %v7863 = vld [vmem:[#allocation4 + $0x7a0] sm:$0xff]
    %v7864 = vld [vmem:[#allocation4 + $0x7a8] sm:$0xff]
    %v7865 = vld [vmem:[#allocation4 + $0x7b0] sm:$0xff]
    %v7866 = vld [vmem:[#allocation4 + $0x7b8] sm:$0xff]
    %v7867 = vld [vmem:[#allocation4 + $0x7c0] sm:$0xff]
    %v7868 = vld [vmem:[#allocation4 + $0x7c8] sm:$0xff]
    %v7869 = vld [vmem:[#allocation4 + $0x7d0] sm:$0xff]
    %v7870 = vld [vmem:[#allocation4 + $0x7d8] sm:$0xff]
    %v7871 = vld [vmem:[#allocation4 + $0x7e0] sm:$0xff]
    %v7872 = vld [vmem:[#allocation4 + $0x7e8] sm:$0xff]
    %v7873 = vld [vmem:[#allocation4 + $0x7f0] sm:$0xff]
    %v7874 = vld [vmem:[#allocation4 + $0x7f8] sm:$0xff]
    %v7875 = vld [vmem:[#allocation4 + $0x800] sm:$0xff]
    %v7876 = vld [vmem:[#allocation4 + $0x808] sm:$0xff]
    %v7877 = vld [vmem:[#allocation4 + $0x810] sm:$0xff]
    %v7878 = vld [vmem:[#allocation4 + $0x818] sm:$0xff]
    %v7879 = vld [vmem:[#allocation4 + $0x820] sm:$0xff]
    %v7880 = vld [vmem:[#allocation4 + $0x828] sm:$0xff]
    %v7881 = vld [vmem:[#allocation4 + $0x830] sm:$0xff]
    %v7882 = vld [vmem:[#allocation4 + $0x838] sm:$0xff]
    %v7883 = vld [vmem:[#allocation4 + $0x840] sm:$0xff]
    %v7884 = vld [vmem:[#allocation4 + $0x848] sm:$0xff]
    %v7885 = vld [vmem:[#allocation4 + $0x850] sm:$0xff]
    %v7886 = vld [vmem:[#allocation4 + $0x858] sm:$0xff]
    %v7887 = vld [vmem:[#allocation4 + $0x860] sm:$0xff]
    %v7888 = vld [vmem:[#allocation4 + $0x868] sm:$0xff]
    %v7889 = vld [vmem:[#allocation4 + $0x870] sm:$0xff]
    %v7890 = vld [vmem:[#allocation4 + $0x878] sm:$0xff]
    %v7891 = vld [vmem:[#allocation4 + $0x880] sm:$0xff]
    %v7892 = vld [vmem:[#allocation4 + $0x888] sm:$0xff]
    %v7893 = vld [vmem:[#allocation4 + $0x890] sm:$0xff]
    %v7894 = vld [vmem:[#allocation4 + $0x898] sm:$0xff]
    %v7895 = vld [vmem:[#allocation4 + $0x8a0] sm:$0xff]
    %v7896 = vld [vmem:[#allocation4 + $0x8a8] sm:$0xff]
    %v7897 = vld [vmem:[#allocation4 + $0x8b0] sm:$0xff]
    %v7898 = vld [vmem:[#allocation4 + $0x8b8] sm:$0xff]
    %v7899 = vld [vmem:[#allocation4 + $0x8c0] sm:$0xff]
    %v7900 = vld [vmem:[#allocation4 + $0x8c8] sm:$0xff]
    %v7901 = vld [vmem:[#allocation4 + $0x8d0] sm:$0xff]
    %v7902 = vld [vmem:[#allocation4 + $0x8d8] sm:$0xff]
    %v7903 = vld [vmem:[#allocation4 + $0x8e0] sm:$0xff]
    %v7904 = vld [vmem:[#allocation4 + $0x8e8] sm:$0xff]
    %v7905 = vld [vmem:[#allocation4 + $0x8f0] sm:$0xff]
    %v7906 = vld [vmem:[#allocation4 + $0x8f8] sm:$0xff]
    %v7907 = vld [vmem:[#allocation4 + $0x900] sm:$0xff]
    %v7908 = vld [vmem:[#allocation4 + $0x908] sm:$0xff]
    %v7909 = vld [vmem:[#allocation4 + $0x910] sm:$0xff]
    %v7910 = vld [vmem:[#allocation4 + $0x918] sm:$0xff]
    %v7911 = vld [vmem:[#allocation4 + $0x920] sm:$0xff]
    %v7912 = vld [vmem:[#allocation4 + $0x928] sm:$0xff]
    %v7913 = vld [vmem:[#allocation4 + $0x930] sm:$0xff]
    %v7914 = vld [vmem:[#allocation4 + $0x938] sm:$0xff]
    %v7915 = vld [vmem:[#allocation4 + $0x940] sm:$0xff]
    %v7916 = vld [vmem:[#allocation4 + $0x948] sm:$0xff]
    %v7917 = vld [vmem:[#allocation4 + $0x950] sm:$0xff]
    %v7918 = vld [vmem:[#allocation4 + $0x958] sm:$0xff]
    %v7919 = vld [vmem:[#allocation4 + $0x960] sm:$0xff]
    %v7920 = vld [vmem:[#allocation4 + $0x968] sm:$0xff]
    %v7921 = vld [vmem:[#allocation4 + $0x970] sm:$0xff]
    %v7922 = vld [vmem:[#allocation4 + $0x978] sm:$0xff]
    %v7923 = vld [vmem:[#allocation4 + $0x980] sm:$0xff]
    %v7924 = vld [vmem:[#allocation4 + $0x988] sm:$0xff]
    %v7925 = vld [vmem:[#allocation4 + $0x990] sm:$0xff]
    %v7926 = vld [vmem:[#allocation4 + $0x998] sm:$0xff]
    %v7927 = vld [vmem:[#allocation4 + $0x9a0] sm:$0xff]
    %v7928 = vld [vmem:[#allocation4 + $0x9a8] sm:$0xff]
    %v7929 = vld [vmem:[#allocation4 + $0x9b0] sm:$0xff]
    %v7930 = vld [vmem:[#allocation4 + $0x9b8] sm:$0xff]
    %v7931 = vld [vmem:[#allocation4 + $0x9c0] sm:$0xff]
    %v7932 = vld [vmem:[#allocation4 + $0x9c8] sm:$0xff]
    %v7933 = vld [vmem:[#allocation4 + $0x9d0] sm:$0xff]
    %v7934 = vld [vmem:[#allocation4 + $0x9d8] sm:$0xff]
    %v7935 = vld [vmem:[#allocation4 + $0x9e0] sm:$0xff]
    %v7936 = vld [vmem:[#allocation4 + $0x9e8] sm:$0xff]
    %v7937 = vld [vmem:[#allocation4 + $0x9f0] sm:$0xff]
    %v7938 = vld [vmem:[#allocation4 + $0x9f8] sm:$0xff]
    %v7939 = vld [vmem:[#allocation4 + $0xa00] sm:$0xff]
    %v7940 = vld [vmem:[#allocation4 + $0xa08] sm:$0xff]
    %v7941 = vld [vmem:[#allocation4 + $0xa10] sm:$0xff]
    %v7942 = vld [vmem:[#allocation4 + $0xa18] sm:$0xff]
    %v7943 = vld [vmem:[#allocation4 + $0xa20] sm:$0xff]
    %v7944 = vld [vmem:[#allocation4 + $0xa28] sm:$0xff]
    %v7945 = vld [vmem:[#allocation4 + $0xa30] sm:$0xff]
    %v7946 = vld [vmem:[#allocation4 + $0xa38] sm:$0xff]
    %v7947 = vld [vmem:[#allocation4 + $0xa40] sm:$0xff]
    %v7948 = vld [vmem:[#allocation4 + $0xa48] sm:$0xff]
    %v7949 = vld [vmem:[#allocation4 + $0xa50] sm:$0xff]
    %v7950 = vld [vmem:[#allocation4 + $0xa58] sm:$0xff]
    %v7951 = vld [vmem:[#allocation4 + $0xa60] sm:$0xff]
    %v7952 = vld [vmem:[#allocation4 + $0xa68] sm:$0xff]
    %v7953 = vld [vmem:[#allocation4 + $0xa70] sm:$0xff]
    %v7954 = vld [vmem:[#allocation4 + $0xa78] sm:$0xff]
    %v7955 = vld [vmem:[#allocation4 + $0xa80] sm:$0xff]
    %v7956 = vld [vmem:[#allocation4 + $0xa88] sm:$0xff]
    %v7957 = vld [vmem:[#allocation4 + $0xa90] sm:$0xff]
    %v7958 = vld [vmem:[#allocation4 + $0xa98] sm:$0xff]
    %v7959 = vld [vmem:[#allocation4 + $0xaa0] sm:$0xff]
    %v7960 = vld [vmem:[#allocation4 + $0xaa8] sm:$0xff]
    %v7961 = vld [vmem:[#allocation4 + $0xab0] sm:$0xff]
    %v7962 = vld [vmem:[#allocation4 + $0xab8] sm:$0xff]
    %v7963 = vld [vmem:[#allocation4 + $0xac0] sm:$0xff]
    %v7964 = vld [vmem:[#allocation4 + $0xac8] sm:$0xff]
    %v7965 = vld [vmem:[#allocation4 + $0xad0] sm:$0xff]
    %v7966 = vld [vmem:[#allocation4 + $0xad8] sm:$0xff]
    %v7967 = vld [vmem:[#allocation4 + $0xae0] sm:$0xff]
    %v7968 = vld [vmem:[#allocation4 + $0xae8] sm:$0xff]
    %v7969 = vld [vmem:[#allocation4 + $0xaf0] sm:$0xff]
    %v7970 = vld [vmem:[#allocation4 + $0xaf8] sm:$0xff]
    %v7971 = vld [vmem:[#allocation4 + $0xb00] sm:$0xff]
    %v7972 = vld [vmem:[#allocation4 + $0xb08] sm:$0xff]
    %v7973 = vld [vmem:[#allocation4 + $0xb10] sm:$0xff]
    %v7974 = vld [vmem:[#allocation4 + $0xb18] sm:$0xff]
    %v7975 = vld [vmem:[#allocation4 + $0xb20] sm:$0xff]
    %v7976 = vld [vmem:[#allocation4 + $0xb28] sm:$0xff]
    %v7977 = vld [vmem:[#allocation4 + $0xb30] sm:$0xff]
    %v7978 = vld [vmem:[#allocation4 + $0xb38] sm:$0xff]
    %v7979 = vld [vmem:[#allocation4 + $0xb40] sm:$0xff]
    %v7980 = vld [vmem:[#allocation4 + $0xb48] sm:$0xff]
    %v7981 = vld [vmem:[#allocation4 + $0xb50] sm:$0xff]
    %v7982 = vld [vmem:[#allocation4 + $0xb58] sm:$0xff]
    %v7983 = vld [vmem:[#allocation4 + $0xb60] sm:$0xff]
    %v7984 = vld [vmem:[#allocation4 + $0xb68] sm:$0xff]
    %v7985 = vld [vmem:[#allocation4 + $0xb70] sm:$0xff]
    %v7986 = vld [vmem:[#allocation4 + $0xb78] sm:$0xff]
    %v7987 = vld [vmem:[#allocation4 + $0xb80] sm:$0xff]
    %v7988 = vld [vmem:[#allocation4 + $0xb88] sm:$0xff]
    %v7989 = vld [vmem:[#allocation4 + $0xb90] sm:$0xff]
    %v7990 = vld [vmem:[#allocation4 + $0xb98] sm:$0xff]
    %v7991 = vld [vmem:[#allocation4 + $0xba0] sm:$0xff]
    %v7992 = vld [vmem:[#allocation4 + $0xba8] sm:$0xff]
    %v7993 = vld [vmem:[#allocation4 + $0xbb0] sm:$0xff]
    %v7994 = vld [vmem:[#allocation4 + $0xbb8] sm:$0xff]
    %v7995 = vld [vmem:[#allocation4 + $0xbc0] sm:$0xff]
    %v7996 = vld [vmem:[#allocation4 + $0xbc8] sm:$0xff]
    %v7997 = vld [vmem:[#allocation4 + $0xbd0] sm:$0xff]
    %v7998 = vld [vmem:[#allocation4 + $0xbd8] sm:$0xff]
    %v7999 = vld [vmem:[#allocation4 + $0xbe0] sm:$0xff]
    %v8000 = vld [vmem:[#allocation4 + $0xbe8] sm:$0xff]
    %v8001 = vld [vmem:[#allocation4 + $0xbf0] sm:$0xff]
    %v8002 = vld [vmem:[#allocation4 + $0xbf8] sm:$0xff]
    %v8003 = vld [vmem:[#allocation4 + $0xc00] sm:$0xff]
    %v8004 = vld [vmem:[#allocation4 + $0xc08] sm:$0xff]
    %v8005 = vld [vmem:[#allocation4 + $0xc10] sm:$0xff]
    %v8006 = vld [vmem:[#allocation4 + $0xc18] sm:$0xff]
    %v8007 = vld [vmem:[#allocation4 + $0xc20] sm:$0xff]
    %v8008 = vld [vmem:[#allocation4 + $0xc28] sm:$0xff]
    %v8009 = vld [vmem:[#allocation4 + $0xc30] sm:$0xff]
    %v8010 = vld [vmem:[#allocation4 + $0xc38] sm:$0xff]
    %v8011 = vld [vmem:[#allocation4 + $0xc40] sm:$0xff]
    %v8012 = vld [vmem:[#allocation4 + $0xc48] sm:$0xff]
    %v8013 = vld [vmem:[#allocation4 + $0xc50] sm:$0xff]
    %v8014 = vld [vmem:[#allocation4 + $0xc58] sm:$0xff]
    %v8015 = vld [vmem:[#allocation4 + $0xc60] sm:$0xff]
    %v8016 = vld [vmem:[#allocation4 + $0xc68] sm:$0xff]
    %v8017 = vld [vmem:[#allocation4 + $0xc70] sm:$0xff]
    %v8018 = vld [vmem:[#allocation4 + $0xc78] sm:$0xff]
    %v8019 = vld [vmem:[#allocation4 + $0xc80] sm:$0xff]
    %v8020 = vld [vmem:[#allocation4 + $0xc88] sm:$0xff]
    %v8021 = vld [vmem:[#allocation4 + $0xc90] sm:$0xff]
    %v8022 = vld [vmem:[#allocation4 + $0xc98] sm:$0xff]
    %v8023 = vld [vmem:[#allocation4 + $0xca0] sm:$0xff]
    %v8024 = vld [vmem:[#allocation4 + $0xca8] sm:$0xff]
    %v8025 = vld [vmem:[#allocation4 + $0xcb0] sm:$0xff]
    %v8026 = vld [vmem:[#allocation4 + $0xcb8] sm:$0xff]
    %v8027 = vld [vmem:[#allocation4 + $0xcc0] sm:$0xff]
    %v8028 = vld [vmem:[#allocation4 + $0xcc8] sm:$0xff]
    %v8029 = vld [vmem:[#allocation4 + $0xcd0] sm:$0xff]
    %v8030 = vld [vmem:[#allocation4 + $0xcd8] sm:$0xff]
    %v8031 = vld [vmem:[#allocation4 + $0xce0] sm:$0xff]
    %v8032 = vld [vmem:[#allocation4 + $0xce8] sm:$0xff]
    %v8033 = vld [vmem:[#allocation4 + $0xcf0] sm:$0xff]
    %v8034 = vld [vmem:[#allocation4 + $0xcf8] sm:$0xff]
    %v8035 = vld [vmem:[#allocation4 + $0xd00] sm:$0xff]
    %v8036 = vld [vmem:[#allocation4 + $0xd08] sm:$0xff]
    %v8037 = vld [vmem:[#allocation4 + $0xd10] sm:$0xff]
    %v8038 = vld [vmem:[#allocation4 + $0xd18] sm:$0xff]
    %v8039 = vld [vmem:[#allocation4 + $0xd20] sm:$0xff]
    %v8040 = vld [vmem:[#allocation4 + $0xd28] sm:$0xff]
    %v8041 = vld [vmem:[#allocation4 + $0xd30] sm:$0xff]
    %v8042 = vld [vmem:[#allocation4 + $0xd38] sm:$0xff]
    %v8043 = vld [vmem:[#allocation4 + $0xd40] sm:$0xff]
    %v8044 = vld [vmem:[#allocation4 + $0xd48] sm:$0xff]
    %v8045 = vld [vmem:[#allocation4 + $0xd50] sm:$0xff]
    %v8046 = vld [vmem:[#allocation4 + $0xd58] sm:$0xff]
    %v8047 = vld [vmem:[#allocation4 + $0xd60] sm:$0xff]
    %v8048 = vld [vmem:[#allocation4 + $0xd68] sm:$0xff]
    %v8049 = vld [vmem:[#allocation4 + $0xd70] sm:$0xff]
    %v8050 = vld [vmem:[#allocation4 + $0xd78] sm:$0xff]
    %v8051 = vld [vmem:[#allocation4 + $0xd80] sm:$0xff]
    %v8052 = vld [vmem:[#allocation4 + $0xd88] sm:$0xff]
    %v8053 = vld [vmem:[#allocation4 + $0xd90] sm:$0xff]
    %v8054 = vld [vmem:[#allocation4 + $0xd98] sm:$0xff]
    %v8055 = vld [vmem:[#allocation4 + $0xda0] sm:$0xff]
    %v8056 = vld [vmem:[#allocation4 + $0xda8] sm:$0xff]
    %v8057 = vld [vmem:[#allocation4 + $0xdb0] sm:$0xff]
    %v8058 = vld [vmem:[#allocation4 + $0xdb8] sm:$0xff]
    %v8059 = vld [vmem:[#allocation4 + $0xdc0] sm:$0xff]
    %v8060 = vld [vmem:[#allocation4 + $0xdc8] sm:$0xff]
    %v8061 = vld [vmem:[#allocation4 + $0xdd0] sm:$0xff]
    %v8062 = vld [vmem:[#allocation4 + $0xdd8] sm:$0xff]
    %v8063 = vld [vmem:[#allocation4 + $0xde0] sm:$0xff]
    %v8064 = vld [vmem:[#allocation4 + $0xde8] sm:$0xff]
    %v8065 = vld [vmem:[#allocation4 + $0xdf0] sm:$0xff]
    %v8066 = vld [vmem:[#allocation4 + $0xdf8] sm:$0xff]
    %v8068 = vlaneseq
    %v8069 = vshrl.u32 %v8068, 7
    %v8070 = vsub.s32 0, %v8069
    %v8071 = vrot.slane %v187, %v8070
    %v8072 = vlaneseq
    %v8073 = vshrl.u32 %v8072, 7
    %v8074 = vsub.s32 1, %v8073
    %v8075 = vrot.slane %v187, %v8074
    %v8076 = vlaneseq
    %v8077 = vshrl.u32 %v8076, 7
    %v8078 = vsub.s32 2, %v8077
    %v8079 = vrot.slane %v187, %v8078
    %v8080 = vlaneseq
    %v8081 = vshrl.u32 %v8080, 7
    %v8082 = vsub.s32 3, %v8081
    %v8083 = vrot.slane %v187, %v8082
    %v8084 = vlaneseq
    %v8085 = vshrl.u32 %v8084, 7
    %v8086 = vsub.s32 4, %v8085
    %v8087 = vrot.slane %v187, %v8086
    %v8088 = vlaneseq
    %v8089 = vshrl.u32 %v8088, 7
    %v8090 = vsub.s32 5, %v8089
    %v8091 = vrot.slane %v187, %v8090
    %v8092 = vlaneseq
    %v8093 = vshrl.u32 %v8092, 7
    %v8094 = vsub.s32 6, %v8093
    %v8095 = vrot.slane %v187, %v8094
    %8103 = vmatprep.subr.bf16.mxu0 %v7620
    %8104 = vmatpush1.bf16.msra.mxu0 %v7619
    %8105 = vmatprep.subr.bf16.mxu0 %v7627
    %8106 = vmatpush1.bf16.msra.mxu0 %v7626
    %8107 = vmatprep.subr.bf16.mxu0 %v7634
    %8108 = vmatpush1.bf16.msra.mxu0 %v7633
    %8109 = vmatprep.subr.bf16.mxu0 %v7641
    %8110 = vmatpush1.bf16.msra.mxu0 %v7640
    %8111 = vmatprep.subr.bf16.mxu0 %v7648
    %8112 = vmatpush1.bf16.msra.mxu0 %v7647
    %8113 = vmatprep.subr.bf16.mxu0 %v7655
    %8114 = vmatpush1.bf16.msra.mxu0 %v7654
    %8115 = vmatprep.subr.bf16.mxu0 %v7662
    %8116 = vmatpush1.bf16.msra.mxu0 %v7661
    %8117 = vmatprep.subr.bf16.mxu0 %v7669
    %8118 = vmatpush1.bf16.msra.mxu0 %v7668
    %8119 = vmatprep.subr.bf16.mxu0 %v7676
    %8120 = vmatpush1.bf16.msra.mxu0 %v7675
    %8121 = vmatprep.subr.bf16.mxu0 %v7683
    %8122 = vmatpush1.bf16.msra.mxu0 %v7682
    %8123 = vmatprep.subr.bf16.mxu0 %v7690
    %8124 = vmatpush1.bf16.msra.mxu0 %v7689
    %8125 = vmatprep.subr.bf16.mxu0 %v7697
    %8126 = vmatpush1.bf16.msra.mxu0 %v7696
    %8127 = vmatprep.subr.bf16.mxu0 %v7704
    %8128 = vmatpush1.bf16.msra.mxu0 %v7703
    %8129 = vmatprep.subr.bf16.mxu0 %v7711
    %8130 = vmatpush1.bf16.msra.mxu0 %v7710
    %8131 = vmatprep.subr.bf16.mxu0 %v7718
    %8132 = vmatpush1.bf16.msra.mxu0 %v7717
    %8133 = vmatprep.subr.bf16.mxu0 %v7725
    %8134 = vmatpush1.bf16.msra.mxu0 %v7724
    %8135 = vmatprep.mubr.bf16.mxu0 %v7492
    %8136 = vmatmul.mubr.bf16.gmra.mrb[0].mxu0 %v7491
    %v8137 = vpop.f32.mrb[0].mxu0
    %v8138 = vadd.f32 %v8071, %v8137
    %v8139 = vpop.f32.mrb[0].mxu0
    %v8140 = vadd.f32 %v8075, %v8139
    %v8141 = vpop.f32.mrb[0].mxu0
    %v8142 = vadd.f32 %v8071, %v8141
    %v8143 = vpop.f32.mrb[0].mxu0
    %v8144 = vadd.f32 %v8075, %v8143
    %8145 = vmatprep.mubr.bf16.mxu0 %v7500
    %8146 = vmatmul.mubr.bf16.gmra.mrb[0].mxu0 %v7499
    %v8147 = vpop.f32.mrb[0].mxu0
    %v8148 = vadd.f32 %v8071, %v8147
    %v8149 = vpop.f32.mrb[0].mxu0
    %v8150 = vadd.f32 %v8075, %v8149
    %v8151 = vpop.f32.mrb[0].mxu0
    %v8152 = vadd.f32 %v8071, %v8151
    %v8153 = vpop.f32.mrb[0].mxu0
    %v8154 = vadd.f32 %v8075, %v8153
    %8155 = vmatprep.mubr.bf16.mxu0 %v7508
    %8156 = vmatmul.mubr.bf16.gmra.mrb[0].mxu0 %v7507
    %v8157 = vpop.f32.mrb[0].mxu0
    %v8158 = vadd.f32 %v8071, %v8157
    %v8159 = vpop.f32.mrb[0].mxu0
    %v8160 = vadd.f32 %v8075, %v8159
    %v8161 = vpop.f32.mrb[0].mxu0
    %v8162 = vadd.f32 %v8071, %v8161
    %v8163 = vpop.f32.mrb[0].mxu0
    %v8164 = vadd.f32 %v8075, %v8163
    %8165 = vmatprep.mubr.bf16.mxu0 %v7516
    %8166 = vmatmul.mubr.bf16.gmra.mrb[0].mxu0 %v7515
    %v8167 = vpop.f32.mrb[0].mxu0
    %v8168 = vadd.f32 %v8071, %v8167
    %v8169 = vpop.f32.mrb[0].mxu0
    %v8170 = vadd.f32 %v8075, %v8169
    %v8171 = vpop.f32.mrb[0].mxu0
    %v8172 = vadd.f32 %v8071, %v8171
    %v8173 = vpop.f32.mrb[0].mxu0
    %v8174 = vadd.f32 %v8075, %v8173
    %8175 = vmatprep.mubr.bf16.mxu0 %v7524
    %8176 = vmatmul.mubr.bf16.gmra.mrb[0].mxu0 %v7523
    %v8177 = vpop.f32.mrb[0].mxu0
    %v8178 = vadd.f32 %v8071, %v8177
    %v8179 = vpop.f32.mrb[0].mxu0
    %v8180 = vadd.f32 %v8075, %v8179
    %v8181 = vpop.f32.mrb[0].mxu0
    %v8182 = vadd.f32 %v8071, %v8181
    %v8183 = vpop.f32.mrb[0].mxu0
    %v8184 = vadd.f32 %v8075, %v8183
    %8185 = vmatprep.mubr.bf16.mxu0 %v7532
    %8186 = vmatmul.mubr.bf16.gmra.mrb[0].mxu0 %v7531
    %v8187 = vpop.f32.mrb[0].mxu0
    %v8188 = vadd.f32 %v8071, %v8187
    %v8189 = vpop.f32.mrb[0].mxu0
    %v8190 = vadd.f32 %v8075, %v8189
    %v8191 = vpop.f32.mrb[0].mxu0
    %v8192 = vadd.f32 %v8071, %v8191
    %v8193 = vpop.f32.mrb[0].mxu0
    %v8194 = vadd.f32 %v8075, %v8193
    %8195 = vmatprep.mubr.bf16.mxu0 %v7540
    %8196 = vmatmul.mubr.bf16.gmra.mrb[0].mxu0 %v7539
    %v8197 = vpop.f32.mrb[0].mxu0
    %v8198 = vadd.f32 %v8071, %v8197
    %v8199 = vpop.f32.mrb[0].mxu0
    %v8200 = vadd.f32 %v8075, %v8199
    %v8201 = vpop.f32.mrb[0].mxu0
    %v8202 = vadd.f32 %v8071, %v8201
    %v8203 = vpop.f32.mrb[0].mxu0
    %v8204 = vadd.f32 %v8075, %v8203
    %8205 = vmatprep.mubr.bf16.mxu0 %v7548
    %8206 = vmatmul.mubr.bf16.gmra.mrb[0].mxu0 %v7547
    %v8207 = vpop.f32.mrb[0].mxu0
    %v8208 = vadd.f32 %v8071, %v8207
    %v8209 = vpop.f32.mrb[0].mxu0
    %v8210 = vadd.f32 %v8075, %v8209
    %v8211 = vpop.f32.mrb[0].mxu0
    %v8212 = vadd.f32 %v8071, %v8211
    %v8213 = vpop.f32.mrb[0].mxu0
    %v8214 = vadd.f32 %v8075, %v8213
    %8215 = vmatprep.mubr.bf16.mxu0 %v7556
    %8216 = vmatmul.mubr.bf16.gmra.mrb[0].mxu0 %v7555
    %v8217 = vpop.f32.mrb[0].mxu0
    %v8218 = vadd.f32 %v8071, %v8217
    %v8219 = vpop.f32.mrb[0].mxu0
    %v8220 = vadd.f32 %v8075, %v8219
    %v8221 = vpop.f32.mrb[0].mxu0
    %v8222 = vadd.f32 %v8071, %v8221
    %v8223 = vpop.f32.mrb[0].mxu0
    %v8224 = vadd.f32 %v8075, %v8223
    %8225 = vmatprep.mubr.bf16.mxu0 %v7564
    %8226 = vmatmul.mubr.bf16.gmra.mrb[0].mxu0 %v7563
    %v8227 = vpop.f32.mrb[0].mxu0
    %v8228 = vadd.f32 %v8071, %v8227
    %v8229 = vpop.f32.mrb[0].mxu0
    %v8230 = vadd.f32 %v8075, %v8229
    %v8231 = vpop.f32.mrb[0].mxu0
    %v8232 = vadd.f32 %v8071, %v8231
    %v8233 = vpop.f32.mrb[0].mxu0
    %v8234 = vadd.f32 %v8075, %v8233
    %8235 = vmatprep.mubr.bf16.mxu0 %v7572
    %8236 = vmatmul.mubr.bf16.gmra.mrb[0].mxu0 %v7571
    %v8237 = vpop.f32.mrb[0].mxu0
    %v8238 = vadd.f32 %v8071, %v8237
    %v8239 = vpop.f32.mrb[0].mxu0
    %v8240 = vadd.f32 %v8075, %v8239
    %v8241 = vpop.f32.mrb[0].mxu0
    %v8242 = vadd.f32 %v8071, %v8241
    %v8243 = vpop.f32.mrb[0].mxu0
    %v8244 = vadd.f32 %v8075, %v8243
    %8245 = vmatprep.mubr.bf16.mxu0 %v7580
    %8246 = vmatmul.mubr.bf16.gmra.mrb[0].mxu0 %v7579
    %v8247 = vpop.f32.mrb[0].mxu0
    %v8248 = vadd.f32 %v8071, %v8247
    %v8249 = vpop.f32.mrb[0].mxu0
    %v8250 = vadd.f32 %v8075, %v8249
    %v8251 = vpop.f32.mrb[0].mxu0
    %v8252 = vadd.f32 %v8071, %v8251
    %v8253 = vpop.f32.mrb[0].mxu0
    %v8254 = vadd.f32 %v8075, %v8253
    %8255 = vmatprep.mubr.bf16.mxu0 %v7588
    %8256 = vmatmul.mubr.bf16.gmra.mrb[0].mxu0 %v7587
    %v8257 = vpop.f32.mrb[0].mxu0
    %v8258 = vadd.f32 %v8071, %v8257
    %v8259 = vpop.f32.mrb[0].mxu0
    %v8260 = vadd.f32 %v8075, %v8259
    %v8261 = vpop.f32.mrb[0].mxu0
    %v8262 = vadd.f32 %v8071, %v8261
    %v8263 = vpop.f32.mrb[0].mxu0
    %v8264 = vadd.f32 %v8075, %v8263
    %8265 = vmatprep.mubr.bf16.mxu0 %v7596
    %8266 = vmatmul.mubr.bf16.gmra.mrb[0].mxu0 %v7595
    %v8267 = vpop.f32.mrb[0].mxu0
    %v8268 = vadd.f32 %v8071, %v8267
    %v8269 = vpop.f32.mrb[0].mxu0
    %v8270 = vadd.f32 %v8075, %v8269
    %v8271 = vpop.f32.mrb[0].mxu0
    %v8272 = vadd.f32 %v8071, %v8271
    %v8273 = vpop.f32.mrb[0].mxu0
    %v8274 = vadd.f32 %v8075, %v8273
    %8275 = vmatprep.mubr.bf16.mxu0 %v7604
    %8276 = vmatmul.mubr.bf16.gmra.mrb[0].mxu0 %v7603
    %v8277 = vpop.f32.mrb[0].mxu0
    %v8278 = vadd.f32 %v8071, %v8277
    %v8279 = vpop.f32.mrb[0].mxu0
    %v8280 = vadd.f32 %v8075, %v8279
    %v8281 = vpop.f32.mrb[0].mxu0
    %v8282 = vadd.f32 %v8071, %v8281
    %v8283 = vpop.f32.mrb[0].mxu0
    %v8284 = vadd.f32 %v8075, %v8283
    %8285 = vmatprep.mubr.bf16.mxu0 %v7612
    %8286 = vmatmul.mubr.bf16.gmra.mrb[0].mxu0 %v7611
    %v8287 = vpop.f32.mrb[0].mxu0
    %v8288 = vadd.f32 %v8071, %v8287
    %v8289 = vpop.f32.mrb[0].mxu0
    %v8290 = vadd.f32 %v8075, %v8289
    %v8291 = vpop.f32.mrb[0].mxu0
    %v8292 = vadd.f32 %v8071, %v8291
    %v8293 = vpop.f32.mrb[0].mxu0
    %v8294 = vadd.f32 %v8075, %v8293
    %8295 = vdwg.mxu0
    %8296 = vmatprep.subr.bf16.mxu0 %v7732
    %8297 = vmatpush1.bf16.msra.mxu0 %v7731
    %8298 = vmatprep.subr.bf16.mxu0 %v7739
    %8299 = vmatpush1.bf16.msra.mxu0 %v7738
    %8300 = vmatprep.subr.bf16.mxu0 %v7746
    %8301 = vmatpush1.bf16.msra.mxu0 %v7745
    %8302 = vmatprep.subr.bf16.mxu0 %v7753
    %8303 = vmatpush1.bf16.msra.mxu0 %v7752
    %8304 = vmatprep.subr.bf16.mxu0 %v7760
    %8305 = vmatpush1.bf16.msra.mxu0 %v7759
    %8306 = vmatprep.subr.bf16.mxu0 %v7767
    %8307 = vmatpush1.bf16.msra.mxu0 %v7766
    %8308 = vmatprep.subr.bf16.mxu0 %v7774
    %8309 = vmatpush1.bf16.msra.mxu0 %v7773
    %8310 = vmatprep.subr.bf16.mxu0 %v7781
    %8311 = vmatpush1.bf16.msra.mxu0 %v7780
    %8312 = vmatprep.subr.bf16.mxu0 %v7788
    %8313 = vmatpush1.bf16.msra.mxu0 %v7787
    %8314 = vmatprep.subr.bf16.mxu0 %v7795
    %8315 = vmatpush1.bf16.msra.mxu0 %v7794
    %8316 = vmatprep.subr.bf16.mxu0 %v7802
    %8317 = vmatpush1.bf16.msra.mxu0 %v7801
    %8318 = vmatprep.subr.bf16.mxu0 %v7809
    %8319 = vmatpush1.bf16.msra.mxu0 %v7808
    %8320 = vmatprep.subr.bf16.mxu0 %v7816
    %8321 = vmatpush1.bf16.msra.mxu0 %v7815
    %8322 = vmatprep.subr.bf16.mxu0 %v7823
    %8323 = vmatpush1.bf16.msra.mxu0 %v7822
    %8324 = vmatprep.subr.bf16.mxu0 %v7830
    %8325 = vmatpush1.bf16.msra.mxu0 %v7829
    %8326 = vmatprep.subr.bf16.mxu0 %v7837
    %8327 = vmatpush1.bf16.msra.mxu0 %v7836
    %8328 = vmatprep.mubr.bf16.mxu0 %v7494
    %8329 = vmatmul.mubr.bf16.gmra.mrb[0].mxu0 %v7493
    %v8330 = vpop.f32.mrb[0].mxu0
    %v8331 = vadd.f32 %v8138, %v8330
    %v8332 = vpop.f32.mrb[0].mxu0
    %v8333 = vadd.f32 %v8140, %v8332
    %v8334 = vpop.f32.mrb[0].mxu0
    %v8335 = vadd.f32 %v8142, %v8334
    %v8336 = vpop.f32.mrb[0].mxu0
    %v8337 = vadd.f32 %v8144, %v8336
    %8338 = vmatprep.mubr.bf16.mxu0 %v7502
    %8339 = vmatmul.mubr.bf16.gmra.mrb[0].mxu0 %v7501
    %v8340 = vpop.f32.mrb[0].mxu0
    %v8341 = vadd.f32 %v8148, %v8340
    %v8342 = vpop.f32.mrb[0].mxu0
    %v8343 = vadd.f32 %v8150, %v8342
    %v8344 = vpop.f32.mrb[0].mxu0
    %v8345 = vadd.f32 %v8152, %v8344
    %v8346 = vpop.f32.mrb[0].mxu0
    %v8347 = vadd.f32 %v8154, %v8346
    %8348 = vmatprep.mubr.bf16.mxu0 %v7510
    %8349 = vmatmul.mubr.bf16.gmra.mrb[0].mxu0 %v7509
    %v8350 = vpop.f32.mrb[0].mxu0
    %v8351 = vadd.f32 %v8158, %v8350
    %v8352 = vpop.f32.mrb[0].mxu0
    %v8353 = vadd.f32 %v8160, %v8352
    %v8354 = vpop.f32.mrb[0].mxu0
    %v8355 = vadd.f32 %v8162, %v8354
    %v8356 = vpop.f32.mrb[0].mxu0
    %v8357 = vadd.f32 %v8164, %v8356
    %8358 = vmatprep.mubr.bf16.mxu0 %v7518
    %8359 = vmatmul.mubr.bf16.gmra.mrb[0].mxu0 %v7517
    %v8360 = vpop.f32.mrb[0].mxu0
    %v8361 = vadd.f32 %v8168, %v8360
    %v8362 = vpop.f32.mrb[0].mxu0
    %v8363 = vadd.f32 %v8170, %v8362
    %v8364 = vpop.f32.mrb[0].mxu0
    %v8365 = vadd.f32 %v8172, %v8364
    %v8366 = vpop.f32.mrb[0].mxu0
    %v8367 = vadd.f32 %v8174, %v8366
    %8368 = vmatprep.mubr.bf16.mxu0 %v7526
    %8369 = vmatmul.mubr.bf16.gmra.mrb[0].mxu0 %v7525
    %v8370 = vpop.f32.mrb[0].mxu0
    %v8371 = vadd.f32 %v8178, %v8370
    %v8372 = vpop.f32.mrb[0].mxu0
    %v8373 = vadd.f32 %v8180, %v8372
    %v8374 = vpop.f32.mrb[0].mxu0
    %v8375 = vadd.f32 %v8182, %v8374
    %v8376 = vpop.f32.mrb[0].mxu0
    %v8377 = vadd.f32 %v8184, %v8376
    %8378 = vmatprep.mubr.bf16.mxu0 %v7534
    %8379 = vmatmul.mubr.bf16.gmra.mrb[0].mxu0 %v7533
    %v8380 = vpop.f32.mrb[0].mxu0
    %v8381 = vadd.f32 %v8188, %v8380
    %v8382 = vpop.f32.mrb[0].mxu0
    %v8383 = vadd.f32 %v8190, %v8382
    %v8384 = vpop.f32.mrb[0].mxu0
    %v8385 = vadd.f32 %v8192, %v8384
    %v8386 = vpop.f32.mrb[0].mxu0
    %v8387 = vadd.f32 %v8194, %v8386
    %8388 = vmatprep.mubr.bf16.mxu0 %v7542
    %8389 = vmatmul.mubr.bf16.gmra.mrb[0].mxu0 %v7541
    %v8390 = vpop.f32.mrb[0].mxu0
    %v8391 = vadd.f32 %v8198, %v8390
    %v8392 = vpop.f32.mrb[0].mxu0
    %v8393 = vadd.f32 %v8200, %v8392
    %v8394 = vpop.f32.mrb[0].mxu0
    %v8395 = vadd.f32 %v8202, %v8394
    %v8396 = vpop.f32.mrb[0].mxu0
    %v8397 = vadd.f32 %v8204, %v8396
    %8398 = vmatprep.mubr.bf16.mxu0 %v7550
    %8399 = vmatmul.mubr.bf16.gmra.mrb[0].mxu0 %v7549
    %v8400 = vpop.f32.mrb[0].mxu0
    %v8401 = vadd.f32 %v8208, %v8400
    %v8402 = vpop.f32.mrb[0].mxu0
    %v8403 = vadd.f32 %v8210, %v8402
    %v8404 = vpop.f32.mrb[0].mxu0
    %v8405 = vadd.f32 %v8212, %v8404
    %v8406 = vpop.f32.mrb[0].mxu0
    %v8407 = vadd.f32 %v8214, %v8406
    %8408 = vmatprep.mubr.bf16.mxu0 %v7558
    %8409 = vmatmul.mubr.bf16.gmra.mrb[0].mxu0 %v7557
    %v8410 = vpop.f32.mrb[0].mxu0
    %v8411 = vadd.f32 %v8218, %v8410
    %v8412 = vpop.f32.mrb[0].mxu0
    %v8413 = vadd.f32 %v8220, %v8412
    %v8414 = vpop.f32.mrb[0].mxu0
    %v8415 = vadd.f32 %v8222, %v8414
    %v8416 = vpop.f32.mrb[0].mxu0
    %v8417 = vadd.f32 %v8224, %v8416
    %8418 = vmatprep.mubr.bf16.mxu0 %v7566
    %8419 = vmatmul.mubr.bf16.gmra.mrb[0].mxu0 %v7565
    %v8420 = vpop.f32.mrb[0].mxu0
    %v8421 = vadd.f32 %v8228, %v8420
    %v8422 = vpop.f32.mrb[0].mxu0
    %v8423 = vadd.f32 %v8230, %v8422
    %v8424 = vpop.f32.mrb[0].mxu0
    %v8425 = vadd.f32 %v8232, %v8424
    %v8426 = vpop.f32.mrb[0].mxu0
    %v8427 = vadd.f32 %v8234, %v8426
    %8428 = vmatprep.mubr.bf16.mxu0 %v7574
    %8429 = vmatmul.mubr.bf16.gmra.mrb[0].mxu0 %v7573
    %v8430 = vpop.f32.mrb[0].mxu0
    %v8431 = vadd.f32 %v8238, %v8430
    %v8432 = vpop.f32.mrb[0].mxu0
    %v8433 = vadd.f32 %v8240, %v8432
    %v8434 = vpop.f32.mrb[0].mxu0
    %v8435 = vadd.f32 %v8242, %v8434
    %v8436 = vpop.f32.mrb[0].mxu0
    %v8437 = vadd.f32 %v8244, %v8436
    %8438 = vmatprep.mubr.bf16.mxu0 %v7582
    %8439 = vmatmul.mubr.bf16.gmra.mrb[0].mxu0 %v7581
    %v8440 = vpop.f32.mrb[0].mxu0
    %v8441 = vadd.f32 %v8248, %v8440
    %v8442 = vpop.f32.mrb[0].mxu0
    %v8443 = vadd.f32 %v8250, %v8442
    %v8444 = vpop.f32.mrb[0].mxu0
    %v8445 = vadd.f32 %v8252, %v8444
    %v8446 = vpop.f32.mrb[0].mxu0
    %v8447 = vadd.f32 %v8254, %v8446
    %8448 = vmatprep.mubr.bf16.mxu0 %v7590
    %8449 = vmatmul.mubr.bf16.gmra.mrb[0].mxu0 %v7589
    %v8450 = vpop.f32.mrb[0].mxu0
    %v8451 = vadd.f32 %v8258, %v8450
    %v8452 = vpop.f32.mrb[0].mxu0
    %v8453 = vadd.f32 %v8260, %v8452
    %v8454 = vpop.f32.mrb[0].mxu0
    %v8455 = vadd.f32 %v8262, %v8454
    %v8456 = vpop.f32.mrb[0].mxu0
    %v8457 = vadd.f32 %v8264, %v8456
    %8458 = vmatprep.mubr.bf16.mxu0 %v7598
    %8459 = vmatmul.mubr.bf16.gmra.mrb[0].mxu0 %v7597
    %v8460 = vpop.f32.mrb[0].mxu0
    %v8461 = vadd.f32 %v8268, %v8460
    %v8462 = vpop.f32.mrb[0].mxu0
    %v8463 = vadd.f32 %v8270, %v8462
    %v8464 = vpop.f32.mrb[0].mxu0
    %v8465 = vadd.f32 %v8272, %v8464
    %v8466 = vpop.f32.mrb[0].mxu0
    %v8467 = vadd.f32 %v8274, %v8466
    %8468 = vmatprep.mubr.bf16.mxu0 %v7606
    %8469 = vmatmul.mubr.bf16.gmra.mrb[0].mxu0 %v7605
    %v8470 = vpop.f32.mrb[0].mxu0
    %v8471 = vadd.f32 %v8278, %v8470
    %v8472 = vpop.f32.mrb[0].mxu0
    %v8473 = vadd.f32 %v8280, %v8472
    %v8474 = vpop.f32.mrb[0].mxu0
    %v8475 = vadd.f32 %v8282, %v8474
    %v8476 = vpop.f32.mrb[0].mxu0
    %v8477 = vadd.f32 %v8284, %v8476
    %8478 = vmatprep.mubr.bf16.mxu0 %v7614
    %8479 = vmatmul.mubr.bf16.gmra.mrb[0].mxu0 %v7613
    %v8480 = vpop.f32.mrb[0].mxu0
    %v8481 = vadd.f32 %v8288, %v8480
    %v8482 = vpop.f32.mrb[0].mxu0
    %v8483 = vadd.f32 %v8290, %v8482
    %v8484 = vpop.f32.mrb[0].mxu0
    %v8485 = vadd.f32 %v8292, %v8484
    %v8486 = vpop.f32.mrb[0].mxu0
    %v8487 = vadd.f32 %v8294, %v8486
    %8488 = vdwg.mxu0
    %8489 = vmatprep.subr.bf16.mxu0 %v7844
    %8490 = vmatpush1.bf16.msra.mxu0 %v7843
    %8491 = vmatprep.subr.bf16.mxu0 %v7851
    %8492 = vmatpush1.bf16.msra.mxu0 %v7850
    %8493 = vmatprep.subr.bf16.mxu0 %v7858
    %8494 = vmatpush1.bf16.msra.mxu0 %v7857
    %8495 = vmatprep.subr.bf16.mxu0 %v7865
    %8496 = vmatpush1.bf16.msra.mxu0 %v7864
    %8497 = vmatprep.subr.bf16.mxu0 %v7872
    %8498 = vmatpush1.bf16.msra.mxu0 %v7871
    %8499 = vmatprep.subr.bf16.mxu0 %v7879
    %8500 = vmatpush1.bf16.msra.mxu0 %v7878
    %8501 = vmatprep.subr.bf16.mxu0 %v7886
    %8502 = vmatpush1.bf16.msra.mxu0 %v7885
    %8503 = vmatprep.subr.bf16.mxu0 %v7893
    %8504 = vmatpush1.bf16.msra.mxu0 %v7892
    %8505 = vmatprep.subr.bf16.mxu0 %v7900
    %8506 = vmatpush1.bf16.msra.mxu0 %v7899
    %8507 = vmatprep.subr.bf16.mxu0 %v7907
    %8508 = vmatpush1.bf16.msra.mxu0 %v7906
    %8509 = vmatprep.subr.bf16.mxu0 %v7914
    %8510 = vmatpush1.bf16.msra.mxu0 %v7913
    %8511 = vmatprep.subr.bf16.mxu0 %v7921
    %8512 = vmatpush1.bf16.msra.mxu0 %v7920
    %8513 = vmatprep.subr.bf16.mxu0 %v7928
    %8514 = vmatpush1.bf16.msra.mxu0 %v7927
    %8515 = vmatprep.subr.bf16.mxu0 %v7935
    %8516 = vmatpush1.bf16.msra.mxu0 %v7934
    %8517 = vmatprep.subr.bf16.mxu0 %v7942
    %8518 = vmatpush1.bf16.msra.mxu0 %v7941
    %8519 = vmatprep.subr.bf16.mxu0 %v7949
    %8520 = vmatpush1.bf16.msra.mxu0 %v7948
    %8521 = vmatprep.mubr.bf16.mxu0 %v7496
    %8522 = vmatmul.mubr.bf16.gmra.mrb[0].mxu0 %v7495
    %v8523 = vpop.f32.mrb[0].mxu0
    %v8524 = vadd.f32 %v8331, %v8523
    %v8525 = vpop.f32.mrb[0].mxu0
    %v8526 = vadd.f32 %v8333, %v8525
    %v8527 = vpop.f32.mrb[0].mxu0
    %v8528 = vadd.f32 %v8335, %v8527
    %v8529 = vpop.f32.mrb[0].mxu0
    %v8530 = vadd.f32 %v8337, %v8529
    %8531 = vmatprep.mubr.bf16.mxu0 %v7504
    %8532 = vmatmul.mubr.bf16.gmra.mrb[0].mxu0 %v7503
    %v8533 = vpop.f32.mrb[0].mxu0
    %v8534 = vadd.f32 %v8341, %v8533
    %v8535 = vpop.f32.mrb[0].mxu0
    %v8536 = vadd.f32 %v8343, %v8535
    %v8537 = vpop.f32.mrb[0].mxu0
    %v8538 = vadd.f32 %v8345, %v8537
    %v8539 = vpop.f32.mrb[0].mxu0
    %v8540 = vadd.f32 %v8347, %v8539
    %8541 = vmatprep.mubr.bf16.mxu0 %v7512
    %8542 = vmatmul.mubr.bf16.gmra.mrb[0].mxu0 %v7511
    %v8543 = vpop.f32.mrb[0].mxu0
    %v8544 = vadd.f32 %v8351, %v8543
    %v8545 = vpop.f32.mrb[0].mxu0
    %v8546 = vadd.f32 %v8353, %v8545
    %v8547 = vpop.f32.mrb[0].mxu0
    %v8548 = vadd.f32 %v8355, %v8547
    %v8549 = vpop.f32.mrb[0].mxu0
    %v8550 = vadd.f32 %v8357, %v8549
    %8551 = vmatprep.mubr.bf16.mxu0 %v7520
    %8552 = vmatmul.mubr.bf16.gmra.mrb[0].mxu0 %v7519
    %v8553 = vpop.f32.mrb[0].mxu0
    %v8554 = vadd.f32 %v8361, %v8553
    %v8555 = vpop.f32.mrb[0].mxu0
    %v8556 = vadd.f32 %v8363, %v8555
    %v8557 = vpop.f32.mrb[0].mxu0
    %v8558 = vadd.f32 %v8365, %v8557
    %v8559 = vpop.f32.mrb[0].mxu0
    %v8560 = vadd.f32 %v8367, %v8559
    %8561 = vmatprep.mubr.bf16.mxu0 %v7528
    %8562 = vmatmul.mubr.bf16.gmra.mrb[0].mxu0 %v7527
    %v8563 = vpop.f32.mrb[0].mxu0
    %v8564 = vadd.f32 %v8371, %v8563
    %v8565 = vpop.f32.mrb[0].mxu0
    %v8566 = vadd.f32 %v8373, %v8565
    %v8567 = vpop.f32.mrb[0].mxu0
    %v8568 = vadd.f32 %v8375, %v8567
    %v8569 = vpop.f32.mrb[0].mxu0
    %v8570 = vadd.f32 %v8377, %v8569
    %8571 = vmatprep.mubr.bf16.mxu0 %v7536
    %8572 = vmatmul.mubr.bf16.gmra.mrb[0].mxu0 %v7535
    %v8573 = vpop.f32.mrb[0].mxu0
    %v8574 = vadd.f32 %v8381, %v8573
    %v8575 = vpop.f32.mrb[0].mxu0
    %v8576 = vadd.f32 %v8383, %v8575
    %v8577 = vpop.f32.mrb[0].mxu0
    %v8578 = vadd.f32 %v8385, %v8577
    %v8579 = vpop.f32.mrb[0].mxu0
    %v8580 = vadd.f32 %v8387, %v8579
    %8581 = vmatprep.mubr.bf16.mxu0 %v7544
    %8582 = vmatmul.mubr.bf16.gmra.mrb[0].mxu0 %v7543
    %v8583 = vpop.f32.mrb[0].mxu0
    %v8584 = vadd.f32 %v8391, %v8583
    %v8585 = vpop.f32.mrb[0].mxu0
    %v8586 = vadd.f32 %v8393, %v8585
    %v8587 = vpop.f32.mrb[0].mxu0
    %v8588 = vadd.f32 %v8395, %v8587
    %v8589 = vpop.f32.mrb[0].mxu0
    %v8590 = vadd.f32 %v8397, %v8589
    %8591 = vmatprep.mubr.bf16.mxu0 %v7552
    %8592 = vmatmul.mubr.bf16.gmra.mrb[0].mxu0 %v7551
    %v8593 = vpop.f32.mrb[0].mxu0
    %v8594 = vadd.f32 %v8401, %v8593
    %v8595 = vpop.f32.mrb[0].mxu0
    %v8596 = vadd.f32 %v8403, %v8595
    %v8597 = vpop.f32.mrb[0].mxu0
    %v8598 = vadd.f32 %v8405, %v8597
    %v8599 = vpop.f32.mrb[0].mxu0
    %v8600 = vadd.f32 %v8407, %v8599
    %8601 = vmatprep.mubr.bf16.mxu0 %v7560
    %8602 = vmatmul.mubr.bf16.gmra.mrb[0].mxu0 %v7559
    %v8603 = vpop.f32.mrb[0].mxu0
    %v8604 = vadd.f32 %v8411, %v8603
    %v8605 = vpop.f32.mrb[0].mxu0
    %v8606 = vadd.f32 %v8413, %v8605
    %v8607 = vpop.f32.mrb[0].mxu0
    %v8608 = vadd.f32 %v8415, %v8607
    %v8609 = vpop.f32.mrb[0].mxu0
    %v8610 = vadd.f32 %v8417, %v8609
    %8611 = vmatprep.mubr.bf16.mxu0 %v7568
    %8612 = vmatmul.mubr.bf16.gmra.mrb[0].mxu0 %v7567
    %v8613 = vpop.f32.mrb[0].mxu0
    %v8614 = vadd.f32 %v8421, %v8613
    %v8615 = vpop.f32.mrb[0].mxu0
    %v8616 = vadd.f32 %v8423, %v8615
    %v8617 = vpop.f32.mrb[0].mxu0
    %v8618 = vadd.f32 %v8425, %v8617
    %v8619 = vpop.f32.mrb[0].mxu0
    %v8620 = vadd.f32 %v8427, %v8619
    %8621 = vmatprep.mubr.bf16.mxu0 %v7576
    %8622 = vmatmul.mubr.bf16.gmra.mrb[0].mxu0 %v7575
    %v8623 = vpop.f32.mrb[0].mxu0
    %v8624 = vadd.f32 %v8431, %v8623
    %v8625 = vpop.f32.mrb[0].mxu0
    %v8626 = vadd.f32 %v8433, %v8625
    %v8627 = vpop.f32.mrb[0].mxu0
    %v8628 = vadd.f32 %v8435, %v8627
    %v8629 = vpop.f32.mrb[0].mxu0
    %v8630 = vadd.f32 %v8437, %v8629
    %8631 = vmatprep.mubr.bf16.mxu0 %v7584
    %8632 = vmatmul.mubr.bf16.gmra.mrb[0].mxu0 %v7583
    %v8633 = vpop.f32.mrb[0].mxu0
    %v8634 = vadd.f32 %v8441, %v8633
    %v8635 = vpop.f32.mrb[0].mxu0
    %v8636 = vadd.f32 %v8443, %v8635
    %v8637 = vpop.f32.mrb[0].mxu0
    %v8638 = vadd.f32 %v8445, %v8637
    %v8639 = vpop.f32.mrb[0].mxu0
    %v8640 = vadd.f32 %v8447, %v8639
    %8641 = vmatprep.mubr.bf16.mxu0 %v7592
    %8642 = vmatmul.mubr.bf16.gmra.mrb[0].mxu0 %v7591
    %v8643 = vpop.f32.mrb[0].mxu0
    %v8644 = vadd.f32 %v8451, %v8643
    %v8645 = vpop.f32.mrb[0].mxu0
    %v8646 = vadd.f32 %v8453, %v8645
    %v8647 = vpop.f32.mrb[0].mxu0
    %v8648 = vadd.f32 %v8455, %v8647
    %v8649 = vpop.f32.mrb[0].mxu0
    %v8650 = vadd.f32 %v8457, %v8649
    %8651 = vmatprep.mubr.bf16.mxu0 %v7600
    %8652 = vmatmul.mubr.bf16.gmra.mrb[0].mxu0 %v7599
    %v8653 = vpop.f32.mrb[0].mxu0
    %v8654 = vadd.f32 %v8461, %v8653
    %v8655 = vpop.f32.mrb[0].mxu0
    %v8656 = vadd.f32 %v8463, %v8655
    %v8657 = vpop.f32.mrb[0].mxu0
    %v8658 = vadd.f32 %v8465, %v8657
    %v8659 = vpop.f32.mrb[0].mxu0
    %v8660 = vadd.f32 %v8467, %v8659
    %8661 = vmatprep.mubr.bf16.mxu0 %v7608
    %8662 = vmatmul.mubr.bf16.gmra.mrb[0].mxu0 %v7607
    %v8663 = vpop.f32.mrb[0].mxu0
    %v8664 = vadd.f32 %v8471, %v8663
    %v8665 = vpop.f32.mrb[0].mxu0
    %v8666 = vadd.f32 %v8473, %v8665
    %v8667 = vpop.f32.mrb[0].mxu0
    %v8668 = vadd.f32 %v8475, %v8667
    %v8669 = vpop.f32.mrb[0].mxu0
    %v8670 = vadd.f32 %v8477, %v8669
    %8671 = vmatprep.mubr.bf16.mxu0 %v7616
    %8672 = vmatmul.mubr.bf16.gmra.mrb[0].mxu0 %v7615
    %v8673 = vpop.f32.mrb[0].mxu0
    %v8674 = vadd.f32 %v8481, %v8673
    %v8675 = vpop.f32.mrb[0].mxu0
    %v8676 = vadd.f32 %v8483, %v8675
    %v8677 = vpop.f32.mrb[0].mxu0
    %v8678 = vadd.f32 %v8485, %v8677
    %v8679 = vpop.f32.mrb[0].mxu0
    %v8680 = vadd.f32 %v8487, %v8679
    %8681 = vdwg.mxu0
    %8682 = vmatprep.subr.bf16.mxu0 %v7956
    %8683 = vmatpush1.bf16.msra.mxu0 %v7955
    %8684 = vmatprep.subr.bf16.mxu0 %v7963
    %8685 = vmatpush1.bf16.msra.mxu0 %v7962
    %8686 = vmatprep.subr.bf16.mxu0 %v7970
    %8687 = vmatpush1.bf16.msra.mxu0 %v7969
    %8688 = vmatprep.subr.bf16.mxu0 %v7977
    %8689 = vmatpush1.bf16.msra.mxu0 %v7976
    %8690 = vmatprep.subr.bf16.mxu0 %v7984
    %8691 = vmatpush1.bf16.msra.mxu0 %v7983
    %8692 = vmatprep.subr.bf16.mxu0 %v7991
    %8693 = vmatpush1.bf16.msra.mxu0 %v7990
    %8694 = vmatprep.subr.bf16.mxu0 %v7998
    %8695 = vmatpush1.bf16.msra.mxu0 %v7997
    %8696 = vmatprep.subr.bf16.mxu0 %v8005
    %8697 = vmatpush1.bf16.msra.mxu0 %v8004
    %8698 = vmatprep.subr.bf16.mxu0 %v8012
    %8699 = vmatpush1.bf16.msra.mxu0 %v8011
    %8700 = vmatprep.subr.bf16.mxu0 %v8019
    %8701 = vmatpush1.bf16.msra.mxu0 %v8018
    %8702 = vmatprep.subr.bf16.mxu0 %v8026
    %8703 = vmatpush1.bf16.msra.mxu0 %v8025
    %8704 = vmatprep.subr.bf16.mxu0 %v8033
    %8705 = vmatpush1.bf16.msra.mxu0 %v8032
    %8706 = vmatprep.subr.bf16.mxu0 %v8040
    %8707 = vmatpush1.bf16.msra.mxu0 %v8039
    %8708 = vmatprep.subr.bf16.mxu0 %v8047
    %8709 = vmatpush1.bf16.msra.mxu0 %v8046
    %8710 = vmatprep.subr.bf16.mxu0 %v8054
    %8711 = vmatpush1.bf16.msra.mxu0 %v8053
    %8712 = vmatprep.subr.bf16.mxu0 %v8061
    %8713 = vmatpush1.bf16.msra.mxu0 %v8060
    %8714 = vmatprep.mubr.bf16.mxu0 %v7498
    %8715 = vmatmul.mubr.bf16.gmra.mrb[0].mxu0 %v7497
    %v8716 = vpop.f32.mrb[0].mxu0
    %v8717 = vadd.f32 %v8524, %v8716
    %v8718 = vpop.f32.mrb[0].mxu0
    %v8719 = vadd.f32 %v8526, %v8718
    %v8720 = vpop.f32.mrb[0].mxu0
    %v8721 = vadd.f32 %v8528, %v8720
    %v8722 = vpop.f32.mrb[0].mxu0
    %v8723 = vadd.f32 %v8530, %v8722
    %8724 = vmatprep.mubr.bf16.mxu0 %v7506
    %8725 = vmatmul.mubr.bf16.gmra.mrb[0].mxu0 %v7505
    %v8726 = vpop.f32.mrb[0].mxu0
    %v8727 = vadd.f32 %v8534, %v8726
    %v8728 = vpop.f32.mrb[0].mxu0
    %v8729 = vadd.f32 %v8536, %v8728
    %v8730 = vpop.f32.mrb[0].mxu0
    %v8731 = vadd.f32 %v8538, %v8730
    %v8732 = vpop.f32.mrb[0].mxu0
    %v8733 = vadd.f32 %v8540, %v8732
    %8734 = vmatprep.mubr.bf16.mxu0 %v7514
    %8735 = vmatmul.mubr.bf16.gmra.mrb[0].mxu0 %v7513
    %v8736 = vpop.f32.mrb[0].mxu0
    %v8737 = vadd.f32 %v8544, %v8736
    %v8738 = vpop.f32.mrb[0].mxu0
    %v8739 = vadd.f32 %v8546, %v8738
    %v8740 = vpop.f32.mrb[0].mxu0
    %v8741 = vadd.f32 %v8548, %v8740
    %v8742 = vpop.f32.mrb[0].mxu0
    %v8743 = vadd.f32 %v8550, %v8742
    %8744 = vmatprep.mubr.bf16.mxu0 %v7522
    %8745 = vmatmul.mubr.bf16.gmra.mrb[0].mxu0 %v7521
    %v8746 = vpop.f32.mrb[0].mxu0
    %v8747 = vadd.f32 %v8554, %v8746
    %v8748 = vpop.f32.mrb[0].mxu0
    %v8749 = vadd.f32 %v8556, %v8748
    %v8750 = vpop.f32.mrb[0].mxu0
    %v8751 = vadd.f32 %v8558, %v8750
    %v8752 = vpop.f32.mrb[0].mxu0
    %v8753 = vadd.f32 %v8560, %v8752
    %8754 = vmatprep.mubr.bf16.mxu0 %v7530
    %8755 = vmatmul.mubr.bf16.gmra.mrb[0].mxu0 %v7529
    %v8756 = vpop.f32.mrb[0].mxu0
    %v8757 = vadd.f32 %v8564, %v8756
    %v8758 = vpop.f32.mrb[0].mxu0
    %v8759 = vadd.f32 %v8566, %v8758
    %v8760 = vpop.f32.mrb[0].mxu0
    %v8761 = vadd.f32 %v8568, %v8760
    %v8762 = vpop.f32.mrb[0].mxu0
    %v8763 = vadd.f32 %v8570, %v8762
    %8764 = vmatprep.mubr.bf16.mxu0 %v7538
    %8765 = vmatmul.mubr.bf16.gmra.mrb[0].mxu0 %v7537
    %v8766 = vpop.f32.mrb[0].mxu0
    %v8767 = vadd.f32 %v8574, %v8766
    %v8768 = vpop.f32.mrb[0].mxu0
    %v8769 = vadd.f32 %v8576, %v8768
    %v8770 = vpop.f32.mrb[0].mxu0
    %v8771 = vadd.f32 %v8578, %v8770
    %v8772 = vpop.f32.mrb[0].mxu0
    %v8773 = vadd.f32 %v8580, %v8772
    %8774 = vmatprep.mubr.bf16.mxu0 %v7546
    %8775 = vmatmul.mubr.bf16.gmra.mrb[0].mxu0 %v7545
    %v8776 = vpop.f32.mrb[0].mxu0
    %v8777 = vadd.f32 %v8584, %v8776
    %v8778 = vpop.f32.mrb[0].mxu0
    %v8779 = vadd.f32 %v8586, %v8778
    %v8780 = vpop.f32.mrb[0].mxu0
    %v8781 = vadd.f32 %v8588, %v8780
    %v8782 = vpop.f32.mrb[0].mxu0
    %v8783 = vadd.f32 %v8590, %v8782
    %8784 = vmatprep.mubr.bf16.mxu0 %v7554
    %8785 = vmatmul.mubr.bf16.gmra.mrb[0].mxu0 %v7553
    %v8786 = vpop.f32.mrb[0].mxu0
    %v8787 = vadd.f32 %v8594, %v8786
    %v8788 = vpop.f32.mrb[0].mxu0
    %v8789 = vadd.f32 %v8596, %v8788
    %v8790 = vpop.f32.mrb[0].mxu0
    %v8791 = vadd.f32 %v8598, %v8790
    %v8792 = vpop.f32.mrb[0].mxu0
    %v8793 = vadd.f32 %v8600, %v8792
    %8794 = vmatprep.mubr.bf16.mxu0 %v7562
    %8795 = vmatmul.mubr.bf16.gmra.mrb[0].mxu0 %v7561
    %v8796 = vpop.f32.mrb[0].mxu0
    %v8797 = vadd.f32 %v8604, %v8796
    %v8798 = vpop.f32.mrb[0].mxu0
    %v8799 = vadd.f32 %v8606, %v8798
    %v8800 = vpop.f32.mrb[0].mxu0
    %v8801 = vadd.f32 %v8608, %v8800
    %v8802 = vpop.f32.mrb[0].mxu0
    %v8803 = vadd.f32 %v8610, %v8802
    %8804 = vmatprep.mubr.bf16.mxu0 %v7570
    %8805 = vmatmul.mubr.bf16.gmra.mrb[0].mxu0 %v7569
    %v8806 = vpop.f32.mrb[0].mxu0
    %v8807 = vadd.f32 %v8614, %v8806
    %v8808 = vpop.f32.mrb[0].mxu0
    %v8809 = vadd.f32 %v8616, %v8808
    %v8810 = vpop.f32.mrb[0].mxu0
    %v8811 = vadd.f32 %v8618, %v8810
    %v8812 = vpop.f32.mrb[0].mxu0
    %v8813 = vadd.f32 %v8620, %v8812
    %8814 = vmatprep.mubr.bf16.mxu0 %v7578
    %8815 = vmatmul.mubr.bf16.gmra.mrb[0].mxu0 %v7577
    %v8816 = vpop.f32.mrb[0].mxu0
    %v8817 = vadd.f32 %v8624, %v8816
    %v8818 = vpop.f32.mrb[0].mxu0
    %v8819 = vadd.f32 %v8626, %v8818
    %v8820 = vpop.f32.mrb[0].mxu0
    %v8821 = vadd.f32 %v8628, %v8820
    %v8822 = vpop.f32.mrb[0].mxu0
    %v8823 = vadd.f32 %v8630, %v8822
    %8824 = vmatprep.mubr.bf16.mxu0 %v7586
    %8825 = vmatmul.mubr.bf16.gmra.mrb[0].mxu0 %v7585
    %v8826 = vpop.f32.mrb[0].mxu0
    %v8827 = vadd.f32 %v8634, %v8826
    %v8828 = vpop.f32.mrb[0].mxu0
    %v8829 = vadd.f32 %v8636, %v8828
    %v8830 = vpop.f32.mrb[0].mxu0
    %v8831 = vadd.f32 %v8638, %v8830
    %v8832 = vpop.f32.mrb[0].mxu0
    %v8833 = vadd.f32 %v8640, %v8832
    %8834 = vmatprep.mubr.bf16.mxu0 %v7594
    %8835 = vmatmul.mubr.bf16.gmra.mrb[0].mxu0 %v7593
    %v8836 = vpop.f32.mrb[0].mxu0
    %v8837 = vadd.f32 %v8644, %v8836
    %v8838 = vpop.f32.mrb[0].mxu0
    %v8839 = vadd.f32 %v8646, %v8838
    %v8840 = vpop.f32.mrb[0].mxu0
    %v8841 = vadd.f32 %v8648, %v8840
    %v8842 = vpop.f32.mrb[0].mxu0
    %v8843 = vadd.f32 %v8650, %v8842
    %8844 = vmatprep.mubr.bf16.mxu0 %v7602
    %8845 = vmatmul.mubr.bf16.gmra.mrb[0].mxu0 %v7601
    %v8846 = vpop.f32.mrb[0].mxu0
    %v8847 = vadd.f32 %v8654, %v8846
    %v8848 = vpop.f32.mrb[0].mxu0
    %v8849 = vadd.f32 %v8656, %v8848
    %v8850 = vpop.f32.mrb[0].mxu0
    %v8851 = vadd.f32 %v8658, %v8850
    %v8852 = vpop.f32.mrb[0].mxu0
    %v8853 = vadd.f32 %v8660, %v8852
    %8854 = vmatprep.mubr.bf16.mxu0 %v7610
    %8855 = vmatmul.mubr.bf16.gmra.mrb[0].mxu0 %v7609
    %v8856 = vpop.f32.mrb[0].mxu0
    %v8857 = vadd.f32 %v8664, %v8856
    %v8858 = vpop.f32.mrb[0].mxu0
    %v8859 = vadd.f32 %v8666, %v8858
    %v8860 = vpop.f32.mrb[0].mxu0
    %v8861 = vadd.f32 %v8668, %v8860
    %v8862 = vpop.f32.mrb[0].mxu0
    %v8863 = vadd.f32 %v8670, %v8862
    %8864 = vmatprep.mubr.bf16.mxu0 %v7618
    %8865 = vmatmul.mubr.bf16.gmra.mrb[0].mxu0 %v7617
    %v8866 = vpop.f32.mrb[0].mxu0
    %v8867 = vadd.f32 %v8674, %v8866
    %v8868 = vpop.f32.mrb[0].mxu0
    %v8869 = vadd.f32 %v8676, %v8868
    %v8870 = vpop.f32.mrb[0].mxu0
    %v8871 = vadd.f32 %v8678, %v8870
    %v8872 = vpop.f32.mrb[0].mxu0
    %v8873 = vadd.f32 %v8680, %v8872
    %8874 = vdwg.mxu0
    %8875 = vmatprep.subr.bf16.mxu0 %v7622
    %8876 = vmatpush1.bf16.msra.mxu0 %v7621
    %8877 = vmatprep.subr.bf16.mxu0 %v7629
    %8878 = vmatpush1.bf16.msra.mxu0 %v7628
    %8879 = vmatprep.subr.bf16.mxu0 %v7636
    %8880 = vmatpush1.bf16.msra.mxu0 %v7635
    %8881 = vmatprep.subr.bf16.mxu0 %v7643
    %8882 = vmatpush1.bf16.msra.mxu0 %v7642
    %8883 = vmatprep.subr.bf16.mxu0 %v7650
    %8884 = vmatpush1.bf16.msra.mxu0 %v7649
    %8885 = vmatprep.subr.bf16.mxu0 %v7657
    %8886 = vmatpush1.bf16.msra.mxu0 %v7656
    %8887 = vmatprep.subr.bf16.mxu0 %v7664
    %8888 = vmatpush1.bf16.msra.mxu0 %v7663
    %8889 = vmatprep.subr.bf16.mxu0 %v7671
    %8890 = vmatpush1.bf16.msra.mxu0 %v7670
    %8891 = vmatprep.subr.bf16.mxu0 %v7678
    %8892 = vmatpush1.bf16.msra.mxu0 %v7677
    %8893 = vmatprep.subr.bf16.mxu0 %v7685
    %8894 = vmatpush1.bf16.msra.mxu0 %v7684
    %8895 = vmatprep.subr.bf16.mxu0 %v7692
    %8896 = vmatpush1.bf16.msra.mxu0 %v7691
    %8897 = vmatprep.subr.bf16.mxu0 %v7699
    %8898 = vmatpush1.bf16.msra.mxu0 %v7698
    %8899 = vmatprep.subr.bf16.mxu0 %v7706
    %8900 = vmatpush1.bf16.msra.mxu0 %v7705
    %8901 = vmatprep.subr.bf16.mxu0 %v7713
    %8902 = vmatpush1.bf16.msra.mxu0 %v7712
    %8903 = vmatprep.subr.bf16.mxu0 %v7720
    %8904 = vmatpush1.bf16.msra.mxu0 %v7719
    %8905 = vmatprep.subr.bf16.mxu0 %v7727
    %8906 = vmatpush1.bf16.msra.mxu0 %v7726
    %8907 = vmatprep.mubr.bf16.mxu0 %v7492
    %8908 = vmatmul.mubr.bf16.gmra.mrb[0].mxu0 %v7491
    %v8909 = vpop.f32.mrb[0].mxu0
    %v8910 = vadd.f32 %v8079, %v8909
    %v8911 = vpop.f32.mrb[0].mxu0
    %v8912 = vadd.f32 %v8083, %v8911
    %v8913 = vpop.f32.mrb[0].mxu0
    %v8914 = vadd.f32 %v8079, %v8913
    %v8915 = vpop.f32.mrb[0].mxu0
    %v8916 = vadd.f32 %v8083, %v8915
    %8917 = vmatprep.mubr.bf16.mxu0 %v7500
    %8918 = vmatmul.mubr.bf16.gmra.mrb[0].mxu0 %v7499
    %v8919 = vpop.f32.mrb[0].mxu0
    %v8920 = vadd.f32 %v8079, %v8919
    %v8921 = vpop.f32.mrb[0].mxu0
    %v8922 = vadd.f32 %v8083, %v8921
    %v8923 = vpop.f32.mrb[0].mxu0
    %v8924 = vadd.f32 %v8079, %v8923
    %v8925 = vpop.f32.mrb[0].mxu0
    %v8926 = vadd.f32 %v8083, %v8925
    %8927 = vmatprep.mubr.bf16.mxu0 %v7508
    %8928 = vmatmul.mubr.bf16.gmra.mrb[0].mxu0 %v7507
    %v8929 = vpop.f32.mrb[0].mxu0
    %v8930 = vadd.f32 %v8079, %v8929
    %v8931 = vpop.f32.mrb[0].mxu0
    %v8932 = vadd.f32 %v8083, %v8931
    %v8933 = vpop.f32.mrb[0].mxu0
    %v8934 = vadd.f32 %v8079, %v8933
    %v8935 = vpop.f32.mrb[0].mxu0
    %v8936 = vadd.f32 %v8083, %v8935
    %8937 = vmatprep.mubr.bf16.mxu0 %v7516
    %8938 = vmatmul.mubr.bf16.gmra.mrb[0].mxu0 %v7515
    %v8939 = vpop.f32.mrb[0].mxu0
    %v8940 = vadd.f32 %v8079, %v8939
    %v8941 = vpop.f32.mrb[0].mxu0
    %v8942 = vadd.f32 %v8083, %v8941
    %v8943 = vpop.f32.mrb[0].mxu0
    %v8944 = vadd.f32 %v8079, %v8943
    %v8945 = vpop.f32.mrb[0].mxu0
    %v8946 = vadd.f32 %v8083, %v8945
    %8947 = vmatprep.mubr.bf16.mxu0 %v7524
    %8948 = vmatmul.mubr.bf16.gmra.mrb[0].mxu0 %v7523
    %v8949 = vpop.f32.mrb[0].mxu0
    %v8950 = vadd.f32 %v8079, %v8949
    %v8951 = vpop.f32.mrb[0].mxu0
    %v8952 = vadd.f32 %v8083, %v8951
    %v8953 = vpop.f32.mrb[0].mxu0
    %v8954 = vadd.f32 %v8079, %v8953
    %v8955 = vpop.f32.mrb[0].mxu0
    %v8956 = vadd.f32 %v8083, %v8955
    %8957 = vmatprep.mubr.bf16.mxu0 %v7532
    %8958 = vmatmul.mubr.bf16.gmra.mrb[0].mxu0 %v7531
    %v8959 = vpop.f32.mrb[0].mxu0
    %v8960 = vadd.f32 %v8079, %v8959
    %v8961 = vpop.f32.mrb[0].mxu0
    %v8962 = vadd.f32 %v8083, %v8961
    %v8963 = vpop.f32.mrb[0].mxu0
    %v8964 = vadd.f32 %v8079, %v8963
    %v8965 = vpop.f32.mrb[0].mxu0
    %v8966 = vadd.f32 %v8083, %v8965
    %8967 = vmatprep.mubr.bf16.mxu0 %v7540
    %8968 = vmatmul.mubr.bf16.gmra.mrb[0].mxu0 %v7539
    %v8969 = vpop.f32.mrb[0].mxu0
    %v8970 = vadd.f32 %v8079, %v8969
    %v8971 = vpop.f32.mrb[0].mxu0
    %v8972 = vadd.f32 %v8083, %v8971
    %v8973 = vpop.f32.mrb[0].mxu0
    %v8974 = vadd.f32 %v8079, %v8973
    %v8975 = vpop.f32.mrb[0].mxu0
    %v8976 = vadd.f32 %v8083, %v8975
    %8977 = vmatprep.mubr.bf16.mxu0 %v7548
    %8978 = vmatmul.mubr.bf16.gmra.mrb[0].mxu0 %v7547
    %v8979 = vpop.f32.mrb[0].mxu0
    %v8980 = vadd.f32 %v8079, %v8979
    %v8981 = vpop.f32.mrb[0].mxu0
    %v8982 = vadd.f32 %v8083, %v8981
    %v8983 = vpop.f32.mrb[0].mxu0
    %v8984 = vadd.f32 %v8079, %v8983
    %v8985 = vpop.f32.mrb[0].mxu0
    %v8986 = vadd.f32 %v8083, %v8985
    %8987 = vmatprep.mubr.bf16.mxu0 %v7556
    %8988 = vmatmul.mubr.bf16.gmra.mrb[0].mxu0 %v7555
    %v8989 = vpop.f32.mrb[0].mxu0
    %v8990 = vadd.f32 %v8079, %v8989
    %v8991 = vpop.f32.mrb[0].mxu0
    %v8992 = vadd.f32 %v8083, %v8991
    %v8993 = vpop.f32.mrb[0].mxu0
    %v8994 = vadd.f32 %v8079, %v8993
    %v8995 = vpop.f32.mrb[0].mxu0
    %v8996 = vadd.f32 %v8083, %v8995
    %8997 = vmatprep.mubr.bf16.mxu0 %v7564
    %8998 = vmatmul.mubr.bf16.gmra.mrb[0].mxu0 %v7563
    %v8999 = vpop.f32.mrb[0].mxu0
    %v9000 = vadd.f32 %v8079, %v8999
    %v9001 = vpop.f32.mrb[0].mxu0
    %v9002 = vadd.f32 %v8083, %v9001
    %v9003 = vpop.f32.mrb[0].mxu0
    %v9004 = vadd.f32 %v8079, %v9003
    %v9005 = vpop.f32.mrb[0].mxu0
    %v9006 = vadd.f32 %v8083, %v9005
    %9007 = vmatprep.mubr.bf16.mxu0 %v7572
    %9008 = vmatmul.mubr.bf16.gmra.mrb[0].mxu0 %v7571
    %v9009 = vpop.f32.mrb[0].mxu0
    %v9010 = vadd.f32 %v8079, %v9009
    %v9011 = vpop.f32.mrb[0].mxu0
    %v9012 = vadd.f32 %v8083, %v9011
    %v9013 = vpop.f32.mrb[0].mxu0
    %v9014 = vadd.f32 %v8079, %v9013
    %v9015 = vpop.f32.mrb[0].mxu0
    %v9016 = vadd.f32 %v8083, %v9015
    %9017 = vmatprep.mubr.bf16.mxu0 %v7580
    %9018 = vmatmul.mubr.bf16.gmra.mrb[0].mxu0 %v7579
    %v9019 = vpop.f32.mrb[0].mxu0
    %v9020 = vadd.f32 %v8079, %v9019
    %v9021 = vpop.f32.mrb[0].mxu0
    %v9022 = vadd.f32 %v8083, %v9021
    %v9023 = vpop.f32.mrb[0].mxu0
    %v9024 = vadd.f32 %v8079, %v9023
    %v9025 = vpop.f32.mrb[0].mxu0
    %v9026 = vadd.f32 %v8083, %v9025
    %9027 = vmatprep.mubr.bf16.mxu0 %v7588
    %9028 = vmatmul.mubr.bf16.gmra.mrb[0].mxu0 %v7587
    %v9029 = vpop.f32.mrb[0].mxu0
    %v9030 = vadd.f32 %v8079, %v9029
    %v9031 = vpop.f32.mrb[0].mxu0
    %v9032 = vadd.f32 %v8083, %v9031
    %v9033 = vpop.f32.mrb[0].mxu0
    %v9034 = vadd.f32 %v8079, %v9033
    %v9035 = vpop.f32.mrb[0].mxu0
    %v9036 = vadd.f32 %v8083, %v9035
    %9037 = vmatprep.mubr.bf16.mxu0 %v7596
    %9038 = vmatmul.mubr.bf16.gmra.mrb[0].mxu0 %v7595
    %v9039 = vpop.f32.mrb[0].mxu0
    %v9040 = vadd.f32 %v8079, %v9039
    %v9041 = vpop.f32.mrb[0].mxu0
    %v9042 = vadd.f32 %v8083, %v9041
    %v9043 = vpop.f32.mrb[0].mxu0
    %v9044 = vadd.f32 %v8079, %v9043
    %v9045 = vpop.f32.mrb[0].mxu0
    %v9046 = vadd.f32 %v8083, %v9045
    %9047 = vmatprep.mubr.bf16.mxu0 %v7604
    %9048 = vmatmul.mubr.bf16.gmra.mrb[0].mxu0 %v7603
    %v9049 = vpop.f32.mrb[0].mxu0
    %v9050 = vadd.f32 %v8079, %v9049
    %v9051 = vpop.f32.mrb[0].mxu0
    %v9052 = vadd.f32 %v8083, %v9051
    %v9053 = vpop.f32.mrb[0].mxu0
    %v9054 = vadd.f32 %v8079, %v9053
    %v9055 = vpop.f32.mrb[0].mxu0
    %v9056 = vadd.f32 %v8083, %v9055
    %9057 = vmatprep.mubr.bf16.mxu0 %v7612
    %9058 = vmatmul.mubr.bf16.gmra.mrb[0].mxu0 %v7611
    %v9059 = vpop.f32.mrb[0].mxu0
    %v9060 = vadd.f32 %v8079, %v9059
    %v9061 = vpop.f32.mrb[0].mxu0
    %v9062 = vadd.f32 %v8083, %v9061
    %v9063 = vpop.f32.mrb[0].mxu0
    %v9064 = vadd.f32 %v8079, %v9063
    %v9065 = vpop.f32.mrb[0].mxu0
    %v9066 = vadd.f32 %v8083, %v9065
    %9067 = vdwg.mxu0
    %9068 = vmatprep.subr.bf16.mxu0 %v7734
    %9069 = vmatpush1.bf16.msra.mxu0 %v7733
    %9070 = vmatprep.subr.bf16.mxu0 %v7741
    %9071 = vmatpush1.bf16.msra.mxu0 %v7740
    %9072 = vmatprep.subr.bf16.mxu0 %v7748
    %9073 = vmatpush1.bf16.msra.mxu0 %v7747
    %9074 = vmatprep.subr.bf16.mxu0 %v7755
    %9075 = vmatpush1.bf16.msra.mxu0 %v7754
    %9076 = vmatprep.subr.bf16.mxu0 %v7762
    %9077 = vmatpush1.bf16.msra.mxu0 %v7761
    %9078 = vmatprep.subr.bf16.mxu0 %v7769
    %9079 = vmatpush1.bf16.msra.mxu0 %v7768
    %9080 = vmatprep.subr.bf16.mxu0 %v7776
    %9081 = vmatpush1.bf16.msra.mxu0 %v7775
    %9082 = vmatprep.subr.bf16.mxu0 %v7783
    %9083 = vmatpush1.bf16.msra.mxu0 %v7782
    %9084 = vmatprep.subr.bf16.mxu0 %v7790
    %9085 = vmatpush1.bf16.msra.mxu0 %v7789
    %9086 = vmatprep.subr.bf16.mxu0 %v7797
    %9087 = vmatpush1.bf16.msra.mxu0 %v7796
    %9088 = vmatprep.subr.bf16.mxu0 %v7804
    %9089 = vmatpush1.bf16.msra.mxu0 %v7803
    %9090 = vmatprep.subr.bf16.mxu0 %v7811
    %9091 = vmatpush1.bf16.msra.mxu0 %v7810
    %9092 = vmatprep.subr.bf16.mxu0 %v7818
    %9093 = vmatpush1.bf16.msra.mxu0 %v7817
    %9094 = vmatprep.subr.bf16.mxu0 %v7825
    %9095 = vmatpush1.bf16.msra.mxu0 %v7824
    %9096 = vmatprep.subr.bf16.mxu0 %v7832
    %9097 = vmatpush1.bf16.msra.mxu0 %v7831
    %9098 = vmatprep.subr.bf16.mxu0 %v7839
    %9099 = vmatpush1.bf16.msra.mxu0 %v7838
    %9100 = vmatprep.mubr.bf16.mxu0 %v7494
    %9101 = vmatmul.mubr.bf16.gmra.mrb[0].mxu0 %v7493
    %v9102 = vpop.f32.mrb[0].mxu0
    %v9103 = vadd.f32 %v8910, %v9102
    %v9104 = vpop.f32.mrb[0].mxu0
    %v9105 = vadd.f32 %v8912, %v9104
    %v9106 = vpop.f32.mrb[0].mxu0
    %v9107 = vadd.f32 %v8914, %v9106
    %v9108 = vpop.f32.mrb[0].mxu0
    %v9109 = vadd.f32 %v8916, %v9108
    %9110 = vmatprep.mubr.bf16.mxu0 %v7502
    %9111 = vmatmul.mubr.bf16.gmra.mrb[0].mxu0 %v7501
    %v9112 = vpop.f32.mrb[0].mxu0
    %v9113 = vadd.f32 %v8920, %v9112
    %v9114 = vpop.f32.mrb[0].mxu0
    %v9115 = vadd.f32 %v8922, %v9114
    %v9116 = vpop.f32.mrb[0].mxu0
    %v9117 = vadd.f32 %v8924, %v9116
    %v9118 = vpop.f32.mrb[0].mxu0
    %v9119 = vadd.f32 %v8926, %v9118
    %9120 = vmatprep.mubr.bf16.mxu0 %v7510
    %9121 = vmatmul.mubr.bf16.gmra.mrb[0].mxu0 %v7509
    %v9122 = vpop.f32.mrb[0].mxu0
    %v9123 = vadd.f32 %v8930, %v9122
    %v9124 = vpop.f32.mrb[0].mxu0
    %v9125 = vadd.f32 %v8932, %v9124
    %v9126 = vpop.f32.mrb[0].mxu0
    %v9127 = vadd.f32 %v8934, %v9126
    %v9128 = vpop.f32.mrb[0].mxu0
    %v9129 = vadd.f32 %v8936, %v9128
    %9130 = vmatprep.mubr.bf16.mxu0 %v7518
    %9131 = vmatmul.mubr.bf16.gmra.mrb[0].mxu0 %v7517
    %v9132 = vpop.f32.mrb[0].mxu0
    %v9133 = vadd.f32 %v8940, %v9132
    %v9134 = vpop.f32.mrb[0].mxu0
    %v9135 = vadd.f32 %v8942, %v9134
    %v9136 = vpop.f32.mrb[0].mxu0
    %v9137 = vadd.f32 %v8944, %v9136
    %v9138 = vpop.f32.mrb[0].mxu0
    %v9139 = vadd.f32 %v8946, %v9138
    %9140 = vmatprep.mubr.bf16.mxu0 %v7526
    %9141 = vmatmul.mubr.bf16.gmra.mrb[0].mxu0 %v7525
    %v9142 = vpop.f32.mrb[0].mxu0
    %v9143 = vadd.f32 %v8950, %v9142
    %v9144 = vpop.f32.mrb[0].mxu0
    %v9145 = vadd.f32 %v8952, %v9144
    %v9146 = vpop.f32.mrb[0].mxu0
    %v9147 = vadd.f32 %v8954, %v9146
    %v9148 = vpop.f32.mrb[0].mxu0
    %v9149 = vadd.f32 %v8956, %v9148
    %9150 = vmatprep.mubr.bf16.mxu0 %v7534
    %9151 = vmatmul.mubr.bf16.gmra.mrb[0].mxu0 %v7533
    %v9152 = vpop.f32.mrb[0].mxu0
    %v9153 = vadd.f32 %v8960, %v9152
    %v9154 = vpop.f32.mrb[0].mxu0
    %v9155 = vadd.f32 %v8962, %v9154
    %v9156 = vpop.f32.mrb[0].mxu0
    %v9157 = vadd.f32 %v8964, %v9156
    %v9158 = vpop.f32.mrb[0].mxu0
    %v9159 = vadd.f32 %v8966, %v9158
    %9160 = vmatprep.mubr.bf16.mxu0 %v7542
    %9161 = vmatmul.mubr.bf16.gmra.mrb[0].mxu0 %v7541
    %v9162 = vpop.f32.mrb[0].mxu0
    %v9163 = vadd.f32 %v8970, %v9162
    %v9164 = vpop.f32.mrb[0].mxu0
    %v9165 = vadd.f32 %v8972, %v9164
    %v9166 = vpop.f32.mrb[0].mxu0
    %v9167 = vadd.f32 %v8974, %v9166
    %v9168 = vpop.f32.mrb[0].mxu0
    %v9169 = vadd.f32 %v8976, %v9168
    %9170 = vmatprep.mubr.bf16.mxu0 %v7550
    %9171 = vmatmul.mubr.bf16.gmra.mrb[0].mxu0 %v7549
    %v9172 = vpop.f32.mrb[0].mxu0
    %v9173 = vadd.f32 %v8980, %v9172
    %v9174 = vpop.f32.mrb[0].mxu0
    %v9175 = vadd.f32 %v8982, %v9174
    %v9176 = vpop.f32.mrb[0].mxu0
    %v9177 = vadd.f32 %v8984, %v9176
    %v9178 = vpop.f32.mrb[0].mxu0
    %v9179 = vadd.f32 %v8986, %v9178
    %9180 = vmatprep.mubr.bf16.mxu0 %v7558
    %9181 = vmatmul.mubr.bf16.gmra.mrb[0].mxu0 %v7557
    %v9182 = vpop.f32.mrb[0].mxu0
    %v9183 = vadd.f32 %v8990, %v9182
    %v9184 = vpop.f32.mrb[0].mxu0
    %v9185 = vadd.f32 %v8992, %v9184
    %v9186 = vpop.f32.mrb[0].mxu0
    %v9187 = vadd.f32 %v8994, %v9186
    %v9188 = vpop.f32.mrb[0].mxu0
    %v9189 = vadd.f32 %v8996, %v9188
    %9190 = vmatprep.mubr.bf16.mxu0 %v7566
    %9191 = vmatmul.mubr.bf16.gmra.mrb[0].mxu0 %v7565
    %v9192 = vpop.f32.mrb[0].mxu0
    %v9193 = vadd.f32 %v9000, %v9192
    %v9194 = vpop.f32.mrb[0].mxu0
    %v9195 = vadd.f32 %v9002, %v9194
    %v9196 = vpop.f32.mrb[0].mxu0
    %v9197 = vadd.f32 %v9004, %v9196
    %v9198 = vpop.f32.mrb[0].mxu0
    %v9199 = vadd.f32 %v9006, %v9198
    %9200 = vmatprep.mubr.bf16.mxu0 %v7574
    %9201 = vmatmul.mubr.bf16.gmra.mrb[0].mxu0 %v7573
    %v9202 = vpop.f32.mrb[0].mxu0
    %v9203 = vadd.f32 %v9010, %v9202
    %v9204 = vpop.f32.mrb[0].mxu0
    %v9205 = vadd.f32 %v9012, %v9204
    %v9206 = vpop.f32.mrb[0].mxu0
    %v9207 = vadd.f32 %v9014, %v9206
    %v9208 = vpop.f32.mrb[0].mxu0
    %v9209 = vadd.f32 %v9016, %v9208
    %9210 = vmatprep.mubr.bf16.mxu0 %v7582
    %9211 = vmatmul.mubr.bf16.gmra.mrb[0].mxu0 %v7581
    %v9212 = vpop.f32.mrb[0].mxu0
    %v9213 = vadd.f32 %v9020, %v9212
    %v9214 = vpop.f32.mrb[0].mxu0
    %v9215 = vadd.f32 %v9022, %v9214
    %v9216 = vpop.f32.mrb[0].mxu0
    %v9217 = vadd.f32 %v9024, %v9216
    %v9218 = vpop.f32.mrb[0].mxu0
    %v9219 = vadd.f32 %v9026, %v9218
    %9220 = vmatprep.mubr.bf16.mxu0 %v7590
    %9221 = vmatmul.mubr.bf16.gmra.mrb[0].mxu0 %v7589
    %v9222 = vpop.f32.mrb[0].mxu0
    %v9223 = vadd.f32 %v9030, %v9222
    %v9224 = vpop.f32.mrb[0].mxu0
    %v9225 = vadd.f32 %v9032, %v9224
    %v9226 = vpop.f32.mrb[0].mxu0
    %v9227 = vadd.f32 %v9034, %v9226
    %v9228 = vpop.f32.mrb[0].mxu0
    %v9229 = vadd.f32 %v9036, %v9228
    %9230 = vmatprep.mubr.bf16.mxu0 %v7598
    %9231 = vmatmul.mubr.bf16.gmra.mrb[0].mxu0 %v7597
    %v9232 = vpop.f32.mrb[0].mxu0
    %v9233 = vadd.f32 %v9040, %v9232
    %v9234 = vpop.f32.mrb[0].mxu0
    %v9235 = vadd.f32 %v9042, %v9234
    %v9236 = vpop.f32.mrb[0].mxu0
    %v9237 = vadd.f32 %v9044, %v9236
    %v9238 = vpop.f32.mrb[0].mxu0
    %v9239 = vadd.f32 %v9046, %v9238
    %9240 = vmatprep.mubr.bf16.mxu0 %v7606
    %9241 = vmatmul.mubr.bf16.gmra.mrb[0].mxu0 %v7605
    %v9242 = vpop.f32.mrb[0].mxu0
    %v9243 = vadd.f32 %v9050, %v9242
    %v9244 = vpop.f32.mrb[0].mxu0
    %v9245 = vadd.f32 %v9052, %v9244
    %v9246 = vpop.f32.mrb[0].mxu0
    %v9247 = vadd.f32 %v9054, %v9246
    %v9248 = vpop.f32.mrb[0].mxu0
    %v9249 = vadd.f32 %v9056, %v9248
    %9250 = vmatprep.mubr.bf16.mxu0 %v7614
    %9251 = vmatmul.mubr.bf16.gmra.mrb[0].mxu0 %v7613
    %v9252 = vpop.f32.mrb[0].mxu0
    %v9253 = vadd.f32 %v9060, %v9252
    %v9254 = vpop.f32.mrb[0].mxu0
    %v9255 = vadd.f32 %v9062, %v9254
    %v9256 = vpop.f32.mrb[0].mxu0
    %v9257 = vadd.f32 %v9064, %v9256
    %v9258 = vpop.f32.mrb[0].mxu0
    %v9259 = vadd.f32 %v9066, %v9258
    %9260 = vdwg.mxu0
    %9261 = vmatprep.subr.bf16.mxu0 %v7846
    %9262 = vmatpush1.bf16.msra.mxu0 %v7845
    %9263 = vmatprep.subr.bf16.mxu0 %v7853
    %9264 = vmatpush1.bf16.msra.mxu0 %v7852
    %9265 = vmatprep.subr.bf16.mxu0 %v7860
    %9266 = vmatpush1.bf16.msra.mxu0 %v7859
    %9267 = vmatprep.subr.bf16.mxu0 %v7867
    %9268 = vmatpush1.bf16.msra.mxu0 %v7866
    %9269 = vmatprep.subr.bf16.mxu0 %v7874
    %9270 = vmatpush1.bf16.msra.mxu0 %v7873
    %9271 = vmatprep.subr.bf16.mxu0 %v7881
    %9272 = vmatpush1.bf16.msra.mxu0 %v7880
    %9273 = vmatprep.subr.bf16.mxu0 %v7888
    %9274 = vmatpush1.bf16.msra.mxu0 %v7887
    %9275 = vmatprep.subr.bf16.mxu0 %v7895
    %9276 = vmatpush1.bf16.msra.mxu0 %v7894
    %9277 = vmatprep.subr.bf16.mxu0 %v7902
    %9278 = vmatpush1.bf16.msra.mxu0 %v7901
    %9279 = vmatprep.subr.bf16.mxu0 %v7909
    %9280 = vmatpush1.bf16.msra.mxu0 %v7908
    %9281 = vmatprep.subr.bf16.mxu0 %v7916
    %9282 = vmatpush1.bf16.msra.mxu0 %v7915
    %9283 = vmatprep.subr.bf16.mxu0 %v7923
    %9284 = vmatpush1.bf16.msra.mxu0 %v7922
    %9285 = vmatprep.subr.bf16.mxu0 %v7930
    %9286 = vmatpush1.bf16.msra.mxu0 %v7929
    %9287 = vmatprep.subr.bf16.mxu0 %v7937
    %9288 = vmatpush1.bf16.msra.mxu0 %v7936
    %9289 = vmatprep.subr.bf16.mxu0 %v7944
    %9290 = vmatpush1.bf16.msra.mxu0 %v7943
    %9291 = vmatprep.subr.bf16.mxu0 %v7951
    %9292 = vmatpush1.bf16.msra.mxu0 %v7950
    %9293 = vmatprep.mubr.bf16.mxu0 %v7496
    %9294 = vmatmul.mubr.bf16.gmra.mrb[0].mxu0 %v7495
    %v9295 = vpop.f32.mrb[0].mxu0
    %v9296 = vadd.f32 %v9103, %v9295
    %v9297 = vpop.f32.mrb[0].mxu0
    %v9298 = vadd.f32 %v9105, %v9297
    %v9299 = vpop.f32.mrb[0].mxu0
    %v9300 = vadd.f32 %v9107, %v9299
    %v9301 = vpop.f32.mrb[0].mxu0
    %v9302 = vadd.f32 %v9109, %v9301
    %9303 = vmatprep.mubr.bf16.mxu0 %v7504
    %9304 = vmatmul.mubr.bf16.gmra.mrb[0].mxu0 %v7503
    %v9305 = vpop.f32.mrb[0].mxu0
    %v9306 = vadd.f32 %v9113, %v9305
    %v9307 = vpop.f32.mrb[0].mxu0
    %v9308 = vadd.f32 %v9115, %v9307
    %v9309 = vpop.f32.mrb[0].mxu0
    %v9310 = vadd.f32 %v9117, %v9309
    %v9311 = vpop.f32.mrb[0].mxu0
    %v9312 = vadd.f32 %v9119, %v9311
    %9313 = vmatprep.mubr.bf16.mxu0 %v7512
    %9314 = vmatmul.mubr.bf16.gmra.mrb[0].mxu0 %v7511
    %v9315 = vpop.f32.mrb[0].mxu0
    %v9316 = vadd.f32 %v9123, %v9315
    %v9317 = vpop.f32.mrb[0].mxu0
    %v9318 = vadd.f32 %v9125, %v9317
    %v9319 = vpop.f32.mrb[0].mxu0
    %v9320 = vadd.f32 %v9127, %v9319
    %v9321 = vpop.f32.mrb[0].mxu0
    %v9322 = vadd.f32 %v9129, %v9321
    %9323 = vmatprep.mubr.bf16.mxu0 %v7520
    %9324 = vmatmul.mubr.bf16.gmra.mrb[0].mxu0 %v7519
    %v9325 = vpop.f32.mrb[0].mxu0
    %v9326 = vadd.f32 %v9133, %v9325
    %v9327 = vpop.f32.mrb[0].mxu0
    %v9328 = vadd.f32 %v9135, %v9327
    %v9329 = vpop.f32.mrb[0].mxu0
    %v9330 = vadd.f32 %v9137, %v9329
    %v9331 = vpop.f32.mrb[0].mxu0
    %v9332 = vadd.f32 %v9139, %v9331
    %9333 = vmatprep.mubr.bf16.mxu0 %v7528
    %9334 = vmatmul.mubr.bf16.gmra.mrb[0].mxu0 %v7527
    %v9335 = vpop.f32.mrb[0].mxu0
    %v9336 = vadd.f32 %v9143, %v9335
    %v9337 = vpop.f32.mrb[0].mxu0
    %v9338 = vadd.f32 %v9145, %v9337
    %v9339 = vpop.f32.mrb[0].mxu0
    %v9340 = vadd.f32 %v9147, %v9339
    %v9341 = vpop.f32.mrb[0].mxu0
    %v9342 = vadd.f32 %v9149, %v9341
    %9343 = vmatprep.mubr.bf16.mxu0 %v7536
    %9344 = vmatmul.mubr.bf16.gmra.mrb[0].mxu0 %v7535
    %v9345 = vpop.f32.mrb[0].mxu0
    %v9346 = vadd.f32 %v9153, %v9345
    %v9347 = vpop.f32.mrb[0].mxu0
    %v9348 = vadd.f32 %v9155, %v9347
    %v9349 = vpop.f32.mrb[0].mxu0
    %v9350 = vadd.f32 %v9157, %v9349
    %v9351 = vpop.f32.mrb[0].mxu0
    %v9352 = vadd.f32 %v9159, %v9351
    %9353 = vmatprep.mubr.bf16.mxu0 %v7544
    %9354 = vmatmul.mubr.bf16.gmra.mrb[0].mxu0 %v7543
    %v9355 = vpop.f32.mrb[0].mxu0
    %v9356 = vadd.f32 %v9163, %v9355
    %v9357 = vpop.f32.mrb[0].mxu0
    %v9358 = vadd.f32 %v9165, %v9357
    %v9359 = vpop.f32.mrb[0].mxu0
    %v9360 = vadd.f32 %v9167, %v9359
    %v9361 = vpop.f32.mrb[0].mxu0
    %v9362 = vadd.f32 %v9169, %v9361
    %9363 = vmatprep.mubr.bf16.mxu0 %v7552
    %9364 = vmatmul.mubr.bf16.gmra.mrb[0].mxu0 %v7551
    %v9365 = vpop.f32.mrb[0].mxu0
    %v9366 = vadd.f32 %v9173, %v9365
    %v9367 = vpop.f32.mrb[0].mxu0
    %v9368 = vadd.f32 %v9175, %v9367
    %v9369 = vpop.f32.mrb[0].mxu0
    %v9370 = vadd.f32 %v9177, %v9369
    %v9371 = vpop.f32.mrb[0].mxu0
    %v9372 = vadd.f32 %v9179, %v9371
    %9373 = vmatprep.mubr.bf16.mxu0 %v7560
    %9374 = vmatmul.mubr.bf16.gmra.mrb[0].mxu0 %v7559
    %v9375 = vpop.f32.mrb[0].mxu0
    %v9376 = vadd.f32 %v9183, %v9375
    %v9377 = vpop.f32.mrb[0].mxu0
    %v9378 = vadd.f32 %v9185, %v9377
    %v9379 = vpop.f32.mrb[0].mxu0
    %v9380 = vadd.f32 %v9187, %v9379
    %v9381 = vpop.f32.mrb[0].mxu0
    %v9382 = vadd.f32 %v9189, %v9381
    %9383 = vmatprep.mubr.bf16.mxu0 %v7568
    %9384 = vmatmul.mubr.bf16.gmra.mrb[0].mxu0 %v7567
    %v9385 = vpop.f32.mrb[0].mxu0
    %v9386 = vadd.f32 %v9193, %v9385
    %v9387 = vpop.f32.mrb[0].mxu0
    %v9388 = vadd.f32 %v9195, %v9387
    %v9389 = vpop.f32.mrb[0].mxu0
    %v9390 = vadd.f32 %v9197, %v9389
    %v9391 = vpop.f32.mrb[0].mxu0
    %v9392 = vadd.f32 %v9199, %v9391
    %9393 = vmatprep.mubr.bf16.mxu0 %v7576
    %9394 = vmatmul.mubr.bf16.gmra.mrb[0].mxu0 %v7575
    %v9395 = vpop.f32.mrb[0].mxu0
    %v9396 = vadd.f32 %v9203, %v9395
    %v9397 = vpop.f32.mrb[0].mxu0
    %v9398 = vadd.f32 %v9205, %v9397
    %v9399 = vpop.f32.mrb[0].mxu0
    %v9400 = vadd.f32 %v9207, %v9399
    %v9401 = vpop.f32.mrb[0].mxu0
    %v9402 = vadd.f32 %v9209, %v9401
    %9403 = vmatprep.mubr.bf16.mxu0 %v7584
    %9404 = vmatmul.mubr.bf16.gmra.mrb[0].mxu0 %v7583
    %v9405 = vpop.f32.mrb[0].mxu0
    %v9406 = vadd.f32 %v9213, %v9405
    %v9407 = vpop.f32.mrb[0].mxu0
    %v9408 = vadd.f32 %v9215, %v9407
    %v9409 = vpop.f32.mrb[0].mxu0
    %v9410 = vadd.f32 %v9217, %v9409
    %v9411 = vpop.f32.mrb[0].mxu0
    %v9412 = vadd.f32 %v9219, %v9411
    %9413 = vmatprep.mubr.bf16.mxu0 %v7592
    %9414 = vmatmul.mubr.bf16.gmra.mrb[0].mxu0 %v7591
    %v9415 = vpop.f32.mrb[0].mxu0
    %v9416 = vadd.f32 %v9223, %v9415
    %v9417 = vpop.f32.mrb[0].mxu0
    %v9418 = vadd.f32 %v9225, %v9417
    %v9419 = vpop.f32.mrb[0].mxu0
    %v9420 = vadd.f32 %v9227, %v9419
    %v9421 = vpop.f32.mrb[0].mxu0
    %v9422 = vadd.f32 %v9229, %v9421
    %9423 = vmatprep.mubr.bf16.mxu0 %v7600
    %9424 = vmatmul.mubr.bf16.gmra.mrb[0].mxu0 %v7599
    %v9425 = vpop.f32.mrb[0].mxu0
    %v9426 = vadd.f32 %v9233, %v9425
    %v9427 = vpop.f32.mrb[0].mxu0
    %v9428 = vadd.f32 %v9235, %v9427
    %v9429 = vpop.f32.mrb[0].mxu0
    %v9430 = vadd.f32 %v9237, %v9429
    %v9431 = vpop.f32.mrb[0].mxu0
    %v9432 = vadd.f32 %v9239, %v9431
    %9433 = vmatprep.mubr.bf16.mxu0 %v7608
    %9434 = vmatmul.mubr.bf16.gmra.mrb[0].mxu0 %v7607
    %v9435 = vpop.f32.mrb[0].mxu0
    %v9436 = vadd.f32 %v9243, %v9435
    %v9437 = vpop.f32.mrb[0].mxu0
    %v9438 = vadd.f32 %v9245, %v9437
    %v9439 = vpop.f32.mrb[0].mxu0
    %v9440 = vadd.f32 %v9247, %v9439
    %v9441 = vpop.f32.mrb[0].mxu0
    %v9442 = vadd.f32 %v9249, %v9441
    %9443 = vmatprep.mubr.bf16.mxu0 %v7616
    %9444 = vmatmul.mubr.bf16.gmra.mrb[0].mxu0 %v7615
    %v9445 = vpop.f32.mrb[0].mxu0
    %v9446 = vadd.f32 %v9253, %v9445
    %v9447 = vpop.f32.mrb[0].mxu0
    %v9448 = vadd.f32 %v9255, %v9447
    %v9449 = vpop.f32.mrb[0].mxu0
    %v9450 = vadd.f32 %v9257, %v9449
    %v9451 = vpop.f32.mrb[0].mxu0
    %v9452 = vadd.f32 %v9259, %v9451
    %9453 = vdwg.mxu0
    %9454 = vmatprep.subr.bf16.mxu0 %v7958
    %9455 = vmatpush1.bf16.msra.mxu0 %v7957
    %9456 = vmatprep.subr.bf16.mxu0 %v7965
    %9457 = vmatpush1.bf16.msra.mxu0 %v7964
    %9458 = vmatprep.subr.bf16.mxu0 %v7972
    %9459 = vmatpush1.bf16.msra.mxu0 %v7971
    %9460 = vmatprep.subr.bf16.mxu0 %v7979
    %9461 = vmatpush1.bf16.msra.mxu0 %v7978
    %9462 = vmatprep.subr.bf16.mxu0 %v7986
    %9463 = vmatpush1.bf16.msra.mxu0 %v7985
    %9464 = vmatprep.subr.bf16.mxu0 %v7993
    %9465 = vmatpush1.bf16.msra.mxu0 %v7992
    %9466 = vmatprep.subr.bf16.mxu0 %v8000
    %9467 = vmatpush1.bf16.msra.mxu0 %v7999
    %9468 = vmatprep.subr.bf16.mxu0 %v8007
    %9469 = vmatpush1.bf16.msra.mxu0 %v8006
    %9470 = vmatprep.subr.bf16.mxu0 %v8014
    %9471 = vmatpush1.bf16.msra.mxu0 %v8013
    %9472 = vmatprep.subr.bf16.mxu0 %v8021
    %9473 = vmatpush1.bf16.msra.mxu0 %v8020
    %9474 = vmatprep.subr.bf16.mxu0 %v8028
    %9475 = vmatpush1.bf16.msra.mxu0 %v8027
    %9476 = vmatprep.subr.bf16.mxu0 %v8035
    %9477 = vmatpush1.bf16.msra.mxu0 %v8034
    %9478 = vmatprep.subr.bf16.mxu0 %v8042
    %9479 = vmatpush1.bf16.msra.mxu0 %v8041
    %9480 = vmatprep.subr.bf16.mxu0 %v8049
    %9481 = vmatpush1.bf16.msra.mxu0 %v8048
    %9482 = vmatprep.subr.bf16.mxu0 %v8056
    %9483 = vmatpush1.bf16.msra.mxu0 %v8055
    %9484 = vmatprep.subr.bf16.mxu0 %v8063
    %9485 = vmatpush1.bf16.msra.mxu0 %v8062
    %9486 = vmatprep.mubr.bf16.mxu0 %v7498
    %9487 = vmatmul.mubr.bf16.gmra.mrb[0].mxu0 %v7497
    %v9488 = vpop.f32.mrb[0].mxu0
    %v9489 = vadd.f32 %v9296, %v9488
    %v9490 = vpop.f32.mrb[0].mxu0
    %v9491 = vadd.f32 %v9298, %v9490
    %v9492 = vpop.f32.mrb[0].mxu0
    %v9493 = vadd.f32 %v9300, %v9492
    %v9494 = vpop.f32.mrb[0].mxu0
    %v9495 = vadd.f32 %v9302, %v9494
    %9496 = vmatprep.mubr.bf16.mxu0 %v7506
    %9497 = vmatmul.mubr.bf16.gmra.mrb[0].mxu0 %v7505
    %v9498 = vpop.f32.mrb[0].mxu0
    %v9499 = vadd.f32 %v9306, %v9498
    %v9500 = vpop.f32.mrb[0].mxu0
    %v9501 = vadd.f32 %v9308, %v9500
    %v9502 = vpop.f32.mrb[0].mxu0
    %v9503 = vadd.f32 %v9310, %v9502
    %v9504 = vpop.f32.mrb[0].mxu0
    %v9505 = vadd.f32 %v9312, %v9504
    %9506 = vmatprep.mubr.bf16.mxu0 %v7514
    %9507 = vmatmul.mubr.bf16.gmra.mrb[0].mxu0 %v7513
    %v9508 = vpop.f32.mrb[0].mxu0
    %v9509 = vadd.f32 %v9316, %v9508
    %v9510 = vpop.f32.mrb[0].mxu0
    %v9511 = vadd.f32 %v9318, %v9510
    %v9512 = vpop.f32.mrb[0].mxu0
    %v9513 = vadd.f32 %v9320, %v9512
    %v9514 = vpop.f32.mrb[0].mxu0
    %v9515 = vadd.f32 %v9322, %v9514
    %9516 = vmatprep.mubr.bf16.mxu0 %v7522
    %9517 = vmatmul.mubr.bf16.gmra.mrb[0].mxu0 %v7521
    %v9518 = vpop.f32.mrb[0].mxu0
    %v9519 = vadd.f32 %v9326, %v9518
    %v9520 = vpop.f32.mrb[0].mxu0
    %v9521 = vadd.f32 %v9328, %v9520
    %v9522 = vpop.f32.mrb[0].mxu0
    %v9523 = vadd.f32 %v9330, %v9522
    %v9524 = vpop.f32.mrb[0].mxu0
    %v9525 = vadd.f32 %v9332, %v9524
    %9526 = vmatprep.mubr.bf16.mxu0 %v7530
    %9527 = vmatmul.mubr.bf16.gmra.mrb[0].mxu0 %v7529
    %v9528 = vpop.f32.mrb[0].mxu0
    %v9529 = vadd.f32 %v9336, %v9528
    %v9530 = vpop.f32.mrb[0].mxu0
    %v9531 = vadd.f32 %v9338, %v9530
    %v9532 = vpop.f32.mrb[0].mxu0
    %v9533 = vadd.f32 %v9340, %v9532
    %v9534 = vpop.f32.mrb[0].mxu0
    %v9535 = vadd.f32 %v9342, %v9534
    %9536 = vmatprep.mubr.bf16.mxu0 %v7538
    %9537 = vmatmul.mubr.bf16.gmra.mrb[0].mxu0 %v7537
    %v9538 = vpop.f32.mrb[0].mxu0
    %v9539 = vadd.f32 %v9346, %v9538
    %v9540 = vpop.f32.mrb[0].mxu0
    %v9541 = vadd.f32 %v9348, %v9540
    %v9542 = vpop.f32.mrb[0].mxu0
    %v9543 = vadd.f32 %v9350, %v9542
    %v9544 = vpop.f32.mrb[0].mxu0
    %v9545 = vadd.f32 %v9352, %v9544
    %9546 = vmatprep.mubr.bf16.mxu0 %v7546
    %9547 = vmatmul.mubr.bf16.gmra.mrb[0].mxu0 %v7545
    %v9548 = vpop.f32.mrb[0].mxu0
    %v9549 = vadd.f32 %v9356, %v9548
    %v9550 = vpop.f32.mrb[0].mxu0
    %v9551 = vadd.f32 %v9358, %v9550
    %v9552 = vpop.f32.mrb[0].mxu0
    %v9553 = vadd.f32 %v9360, %v9552
    %v9554 = vpop.f32.mrb[0].mxu0
    %v9555 = vadd.f32 %v9362, %v9554
    %9556 = vmatprep.mubr.bf16.mxu0 %v7554
    %9557 = vmatmul.mubr.bf16.gmra.mrb[0].mxu0 %v7553
    %v9558 = vpop.f32.mrb[0].mxu0
    %v9559 = vadd.f32 %v9366, %v9558
    %v9560 = vpop.f32.mrb[0].mxu0
    %v9561 = vadd.f32 %v9368, %v9560
    %v9562 = vpop.f32.mrb[0].mxu0
    %v9563 = vadd.f32 %v9370, %v9562
    %v9564 = vpop.f32.mrb[0].mxu0
    %v9565 = vadd.f32 %v9372, %v9564
    %9566 = vmatprep.mubr.bf16.mxu0 %v7562
    %9567 = vmatmul.mubr.bf16.gmra.mrb[0].mxu0 %v7561
    %v9568 = vpop.f32.mrb[0].mxu0
    %v9569 = vadd.f32 %v9376, %v9568
    %v9570 = vpop.f32.mrb[0].mxu0
    %v9571 = vadd.f32 %v9378, %v9570
    %v9572 = vpop.f32.mrb[0].mxu0
    %v9573 = vadd.f32 %v9380, %v9572
    %v9574 = vpop.f32.mrb[0].mxu0
    %v9575 = vadd.f32 %v9382, %v9574
    %9576 = vmatprep.mubr.bf16.mxu0 %v7570
    %9577 = vmatmul.mubr.bf16.gmra.mrb[0].mxu0 %v7569
    %v9578 = vpop.f32.mrb[0].mxu0
    %v9579 = vadd.f32 %v9386, %v9578
    %v9580 = vpop.f32.mrb[0].mxu0
    %v9581 = vadd.f32 %v9388, %v9580
    %v9582 = vpop.f32.mrb[0].mxu0
    %v9583 = vadd.f32 %v9390, %v9582
    %v9584 = vpop.f32.mrb[0].mxu0
    %v9585 = vadd.f32 %v9392, %v9584
    %9586 = vmatprep.mubr.bf16.mxu0 %v7578
    %9587 = vmatmul.mubr.bf16.gmra.mrb[0].mxu0 %v7577
    %v9588 = vpop.f32.mrb[0].mxu0
    %v9589 = vadd.f32 %v9396, %v9588
    %v9590 = vpop.f32.mrb[0].mxu0
    %v9591 = vadd.f32 %v9398, %v9590
    %v9592 = vpop.f32.mrb[0].mxu0
    %v9593 = vadd.f32 %v9400, %v9592
    %v9594 = vpop.f32.mrb[0].mxu0
    %v9595 = vadd.f32 %v9402, %v9594
    %9596 = vmatprep.mubr.bf16.mxu0 %v7586
    %9597 = vmatmul.mubr.bf16.gmra.mrb[0].mxu0 %v7585
    %v9598 = vpop.f32.mrb[0].mxu0
    %v9599 = vadd.f32 %v9406, %v9598
    %v9600 = vpop.f32.mrb[0].mxu0
    %v9601 = vadd.f32 %v9408, %v9600
    %v9602 = vpop.f32.mrb[0].mxu0
    %v9603 = vadd.f32 %v9410, %v9602
    %v9604 = vpop.f32.mrb[0].mxu0
    %v9605 = vadd.f32 %v9412, %v9604
    %9606 = vmatprep.mubr.bf16.mxu0 %v7594
    %9607 = vmatmul.mubr.bf16.gmra.mrb[0].mxu0 %v7593
    %v9608 = vpop.f32.mrb[0].mxu0
    %v9609 = vadd.f32 %v9416, %v9608
    %v9610 = vpop.f32.mrb[0].mxu0
    %v9611 = vadd.f32 %v9418, %v9610
    %v9612 = vpop.f32.mrb[0].mxu0
    %v9613 = vadd.f32 %v9420, %v9612
    %v9614 = vpop.f32.mrb[0].mxu0
    %v9615 = vadd.f32 %v9422, %v9614
    %9616 = vmatprep.mubr.bf16.mxu0 %v7602
    %9617 = vmatmul.mubr.bf16.gmra.mrb[0].mxu0 %v7601
    %v9618 = vpop.f32.mrb[0].mxu0
    %v9619 = vadd.f32 %v9426, %v9618
    %v9620 = vpop.f32.mrb[0].mxu0
    %v9621 = vadd.f32 %v9428, %v9620
    %v9622 = vpop.f32.mrb[0].mxu0
    %v9623 = vadd.f32 %v9430, %v9622
    %v9624 = vpop.f32.mrb[0].mxu0
    %v9625 = vadd.f32 %v9432, %v9624
    %9626 = vmatprep.mubr.bf16.mxu0 %v7610
    %9627 = vmatmul.mubr.bf16.gmra.mrb[0].mxu0 %v7609
    %v9628 = vpop.f32.mrb[0].mxu0
    %v9629 = vadd.f32 %v9436, %v9628
    %v9630 = vpop.f32.mrb[0].mxu0
    %v9631 = vadd.f32 %v9438, %v9630
    %v9632 = vpop.f32.mrb[0].mxu0
    %v9633 = vadd.f32 %v9440, %v9632
    %v9634 = vpop.f32.mrb[0].mxu0
    %v9635 = vadd.f32 %v9442, %v9634
    %9636 = vmatprep.mubr.bf16.mxu0 %v7618
    %9637 = vmatmul.mubr.bf16.gmra.mrb[0].mxu0 %v7617
    %v9638 = vpop.f32.mrb[0].mxu0
    %v9639 = vadd.f32 %v9446, %v9638
    %v9640 = vpop.f32.mrb[0].mxu0
    %v9641 = vadd.f32 %v9448, %v9640
    %v9642 = vpop.f32.mrb[0].mxu0
    %v9643 = vadd.f32 %v9450, %v9642
    %v9644 = vpop.f32.mrb[0].mxu0
    %v9645 = vadd.f32 %v9452, %v9644
    %9646 = vdwg.mxu0
    %9647 = vmatprep.subr.bf16.mxu0 %v7624
    %9648 = vmatpush1.bf16.msra.mxu0 %v7623
    %9649 = vmatprep.subr.bf16.mxu0 %v7631
    %9650 = vmatpush1.bf16.msra.mxu0 %v7630
    %9651 = vmatprep.subr.bf16.mxu0 %v7638
    %9652 = vmatpush1.bf16.msra.mxu0 %v7637
    %9653 = vmatprep.subr.bf16.mxu0 %v7645
    %9654 = vmatpush1.bf16.msra.mxu0 %v7644
    %9655 = vmatprep.subr.bf16.mxu0 %v7652
    %9656 = vmatpush1.bf16.msra.mxu0 %v7651
    %9657 = vmatprep.subr.bf16.mxu0 %v7659
    %9658 = vmatpush1.bf16.msra.mxu0 %v7658
    %9659 = vmatprep.subr.bf16.mxu0 %v7666
    %9660 = vmatpush1.bf16.msra.mxu0 %v7665
    %9661 = vmatprep.subr.bf16.mxu0 %v7673
    %9662 = vmatpush1.bf16.msra.mxu0 %v7672
    %9663 = vmatprep.subr.bf16.mxu0 %v7680
    %9664 = vmatpush1.bf16.msra.mxu0 %v7679
    %9665 = vmatprep.subr.bf16.mxu0 %v7687
    %9666 = vmatpush1.bf16.msra.mxu0 %v7686
    %9667 = vmatprep.subr.bf16.mxu0 %v7694
    %9668 = vmatpush1.bf16.msra.mxu0 %v7693
    %9669 = vmatprep.subr.bf16.mxu0 %v7701
    %9670 = vmatpush1.bf16.msra.mxu0 %v7700
    %9671 = vmatprep.subr.bf16.mxu0 %v7708
    %9672 = vmatpush1.bf16.msra.mxu0 %v7707
    %9673 = vmatprep.subr.bf16.mxu0 %v7715
    %9674 = vmatpush1.bf16.msra.mxu0 %v7714
    %9675 = vmatprep.subr.bf16.mxu0 %v7722
    %9676 = vmatpush1.bf16.msra.mxu0 %v7721
    %9677 = vmatprep.subr.bf16.mxu0 %v7729
    %9678 = vmatpush1.bf16.msra.mxu0 %v7728
    %9679 = vmatprep.mubr.bf16.mxu0 %v7492
    %9680 = vmatmul.mubr.bf16.gmra.mrb[0].mxu0 %v7491
    %v9681 = vpop.f32.mrb[0].mxu0
    %v9682 = vadd.f32 %v8087, %v9681
    %v9683 = vpop.f32.mrb[0].mxu0
    %v9684 = vadd.f32 %v8091, %v9683
    %v9685 = vpop.f32.mrb[0].mxu0
    %v9686 = vadd.f32 %v8087, %v9685
    %v9687 = vpop.f32.mrb[0].mxu0
    %v9688 = vadd.f32 %v8091, %v9687
    %9689 = vmatprep.mubr.bf16.mxu0 %v7500
    %9690 = vmatmul.mubr.bf16.gmra.mrb[0].mxu0 %v7499
    %v9691 = vpop.f32.mrb[0].mxu0
    %v9692 = vadd.f32 %v8087, %v9691
    %v9693 = vpop.f32.mrb[0].mxu0
    %v9694 = vadd.f32 %v8091, %v9693
    %v9695 = vpop.f32.mrb[0].mxu0
    %v9696 = vadd.f32 %v8087, %v9695
    %v9697 = vpop.f32.mrb[0].mxu0
    %v9698 = vadd.f32 %v8091, %v9697
    %9699 = vmatprep.mubr.bf16.mxu0 %v7508
    %9700 = vmatmul.mubr.bf16.gmra.mrb[0].mxu0 %v7507
    %v9701 = vpop.f32.mrb[0].mxu0
    %v9702 = vadd.f32 %v8087, %v9701
    %v9703 = vpop.f32.mrb[0].mxu0
    %v9704 = vadd.f32 %v8091, %v9703
    %v9705 = vpop.f32.mrb[0].mxu0
    %v9706 = vadd.f32 %v8087, %v9705
    %v9707 = vpop.f32.mrb[0].mxu0
    %v9708 = vadd.f32 %v8091, %v9707
    %9709 = vmatprep.mubr.bf16.mxu0 %v7516
    %9710 = vmatmul.mubr.bf16.gmra.mrb[0].mxu0 %v7515
    %v9711 = vpop.f32.mrb[0].mxu0
    %v9712 = vadd.f32 %v8087, %v9711
    %v9713 = vpop.f32.mrb[0].mxu0
    %v9714 = vadd.f32 %v8091, %v9713
    %v9715 = vpop.f32.mrb[0].mxu0
    %v9716 = vadd.f32 %v8087, %v9715
    %v9717 = vpop.f32.mrb[0].mxu0
    %v9718 = vadd.f32 %v8091, %v9717
    %9719 = vmatprep.mubr.bf16.mxu0 %v7524
    %9720 = vmatmul.mubr.bf16.gmra.mrb[0].mxu0 %v7523
    %v9721 = vpop.f32.mrb[0].mxu0
    %v9722 = vadd.f32 %v8087, %v9721
    %v9723 = vpop.f32.mrb[0].mxu0
    %v9724 = vadd.f32 %v8091, %v9723
    %v9725 = vpop.f32.mrb[0].mxu0
    %v9726 = vadd.f32 %v8087, %v9725
    %v9727 = vpop.f32.mrb[0].mxu0
    %v9728 = vadd.f32 %v8091, %v9727
    %9729 = vmatprep.mubr.bf16.mxu0 %v7532
    %9730 = vmatmul.mubr.bf16.gmra.mrb[0].mxu0 %v7531
    %v9731 = vpop.f32.mrb[0].mxu0
    %v9732 = vadd.f32 %v8087, %v9731
    %v9733 = vpop.f32.mrb[0].mxu0
    %v9734 = vadd.f32 %v8091, %v9733
    %v9735 = vpop.f32.mrb[0].mxu0
    %v9736 = vadd.f32 %v8087, %v9735
    %v9737 = vpop.f32.mrb[0].mxu0
    %v9738 = vadd.f32 %v8091, %v9737
    %9739 = vmatprep.mubr.bf16.mxu0 %v7540
    %9740 = vmatmul.mubr.bf16.gmra.mrb[0].mxu0 %v7539
    %v9741 = vpop.f32.mrb[0].mxu0
    %v9742 = vadd.f32 %v8087, %v9741
    %v9743 = vpop.f32.mrb[0].mxu0
    %v9744 = vadd.f32 %v8091, %v9743
    %v9745 = vpop.f32.mrb[0].mxu0
    %v9746 = vadd.f32 %v8087, %v9745
    %v9747 = vpop.f32.mrb[0].mxu0
    %v9748 = vadd.f32 %v8091, %v9747
    %9749 = vmatprep.mubr.bf16.mxu0 %v7548
    %9750 = vmatmul.mubr.bf16.gmra.mrb[0].mxu0 %v7547
    %v9751 = vpop.f32.mrb[0].mxu0
    %v9752 = vadd.f32 %v8087, %v9751
    %v9753 = vpop.f32.mrb[0].mxu0
    %v9754 = vadd.f32 %v8091, %v9753
    %v9755 = vpop.f32.mrb[0].mxu0
    %v9756 = vadd.f32 %v8087, %v9755
    %v9757 = vpop.f32.mrb[0].mxu0
    %v9758 = vadd.f32 %v8091, %v9757
    %9759 = vmatprep.mubr.bf16.mxu0 %v7556
    %9760 = vmatmul.mubr.bf16.gmra.mrb[0].mxu0 %v7555
    %v9761 = vpop.f32.mrb[0].mxu0
    %v9762 = vadd.f32 %v8087, %v9761
    %v9763 = vpop.f32.mrb[0].mxu0
    %v9764 = vadd.f32 %v8091, %v9763
    %v9765 = vpop.f32.mrb[0].mxu0
    %v9766 = vadd.f32 %v8087, %v9765
    %v9767 = vpop.f32.mrb[0].mxu0
    %v9768 = vadd.f32 %v8091, %v9767
    %9769 = vmatprep.mubr.bf16.mxu0 %v7564
    %9770 = vmatmul.mubr.bf16.gmra.mrb[0].mxu0 %v7563
    %v9771 = vpop.f32.mrb[0].mxu0
    %v9772 = vadd.f32 %v8087, %v9771
    %v9773 = vpop.f32.mrb[0].mxu0
    %v9774 = vadd.f32 %v8091, %v9773
    %v9775 = vpop.f32.mrb[0].mxu0
    %v9776 = vadd.f32 %v8087, %v9775
    %v9777 = vpop.f32.mrb[0].mxu0
    %v9778 = vadd.f32 %v8091, %v9777
    %9779 = vmatprep.mubr.bf16.mxu0 %v7572
    %9780 = vmatmul.mubr.bf16.gmra.mrb[0].mxu0 %v7571
    %v9781 = vpop.f32.mrb[0].mxu0
    %v9782 = vadd.f32 %v8087, %v9781
    %v9783 = vpop.f32.mrb[0].mxu0
    %v9784 = vadd.f32 %v8091, %v9783
    %v9785 = vpop.f32.mrb[0].mxu0
    %v9786 = vadd.f32 %v8087, %v9785
    %v9787 = vpop.f32.mrb[0].mxu0
    %v9788 = vadd.f32 %v8091, %v9787
    %9789 = vmatprep.mubr.bf16.mxu0 %v7580
    %9790 = vmatmul.mubr.bf16.gmra.mrb[0].mxu0 %v7579
    %v9791 = vpop.f32.mrb[0].mxu0
    %v9792 = vadd.f32 %v8087, %v9791
    %v9793 = vpop.f32.mrb[0].mxu0
    %v9794 = vadd.f32 %v8091, %v9793
    %v9795 = vpop.f32.mrb[0].mxu0
    %v9796 = vadd.f32 %v8087, %v9795
    %v9797 = vpop.f32.mrb[0].mxu0
    %v9798 = vadd.f32 %v8091, %v9797
    %9799 = vmatprep.mubr.bf16.mxu0 %v7588
    %9800 = vmatmul.mubr.bf16.gmra.mrb[0].mxu0 %v7587
    %v9801 = vpop.f32.mrb[0].mxu0
    %v9802 = vadd.f32 %v8087, %v9801
    %v9803 = vpop.f32.mrb[0].mxu0
    %v9804 = vadd.f32 %v8091, %v9803
    %v9805 = vpop.f32.mrb[0].mxu0
    %v9806 = vadd.f32 %v8087, %v9805
    %v9807 = vpop.f32.mrb[0].mxu0
    %v9808 = vadd.f32 %v8091, %v9807
    %9809 = vmatprep.mubr.bf16.mxu0 %v7596
    %9810 = vmatmul.mubr.bf16.gmra.mrb[0].mxu0 %v7595
    %v9811 = vpop.f32.mrb[0].mxu0
    %v9812 = vadd.f32 %v8087, %v9811
    %v9813 = vpop.f32.mrb[0].mxu0
    %v9814 = vadd.f32 %v8091, %v9813
    %v9815 = vpop.f32.mrb[0].mxu0
    %v9816 = vadd.f32 %v8087, %v9815
    %v9817 = vpop.f32.mrb[0].mxu0
    %v9818 = vadd.f32 %v8091, %v9817
    %9819 = vmatprep.mubr.bf16.mxu0 %v7604
    %9820 = vmatmul.mubr.bf16.gmra.mrb[0].mxu0 %v7603
    %v9821 = vpop.f32.mrb[0].mxu0
    %v9822 = vadd.f32 %v8087, %v9821
    %v9823 = vpop.f32.mrb[0].mxu0
    %v9824 = vadd.f32 %v8091, %v9823
    %v9825 = vpop.f32.mrb[0].mxu0
    %v9826 = vadd.f32 %v8087, %v9825
    %v9827 = vpop.f32.mrb[0].mxu0
    %v9828 = vadd.f32 %v8091, %v9827
    %9829 = vmatprep.mubr.bf16.mxu0 %v7612
    %9830 = vmatmul.mubr.bf16.gmra.mrb[0].mxu0 %v7611
    %v9831 = vpop.f32.mrb[0].mxu0
    %v9832 = vadd.f32 %v8087, %v9831
    %v9833 = vpop.f32.mrb[0].mxu0
    %v9834 = vadd.f32 %v8091, %v9833
    %v9835 = vpop.f32.mrb[0].mxu0
    %v9836 = vadd.f32 %v8087, %v9835
    %v9837 = vpop.f32.mrb[0].mxu0
    %v9838 = vadd.f32 %v8091, %v9837
    %9839 = vdwg.mxu0
    %9840 = vmatprep.subr.bf16.mxu0 %v7736
    %9841 = vmatpush1.bf16.msra.mxu0 %v7735
    %9842 = vmatprep.subr.bf16.mxu0 %v7743
    %9843 = vmatpush1.bf16.msra.mxu0 %v7742
    %9844 = vmatprep.subr.bf16.mxu0 %v7750
    %9845 = vmatpush1.bf16.msra.mxu0 %v7749
    %9846 = vmatprep.subr.bf16.mxu0 %v7757
    %9847 = vmatpush1.bf16.msra.mxu0 %v7756
    %9848 = vmatprep.subr.bf16.mxu0 %v7764
    %9849 = vmatpush1.bf16.msra.mxu0 %v7763
    %9850 = vmatprep.subr.bf16.mxu0 %v7771
    %9851 = vmatpush1.bf16.msra.mxu0 %v7770
    %9852 = vmatprep.subr.bf16.mxu0 %v7778
    %9853 = vmatpush1.bf16.msra.mxu0 %v7777
    %9854 = vmatprep.subr.bf16.mxu0 %v7785
    %9855 = vmatpush1.bf16.msra.mxu0 %v7784
    %9856 = vmatprep.subr.bf16.mxu0 %v7792
    %9857 = vmatpush1.bf16.msra.mxu0 %v7791
    %9858 = vmatprep.subr.bf16.mxu0 %v7799
    %9859 = vmatpush1.bf16.msra.mxu0 %v7798
    %9860 = vmatprep.subr.bf16.mxu0 %v7806
    %9861 = vmatpush1.bf16.msra.mxu0 %v7805
    %9862 = vmatprep.subr.bf16.mxu0 %v7813
    %9863 = vmatpush1.bf16.msra.mxu0 %v7812
    %9864 = vmatprep.subr.bf16.mxu0 %v7820
    %9865 = vmatpush1.bf16.msra.mxu0 %v7819
    %9866 = vmatprep.subr.bf16.mxu0 %v7827
    %9867 = vmatpush1.bf16.msra.mxu0 %v7826
    %9868 = vmatprep.subr.bf16.mxu0 %v7834
    %9869 = vmatpush1.bf16.msra.mxu0 %v7833
    %9870 = vmatprep.subr.bf16.mxu0 %v7841
    %9871 = vmatpush1.bf16.msra.mxu0 %v7840
    %9872 = vmatprep.mubr.bf16.mxu0 %v7494
    %9873 = vmatmul.mubr.bf16.gmra.mrb[0].mxu0 %v7493
    %v9874 = vpop.f32.mrb[0].mxu0
    %v9875 = vadd.f32 %v9682, %v9874
    %v9876 = vpop.f32.mrb[0].mxu0
    %v9877 = vadd.f32 %v9684, %v9876
    %v9878 = vpop.f32.mrb[0].mxu0
    %v9879 = vadd.f32 %v9686, %v9878
    %v9880 = vpop.f32.mrb[0].mxu0
    %v9881 = vadd.f32 %v9688, %v9880
    %9882 = vmatprep.mubr.bf16.mxu0 %v7502
    %9883 = vmatmul.mubr.bf16.gmra.mrb[0].mxu0 %v7501
    %v9884 = vpop.f32.mrb[0].mxu0
    %v9885 = vadd.f32 %v9692, %v9884
    %v9886 = vpop.f32.mrb[0].mxu0
    %v9887 = vadd.f32 %v9694, %v9886
    %v9888 = vpop.f32.mrb[0].mxu0
    %v9889 = vadd.f32 %v9696, %v9888
    %v9890 = vpop.f32.mrb[0].mxu0
    %v9891 = vadd.f32 %v9698, %v9890
    %9892 = vmatprep.mubr.bf16.mxu0 %v7510
    %9893 = vmatmul.mubr.bf16.gmra.mrb[0].mxu0 %v7509
    %v9894 = vpop.f32.mrb[0].mxu0
    %v9895 = vadd.f32 %v9702, %v9894
    %v9896 = vpop.f32.mrb[0].mxu0
    %v9897 = vadd.f32 %v9704, %v9896
    %v9898 = vpop.f32.mrb[0].mxu0
    %v9899 = vadd.f32 %v9706, %v9898
    %v9900 = vpop.f32.mrb[0].mxu0
    %v9901 = vadd.f32 %v9708, %v9900
    %9902 = vmatprep.mubr.bf16.mxu0 %v7518
    %9903 = vmatmul.mubr.bf16.gmra.mrb[0].mxu0 %v7517
    %v9904 = vpop.f32.mrb[0].mxu0
    %v9905 = vadd.f32 %v9712, %v9904
    %v9906 = vpop.f32.mrb[0].mxu0
    %v9907 = vadd.f32 %v9714, %v9906
    %v9908 = vpop.f32.mrb[0].mxu0
    %v9909 = vadd.f32 %v9716, %v9908
    %v9910 = vpop.f32.mrb[0].mxu0
    %v9911 = vadd.f32 %v9718, %v9910
    %9912 = vmatprep.mubr.bf16.mxu0 %v7526
    %9913 = vmatmul.mubr.bf16.gmra.mrb[0].mxu0 %v7525
    %v9914 = vpop.f32.mrb[0].mxu0
    %v9915 = vadd.f32 %v9722, %v9914
    %v9916 = vpop.f32.mrb[0].mxu0
    %v9917 = vadd.f32 %v9724, %v9916
    %v9918 = vpop.f32.mrb[0].mxu0
    %v9919 = vadd.f32 %v9726, %v9918
    %v9920 = vpop.f32.mrb[0].mxu0
    %v9921 = vadd.f32 %v9728, %v9920
    %9922 = vmatprep.mubr.bf16.mxu0 %v7534
    %9923 = vmatmul.mubr.bf16.gmra.mrb[0].mxu0 %v7533
    %v9924 = vpop.f32.mrb[0].mxu0
    %v9925 = vadd.f32 %v9732, %v9924
    %v9926 = vpop.f32.mrb[0].mxu0
    %v9927 = vadd.f32 %v9734, %v9926
    %v9928 = vpop.f32.mrb[0].mxu0
    %v9929 = vadd.f32 %v9736, %v9928
    %v9930 = vpop.f32.mrb[0].mxu0
    %v9931 = vadd.f32 %v9738, %v9930
    %9932 = vmatprep.mubr.bf16.mxu0 %v7542
    %9933 = vmatmul.mubr.bf16.gmra.mrb[0].mxu0 %v7541
    %v9934 = vpop.f32.mrb[0].mxu0
    %v9935 = vadd.f32 %v9742, %v9934
    %v9936 = vpop.f32.mrb[0].mxu0
    %v9937 = vadd.f32 %v9744, %v9936
    %v9938 = vpop.f32.mrb[0].mxu0
    %v9939 = vadd.f32 %v9746, %v9938
    %v9940 = vpop.f32.mrb[0].mxu0
    %v9941 = vadd.f32 %v9748, %v9940
    %9942 = vmatprep.mubr.bf16.mxu0 %v7550
    %9943 = vmatmul.mubr.bf16.gmra.mrb[0].mxu0 %v7549
    %v9944 = vpop.f32.mrb[0].mxu0
    %v9945 = vadd.f32 %v9752, %v9944
    %v9946 = vpop.f32.mrb[0].mxu0
    %v9947 = vadd.f32 %v9754, %v9946
    %v9948 = vpop.f32.mrb[0].mxu0
    %v9949 = vadd.f32 %v9756, %v9948
    %v9950 = vpop.f32.mrb[0].mxu0
    %v9951 = vadd.f32 %v9758, %v9950
    %9952 = vmatprep.mubr.bf16.mxu0 %v7558
    %9953 = vmatmul.mubr.bf16.gmra.mrb[0].mxu0 %v7557
    %v9954 = vpop.f32.mrb[0].mxu0
    %v9955 = vadd.f32 %v9762, %v9954
    %v9956 = vpop.f32.mrb[0].mxu0
    %v9957 = vadd.f32 %v9764, %v9956
    %v9958 = vpop.f32.mrb[0].mxu0
    %v9959 = vadd.f32 %v9766, %v9958
    %v9960 = vpop.f32.mrb[0].mxu0
    %v9961 = vadd.f32 %v9768, %v9960
    %9962 = vmatprep.mubr.bf16.mxu0 %v7566
    %9963 = vmatmul.mubr.bf16.gmra.mrb[0].mxu0 %v7565
    %v9964 = vpop.f32.mrb[0].mxu0
    %v9965 = vadd.f32 %v9772, %v9964
    %v9966 = vpop.f32.mrb[0].mxu0
    %v9967 = vadd.f32 %v9774, %v9966
    %v9968 = vpop.f32.mrb[0].mxu0
    %v9969 = vadd.f32 %v9776, %v9968
    %v9970 = vpop.f32.mrb[0].mxu0
    %v9971 = vadd.f32 %v9778, %v9970
    %9972 = vmatprep.mubr.bf16.mxu0 %v7574
    %9973 = vmatmul.mubr.bf16.gmra.mrb[0].mxu0 %v7573
    %v9974 = vpop.f32.mrb[0].mxu0
    %v9975 = vadd.f32 %v9782, %v9974
    %v9976 = vpop.f32.mrb[0].mxu0
    %v9977 = vadd.f32 %v9784, %v9976
    %v9978 = vpop.f32.mrb[0].mxu0
    %v9979 = vadd.f32 %v9786, %v9978
    %v9980 = vpop.f32.mrb[0].mxu0
    %v9981 = vadd.f32 %v9788, %v9980
    %9982 = vmatprep.mubr.bf16.mxu0 %v7582
    %9983 = vmatmul.mubr.bf16.gmra.mrb[0].mxu0 %v7581
    %v9984 = vpop.f32.mrb[0].mxu0
    %v9985 = vadd.f32 %v9792, %v9984
    %v9986 = vpop.f32.mrb[0].mxu0
    %v9987 = vadd.f32 %v9794, %v9986
    %v9988 = vpop.f32.mrb[0].mxu0
    %v9989 = vadd.f32 %v9796, %v9988
    %v9990 = vpop.f32.mrb[0].mxu0
    %v9991 = vadd.f32 %v9798, %v9990
    %9992 = vmatprep.mubr.bf16.mxu0 %v7590
    %9993 = vmatmul.mubr.bf16.gmra.mrb[0].mxu0 %v7589
    %v9994 = vpop.f32.mrb[0].mxu0
    %v9995 = vadd.f32 %v9802, %v9994
    %v9996 = vpop.f32.mrb[0].mxu0
    %v9997 = vadd.f32 %v9804, %v9996
    %v9998 = vpop.f32.mrb[0].mxu0
    %v9999 = vadd.f32 %v9806, %v9998
    %v10000 = vpop.f32.mrb[0].mxu0
    %v10001 = vadd.f32 %v9808, %v10000
    %10002 = vmatprep.mubr.bf16.mxu0 %v7598
    %10003 = vmatmul.mubr.bf16.gmra.mrb[0].mxu0 %v7597
    %v10004 = vpop.f32.mrb[0].mxu0
    %v10005 = vadd.f32 %v9812, %v10004
    %v10006 = vpop.f32.mrb[0].mxu0
    %v10007 = vadd.f32 %v9814, %v10006
    %v10008 = vpop.f32.mrb[0].mxu0
    %v10009 = vadd.f32 %v9816, %v10008
    %v10010 = vpop.f32.mrb[0].mxu0
    %v10011 = vadd.f32 %v9818, %v10010
    %10012 = vmatprep.mubr.bf16.mxu0 %v7606
    %10013 = vmatmul.mubr.bf16.gmra.mrb[0].mxu0 %v7605
    %v10014 = vpop.f32.mrb[0].mxu0
    %v10015 = vadd.f32 %v9822, %v10014
    %v10016 = vpop.f32.mrb[0].mxu0
    %v10017 = vadd.f32 %v9824, %v10016
    %v10018 = vpop.f32.mrb[0].mxu0
    %v10019 = vadd.f32 %v9826, %v10018
    %v10020 = vpop.f32.mrb[0].mxu0
    %v10021 = vadd.f32 %v9828, %v10020
    %10022 = vmatprep.mubr.bf16.mxu0 %v7614
    %10023 = vmatmul.mubr.bf16.gmra.mrb[0].mxu0 %v7613
    %v10024 = vpop.f32.mrb[0].mxu0
    %v10025 = vadd.f32 %v9832, %v10024
    %v10026 = vpop.f32.mrb[0].mxu0
    %v10027 = vadd.f32 %v9834, %v10026
    %v10028 = vpop.f32.mrb[0].mxu0
    %v10029 = vadd.f32 %v9836, %v10028
    %v10030 = vpop.f32.mrb[0].mxu0
    %v10031 = vadd.f32 %v9838, %v10030
    %10032 = vdwg.mxu0
    %10033 = vmatprep.subr.bf16.mxu0 %v7848
    %10034 = vmatpush1.bf16.msra.mxu0 %v7847
    %10035 = vmatprep.subr.bf16.mxu0 %v7855
    %10036 = vmatpush1.bf16.msra.mxu0 %v7854
    %10037 = vmatprep.subr.bf16.mxu0 %v7862
    %10038 = vmatpush1.bf16.msra.mxu0 %v7861
    %10039 = vmatprep.subr.bf16.mxu0 %v7869
    %10040 = vmatpush1.bf16.msra.mxu0 %v7868
    %10041 = vmatprep.subr.bf16.mxu0 %v7876
    %10042 = vmatpush1.bf16.msra.mxu0 %v7875
    %10043 = vmatprep.subr.bf16.mxu0 %v7883
    %10044 = vmatpush1.bf16.msra.mxu0 %v7882
    %10045 = vmatprep.subr.bf16.mxu0 %v7890
    %10046 = vmatpush1.bf16.msra.mxu0 %v7889
    %10047 = vmatprep.subr.bf16.mxu0 %v7897
    %10048 = vmatpush1.bf16.msra.mxu0 %v7896
    %10049 = vmatprep.subr.bf16.mxu0 %v7904
    %10050 = vmatpush1.bf16.msra.mxu0 %v7903
    %10051 = vmatprep.subr.bf16.mxu0 %v7911
    %10052 = vmatpush1.bf16.msra.mxu0 %v7910
    %10053 = vmatprep.subr.bf16.mxu0 %v7918
    %10054 = vmatpush1.bf16.msra.mxu0 %v7917
    %10055 = vmatprep.subr.bf16.mxu0 %v7925
    %10056 = vmatpush1.bf16.msra.mxu0 %v7924
    %10057 = vmatprep.subr.bf16.mxu0 %v7932
    %10058 = vmatpush1.bf16.msra.mxu0 %v7931
    %10059 = vmatprep.subr.bf16.mxu0 %v7939
    %10060 = vmatpush1.bf16.msra.mxu0 %v7938
    %10061 = vmatprep.subr.bf16.mxu0 %v7946
    %10062 = vmatpush1.bf16.msra.mxu0 %v7945
    %10063 = vmatprep.subr.bf16.mxu0 %v7953
    %10064 = vmatpush1.bf16.msra.mxu0 %v7952
    %10065 = vmatprep.mubr.bf16.mxu0 %v7496
    %10066 = vmatmul.mubr.bf16.gmra.mrb[0].mxu0 %v7495
    %v10067 = vpop.f32.mrb[0].mxu0
    %v10068 = vadd.f32 %v9875, %v10067
    %v10069 = vpop.f32.mrb[0].mxu0
    %v10070 = vadd.f32 %v9877, %v10069
    %v10071 = vpop.f32.mrb[0].mxu0
    %v10072 = vadd.f32 %v9879, %v10071
    %v10073 = vpop.f32.mrb[0].mxu0
    %v10074 = vadd.f32 %v9881, %v10073
    %10075 = vmatprep.mubr.bf16.mxu0 %v7504
    %10076 = vmatmul.mubr.bf16.gmra.mrb[0].mxu0 %v7503
    %v10077 = vpop.f32.mrb[0].mxu0
    %v10078 = vadd.f32 %v9885, %v10077
    %v10079 = vpop.f32.mrb[0].mxu0
    %v10080 = vadd.f32 %v9887, %v10079
    %v10081 = vpop.f32.mrb[0].mxu0
    %v10082 = vadd.f32 %v9889, %v10081
    %v10083 = vpop.f32.mrb[0].mxu0
    %v10084 = vadd.f32 %v9891, %v10083
    %10085 = vmatprep.mubr.bf16.mxu0 %v7512
    %10086 = vmatmul.mubr.bf16.gmra.mrb[0].mxu0 %v7511
    %v10087 = vpop.f32.mrb[0].mxu0
    %v10088 = vadd.f32 %v9895, %v10087
    %v10089 = vpop.f32.mrb[0].mxu0
    %v10090 = vadd.f32 %v9897, %v10089
    %v10091 = vpop.f32.mrb[0].mxu0
    %v10092 = vadd.f32 %v9899, %v10091
    %v10093 = vpop.f32.mrb[0].mxu0
    %v10094 = vadd.f32 %v9901, %v10093
    %10095 = vmatprep.mubr.bf16.mxu0 %v7520
    %10096 = vmatmul.mubr.bf16.gmra.mrb[0].mxu0 %v7519
    %v10097 = vpop.f32.mrb[0].mxu0
    %v10098 = vadd.f32 %v9905, %v10097
    %v10099 = vpop.f32.mrb[0].mxu0
    %v10100 = vadd.f32 %v9907, %v10099
    %v10101 = vpop.f32.mrb[0].mxu0
    %v10102 = vadd.f32 %v9909, %v10101
    %v10103 = vpop.f32.mrb[0].mxu0
    %v10104 = vadd.f32 %v9911, %v10103
    %10105 = vmatprep.mubr.bf16.mxu0 %v7528
    %10106 = vmatmul.mubr.bf16.gmra.mrb[0].mxu0 %v7527
    %v10107 = vpop.f32.mrb[0].mxu0
    %v10108 = vadd.f32 %v9915, %v10107
    %v10109 = vpop.f32.mrb[0].mxu0
    %v10110 = vadd.f32 %v9917, %v10109
    %v10111 = vpop.f32.mrb[0].mxu0
    %v10112 = vadd.f32 %v9919, %v10111
    %v10113 = vpop.f32.mrb[0].mxu0
    %v10114 = vadd.f32 %v9921, %v10113
    %10115 = vmatprep.mubr.bf16.mxu0 %v7536
    %10116 = vmatmul.mubr.bf16.gmra.mrb[0].mxu0 %v7535
    %v10117 = vpop.f32.mrb[0].mxu0
    %v10118 = vadd.f32 %v9925, %v10117
    %v10119 = vpop.f32.mrb[0].mxu0
    %v10120 = vadd.f32 %v9927, %v10119
    %v10121 = vpop.f32.mrb[0].mxu0
    %v10122 = vadd.f32 %v9929, %v10121
    %v10123 = vpop.f32.mrb[0].mxu0
    %v10124 = vadd.f32 %v9931, %v10123
    %10125 = vmatprep.mubr.bf16.mxu0 %v7544
    %10126 = vmatmul.mubr.bf16.gmra.mrb[0].mxu0 %v7543
    %v10127 = vpop.f32.mrb[0].mxu0
    %v10128 = vadd.f32 %v9935, %v10127
    %v10129 = vpop.f32.mrb[0].mxu0
    %v10130 = vadd.f32 %v9937, %v10129
    %v10131 = vpop.f32.mrb[0].mxu0
    %v10132 = vadd.f32 %v9939, %v10131
    %v10133 = vpop.f32.mrb[0].mxu0
    %v10134 = vadd.f32 %v9941, %v10133
    %10135 = vmatprep.mubr.bf16.mxu0 %v7552
    %10136 = vmatmul.mubr.bf16.gmra.mrb[0].mxu0 %v7551
    %v10137 = vpop.f32.mrb[0].mxu0
    %v10138 = vadd.f32 %v9945, %v10137
    %v10139 = vpop.f32.mrb[0].mxu0
    %v10140 = vadd.f32 %v9947, %v10139
    %v10141 = vpop.f32.mrb[0].mxu0
    %v10142 = vadd.f32 %v9949, %v10141
    %v10143 = vpop.f32.mrb[0].mxu0
    %v10144 = vadd.f32 %v9951, %v10143
    %10145 = vmatprep.mubr.bf16.mxu0 %v7560
    %10146 = vmatmul.mubr.bf16.gmra.mrb[0].mxu0 %v7559
    %v10147 = vpop.f32.mrb[0].mxu0
    %v10148 = vadd.f32 %v9955, %v10147
    %v10149 = vpop.f32.mrb[0].mxu0
    %v10150 = vadd.f32 %v9957, %v10149
    %v10151 = vpop.f32.mrb[0].mxu0
    %v10152 = vadd.f32 %v9959, %v10151
    %v10153 = vpop.f32.mrb[0].mxu0
    %v10154 = vadd.f32 %v9961, %v10153
    %10155 = vmatprep.mubr.bf16.mxu0 %v7568
    %10156 = vmatmul.mubr.bf16.gmra.mrb[0].mxu0 %v7567
    %v10157 = vpop.f32.mrb[0].mxu0
    %v10158 = vadd.f32 %v9965, %v10157
    %v10159 = vpop.f32.mrb[0].mxu0
    %v10160 = vadd.f32 %v9967, %v10159
    %v10161 = vpop.f32.mrb[0].mxu0
    %v10162 = vadd.f32 %v9969, %v10161
    %v10163 = vpop.f32.mrb[0].mxu0
    %v10164 = vadd.f32 %v9971, %v10163
    %10165 = vmatprep.mubr.bf16.mxu0 %v7576
    %10166 = vmatmul.mubr.bf16.gmra.mrb[0].mxu0 %v7575
    %v10167 = vpop.f32.mrb[0].mxu0
    %v10168 = vadd.f32 %v9975, %v10167
    %v10169 = vpop.f32.mrb[0].mxu0
    %v10170 = vadd.f32 %v9977, %v10169
    %v10171 = vpop.f32.mrb[0].mxu0
    %v10172 = vadd.f32 %v9979, %v10171
    %v10173 = vpop.f32.mrb[0].mxu0
    %v10174 = vadd.f32 %v9981, %v10173
    %10175 = vmatprep.mubr.bf16.mxu0 %v7584
    %10176 = vmatmul.mubr.bf16.gmra.mrb[0].mxu0 %v7583
    %v10177 = vpop.f32.mrb[0].mxu0
    %v10178 = vadd.f32 %v9985, %v10177
    %v10179 = vpop.f32.mrb[0].mxu0
    %v10180 = vadd.f32 %v9987, %v10179
    %v10181 = vpop.f32.mrb[0].mxu0
    %v10182 = vadd.f32 %v9989, %v10181
    %v10183 = vpop.f32.mrb[0].mxu0
    %v10184 = vadd.f32 %v9991, %v10183
    %10185 = vmatprep.mubr.bf16.mxu0 %v7592
    %10186 = vmatmul.mubr.bf16.gmra.mrb[0].mxu0 %v7591
    %v10187 = vpop.f32.mrb[0].mxu0
    %v10188 = vadd.f32 %v9995, %v10187
    %v10189 = vpop.f32.mrb[0].mxu0
    %v10190 = vadd.f32 %v9997, %v10189
    %v10191 = vpop.f32.mrb[0].mxu0
    %v10192 = vadd.f32 %v9999, %v10191
    %v10193 = vpop.f32.mrb[0].mxu0
    %v10194 = vadd.f32 %v10001, %v10193
    %10195 = vmatprep.mubr.bf16.mxu0 %v7600
    %10196 = vmatmul.mubr.bf16.gmra.mrb[0].mxu0 %v7599
    %v10197 = vpop.f32.mrb[0].mxu0
    %v10198 = vadd.f32 %v10005, %v10197
    %v10199 = vpop.f32.mrb[0].mxu0
    %v10200 = vadd.f32 %v10007, %v10199
    %v10201 = vpop.f32.mrb[0].mxu0
    %v10202 = vadd.f32 %v10009, %v10201
    %v10203 = vpop.f32.mrb[0].mxu0
    %v10204 = vadd.f32 %v10011, %v10203
    %10205 = vmatprep.mubr.bf16.mxu0 %v7608
    %10206 = vmatmul.mubr.bf16.gmra.mrb[0].mxu0 %v7607
    %v10207 = vpop.f32.mrb[0].mxu0
    %v10208 = vadd.f32 %v10015, %v10207
    %v10209 = vpop.f32.mrb[0].mxu0
    %v10210 = vadd.f32 %v10017, %v10209
    %v10211 = vpop.f32.mrb[0].mxu0
    %v10212 = vadd.f32 %v10019, %v10211
    %v10213 = vpop.f32.mrb[0].mxu0
    %v10214 = vadd.f32 %v10021, %v10213
    %10215 = vmatprep.mubr.bf16.mxu0 %v7616
    %10216 = vmatmul.mubr.bf16.gmra.mrb[0].mxu0 %v7615
    %v10217 = vpop.f32.mrb[0].mxu0
    %v10218 = vadd.f32 %v10025, %v10217
    %v10219 = vpop.f32.mrb[0].mxu0
    %v10220 = vadd.f32 %v10027, %v10219
    %v10221 = vpop.f32.mrb[0].mxu0
    %v10222 = vadd.f32 %v10029, %v10221
    %v10223 = vpop.f32.mrb[0].mxu0
    %v10224 = vadd.f32 %v10031, %v10223
    %10225 = vdwg.mxu0
    %10226 = vmatprep.subr.bf16.mxu0 %v7960
    %10227 = vmatpush1.bf16.msra.mxu0 %v7959
    %10228 = vmatprep.subr.bf16.mxu0 %v7967
    %10229 = vmatpush1.bf16.msra.mxu0 %v7966
    %10230 = vmatprep.subr.bf16.mxu0 %v7974
    %10231 = vmatpush1.bf16.msra.mxu0 %v7973
    %10232 = vmatprep.subr.bf16.mxu0 %v7981
    %10233 = vmatpush1.bf16.msra.mxu0 %v7980
    %10234 = vmatprep.subr.bf16.mxu0 %v7988
    %10235 = vmatpush1.bf16.msra.mxu0 %v7987
    %10236 = vmatprep.subr.bf16.mxu0 %v7995
    %10237 = vmatpush1.bf16.msra.mxu0 %v7994
    %10238 = vmatprep.subr.bf16.mxu0 %v8002
    %10239 = vmatpush1.bf16.msra.mxu0 %v8001
    %10240 = vmatprep.subr.bf16.mxu0 %v8009
    %10241 = vmatpush1.bf16.msra.mxu0 %v8008
    %10242 = vmatprep.subr.bf16.mxu0 %v8016
    %10243 = vmatpush1.bf16.msra.mxu0 %v8015
    %10244 = vmatprep.subr.bf16.mxu0 %v8023
    %10245 = vmatpush1.bf16.msra.mxu0 %v8022
    %10246 = vmatprep.subr.bf16.mxu0 %v8030
    %10247 = vmatpush1.bf16.msra.mxu0 %v8029
    %10248 = vmatprep.subr.bf16.mxu0 %v8037
    %10249 = vmatpush1.bf16.msra.mxu0 %v8036
    %10250 = vmatprep.subr.bf16.mxu0 %v8044
    %10251 = vmatpush1.bf16.msra.mxu0 %v8043
    %10252 = vmatprep.subr.bf16.mxu0 %v8051
    %10253 = vmatpush1.bf16.msra.mxu0 %v8050
    %10254 = vmatprep.subr.bf16.mxu0 %v8058
    %10255 = vmatpush1.bf16.msra.mxu0 %v8057
    %10256 = vmatprep.subr.bf16.mxu0 %v8065
    %10257 = vmatpush1.bf16.msra.mxu0 %v8064
    %10258 = vmatprep.mubr.bf16.mxu0 %v7498
    %10259 = vmatmul.mubr.bf16.gmra.mrb[0].mxu0 %v7497
    %v10260 = vpop.f32.mrb[0].mxu0
    %v10261 = vadd.f32 %v10068, %v10260
    %v10262 = vpop.f32.mrb[0].mxu0
    %v10263 = vadd.f32 %v10070, %v10262
    %v10264 = vpop.f32.mrb[0].mxu0
    %v10265 = vadd.f32 %v10072, %v10264
    %v10266 = vpop.f32.mrb[0].mxu0
    %v10267 = vadd.f32 %v10074, %v10266
    %10268 = vmatprep.mubr.bf16.mxu0 %v7506
    %10269 = vmatmul.mubr.bf16.gmra.mrb[0].mxu0 %v7505
    %v10270 = vpop.f32.mrb[0].mxu0
    %v10271 = vadd.f32 %v10078, %v10270
    %v10272 = vpop.f32.mrb[0].mxu0
    %v10273 = vadd.f32 %v10080, %v10272
    %v10274 = vpop.f32.mrb[0].mxu0
    %v10275 = vadd.f32 %v10082, %v10274
    %v10276 = vpop.f32.mrb[0].mxu0
    %v10277 = vadd.f32 %v10084, %v10276
    %10278 = vmatprep.mubr.bf16.mxu0 %v7514
    %10279 = vmatmul.mubr.bf16.gmra.mrb[0].mxu0 %v7513
    %v10280 = vpop.f32.mrb[0].mxu0
    %v10281 = vadd.f32 %v10088, %v10280
    %v10282 = vpop.f32.mrb[0].mxu0
    %v10283 = vadd.f32 %v10090, %v10282
    %v10284 = vpop.f32.mrb[0].mxu0
    %v10285 = vadd.f32 %v10092, %v10284
    %v10286 = vpop.f32.mrb[0].mxu0
    %v10287 = vadd.f32 %v10094, %v10286
    %10288 = vmatprep.mubr.bf16.mxu0 %v7522
    %10289 = vmatmul.mubr.bf16.gmra.mrb[0].mxu0 %v7521
    %v10290 = vpop.f32.mrb[0].mxu0
    %v10291 = vadd.f32 %v10098, %v10290
    %v10292 = vpop.f32.mrb[0].mxu0
    %v10293 = vadd.f32 %v10100, %v10292
    %v10294 = vpop.f32.mrb[0].mxu0
    %v10295 = vadd.f32 %v10102, %v10294
    %v10296 = vpop.f32.mrb[0].mxu0
    %v10297 = vadd.f32 %v10104, %v10296
    %10298 = vmatprep.mubr.bf16.mxu0 %v7530
    %10299 = vmatmul.mubr.bf16.gmra.mrb[0].mxu0 %v7529
    %v10300 = vpop.f32.mrb[0].mxu0
    %v10301 = vadd.f32 %v10108, %v10300
    %v10302 = vpop.f32.mrb[0].mxu0
    %v10303 = vadd.f32 %v10110, %v10302
    %v10304 = vpop.f32.mrb[0].mxu0
    %v10305 = vadd.f32 %v10112, %v10304
    %v10306 = vpop.f32.mrb[0].mxu0
    %v10307 = vadd.f32 %v10114, %v10306
    %10308 = vmatprep.mubr.bf16.mxu0 %v7538
    %10309 = vmatmul.mubr.bf16.gmra.mrb[0].mxu0 %v7537
    %v10310 = vpop.f32.mrb[0].mxu0
    %v10311 = vadd.f32 %v10118, %v10310
    %v10312 = vpop.f32.mrb[0].mxu0
    %v10313 = vadd.f32 %v10120, %v10312
    %v10314 = vpop.f32.mrb[0].mxu0
    %v10315 = vadd.f32 %v10122, %v10314
    %v10316 = vpop.f32.mrb[0].mxu0
    %v10317 = vadd.f32 %v10124, %v10316
    %10318 = vmatprep.mubr.bf16.mxu0 %v7546
    %10319 = vmatmul.mubr.bf16.gmra.mrb[0].mxu0 %v7545
    %v10320 = vpop.f32.mrb[0].mxu0
    %v10321 = vadd.f32 %v10128, %v10320
    %v10322 = vpop.f32.mrb[0].mxu0
    %v10323 = vadd.f32 %v10130, %v10322
    %v10324 = vpop.f32.mrb[0].mxu0
    %v10325 = vadd.f32 %v10132, %v10324
    %v10326 = vpop.f32.mrb[0].mxu0
    %v10327 = vadd.f32 %v10134, %v10326
    %10328 = vmatprep.mubr.bf16.mxu0 %v7554
    %10329 = vmatmul.mubr.bf16.gmra.mrb[0].mxu0 %v7553
    %v10330 = vpop.f32.mrb[0].mxu0
    %v10331 = vadd.f32 %v10138, %v10330
    %v10332 = vpop.f32.mrb[0].mxu0
    %v10333 = vadd.f32 %v10140, %v10332
    %v10334 = vpop.f32.mrb[0].mxu0
    %v10335 = vadd.f32 %v10142, %v10334
    %v10336 = vpop.f32.mrb[0].mxu0
    %v10337 = vadd.f32 %v10144, %v10336
    %10338 = vmatprep.mubr.bf16.mxu0 %v7562
    %10339 = vmatmul.mubr.bf16.gmra.mrb[0].mxu0 %v7561
    %v10340 = vpop.f32.mrb[0].mxu0
    %v10341 = vadd.f32 %v10148, %v10340
    %v10342 = vpop.f32.mrb[0].mxu0
    %v10343 = vadd.f32 %v10150, %v10342
    %v10344 = vpop.f32.mrb[0].mxu0
    %v10345 = vadd.f32 %v10152, %v10344
    %v10346 = vpop.f32.mrb[0].mxu0
    %v10347 = vadd.f32 %v10154, %v10346
    %10348 = vmatprep.mubr.bf16.mxu0 %v7570
    %10349 = vmatmul.mubr.bf16.gmra.mrb[0].mxu0 %v7569
    %v10350 = vpop.f32.mrb[0].mxu0
    %v10351 = vadd.f32 %v10158, %v10350
    %v10352 = vpop.f32.mrb[0].mxu0
    %v10353 = vadd.f32 %v10160, %v10352
    %v10354 = vpop.f32.mrb[0].mxu0
    %v10355 = vadd.f32 %v10162, %v10354
    %v10356 = vpop.f32.mrb[0].mxu0
    %v10357 = vadd.f32 %v10164, %v10356
    %10358 = vmatprep.mubr.bf16.mxu0 %v7578
    %10359 = vmatmul.mubr.bf16.gmra.mrb[0].mxu0 %v7577
    %v10360 = vpop.f32.mrb[0].mxu0
    %v10361 = vadd.f32 %v10168, %v10360
    %v10362 = vpop.f32.mrb[0].mxu0
    %v10363 = vadd.f32 %v10170, %v10362
    %v10364 = vpop.f32.mrb[0].mxu0
    %v10365 = vadd.f32 %v10172, %v10364
    %v10366 = vpop.f32.mrb[0].mxu0
    %v10367 = vadd.f32 %v10174, %v10366
    %10368 = vmatprep.mubr.bf16.mxu0 %v7586
    %10369 = vmatmul.mubr.bf16.gmra.mrb[0].mxu0 %v7585
    %v10370 = vpop.f32.mrb[0].mxu0
    %v10371 = vadd.f32 %v10178, %v10370
    %v10372 = vpop.f32.mrb[0].mxu0
    %v10373 = vadd.f32 %v10180, %v10372
    %v10374 = vpop.f32.mrb[0].mxu0
    %v10375 = vadd.f32 %v10182, %v10374
    %v10376 = vpop.f32.mrb[0].mxu0
    %v10377 = vadd.f32 %v10184, %v10376
    %10378 = vmatprep.mubr.bf16.mxu0 %v7594
    %10379 = vmatmul.mubr.bf16.gmra.mrb[0].mxu0 %v7593
    %v10380 = vpop.f32.mrb[0].mxu0
    %v10381 = vadd.f32 %v10188, %v10380
    %v10382 = vpop.f32.mrb[0].mxu0
    %v10383 = vadd.f32 %v10190, %v10382
    %v10384 = vpop.f32.mrb[0].mxu0
    %v10385 = vadd.f32 %v10192, %v10384
    %v10386 = vpop.f32.mrb[0].mxu0
    %v10387 = vadd.f32 %v10194, %v10386
    %10388 = vmatprep.mubr.bf16.mxu0 %v7602
    %10389 = vmatmul.mubr.bf16.gmra.mrb[0].mxu0 %v7601
    %v10390 = vpop.f32.mrb[0].mxu0
    %v10391 = vadd.f32 %v10198, %v10390
    %v10392 = vpop.f32.mrb[0].mxu0
    %v10393 = vadd.f32 %v10200, %v10392
    %v10394 = vpop.f32.mrb[0].mxu0
    %v10395 = vadd.f32 %v10202, %v10394
    %v10396 = vpop.f32.mrb[0].mxu0
    %v10397 = vadd.f32 %v10204, %v10396
    %10398 = vmatprep.mubr.bf16.mxu0 %v7610
    %10399 = vmatmul.mubr.bf16.gmra.mrb[0].mxu0 %v7609
    %v10400 = vpop.f32.mrb[0].mxu0
    %v10401 = vadd.f32 %v10208, %v10400
    %v10402 = vpop.f32.mrb[0].mxu0
    %v10403 = vadd.f32 %v10210, %v10402
    %v10404 = vpop.f32.mrb[0].mxu0
    %v10405 = vadd.f32 %v10212, %v10404
    %v10406 = vpop.f32.mrb[0].mxu0
    %v10407 = vadd.f32 %v10214, %v10406
    %10408 = vmatprep.mubr.bf16.mxu0 %v7618
    %10409 = vmatmul.mubr.bf16.gmra.mrb[0].mxu0 %v7617
    %v10410 = vpop.f32.mrb[0].mxu0
    %v10411 = vadd.f32 %v10218, %v10410
    %v10412 = vpop.f32.mrb[0].mxu0
    %v10413 = vadd.f32 %v10220, %v10412
    %v10414 = vpop.f32.mrb[0].mxu0
    %v10415 = vadd.f32 %v10222, %v10414
    %v10416 = vpop.f32.mrb[0].mxu0
    %v10417 = vadd.f32 %v10224, %v10416
    %10418 = vdwg.mxu0
    %10419 = vmatprep.subr.bf16.mxu0 0
    %10420 = vmatpush1.bf16.msra.mxu0 %v7625
    %10421 = vmatprep.subr.bf16.mxu0 0
    %10422 = vmatpush1.bf16.msra.mxu0 %v7632
    %10423 = vmatprep.subr.bf16.mxu0 0
    %10424 = vmatpush1.bf16.msra.mxu0 %v7639
    %10425 = vmatprep.subr.bf16.mxu0 0
    %10426 = vmatpush1.bf16.msra.mxu0 %v7646
    %10427 = vmatprep.subr.bf16.mxu0 0
    %10428 = vmatpush1.bf16.msra.mxu0 %v7653
    %10429 = vmatprep.subr.bf16.mxu0 0
    %10430 = vmatpush1.bf16.msra.mxu0 %v7660
    %10431 = vmatprep.subr.bf16.mxu0 0
    %10432 = vmatpush1.bf16.msra.mxu0 %v7667
    %10433 = vmatprep.subr.bf16.mxu0 0
    %10434 = vmatpush1.bf16.msra.mxu0 %v7674
    %10435 = vmatprep.subr.bf16.mxu0 0
    %10436 = vmatpush1.bf16.msra.mxu0 %v7681
    %10437 = vmatprep.subr.bf16.mxu0 0
    %10438 = vmatpush1.bf16.msra.mxu0 %v7688
    %10439 = vmatprep.subr.bf16.mxu0 0
    %10440 = vmatpush1.bf16.msra.mxu0 %v7695
    %10441 = vmatprep.subr.bf16.mxu0 0
    %10442 = vmatpush1.bf16.msra.mxu0 %v7702
    %10443 = vmatprep.subr.bf16.mxu0 0
    %10444 = vmatpush1.bf16.msra.mxu0 %v7709
    %10445 = vmatprep.subr.bf16.mxu0 0
    %10446 = vmatpush1.bf16.msra.mxu0 %v7716
    %10447 = vmatprep.subr.bf16.mxu0 0
    %10448 = vmatpush1.bf16.msra.mxu0 %v7723
    %10449 = vmatprep.subr.bf16.mxu0 0
    %10450 = vmatpush1.bf16.msra.mxu0 %v7730
    %10451 = vmatprep.mubr.bf16.mxu0 %v7492
    %10452 = vmatmul.mubr.bf16.gmra.mrb[0].mxu0 %v7491
    %v10453 = vpop.f32.mrb[0].mxu0
    %v10454 = vadd.f32 %v8095, %v10453
    %v10455 = vpop.f32.mrb[0].mxu0
    %v10456 = vpop.f32.mrb[0].mxu0
    %v10457 = vadd.f32 %v8095, %v10456
    %v10458 = vpop.f32.mrb[0].mxu0
    %10459 = vmatprep.mubr.bf16.mxu0 %v7500
    %10460 = vmatmul.mubr.bf16.gmra.mrb[0].mxu0 %v7499
    %v10461 = vpop.f32.mrb[0].mxu0
    %v10462 = vadd.f32 %v8095, %v10461
    %v10463 = vpop.f32.mrb[0].mxu0
    %v10464 = vpop.f32.mrb[0].mxu0
    %v10465 = vadd.f32 %v8095, %v10464
    %v10466 = vpop.f32.mrb[0].mxu0
    %10467 = vmatprep.mubr.bf16.mxu0 %v7508
    %10468 = vmatmul.mubr.bf16.gmra.mrb[0].mxu0 %v7507
    %v10469 = vpop.f32.mrb[0].mxu0
    %v10470 = vadd.f32 %v8095, %v10469
    %v10471 = vpop.f32.mrb[0].mxu0
    %v10472 = vpop.f32.mrb[0].mxu0
    %v10473 = vadd.f32 %v8095, %v10472
    %v10474 = vpop.f32.mrb[0].mxu0
    %10475 = vmatprep.mubr.bf16.mxu0 %v7516
    %10476 = vmatmul.mubr.bf16.gmra.mrb[0].mxu0 %v7515
    %v10477 = vpop.f32.mrb[0].mxu0
    %v10478 = vadd.f32 %v8095, %v10477
    %v10479 = vpop.f32.mrb[0].mxu0
    %v10480 = vpop.f32.mrb[0].mxu0
    %v10481 = vadd.f32 %v8095, %v10480
    %v10482 = vpop.f32.mrb[0].mxu0
    %10483 = vmatprep.mubr.bf16.mxu0 %v7524
    %10484 = vmatmul.mubr.bf16.gmra.mrb[0].mxu0 %v7523
    %v10485 = vpop.f32.mrb[0].mxu0
    %v10486 = vadd.f32 %v8095, %v10485
    %v10487 = vpop.f32.mrb[0].mxu0
    %v10488 = vpop.f32.mrb[0].mxu0
    %v10489 = vadd.f32 %v8095, %v10488
    %v10490 = vpop.f32.mrb[0].mxu0
    %10491 = vmatprep.mubr.bf16.mxu0 %v7532
    %10492 = vmatmul.mubr.bf16.gmra.mrb[0].mxu0 %v7531
    %v10493 = vpop.f32.mrb[0].mxu0
    %v10494 = vadd.f32 %v8095, %v10493
    %v10495 = vpop.f32.mrb[0].mxu0
    %v10496 = vpop.f32.mrb[0].mxu0
    %v10497 = vadd.f32 %v8095, %v10496
    %v10498 = vpop.f32.mrb[0].mxu0
    %10499 = vmatprep.mubr.bf16.mxu0 %v7540
    %10500 = vmatmul.mubr.bf16.gmra.mrb[0].mxu0 %v7539
    %v10501 = vpop.f32.mrb[0].mxu0
    %v10502 = vadd.f32 %v8095, %v10501
    %v10503 = vpop.f32.mrb[0].mxu0
    %v10504 = vpop.f32.mrb[0].mxu0
    %v10505 = vadd.f32 %v8095, %v10504
    %v10506 = vpop.f32.mrb[0].mxu0
    %10507 = vmatprep.mubr.bf16.mxu0 %v7548
    %10508 = vmatmul.mubr.bf16.gmra.mrb[0].mxu0 %v7547
    %v10509 = vpop.f32.mrb[0].mxu0
    %v10510 = vadd.f32 %v8095, %v10509
    %v10511 = vpop.f32.mrb[0].mxu0
    %v10512 = vpop.f32.mrb[0].mxu0
    %v10513 = vadd.f32 %v8095, %v10512
    %v10514 = vpop.f32.mrb[0].mxu0
    %10515 = vmatprep.mubr.bf16.mxu0 %v7556
    %10516 = vmatmul.mubr.bf16.gmra.mrb[0].mxu0 %v7555
    %v10517 = vpop.f32.mrb[0].mxu0
    %v10518 = vadd.f32 %v8095, %v10517
    %v10519 = vpop.f32.mrb[0].mxu0
    %v10520 = vpop.f32.mrb[0].mxu0
    %v10521 = vadd.f32 %v8095, %v10520
    %v10522 = vpop.f32.mrb[0].mxu0
    %10523 = vmatprep.mubr.bf16.mxu0 %v7564
    %10524 = vmatmul.mubr.bf16.gmra.mrb[0].mxu0 %v7563
    %v10525 = vpop.f32.mrb[0].mxu0
    %v10526 = vadd.f32 %v8095, %v10525
    %v10527 = vpop.f32.mrb[0].mxu0
    %v10528 = vpop.f32.mrb[0].mxu0
    %v10529 = vadd.f32 %v8095, %v10528
    %v10530 = vpop.f32.mrb[0].mxu0
    %10531 = vmatprep.mubr.bf16.mxu0 %v7572
    %10532 = vmatmul.mubr.bf16.gmra.mrb[0].mxu0 %v7571
    %v10533 = vpop.f32.mrb[0].mxu0
    %v10534 = vadd.f32 %v8095, %v10533
    %v10535 = vpop.f32.mrb[0].mxu0
    %v10536 = vpop.f32.mrb[0].mxu0
    %v10537 = vadd.f32 %v8095, %v10536
    %v10538 = vpop.f32.mrb[0].mxu0
    %10539 = vmatprep.mubr.bf16.mxu0 %v7580
    %10540 = vmatmul.mubr.bf16.gmra.mrb[0].mxu0 %v7579
    %v10541 = vpop.f32.mrb[0].mxu0
    %v10542 = vadd.f32 %v8095, %v10541
    %v10543 = vpop.f32.mrb[0].mxu0
    %v10544 = vpop.f32.mrb[0].mxu0
    %v10545 = vadd.f32 %v8095, %v10544
    %v10546 = vpop.f32.mrb[0].mxu0
    %10547 = vmatprep.mubr.bf16.mxu0 %v7588
    %10548 = vmatmul.mubr.bf16.gmra.mrb[0].mxu0 %v7587
    %v10549 = vpop.f32.mrb[0].mxu0
    %v10550 = vadd.f32 %v8095, %v10549
    %v10551 = vpop.f32.mrb[0].mxu0
    %v10552 = vpop.f32.mrb[0].mxu0
    %v10553 = vadd.f32 %v8095, %v10552
    %v10554 = vpop.f32.mrb[0].mxu0
    %10555 = vmatprep.mubr.bf16.mxu0 %v7596
    %10556 = vmatmul.mubr.bf16.gmra.mrb[0].mxu0 %v7595
    %v10557 = vpop.f32.mrb[0].mxu0
    %v10558 = vadd.f32 %v8095, %v10557
    %v10559 = vpop.f32.mrb[0].mxu0
    %v10560 = vpop.f32.mrb[0].mxu0
    %v10561 = vadd.f32 %v8095, %v10560
    %v10562 = vpop.f32.mrb[0].mxu0
    %10563 = vmatprep.mubr.bf16.mxu0 %v7604
    %10564 = vmatmul.mubr.bf16.gmra.mrb[0].mxu0 %v7603
    %v10565 = vpop.f32.mrb[0].mxu0
    %v10566 = vadd.f32 %v8095, %v10565
    %v10567 = vpop.f32.mrb[0].mxu0
    %v10568 = vpop.f32.mrb[0].mxu0
    %v10569 = vadd.f32 %v8095, %v10568
    %v10570 = vpop.f32.mrb[0].mxu0
    %10571 = vmatprep.mubr.bf16.mxu0 %v7612
    %10572 = vmatmul.mubr.bf16.gmra.mrb[0].mxu0 %v7611
    %v10573 = vpop.f32.mrb[0].mxu0
    %v10574 = vadd.f32 %v8095, %v10573
    %v10575 = vpop.f32.mrb[0].mxu0
    %v10576 = vpop.f32.mrb[0].mxu0
    %v10577 = vadd.f32 %v8095, %v10576
    %v10578 = vpop.f32.mrb[0].mxu0
    %10579 = vdwg.mxu0
    %10580 = vmatprep.subr.bf16.mxu0 0
    %10581 = vmatpush1.bf16.msra.mxu0 %v7737
    %10582 = vmatprep.subr.bf16.mxu0 0
    %10583 = vmatpush1.bf16.msra.mxu0 %v7744
    %10584 = vmatprep.subr.bf16.mxu0 0
    %10585 = vmatpush1.bf16.msra.mxu0 %v7751
    %10586 = vmatprep.subr.bf16.mxu0 0
    %10587 = vmatpush1.bf16.msra.mxu0 %v7758
    %10588 = vmatprep.subr.bf16.mxu0 0
    %10589 = vmatpush1.bf16.msra.mxu0 %v7765
    %10590 = vmatprep.subr.bf16.mxu0 0
    %10591 = vmatpush1.bf16.msra.mxu0 %v7772
    %10592 = vmatprep.subr.bf16.mxu0 0
    %10593 = vmatpush1.bf16.msra.mxu0 %v7779
    %10594 = vmatprep.subr.bf16.mxu0 0
    %10595 = vmatpush1.bf16.msra.mxu0 %v7786
    %10596 = vmatprep.subr.bf16.mxu0 0
    %10597 = vmatpush1.bf16.msra.mxu0 %v7793
    %10598 = vmatprep.subr.bf16.mxu0 0
    %10599 = vmatpush1.bf16.msra.mxu0 %v7800
    %10600 = vmatprep.subr.bf16.mxu0 0
    %10601 = vmatpush1.bf16.msra.mxu0 %v7807
    %10602 = vmatprep.subr.bf16.mxu0 0
    %10603 = vmatpush1.bf16.msra.mxu0 %v7814
    %10604 = vmatprep.subr.bf16.mxu0 0
    %10605 = vmatpush1.bf16.msra.mxu0 %v7821
    %10606 = vmatprep.subr.bf16.mxu0 0
    %10607 = vmatpush1.bf16.msra.mxu0 %v7828
    %10608 = vmatprep.subr.bf16.mxu0 0
    %10609 = vmatpush1.bf16.msra.mxu0 %v7835
    %10610 = vmatprep.subr.bf16.mxu0 0
    %10611 = vmatpush1.bf16.msra.mxu0 %v7842
    %10612 = vmatprep.mubr.bf16.mxu0 %v7494
    %10613 = vmatmul.mubr.bf16.gmra.mrb[0].mxu0 %v7493
    %v10614 = vpop.f32.mrb[0].mxu0
    %v10615 = vadd.f32 %v10454, %v10614
    %v10616 = vpop.f32.mrb[0].mxu0
    %v10617 = vpop.f32.mrb[0].mxu0
    %v10618 = vadd.f32 %v10457, %v10617
    %v10619 = vpop.f32.mrb[0].mxu0
    %10620 = vmatprep.mubr.bf16.mxu0 %v7502
    %10621 = vmatmul.mubr.bf16.gmra.mrb[0].mxu0 %v7501
    %v10622 = vpop.f32.mrb[0].mxu0
    %v10623 = vadd.f32 %v10462, %v10622
    %v10624 = vpop.f32.mrb[0].mxu0
    %v10625 = vpop.f32.mrb[0].mxu0
    %v10626 = vadd.f32 %v10465, %v10625
    %v10627 = vpop.f32.mrb[0].mxu0
    %10628 = vmatprep.mubr.bf16.mxu0 %v7510
    %10629 = vmatmul.mubr.bf16.gmra.mrb[0].mxu0 %v7509
    %v10630 = vpop.f32.mrb[0].mxu0
    %v10631 = vadd.f32 %v10470, %v10630
    %v10632 = vpop.f32.mrb[0].mxu0
    %v10633 = vpop.f32.mrb[0].mxu0
    %v10634 = vadd.f32 %v10473, %v10633
    %v10635 = vpop.f32.mrb[0].mxu0
    %10636 = vmatprep.mubr.bf16.mxu0 %v7518
    %10637 = vmatmul.mubr.bf16.gmra.mrb[0].mxu0 %v7517
    %v10638 = vpop.f32.mrb[0].mxu0
    %v10639 = vadd.f32 %v10478, %v10638
    %v10640 = vpop.f32.mrb[0].mxu0
    %v10641 = vpop.f32.mrb[0].mxu0
    %v10642 = vadd.f32 %v10481, %v10641
    %v10643 = vpop.f32.mrb[0].mxu0
    %10644 = vmatprep.mubr.bf16.mxu0 %v7526
    %10645 = vmatmul.mubr.bf16.gmra.mrb[0].mxu0 %v7525
    %v10646 = vpop.f32.mrb[0].mxu0
    %v10647 = vadd.f32 %v10486, %v10646
    %v10648 = vpop.f32.mrb[0].mxu0
    %v10649 = vpop.f32.mrb[0].mxu0
    %v10650 = vadd.f32 %v10489, %v10649
    %v10651 = vpop.f32.mrb[0].mxu0
    %10652 = vmatprep.mubr.bf16.mxu0 %v7534
    %10653 = vmatmul.mubr.bf16.gmra.mrb[0].mxu0 %v7533
    %v10654 = vpop.f32.mrb[0].mxu0
    %v10655 = vadd.f32 %v10494, %v10654
    %v10656 = vpop.f32.mrb[0].mxu0
    %v10657 = vpop.f32.mrb[0].mxu0
    %v10658 = vadd.f32 %v10497, %v10657
    %v10659 = vpop.f32.mrb[0].mxu0
    %10660 = vmatprep.mubr.bf16.mxu0 %v7542
    %10661 = vmatmul.mubr.bf16.gmra.mrb[0].mxu0 %v7541
    %v10662 = vpop.f32.mrb[0].mxu0
    %v10663 = vadd.f32 %v10502, %v10662
    %v10664 = vpop.f32.mrb[0].mxu0
    %v10665 = vpop.f32.mrb[0].mxu0
    %v10666 = vadd.f32 %v10505, %v10665
    %v10667 = vpop.f32.mrb[0].mxu0
    %10668 = vmatprep.mubr.bf16.mxu0 %v7550
    %10669 = vmatmul.mubr.bf16.gmra.mrb[0].mxu0 %v7549
    %v10670 = vpop.f32.mrb[0].mxu0
    %v10671 = vadd.f32 %v10510, %v10670
    %v10672 = vpop.f32.mrb[0].mxu0
    %v10673 = vpop.f32.mrb[0].mxu0
    %v10674 = vadd.f32 %v10513, %v10673
    %v10675 = vpop.f32.mrb[0].mxu0
    %10676 = vmatprep.mubr.bf16.mxu0 %v7558
    %10677 = vmatmul.mubr.bf16.gmra.mrb[0].mxu0 %v7557
    %v10678 = vpop.f32.mrb[0].mxu0
    %v10679 = vadd.f32 %v10518, %v10678
    %v10680 = vpop.f32.mrb[0].mxu0
    %v10681 = vpop.f32.mrb[0].mxu0
    %v10682 = vadd.f32 %v10521, %v10681
    %v10683 = vpop.f32.mrb[0].mxu0
    %10684 = vmatprep.mubr.bf16.mxu0 %v7566
    %10685 = vmatmul.mubr.bf16.gmra.mrb[0].mxu0 %v7565
    %v10686 = vpop.f32.mrb[0].mxu0
    %v10687 = vadd.f32 %v10526, %v10686
    %v10688 = vpop.f32.mrb[0].mxu0
    %v10689 = vpop.f32.mrb[0].mxu0
    %v10690 = vadd.f32 %v10529, %v10689
    %v10691 = vpop.f32.mrb[0].mxu0
    %10692 = vmatprep.mubr.bf16.mxu0 %v7574
    %10693 = vmatmul.mubr.bf16.gmra.mrb[0].mxu0 %v7573
    %v10694 = vpop.f32.mrb[0].mxu0
    %v10695 = vadd.f32 %v10534, %v10694
    %v10696 = vpop.f32.mrb[0].mxu0
    %v10697 = vpop.f32.mrb[0].mxu0
    %v10698 = vadd.f32 %v10537, %v10697
    %v10699 = vpop.f32.mrb[0].mxu0
    %10700 = vmatprep.mubr.bf16.mxu0 %v7582
    %10701 = vmatmul.mubr.bf16.gmra.mrb[0].mxu0 %v7581
    %v10702 = vpop.f32.mrb[0].mxu0
    %v10703 = vadd.f32 %v10542, %v10702
    %v10704 = vpop.f32.mrb[0].mxu0
    %v10705 = vpop.f32.mrb[0].mxu0
    %v10706 = vadd.f32 %v10545, %v10705
    %v10707 = vpop.f32.mrb[0].mxu0
    %10708 = vmatprep.mubr.bf16.mxu0 %v7590
    %10709 = vmatmul.mubr.bf16.gmra.mrb[0].mxu0 %v7589
    %v10710 = vpop.f32.mrb[0].mxu0
    %v10711 = vadd.f32 %v10550, %v10710
    %v10712 = vpop.f32.mrb[0].mxu0
    %v10713 = vpop.f32.mrb[0].mxu0
    %v10714 = vadd.f32 %v10553, %v10713
    %v10715 = vpop.f32.mrb[0].mxu0
    %10716 = vmatprep.mubr.bf16.mxu0 %v7598
    %10717 = vmatmul.mubr.bf16.gmra.mrb[0].mxu0 %v7597
    %v10718 = vpop.f32.mrb[0].mxu0
    %v10719 = vadd.f32 %v10558, %v10718
    %v10720 = vpop.f32.mrb[0].mxu0
    %v10721 = vpop.f32.mrb[0].mxu0
    %v10722 = vadd.f32 %v10561, %v10721
    %v10723 = vpop.f32.mrb[0].mxu0
    %10724 = vmatprep.mubr.bf16.mxu0 %v7606
    %10725 = vmatmul.mubr.bf16.gmra.mrb[0].mxu0 %v7605
    %v10726 = vpop.f32.mrb[0].mxu0
    %v10727 = vadd.f32 %v10566, %v10726
    %v10728 = vpop.f32.mrb[0].mxu0
    %v10729 = vpop.f32.mrb[0].mxu0
    %v10730 = vadd.f32 %v10569, %v10729
    %v10731 = vpop.f32.mrb[0].mxu0
    %10732 = vmatprep.mubr.bf16.mxu0 %v7614
    %10733 = vmatmul.mubr.bf16.gmra.mrb[0].mxu0 %v7613
    %v10734 = vpop.f32.mrb[0].mxu0
    %v10735 = vadd.f32 %v10574, %v10734
    %v10736 = vpop.f32.mrb[0].mxu0
    %v10737 = vpop.f32.mrb[0].mxu0
    %v10738 = vadd.f32 %v10577, %v10737
    %v10739 = vpop.f32.mrb[0].mxu0
    %10740 = vdwg.mxu0
    %10741 = vmatprep.subr.bf16.mxu0 0
    %10742 = vmatpush1.bf16.msra.mxu0 %v7849
    %10743 = vmatprep.subr.bf16.mxu0 0
    %10744 = vmatpush1.bf16.msra.mxu0 %v7856
    %10745 = vmatprep.subr.bf16.mxu0 0
    %10746 = vmatpush1.bf16.msra.mxu0 %v7863
    %10747 = vmatprep.subr.bf16.mxu0 0
    %10748 = vmatpush1.bf16.msra.mxu0 %v7870
    %10749 = vmatprep.subr.bf16.mxu0 0
    %10750 = vmatpush1.bf16.msra.mxu0 %v7877
    %10751 = vmatprep.subr.bf16.mxu0 0
    %10752 = vmatpush1.bf16.msra.mxu0 %v7884
    %10753 = vmatprep.subr.bf16.mxu0 0
    %10754 = vmatpush1.bf16.msra.mxu0 %v7891
    %10755 = vmatprep.subr.bf16.mxu0 0
    %10756 = vmatpush1.bf16.msra.mxu0 %v7898
    %10757 = vmatprep.subr.bf16.mxu0 0
    %10758 = vmatpush1.bf16.msra.mxu0 %v7905
    %10759 = vmatprep.subr.bf16.mxu0 0
    %10760 = vmatpush1.bf16.msra.mxu0 %v7912
    %10761 = vmatprep.subr.bf16.mxu0 0
    %10762 = vmatpush1.bf16.msra.mxu0 %v7919
    %10763 = vmatprep.subr.bf16.mxu0 0
    %10764 = vmatpush1.bf16.msra.mxu0 %v7926
    %10765 = vmatprep.subr.bf16.mxu0 0
    %10766 = vmatpush1.bf16.msra.mxu0 %v7933
    %10767 = vmatprep.subr.bf16.mxu0 0
    %10768 = vmatpush1.bf16.msra.mxu0 %v7940
    %10769 = vmatprep.subr.bf16.mxu0 0
    %10770 = vmatpush1.bf16.msra.mxu0 %v7947
    %10771 = vmatprep.subr.bf16.mxu0 0
    %10772 = vmatpush1.bf16.msra.mxu0 %v7954
    %10773 = vmatprep.mubr.bf16.mxu0 %v7496
    %10774 = vmatmul.mubr.bf16.gmra.mrb[0].mxu0 %v7495
    %v10775 = vpop.f32.mrb[0].mxu0
    %v10776 = vadd.f32 %v10615, %v10775
    %v10777 = vpop.f32.mrb[0].mxu0
    %v10778 = vpop.f32.mrb[0].mxu0
    %v10779 = vadd.f32 %v10618, %v10778
    %v10780 = vpop.f32.mrb[0].mxu0
    %10781 = vmatprep.mubr.bf16.mxu0 %v7504
    %10782 = vmatmul.mubr.bf16.gmra.mrb[0].mxu0 %v7503
    %v10783 = vpop.f32.mrb[0].mxu0
    %v10784 = vadd.f32 %v10623, %v10783
    %v10785 = vpop.f32.mrb[0].mxu0
    %v10786 = vpop.f32.mrb[0].mxu0
    %v10787 = vadd.f32 %v10626, %v10786
    %v10788 = vpop.f32.mrb[0].mxu0
    %10789 = vmatprep.mubr.bf16.mxu0 %v7512
    %10790 = vmatmul.mubr.bf16.gmra.mrb[0].mxu0 %v7511
    %v10791 = vpop.f32.mrb[0].mxu0
    %v10792 = vadd.f32 %v10631, %v10791
    %v10793 = vpop.f32.mrb[0].mxu0
    %v10794 = vpop.f32.mrb[0].mxu0
    %v10795 = vadd.f32 %v10634, %v10794
    %v10796 = vpop.f32.mrb[0].mxu0
    %10797 = vmatprep.mubr.bf16.mxu0 %v7520
    %10798 = vmatmul.mubr.bf16.gmra.mrb[0].mxu0 %v7519
    %v10799 = vpop.f32.mrb[0].mxu0
    %v10800 = vadd.f32 %v10639, %v10799
    %v10801 = vpop.f32.mrb[0].mxu0
    %v10802 = vpop.f32.mrb[0].mxu0
    %v10803 = vadd.f32 %v10642, %v10802
    %v10804 = vpop.f32.mrb[0].mxu0
    %10805 = vmatprep.mubr.bf16.mxu0 %v7528
    %10806 = vmatmul.mubr.bf16.gmra.mrb[0].mxu0 %v7527
    %v10807 = vpop.f32.mrb[0].mxu0
    %v10808 = vadd.f32 %v10647, %v10807
    %v10809 = vpop.f32.mrb[0].mxu0
    %v10810 = vpop.f32.mrb[0].mxu0
    %v10811 = vadd.f32 %v10650, %v10810
    %v10812 = vpop.f32.mrb[0].mxu0
    %10813 = vmatprep.mubr.bf16.mxu0 %v7536
    %10814 = vmatmul.mubr.bf16.gmra.mrb[0].mxu0 %v7535
    %v10815 = vpop.f32.mrb[0].mxu0
    %v10816 = vadd.f32 %v10655, %v10815
    %v10817 = vpop.f32.mrb[0].mxu0
    %v10818 = vpop.f32.mrb[0].mxu0
    %v10819 = vadd.f32 %v10658, %v10818
    %v10820 = vpop.f32.mrb[0].mxu0
    %10821 = vmatprep.mubr.bf16.mxu0 %v7544
    %10822 = vmatmul.mubr.bf16.gmra.mrb[0].mxu0 %v7543
    %v10823 = vpop.f32.mrb[0].mxu0
    %v10824 = vadd.f32 %v10663, %v10823
    %v10825 = vpop.f32.mrb[0].mxu0
    %v10826 = vpop.f32.mrb[0].mxu0
    %v10827 = vadd.f32 %v10666, %v10826
    %v10828 = vpop.f32.mrb[0].mxu0
    %10829 = vmatprep.mubr.bf16.mxu0 %v7552
    %10830 = vmatmul.mubr.bf16.gmra.mrb[0].mxu0 %v7551
    %v10831 = vpop.f32.mrb[0].mxu0
    %v10832 = vadd.f32 %v10671, %v10831
    %v10833 = vpop.f32.mrb[0].mxu0
    %v10834 = vpop.f32.mrb[0].mxu0
    %v10835 = vadd.f32 %v10674, %v10834
    %v10836 = vpop.f32.mrb[0].mxu0
    %10837 = vmatprep.mubr.bf16.mxu0 %v7560
    %10838 = vmatmul.mubr.bf16.gmra.mrb[0].mxu0 %v7559
    %v10839 = vpop.f32.mrb[0].mxu0
    %v10840 = vadd.f32 %v10679, %v10839
    %v10841 = vpop.f32.mrb[0].mxu0
    %v10842 = vpop.f32.mrb[0].mxu0
    %v10843 = vadd.f32 %v10682, %v10842
    %v10844 = vpop.f32.mrb[0].mxu0
    %10845 = vmatprep.mubr.bf16.mxu0 %v7568
    %10846 = vmatmul.mubr.bf16.gmra.mrb[0].mxu0 %v7567
    %v10847 = vpop.f32.mrb[0].mxu0
    %v10848 = vadd.f32 %v10687, %v10847
    %v10849 = vpop.f32.mrb[0].mxu0
    %v10850 = vpop.f32.mrb[0].mxu0
    %v10851 = vadd.f32 %v10690, %v10850
    %v10852 = vpop.f32.mrb[0].mxu0
    %10853 = vmatprep.mubr.bf16.mxu0 %v7576
    %10854 = vmatmul.mubr.bf16.gmra.mrb[0].mxu0 %v7575
    %v10855 = vpop.f32.mrb[0].mxu0
    %v10856 = vadd.f32 %v10695, %v10855
    %v10857 = vpop.f32.mrb[0].mxu0
    %v10858 = vpop.f32.mrb[0].mxu0
    %v10859 = vadd.f32 %v10698, %v10858
    %v10860 = vpop.f32.mrb[0].mxu0
    %10861 = vmatprep.mubr.bf16.mxu0 %v7584
    %10862 = vmatmul.mubr.bf16.gmra.mrb[0].mxu0 %v7583
    %v10863 = vpop.f32.mrb[0].mxu0
    %v10864 = vadd.f32 %v10703, %v10863
    %v10865 = vpop.f32.mrb[0].mxu0
    %v10866 = vpop.f32.mrb[0].mxu0
    %v10867 = vadd.f32 %v10706, %v10866
    %v10868 = vpop.f32.mrb[0].mxu0
    %10869 = vmatprep.mubr.bf16.mxu0 %v7592
    %10870 = vmatmul.mubr.bf16.gmra.mrb[0].mxu0 %v7591
    %v10871 = vpop.f32.mrb[0].mxu0
    %v10872 = vadd.f32 %v10711, %v10871
    %v10873 = vpop.f32.mrb[0].mxu0
    %v10874 = vpop.f32.mrb[0].mxu0
    %v10875 = vadd.f32 %v10714, %v10874
    %v10876 = vpop.f32.mrb[0].mxu0
    %10877 = vmatprep.mubr.bf16.mxu0 %v7600
    %10878 = vmatmul.mubr.bf16.gmra.mrb[0].mxu0 %v7599
    %v10879 = vpop.f32.mrb[0].mxu0
    %v10880 = vadd.f32 %v10719, %v10879
    %v10881 = vpop.f32.mrb[0].mxu0
    %v10882 = vpop.f32.mrb[0].mxu0
    %v10883 = vadd.f32 %v10722, %v10882
    %v10884 = vpop.f32.mrb[0].mxu0
    %10885 = vmatprep.mubr.bf16.mxu0 %v7608
    %10886 = vmatmul.mubr.bf16.gmra.mrb[0].mxu0 %v7607
    %v10887 = vpop.f32.mrb[0].mxu0
    %v10888 = vadd.f32 %v10727, %v10887
    %v10889 = vpop.f32.mrb[0].mxu0
    %v10890 = vpop.f32.mrb[0].mxu0
    %v10891 = vadd.f32 %v10730, %v10890
    %v10892 = vpop.f32.mrb[0].mxu0
    %10893 = vmatprep.mubr.bf16.mxu0 %v7616
    %10894 = vmatmul.mubr.bf16.gmra.mrb[0].mxu0 %v7615
    %v10895 = vpop.f32.mrb[0].mxu0
    %v10896 = vadd.f32 %v10735, %v10895
    %v10897 = vpop.f32.mrb[0].mxu0
    %v10898 = vpop.f32.mrb[0].mxu0
    %v10899 = vadd.f32 %v10738, %v10898
    %v10900 = vpop.f32.mrb[0].mxu0
    %10901 = vdwg.mxu0
    %10902 = vmatprep.subr.bf16.mxu0 0
    %10903 = vmatpush1.bf16.msra.mxu0 %v7961
    %10904 = vmatprep.subr.bf16.mxu0 0
    %10905 = vmatpush1.bf16.msra.mxu0 %v7968
    %10906 = vmatprep.subr.bf16.mxu0 0
    %10907 = vmatpush1.bf16.msra.mxu0 %v7975
    %10908 = vmatprep.subr.bf16.mxu0 0
    %10909 = vmatpush1.bf16.msra.mxu0 %v7982
    %10910 = vmatprep.subr.bf16.mxu0 0
    %10911 = vmatpush1.bf16.msra.mxu0 %v7989
    %10912 = vmatprep.subr.bf16.mxu0 0
    %10913 = vmatpush1.bf16.msra.mxu0 %v7996
    %10914 = vmatprep.subr.bf16.mxu0 0
    %10915 = vmatpush1.bf16.msra.mxu0 %v8003
    %10916 = vmatprep.subr.bf16.mxu0 0
    %10917 = vmatpush1.bf16.msra.mxu0 %v8010
    %10918 = vmatprep.subr.bf16.mxu0 0
    %10919 = vmatpush1.bf16.msra.mxu0 %v8017
    %10920 = vmatprep.subr.bf16.mxu0 0
    %10921 = vmatpush1.bf16.msra.mxu0 %v8024
    %10922 = vmatprep.subr.bf16.mxu0 0
    %10923 = vmatpush1.bf16.msra.mxu0 %v8031
    %10924 = vmatprep.subr.bf16.mxu0 0
    %10925 = vmatpush1.bf16.msra.mxu0 %v8038
    %10926 = vmatprep.subr.bf16.mxu0 0
    %10927 = vmatpush1.bf16.msra.mxu0 %v8045
    %10928 = vmatprep.subr.bf16.mxu0 0
    %10929 = vmatpush1.bf16.msra.mxu0 %v8052
    %10930 = vmatprep.subr.bf16.mxu0 0
    %10931 = vmatpush1.bf16.msra.mxu0 %v8059
    %10932 = vmatprep.subr.bf16.mxu0 0
    %10933 = vmatpush1.bf16.msra.mxu0 %v8066
    %10934 = vmatprep.mubr.bf16.mxu0 %v7498
    %10935 = vmatmul.mubr.bf16.gmra.mrb[0].mxu0 %v7497
    %v10936 = vpop.f32.mrb[0].mxu0
    %v10937 = vadd.f32 %v10776, %v10936
    %v10938 = vpop.f32.mrb[0].mxu0
    %v10939 = vpop.f32.mrb[0].mxu0
    %v10940 = vadd.f32 %v10779, %v10939
    %v10941 = vpop.f32.mrb[0].mxu0
    %10942 = vmatprep.mubr.bf16.mxu0 %v7506
    %10943 = vmatmul.mubr.bf16.gmra.mrb[0].mxu0 %v7505
    %v10944 = vpop.f32.mrb[0].mxu0
    %v10945 = vadd.f32 %v10784, %v10944
    %v10946 = vpop.f32.mrb[0].mxu0
    %v10947 = vpop.f32.mrb[0].mxu0
    %v10948 = vadd.f32 %v10787, %v10947
    %v10949 = vpop.f32.mrb[0].mxu0
    %10950 = vmatprep.mubr.bf16.mxu0 %v7514
    %10951 = vmatmul.mubr.bf16.gmra.mrb[0].mxu0 %v7513
    %v10952 = vpop.f32.mrb[0].mxu0
    %v10953 = vadd.f32 %v10792, %v10952
    %v10954 = vpop.f32.mrb[0].mxu0
    %v10955 = vpop.f32.mrb[0].mxu0
    %v10956 = vadd.f32 %v10795, %v10955
    %v10957 = vpop.f32.mrb[0].mxu0
    %10958 = vmatprep.mubr.bf16.mxu0 %v7522
    %10959 = vmatmul.mubr.bf16.gmra.mrb[0].mxu0 %v7521
    %v10960 = vpop.f32.mrb[0].mxu0
    %v10961 = vadd.f32 %v10800, %v10960
    %v10962 = vpop.f32.mrb[0].mxu0
    %v10963 = vpop.f32.mrb[0].mxu0
    %v10964 = vadd.f32 %v10803, %v10963
    %v10965 = vpop.f32.mrb[0].mxu0
    %10966 = vmatprep.mubr.bf16.mxu0 %v7530
    %10967 = vmatmul.mubr.bf16.gmra.mrb[0].mxu0 %v7529
    %v10968 = vpop.f32.mrb[0].mxu0
    %v10969 = vadd.f32 %v10808, %v10968
    %v10970 = vpop.f32.mrb[0].mxu0
    %v10971 = vpop.f32.mrb[0].mxu0
    %v10972 = vadd.f32 %v10811, %v10971
    %v10973 = vpop.f32.mrb[0].mxu0
    %10974 = vmatprep.mubr.bf16.mxu0 %v7538
    %10975 = vmatmul.mubr.bf16.gmra.mrb[0].mxu0 %v7537
    %v10976 = vpop.f32.mrb[0].mxu0
    %v10977 = vadd.f32 %v10816, %v10976
    %v10978 = vpop.f32.mrb[0].mxu0
    %v10979 = vpop.f32.mrb[0].mxu0
    %v10980 = vadd.f32 %v10819, %v10979
    %v10981 = vpop.f32.mrb[0].mxu0
    %10982 = vmatprep.mubr.bf16.mxu0 %v7546
    %10983 = vmatmul.mubr.bf16.gmra.mrb[0].mxu0 %v7545
    %v10984 = vpop.f32.mrb[0].mxu0
    %v10985 = vadd.f32 %v10824, %v10984
    %v10986 = vpop.f32.mrb[0].mxu0
    %v10987 = vpop.f32.mrb[0].mxu0
    %v10988 = vadd.f32 %v10827, %v10987
    %v10989 = vpop.f32.mrb[0].mxu0
    %10990 = vmatprep.mubr.bf16.mxu0 %v7554
    %10991 = vmatmul.mubr.bf16.gmra.mrb[0].mxu0 %v7553
    %v10992 = vpop.f32.mrb[0].mxu0
    %v10993 = vadd.f32 %v10832, %v10992
    %v10994 = vpop.f32.mrb[0].mxu0
    %v10995 = vpop.f32.mrb[0].mxu0
    %v10996 = vadd.f32 %v10835, %v10995
    %v10997 = vpop.f32.mrb[0].mxu0
    %10998 = vmatprep.mubr.bf16.mxu0 %v7562
    %10999 = vmatmul.mubr.bf16.gmra.mrb[0].mxu0 %v7561
    %v11000 = vpop.f32.mrb[0].mxu0
    %v11001 = vadd.f32 %v10840, %v11000
    %v11002 = vpop.f32.mrb[0].mxu0
    %v11003 = vpop.f32.mrb[0].mxu0
    %v11004 = vadd.f32 %v10843, %v11003
    %v11005 = vpop.f32.mrb[0].mxu0
    %11006 = vmatprep.mubr.bf16.mxu0 %v7570
    %11007 = vmatmul.mubr.bf16.gmra.mrb[0].mxu0 %v7569
    %v11008 = vpop.f32.mrb[0].mxu0
    %v11009 = vadd.f32 %v10848, %v11008
    %v11010 = vpop.f32.mrb[0].mxu0
    %v11011 = vpop.f32.mrb[0].mxu0
    %v11012 = vadd.f32 %v10851, %v11011
    %v11013 = vpop.f32.mrb[0].mxu0
    %11014 = vmatprep.mubr.bf16.mxu0 %v7578
    %11015 = vmatmul.mubr.bf16.gmra.mrb[0].mxu0 %v7577
    %v11016 = vpop.f32.mrb[0].mxu0
    %v11017 = vadd.f32 %v10856, %v11016
    %v11018 = vpop.f32.mrb[0].mxu0
    %v11019 = vpop.f32.mrb[0].mxu0
    %v11020 = vadd.f32 %v10859, %v11019
    %v11021 = vpop.f32.mrb[0].mxu0
    %11022 = vmatprep.mubr.bf16.mxu0 %v7586
    %11023 = vmatmul.mubr.bf16.gmra.mrb[0].mxu0 %v7585
    %v11024 = vpop.f32.mrb[0].mxu0
    %v11025 = vadd.f32 %v10864, %v11024
    %v11026 = vpop.f32.mrb[0].mxu0
    %v11027 = vpop.f32.mrb[0].mxu0
    %v11028 = vadd.f32 %v10867, %v11027
    %v11029 = vpop.f32.mrb[0].mxu0
    %11030 = vmatprep.mubr.bf16.mxu0 %v7594
    %11031 = vmatmul.mubr.bf16.gmra.mrb[0].mxu0 %v7593
    %v11032 = vpop.f32.mrb[0].mxu0
    %v11033 = vadd.f32 %v10872, %v11032
    %v11034 = vpop.f32.mrb[0].mxu0
    %v11035 = vpop.f32.mrb[0].mxu0
    %v11036 = vadd.f32 %v10875, %v11035
    %v11037 = vpop.f32.mrb[0].mxu0
    %11038 = vmatprep.mubr.bf16.mxu0 %v7602
    %11039 = vmatmul.mubr.bf16.gmra.mrb[0].mxu0 %v7601
    %v11040 = vpop.f32.mrb[0].mxu0
    %v11041 = vadd.f32 %v10880, %v11040
    %v11042 = vpop.f32.mrb[0].mxu0
    %v11043 = vpop.f32.mrb[0].mxu0
    %v11044 = vadd.f32 %v10883, %v11043
    %v11045 = vpop.f32.mrb[0].mxu0
    %11046 = vmatprep.mubr.bf16.mxu0 %v7610
    %11047 = vmatmul.mubr.bf16.gmra.mrb[0].mxu0 %v7609
    %v11048 = vpop.f32.mrb[0].mxu0
    %v11049 = vadd.f32 %v10888, %v11048
    %v11050 = vpop.f32.mrb[0].mxu0
    %v11051 = vpop.f32.mrb[0].mxu0
    %v11052 = vadd.f32 %v10891, %v11051
    %v11053 = vpop.f32.mrb[0].mxu0
    %11054 = vmatprep.mubr.bf16.mxu0 %v7618
    %11055 = vmatmul.mubr.bf16.gmra.mrb[0].mxu0 %v7617
    %v11056 = vpop.f32.mrb[0].mxu0
    %v11057 = vadd.f32 %v10896, %v11056
    %v11058 = vpop.f32.mrb[0].mxu0
    %v11059 = vpop.f32.mrb[0].mxu0
    %v11060 = vadd.f32 %v10899, %v11059
    %v11061 = vpop.f32.mrb[0].mxu0
    %11062 = vdwg.mxu0
    %v11063 = vtanh.pop %v8717
    %v11064 = vtanh.pop %v8719
    %v11065 = vtanh.pop %v9489
    %v11066 = vtanh.pop %v9491
    %v11067 = vtanh.pop %v10261
    %v11068 = vtanh.pop %v10263
    %v11069 = vtanh.pop %v10937
    %v11070 = vtanh.pop %v8721
    %v11071 = vtanh.pop %v8723
    %v11072 = vtanh.pop %v9493
    %v11073 = vtanh.pop %v9495
    %v11074 = vtanh.pop %v10265
    %v11075 = vtanh.pop %v10267
    %v11076 = vtanh.pop %v10940
    %v11077 = vtanh.pop %v8727
    %v11078 = vtanh.pop %v8729
    %v11079 = vtanh.pop %v9499
    %v11080 = vtanh.pop %v9501
    %v11081 = vtanh.pop %v10271
    %v11082 = vtanh.pop %v10273
    %v11083 = vtanh.pop %v10945
    %v11084 = vtanh.pop %v8731
    %v11085 = vtanh.pop %v8733
    %v11086 = vtanh.pop %v9503
    %v11087 = vtanh.pop %v9505
    %v11088 = vtanh.pop %v10275
    %v11089 = vtanh.pop %v10277
    %v11090 = vtanh.pop %v10948
    %v11091 = vtanh.pop %v8737
    %v11092 = vtanh.pop %v8739
    %v11093 = vtanh.pop %v9509
    %v11094 = vtanh.pop %v9511
    %v11095 = vtanh.pop %v10281
    %v11096 = vtanh.pop %v10283
    %v11097 = vtanh.pop %v10953
    %v11098 = vtanh.pop %v8741
    %v11099 = vtanh.pop %v8743
    %v11100 = vtanh.pop %v9513
    %v11101 = vtanh.pop %v9515
    %v11102 = vtanh.pop %v10285
    %v11103 = vtanh.pop %v10287
    %v11104 = vtanh.pop %v10956
    %v11105 = vtanh.pop %v8747
    %v11106 = vtanh.pop %v8749
    %v11107 = vtanh.pop %v9519
    %v11108 = vtanh.pop %v9521
    %v11109 = vtanh.pop %v10291
    %v11110 = vtanh.pop %v10293
    %v11111 = vtanh.pop %v10961
    %v11112 = vtanh.pop %v8751
    %v11113 = vtanh.pop %v8753
    %v11114 = vtanh.pop %v9523
    %v11115 = vtanh.pop %v9525
    %v11116 = vtanh.pop %v10295
    %v11117 = vtanh.pop %v10297
    %v11118 = vtanh.pop %v10964
    %v11119 = vtanh.pop %v8757
    %v11120 = vtanh.pop %v8759
    %v11121 = vtanh.pop %v9529
    %v11122 = vtanh.pop %v9531
    %v11123 = vtanh.pop %v10301
    %v11124 = vtanh.pop %v10303
    %v11125 = vtanh.pop %v10969
    %v11126 = vtanh.pop %v8761
    %v11127 = vtanh.pop %v8763
    %v11128 = vtanh.pop %v9533
    %v11129 = vtanh.pop %v9535
    %v11130 = vtanh.pop %v10305
    %v11131 = vtanh.pop %v10307
    %v11132 = vtanh.pop %v10972
    %v11133 = vtanh.pop %v8767
    %v11134 = vtanh.pop %v8769
    %v11135 = vtanh.pop %v9539
    %v11136 = vtanh.pop %v9541
    %v11137 = vtanh.pop %v10311
    %v11138 = vtanh.pop %v10313
    %v11139 = vtanh.pop %v10977
    %v11140 = vtanh.pop %v8771
    %v11141 = vtanh.pop %v8773
    %v11142 = vtanh.pop %v9543
    %v11143 = vtanh.pop %v9545
    %v11144 = vtanh.pop %v10315
    %v11145 = vtanh.pop %v10317
    %v11146 = vtanh.pop %v10980
    %v11147 = vtanh.pop %v8777
    %v11148 = vtanh.pop %v8779
    %v11149 = vtanh.pop %v9549
    %v11150 = vtanh.pop %v9551
    %v11151 = vtanh.pop %v10321
    %v11152 = vtanh.pop %v10323
    %v11153 = vtanh.pop %v10985
    %v11154 = vtanh.pop %v8781
    %v11155 = vtanh.pop %v8783
    %v11156 = vtanh.pop %v9553
    %v11157 = vtanh.pop %v9555
    %v11158 = vtanh.pop %v10325
    %v11159 = vtanh.pop %v10327
    %v11160 = vtanh.pop %v10988
    %v11161 = vtanh.pop %v8787
    %v11162 = vtanh.pop %v8789
    %v11163 = vtanh.pop %v9559
    %v11164 = vtanh.pop %v9561
    %v11165 = vtanh.pop %v10331
    %v11166 = vtanh.pop %v10333
    %v11167 = vtanh.pop %v10993
    %v11168 = vtanh.pop %v8791
    %v11169 = vtanh.pop %v8793
    %v11170 = vtanh.pop %v9563
    %v11171 = vtanh.pop %v9565
    %v11172 = vtanh.pop %v10335
    %v11173 = vtanh.pop %v10337
    %v11174 = vtanh.pop %v10996
    %v11175 = vtanh.pop %v8797
    %v11176 = vtanh.pop %v8799
    %v11177 = vtanh.pop %v9569
    %v11178 = vtanh.pop %v9571
    %v11179 = vtanh.pop %v10341
    %v11180 = vtanh.pop %v10343
    %v11181 = vtanh.pop %v11001
    %v11182 = vtanh.pop %v8801
    %v11183 = vtanh.pop %v8803
    %v11184 = vtanh.pop %v9573
    %v11185 = vtanh.pop %v9575
    %v11186 = vtanh.pop %v10345
    %v11187 = vtanh.pop %v10347
    %v11188 = vtanh.pop %v11004
    %v11189 = vtanh.pop %v8807
    %v11190 = vtanh.pop %v8809
    %v11191 = vtanh.pop %v9579
    %v11192 = vtanh.pop %v9581
    %v11193 = vtanh.pop %v10351
    %v11194 = vtanh.pop %v10353
    %v11195 = vtanh.pop %v11009
    %v11196 = vtanh.pop %v8811
    %v11197 = vtanh.pop %v8813
    %v11198 = vtanh.pop %v9583
    %v11199 = vtanh.pop %v9585
    %v11200 = vtanh.pop %v10355
    %v11201 = vtanh.pop %v10357
    %v11202 = vtanh.pop %v11012
    %v11203 = vtanh.pop %v8817
    %v11204 = vtanh.pop %v8819
    %v11205 = vtanh.pop %v9589
    %v11206 = vtanh.pop %v9591
    %v11207 = vtanh.pop %v10361
    %v11208 = vtanh.pop %v10363
    %v11209 = vtanh.pop %v11017
    %v11210 = vtanh.pop %v8821
    %v11211 = vtanh.pop %v8823
    %v11212 = vtanh.pop %v9593
    %v11213 = vtanh.pop %v9595
    %v11214 = vtanh.pop %v10365
    %v11215 = vtanh.pop %v10367
    %v11216 = vtanh.pop %v11020
    %v11217 = vtanh.pop %v8827
    %v11218 = vtanh.pop %v8829
    %v11219 = vtanh.pop %v9599
    %v11220 = vtanh.pop %v9601
    %v11221 = vtanh.pop %v10371
    %v11222 = vtanh.pop %v10373
    %v11223 = vtanh.pop %v11025
    %v11224 = vtanh.pop %v8831
    %v11225 = vtanh.pop %v8833
    %v11226 = vtanh.pop %v9603
    %v11227 = vtanh.pop %v9605
    %v11228 = vtanh.pop %v10375
    %v11229 = vtanh.pop %v10377
    %v11230 = vtanh.pop %v11028
    %v11231 = vtanh.pop %v8837
    %v11232 = vtanh.pop %v8839
    %v11233 = vtanh.pop %v9609
    %v11234 = vtanh.pop %v9611
    %v11235 = vtanh.pop %v10381
    %v11236 = vtanh.pop %v10383
    %v11237 = vtanh.pop %v11033
    %v11238 = vtanh.pop %v8841
    %v11239 = vtanh.pop %v8843
    %v11240 = vtanh.pop %v9613
    %v11241 = vtanh.pop %v9615
    %v11242 = vtanh.pop %v10385
    %v11243 = vtanh.pop %v10387
    %v11244 = vtanh.pop %v11036
    %v11245 = vtanh.pop %v8847
    %v11246 = vtanh.pop %v8849
    %v11247 = vtanh.pop %v9619
    %v11248 = vtanh.pop %v9621
    %v11249 = vtanh.pop %v10391
    %v11250 = vtanh.pop %v10393
    %v11251 = vtanh.pop %v11041
    %v11252 = vtanh.pop %v8851
    %v11253 = vtanh.pop %v8853
    %v11254 = vtanh.pop %v9623
    %v11255 = vtanh.pop %v9625
    %v11256 = vtanh.pop %v10395
    %v11257 = vtanh.pop %v10397
    %v11258 = vtanh.pop %v11044
    %v11259 = vtanh.pop %v8857
    %v11260 = vtanh.pop %v8859
    %v11261 = vtanh.pop %v9629
    %v11262 = vtanh.pop %v9631
    %v11263 = vtanh.pop %v10401
    %v11264 = vtanh.pop %v10403
    %v11265 = vtanh.pop %v11049
    %v11266 = vtanh.pop %v8861
    %v11267 = vtanh.pop %v8863
    %v11268 = vtanh.pop %v9633
    %v11269 = vtanh.pop %v9635
    %v11270 = vtanh.pop %v10405
    %v11271 = vtanh.pop %v10407
    %v11272 = vtanh.pop %v11052
    %v11273 = vtanh.pop %v8867
    %v11274 = vtanh.pop %v8869
    %v11275 = vtanh.pop %v9639
    %v11276 = vtanh.pop %v9641
    %v11277 = vtanh.pop %v10411
    %v11278 = vtanh.pop %v10413
    %v11279 = vtanh.pop %v11057
    %v11280 = vtanh.pop %v8871
    %v11281 = vtanh.pop %v8873
    %v11282 = vtanh.pop %v9643
    %v11283 = vtanh.pop %v9645
    %v11284 = vtanh.pop %v10415
    %v11285 = vtanh.pop %v10417
    %v11286 = vtanh.pop %v11060
    %11287 = vst [vmem:[#allocation14] sm:$0xff] %v11063
    %11288 = vst [vmem:[#allocation14 + $0x8] sm:$0xff] %v11064
    %11289 = vst [vmem:[#allocation14 + $0x10] sm:$0xff] %v11065
    %11290 = vst [vmem:[#allocation14 + $0x18] sm:$0xff] %v11066
    %11291 = vst [vmem:[#allocation14 + $0x20] sm:$0xff] %v11067
    %11292 = vst [vmem:[#allocation14 + $0x28] sm:$0xff] %v11068
    %11293 = vst [vmem:[#allocation14 + $0x30] sm:$0xff] %v11069
    %11294 = vst [vmem:[#allocation14 + $0x38] sm:$0xff] %v11070
    %11295 = vst [vmem:[#allocation14 + $0x40] sm:$0xff] %v11071
    %11296 = vst [vmem:[#allocation14 + $0x48] sm:$0xff] %v11072
    %11297 = vst [vmem:[#allocation14 + $0x50] sm:$0xff] %v11073
    %11298 = vst [vmem:[#allocation14 + $0x58] sm:$0xff] %v11074
    %11299 = vst [vmem:[#allocation14 + $0x60] sm:$0xff] %v11075
    %11300 = vst [vmem:[#allocation14 + $0x68] sm:$0xff] %v11076
    %11301 = vst [vmem:[#allocation14 + $0x70] sm:$0xff] %v11077
    %11302 = vst [vmem:[#allocation14 + $0x78] sm:$0xff] %v11078
    %11303 = vst [vmem:[#allocation14 + $0x80] sm:$0xff] %v11079
    %11304 = vst [vmem:[#allocation14 + $0x88] sm:$0xff] %v11080
    %11305 = vst [vmem:[#allocation14 + $0x90] sm:$0xff] %v11081
    %11306 = vst [vmem:[#allocation14 + $0x98] sm:$0xff] %v11082
    %11307 = vst [vmem:[#allocation14 + $0xa0] sm:$0xff] %v11083
    %11308 = vst [vmem:[#allocation14 + $0xa8] sm:$0xff] %v11084
    %11309 = vst [vmem:[#allocation14 + $0xb0] sm:$0xff] %v11085
    %11310 = vst [vmem:[#allocation14 + $0xb8] sm:$0xff] %v11086
    %11311 = vst [vmem:[#allocation14 + $0xc0] sm:$0xff] %v11087
    %11312 = vst [vmem:[#allocation14 + $0xc8] sm:$0xff] %v11088
    %11313 = vst [vmem:[#allocation14 + $0xd0] sm:$0xff] %v11089
    %11314 = vst [vmem:[#allocation14 + $0xd8] sm:$0xff] %v11090
    %11315 = vst [vmem:[#allocation14 + $0xe0] sm:$0xff] %v11091
    %11316 = vst [vmem:[#allocation14 + $0xe8] sm:$0xff] %v11092
    %11317 = vst [vmem:[#allocation14 + $0xf0] sm:$0xff] %v11093
    %11318 = vst [vmem:[#allocation14 + $0xf8] sm:$0xff] %v11094
    %11319 = vst [vmem:[#allocation14 + $0x100] sm:$0xff] %v11095
    %11320 = vst [vmem:[#allocation14 + $0x108] sm:$0xff] %v11096
    %11321 = vst [vmem:[#allocation14 + $0x110] sm:$0xff] %v11097
    %11322 = vst [vmem:[#allocation14 + $0x118] sm:$0xff] %v11098
    %11323 = vst [vmem:[#allocation14 + $0x120] sm:$0xff] %v11099
    %11324 = vst [vmem:[#allocation14 + $0x128] sm:$0xff] %v11100
    %11325 = vst [vmem:[#allocation14 + $0x130] sm:$0xff] %v11101
    %11326 = vst [vmem:[#allocation14 + $0x138] sm:$0xff] %v11102
    %11327 = vst [vmem:[#allocation14 + $0x140] sm:$0xff] %v11103
    %11328 = vst [vmem:[#allocation14 + $0x148] sm:$0xff] %v11104
    %11329 = vst [vmem:[#allocation14 + $0x150] sm:$0xff] %v11105
    %11330 = vst [vmem:[#allocation14 + $0x158] sm:$0xff] %v11106
    %11331 = vst [vmem:[#allocation14 + $0x160] sm:$0xff] %v11107
    %11332 = vst [vmem:[#allocation14 + $0x168] sm:$0xff] %v11108
    %11333 = vst [vmem:[#allocation14 + $0x170] sm:$0xff] %v11109
    %11334 = vst [vmem:[#allocation14 + $0x178] sm:$0xff] %v11110
    %11335 = vst [vmem:[#allocation14 + $0x180] sm:$0xff] %v11111
    %11336 = vst [vmem:[#allocation14 + $0x188] sm:$0xff] %v11112
    %11337 = vst [vmem:[#allocation14 + $0x190] sm:$0xff] %v11113
    %11338 = vst [vmem:[#allocation14 + $0x198] sm:$0xff] %v11114
    %11339 = vst [vmem:[#allocation14 + $0x1a0] sm:$0xff] %v11115
    %11340 = vst [vmem:[#allocation14 + $0x1a8] sm:$0xff] %v11116
    %11341 = vst [vmem:[#allocation14 + $0x1b0] sm:$0xff] %v11117
    %11342 = vst [vmem:[#allocation14 + $0x1b8] sm:$0xff] %v11118
    %11343 = vst [vmem:[#allocation14 + $0x1c0] sm:$0xff] %v11119
    %11344 = vst [vmem:[#allocation14 + $0x1c8] sm:$0xff] %v11120
    %11345 = vst [vmem:[#allocation14 + $0x1d0] sm:$0xff] %v11121
    %11346 = vst [vmem:[#allocation14 + $0x1d8] sm:$0xff] %v11122
    %11347 = vst [vmem:[#allocation14 + $0x1e0] sm:$0xff] %v11123
    %11348 = vst [vmem:[#allocation14 + $0x1e8] sm:$0xff] %v11124
    %11349 = vst [vmem:[#allocation14 + $0x1f0] sm:$0xff] %v11125
    %11350 = vst [vmem:[#allocation14 + $0x1f8] sm:$0xff] %v11126
    %11351 = vst [vmem:[#allocation14 + $0x200] sm:$0xff] %v11127
    %11352 = vst [vmem:[#allocation14 + $0x208] sm:$0xff] %v11128
    %11353 = vst [vmem:[#allocation14 + $0x210] sm:$0xff] %v11129
    %11354 = vst [vmem:[#allocation14 + $0x218] sm:$0xff] %v11130
    %11355 = vst [vmem:[#allocation14 + $0x220] sm:$0xff] %v11131
    %11356 = vst [vmem:[#allocation14 + $0x228] sm:$0xff] %v11132
    %11357 = vst [vmem:[#allocation14 + $0x230] sm:$0xff] %v11133
    %11358 = vst [vmem:[#allocation14 + $0x238] sm:$0xff] %v11134
    %11359 = vst [vmem:[#allocation14 + $0x240] sm:$0xff] %v11135
    %11360 = vst [vmem:[#allocation14 + $0x248] sm:$0xff] %v11136
    %11361 = vst [vmem:[#allocation14 + $0x250] sm:$0xff] %v11137
    %11362 = vst [vmem:[#allocation14 + $0x258] sm:$0xff] %v11138
    %11363 = vst [vmem:[#allocation14 + $0x260] sm:$0xff] %v11139
    %11364 = vst [vmem:[#allocation14 + $0x268] sm:$0xff] %v11140
    %11365 = vst [vmem:[#allocation14 + $0x270] sm:$0xff] %v11141
    %11366 = vst [vmem:[#allocation14 + $0x278] sm:$0xff] %v11142
    %11367 = vst [vmem:[#allocation14 + $0x280] sm:$0xff] %v11143
    %11368 = vst [vmem:[#allocation14 + $0x288] sm:$0xff] %v11144
    %11369 = vst [vmem:[#allocation14 + $0x290] sm:$0xff] %v11145
    %11370 = vst [vmem:[#allocation14 + $0x298] sm:$0xff] %v11146
    %11371 = vst [vmem:[#allocation14 + $0x2a0] sm:$0xff] %v11147
    %11372 = vst [vmem:[#allocation14 + $0x2a8] sm:$0xff] %v11148
    %11373 = vst [vmem:[#allocation14 + $0x2b0] sm:$0xff] %v11149
    %11374 = vst [vmem:[#allocation14 + $0x2b8] sm:$0xff] %v11150
    %11375 = vst [vmem:[#allocation14 + $0x2c0] sm:$0xff] %v11151
    %11376 = vst [vmem:[#allocation14 + $0x2c8] sm:$0xff] %v11152
    %11377 = vst [vmem:[#allocation14 + $0x2d0] sm:$0xff] %v11153
    %11378 = vst [vmem:[#allocation14 + $0x2d8] sm:$0xff] %v11154
    %11379 = vst [vmem:[#allocation14 + $0x2e0] sm:$0xff] %v11155
    %11380 = vst [vmem:[#allocation14 + $0x2e8] sm:$0xff] %v11156
    %11381 = vst [vmem:[#allocation14 + $0x2f0] sm:$0xff] %v11157
    %11382 = vst [vmem:[#allocation14 + $0x2f8] sm:$0xff] %v11158
    %11383 = vst [vmem:[#allocation14 + $0x300] sm:$0xff] %v11159
    %11384 = vst [vmem:[#allocation14 + $0x308] sm:$0xff] %v11160
    %11385 = vst [vmem:[#allocation14 + $0x310] sm:$0xff] %v11161
    %11386 = vst [vmem:[#allocation14 + $0x318] sm:$0xff] %v11162
    %11387 = vst [vmem:[#allocation14 + $0x320] sm:$0xff] %v11163
    %11388 = vst [vmem:[#allocation14 + $0x328] sm:$0xff] %v11164
    %11389 = vst [vmem:[#allocation14 + $0x330] sm:$0xff] %v11165
    %11390 = vst [vmem:[#allocation14 + $0x338] sm:$0xff] %v11166
    %11391 = vst [vmem:[#allocation14 + $0x340] sm:$0xff] %v11167
    %11392 = vst [vmem:[#allocation14 + $0x348] sm:$0xff] %v11168
    %11393 = vst [vmem:[#allocation14 + $0x350] sm:$0xff] %v11169
    %11394 = vst [vmem:[#allocation14 + $0x358] sm:$0xff] %v11170
    %11395 = vst [vmem:[#allocation14 + $0x360] sm:$0xff] %v11171
    %11396 = vst [vmem:[#allocation14 + $0x368] sm:$0xff] %v11172
    %11397 = vst [vmem:[#allocation14 + $0x370] sm:$0xff] %v11173
    %11398 = vst [vmem:[#allocation14 + $0x378] sm:$0xff] %v11174
    %11399 = vst [vmem:[#allocation14 + $0x380] sm:$0xff] %v11175
    %11400 = vst [vmem:[#allocation14 + $0x388] sm:$0xff] %v11176
    %11401 = vst [vmem:[#allocation14 + $0x390] sm:$0xff] %v11177
    %11402 = vst [vmem:[#allocation14 + $0x398] sm:$0xff] %v11178
    %11403 = vst [vmem:[#allocation14 + $0x3a0] sm:$0xff] %v11179
    %11404 = vst [vmem:[#allocation14 + $0x3a8] sm:$0xff] %v11180
    %11405 = vst [vmem:[#allocation14 + $0x3b0] sm:$0xff] %v11181
    %11406 = vst [vmem:[#allocation14 + $0x3b8] sm:$0xff] %v11182
    %11407 = vst [vmem:[#allocation14 + $0x3c0] sm:$0xff] %v11183
    %11408 = vst [vmem:[#allocation14 + $0x3c8] sm:$0xff] %v11184
    %11409 = vst [vmem:[#allocation14 + $0x3d0] sm:$0xff] %v11185
    %11410 = vst [vmem:[#allocation14 + $0x3d8] sm:$0xff] %v11186
    %11411 = vst [vmem:[#allocation14 + $0x3e0] sm:$0xff] %v11187
    %11412 = vst [vmem:[#allocation14 + $0x3e8] sm:$0xff] %v11188
    %11413 = vst [vmem:[#allocation14 + $0x3f0] sm:$0xff] %v11189
    %11414 = vst [vmem:[#allocation14 + $0x3f8] sm:$0xff] %v11190
    %11415 = vst [vmem:[#allocation14 + $0x400] sm:$0xff] %v11191
    %11416 = vst [vmem:[#allocation14 + $0x408] sm:$0xff] %v11192
    %11417 = vst [vmem:[#allocation14 + $0x410] sm:$0xff] %v11193
    %11418 = vst [vmem:[#allocation14 + $0x418] sm:$0xff] %v11194
    %11419 = vst [vmem:[#allocation14 + $0x420] sm:$0xff] %v11195
    %11420 = vst [vmem:[#allocation14 + $0x428] sm:$0xff] %v11196
    %11421 = vst [vmem:[#allocation14 + $0x430] sm:$0xff] %v11197
    %11422 = vst [vmem:[#allocation14 + $0x438] sm:$0xff] %v11198
    %11423 = vst [vmem:[#allocation14 + $0x440] sm:$0xff] %v11199
    %11424 = vst [vmem:[#allocation14 + $0x448] sm:$0xff] %v11200
    %11425 = vst [vmem:[#allocation14 + $0x450] sm:$0xff] %v11201
    %11426 = vst [vmem:[#allocation14 + $0x458] sm:$0xff] %v11202
    %11427 = vst [vmem:[#allocation14 + $0x460] sm:$0xff] %v11203
    %11428 = vst [vmem:[#allocation14 + $0x468] sm:$0xff] %v11204
    %11429 = vst [vmem:[#allocation14 + $0x470] sm:$0xff] %v11205
    %11430 = vst [vmem:[#allocation14 + $0x478] sm:$0xff] %v11206
    %11431 = vst [vmem:[#allocation14 + $0x480] sm:$0xff] %v11207
    %11432 = vst [vmem:[#allocation14 + $0x488] sm:$0xff] %v11208
    %11433 = vst [vmem:[#allocation14 + $0x490] sm:$0xff] %v11209
    %11434 = vst [vmem:[#allocation14 + $0x498] sm:$0xff] %v11210
    %11435 = vst [vmem:[#allocation14 + $0x4a0] sm:$0xff] %v11211
    %11436 = vst [vmem:[#allocation14 + $0x4a8] sm:$0xff] %v11212
    %11437 = vst [vmem:[#allocation14 + $0x4b0] sm:$0xff] %v11213
    %11438 = vst [vmem:[#allocation14 + $0x4b8] sm:$0xff] %v11214
    %11439 = vst [vmem:[#allocation14 + $0x4c0] sm:$0xff] %v11215
    %11440 = vst [vmem:[#allocation14 + $0x4c8] sm:$0xff] %v11216
    %11441 = vst [vmem:[#allocation14 + $0x4d0] sm:$0xff] %v11217
    %11442 = vst [vmem:[#allocation14 + $0x4d8] sm:$0xff] %v11218
    %11443 = vst [vmem:[#allocation14 + $0x4e0] sm:$0xff] %v11219
    %11444 = vst [vmem:[#allocation14 + $0x4e8] sm:$0xff] %v11220
    %11445 = vst [vmem:[#allocation14 + $0x4f0] sm:$0xff] %v11221
    %11446 = vst [vmem:[#allocation14 + $0x4f8] sm:$0xff] %v11222
    %11447 = vst [vmem:[#allocation14 + $0x500] sm:$0xff] %v11223
    %11448 = vst [vmem:[#allocation14 + $0x508] sm:$0xff] %v11224
    %11449 = vst [vmem:[#allocation14 + $0x510] sm:$0xff] %v11225
    %11450 = vst [vmem:[#allocation14 + $0x518] sm:$0xff] %v11226
    %11451 = vst [vmem:[#allocation14 + $0x520] sm:$0xff] %v11227
    %11452 = vst [vmem:[#allocation14 + $0x528] sm:$0xff] %v11228
    %11453 = vst [vmem:[#allocation14 + $0x530] sm:$0xff] %v11229
    %11454 = vst [vmem:[#allocation14 + $0x538] sm:$0xff] %v11230
    %11455 = vst [vmem:[#allocation14 + $0x540] sm:$0xff] %v11231
    %11456 = vst [vmem:[#allocation14 + $0x548] sm:$0xff] %v11232
    %11457 = vst [vmem:[#allocation14 + $0x550] sm:$0xff] %v11233
    %11458 = vst [vmem:[#allocation14 + $0x558] sm:$0xff] %v11234
    %11459 = vst [vmem:[#allocation14 + $0x560] sm:$0xff] %v11235
    %11460 = vst [vmem:[#allocation14 + $0x568] sm:$0xff] %v11236
    %11461 = vst [vmem:[#allocation14 + $0x570] sm:$0xff] %v11237
    %11462 = vst [vmem:[#allocation14 + $0x578] sm:$0xff] %v11238
    %11463 = vst [vmem:[#allocation14 + $0x580] sm:$0xff] %v11239
    %11464 = vst [vmem:[#allocation14 + $0x588] sm:$0xff] %v11240
    %11465 = vst [vmem:[#allocation14 + $0x590] sm:$0xff] %v11241
    %11466 = vst [vmem:[#allocation14 + $0x598] sm:$0xff] %v11242
    %11467 = vst [vmem:[#allocation14 + $0x5a0] sm:$0xff] %v11243
    %11468 = vst [vmem:[#allocation14 + $0x5a8] sm:$0xff] %v11244
    %11469 = vst [vmem:[#allocation14 + $0x5b0] sm:$0xff] %v11245
    %11470 = vst [vmem:[#allocation14 + $0x5b8] sm:$0xff] %v11246
    %11471 = vst [vmem:[#allocation14 + $0x5c0] sm:$0xff] %v11247
    %11472 = vst [vmem:[#allocation14 + $0x5c8] sm:$0xff] %v11248
    %11473 = vst [vmem:[#allocation14 + $0x5d0] sm:$0xff] %v11249
    %11474 = vst [vmem:[#allocation14 + $0x5d8] sm:$0xff] %v11250
    %11475 = vst [vmem:[#allocation14 + $0x5e0] sm:$0xff] %v11251
    %11476 = vst [vmem:[#allocation14 + $0x5e8] sm:$0xff] %v11252
    %11477 = vst [vmem:[#allocation14 + $0x5f0] sm:$0xff] %v11253
    %11478 = vst [vmem:[#allocation14 + $0x5f8] sm:$0xff] %v11254
    %11479 = vst [vmem:[#allocation14 + $0x600] sm:$0xff] %v11255
    %11480 = vst [vmem:[#allocation14 + $0x608] sm:$0xff] %v11256
    %11481 = vst [vmem:[#allocation14 + $0x610] sm:$0xff] %v11257
    %11482 = vst [vmem:[#allocation14 + $0x618] sm:$0xff] %v11258
    %11483 = vst [vmem:[#allocation14 + $0x620] sm:$0xff] %v11259
    %11484 = vst [vmem:[#allocation14 + $0x628] sm:$0xff] %v11260
    %11485 = vst [vmem:[#allocation14 + $0x630] sm:$0xff] %v11261
    %11486 = vst [vmem:[#allocation14 + $0x638] sm:$0xff] %v11262
    %11487 = vst [vmem:[#allocation14 + $0x640] sm:$0xff] %v11263
    %11488 = vst [vmem:[#allocation14 + $0x648] sm:$0xff] %v11264
    %11489 = vst [vmem:[#allocation14 + $0x650] sm:$0xff] %v11265
    %11490 = vst [vmem:[#allocation14 + $0x658] sm:$0xff] %v11266
    %11491 = vst [vmem:[#allocation14 + $0x660] sm:$0xff] %v11267
    %11492 = vst [vmem:[#allocation14 + $0x668] sm:$0xff] %v11268
    %11493 = vst [vmem:[#allocation14 + $0x670] sm:$0xff] %v11269
    %11494 = vst [vmem:[#allocation14 + $0x678] sm:$0xff] %v11270
    %11495 = vst [vmem:[#allocation14 + $0x680] sm:$0xff] %v11271
    %11496 = vst [vmem:[#allocation14 + $0x688] sm:$0xff] %v11272
    %11497 = vst [vmem:[#allocation14 + $0x690] sm:$0xff] %v11273
    %11498 = vst [vmem:[#allocation14 + $0x698] sm:$0xff] %v11274
    %11499 = vst [vmem:[#allocation14 + $0x6a0] sm:$0xff] %v11275
    %11500 = vst [vmem:[#allocation14 + $0x6a8] sm:$0xff] %v11276
    %11501 = vst [vmem:[#allocation14 + $0x6b0] sm:$0xff] %v11277
    %11502 = vst [vmem:[#allocation14 + $0x6b8] sm:$0xff] %v11278
    %11503 = vst [vmem:[#allocation14 + $0x6c0] sm:$0xff] %v11279
    %11504 = vst [vmem:[#allocation14 + $0x6c8] sm:$0xff] %v11280
    %11505 = vst [vmem:[#allocation14 + $0x6d0] sm:$0xff] %v11281
    %11506 = vst [vmem:[#allocation14 + $0x6d8] sm:$0xff] %v11282
    %11507 = vst [vmem:[#allocation14 + $0x6e0] sm:$0xff] %v11283
    %11508 = vst [vmem:[#allocation14 + $0x6e8] sm:$0xff] %v11284
    %11509 = vst [vmem:[#allocation14 + $0x6f0] sm:$0xff] %v11285
    %11510 = vst [vmem:[#allocation14 + $0x6f8] sm:$0xff] %v11286
    // Predicated region
    $region34: #{tpu_custom_call.1} parent=1 // pred_check
      _
    $region35: #{tpu_custom_call.1} parent=1 // pred_check_branch
      %11512 = sbr.rel (0) target = $region37
    $region36: #{tpu_custom_call.1} parent=1 // pred_region
      %s11514 = ssub.s32 28672, 28672
      %11515 = vsyncadd [#allocation8], %s11514
      %s11516 = sshll.u32 [#allocation14], 4
      %s11517 = int_to_ptr.vmem [resolvable:$true] %s11516
      %11522 = dma.vmem_to_hbm [thread:$0]  %s11517, 28672, %s7, [#allocation8], 896, 896, 56
    $region37: #{tpu_custom_call.1} parent=1 // pred_fallthru
      _
    // Predicated region
    $region38: #{tpu_custom_call.1} parent=1 // pred_check
      _
    $region39: #{tpu_custom_call.1} parent=1 // pred_check_branch
      %11524 = sbr.rel (0) target = $region41
    $region40: #{tpu_custom_call.1} parent=1 // pred_region
      %11525 = dma.done [#allocation8], 28672
    $region41: #{tpu_custom_call.1} parent=1 // pred_fallthru
      _
    %11526 = vsyncpa [#allocation7], 1
    %11527 = vsyncpa [#allocation10], 1
    %11528 = vsyncpa [#allocation13], 1
    %11529 = vsyncpa [#allocation8], 1
  %11530 = vsyncmov [#allocation5]
  %s11531 = vpop.sfrf %11530
  %p11532 = scmp.eq.s32.totalorder %s11531, 0
  %p11533 = pneg %p11532
  %11535 = shalt.err (%p11533)
  %s11536 = scalar_lea.sflag [#allocation5], 1
  %11537 = vsyncmov %s11536
  %s11538 = vpop.sfrf %11537
  %p11539 = scmp.eq.s32.totalorder %s11538, 0
  %p11540 = pneg %p11539
  %11542 = shalt.err (%p11540)
  %s11543 = scalar_lea.sflag [#allocation5], 2
  %11544 = vsyncmov %s11543
  %s11545 = vpop.sfrf %11544
  %p11546 = scmp.eq.s32.totalorder %s11545, 0
  %p11547 = pneg %p11546
  %11549 = shalt.err (%p11547)

</llo_original>
